<compile_context>
chip_gen: v5e
topology: v5e:2x2
jax: 0.10.0
libtpu: 0.0.40
codegen_flags: <defaults>
</compile_context>

<pallas_src>
import functools

import jax
import jax.numpy as jnp
from jax.experimental import pallas as pl
from jax.experimental.pallas import tpu as pltpu

_EPS = 1e-6
_VMEM_LIMIT = 32 * 1024 * 1024
_PARALLEL = pltpu.CompilerParams(dimension_semantics=("parallel",),
                                 vmem_limit_bytes=_VMEM_LIMIT)
_SINGLE = pltpu.CompilerParams(dimension_semantics=("arbitrary",),
                               vmem_limit_bytes=_VMEM_LIMIT)


def _full(shape):
    """Whole-array block, identical for every grid step (weights / biases)."""
    n = len(shape)
    return pl.BlockSpec(shape, lambda *_: (0,) * n)


# --------------------------------------------------------------------------
# In-kernel math helpers (VPU/EUP ops only -- guaranteed to lower in Mosaic)
# --------------------------------------------------------------------------
def _ln(x, g, b, eps=_EPS):
    """nn.LayerNorm / LayerNorm2d over the channel (last) dim, biased variance."""
    mean = jnp.mean(x, axis=-1, keepdims=True)
    c = x - mean
    var = jnp.mean(c * c, axis=-1, keepdims=True)
    return c * jax.lax.rsqrt(var + eps) * g + b


def _erf(x):
    # Abramowitz & Stegun 7.1.26 rational approximation, |err| <= 1.5e-7 (~f32 ulp),
    # built from exp/abs/where so it lowers unconditionally inside the kernel.
    # TODO(synk): swap for a native erf lowering if Mosaic exposes one.
    z = jnp.abs(x)
    t = 1.0 / (1.0 + 0.3275911 * z)
    poly = t * (0.254829592 + t * (-0.284496736 + t * (1.421413741
                + t * (-1.453152027 + t * 1.061405429))))
    e = 1.0 - poly * jnp.exp(-z * z)
    return jnp.where(x < 0.0, -e, e)


def _gelu_exact(x):
    """nn.GELU() default (erf form), fused as an epilogue on the VPU/EUP."""
    return 0.5 * x * (1.0 + _erf(x * 0.7071067811865476))


# --------------------------------------------------------------------------
# Fused Pallas kernels (one per network stage)
# --------------------------------------------------------------------------
def _stem_kernel(p_ref, w_ref, b_ref, g_ref, bb_ref, o_ref):
    """4x4/s4 conv (as patch matmul) + bias + LayerNorm2d, fused."""
    y = jnp.dot(p_ref[0], w_ref[...], preferred_element_type=jnp.float32) + b_ref[...]
    o_ref[0] = _ln(y, g_ref[...], bb_ref[...])


def _cnblock_kernel(x_ref, dww_ref, dwb_ref, g_ref, bln_ref, w1_ref, b1_ref,
                    w2_ref, b2_ref, ls_ref, o_ref, pad_ref, rows_ref, *, H, W):
    """Fused torchvision CNBlock for one image:
       dw7x7 -> LayerNorm -> Linear(4C) + GELU -> Linear(C) -> layer_scale -> +residual.
       (stochastic depth is identity in eval mode)"""
    C = x_ref.shape[-1]
    x = x_ref[0]                                         # (H*W, C), rows in (h, w) order

    # 1) zero-pad the 3-pixel halo into VMEM scratch (no HBM pad round trip).
    pad_ref[...] = jnp.zeros((H + 6, W + 6, C), jnp.float32)
    for h in range(H):
        pad_ref[3 + h, 3:3 + W, :] = x[h * W:(h + 1) * W, :]

    # 2) depthwise 7x7: ref-slice only along kh; kw shifts are in-register
    #    sublane slices of the loaded (W+6, C) row slab.  Accumulate directly
    #    into the row-major scratch (no in-kernel reshape).
    wk = dww_ref[...]                                    # (49, C), (kh*7+kw, c) order
    for h in range(H):
        acc = jnp.zeros((W, C), jnp.float32)
        for kh in range(7):
            row = pad_ref[h + kh, :, :]                  # (W+6, C)
            for kw in range(7):
                tap = wk[kh * 7 + kw:kh * 7 + kw + 1, :]  # (1, C)
                acc = acc + row[kw:kw + W, :] * tap
        rows_ref[h * W:(h + 1) * W, :] = acc + dwb_ref[...]

    # 3) LayerNorm over channels + pointwise MLP with fused GELU epilogue.
    y = _ln(rows_ref[...], g_ref[...], bln_ref[...])
    h1 = jnp.dot(y, w1_ref[...], preferred_element_type=jnp.float32) + b1_ref[...]
    h1 = _gelu_exact(h1)
    h2 = jnp.dot(h1, w2_ref[...], preferred_element_type=jnp.float32) + b2_ref[...]

    # 4) per-channel layer-scale + residual add, fused into the same kernel.
    o_ref[0] = x + h2 * ls_ref[...]


def _downsample_kernel(p_ref, g_ref, bln_ref, w_ref, b_ref, o_ref):
    """LayerNorm2d (per input pixel) + 2x2/s2 conv, decomposed over the 4 patch
    taps so no transpose or lane-dim slicing is needed inside the kernel."""
    taps = p_ref.shape[1]                                # k*k = 4
    acc = None
    for j in range(taps):
        seg = _ln(p_ref[0, j], g_ref[...], bln_ref[...])  # (R, C0): channels of tap j
        part = jnp.dot(seg, w_ref[j], preferred_element_type=jnp.float32)
        acc = part if acc is None else acc + part
    o_ref[0] = acc + b_ref[...]


def _head_kernel(x_ref, g_ref, bln_ref, wcat_ref, comb_ref, b_ref, o_ref):
    """AdaptiveAvgPool2d(1) + pre-classifier LayerNorm + LoRALinear, fused.
    wcat = [W^T | A^T]  -> one MXU call yields [x@W^T | x@A^T];
    comb = [[I], [scaling*B^T]] recombines them (identity half is FP-exact)."""
    feat = jnp.mean(x_ref[...], axis=1)                  # (N, C) global average pool
    feat = _ln(feat, g_ref[...], bln_ref[...])
    y = jnp.dot(feat, wcat_ref[...], preferred_element_type=jnp.float32)
    o_ref[...] = jnp.dot(y, comb_ref[...], preferred_element_type=jnp.float32) + b_ref[...]


# --------------------------------------------------------------------------
# pallas_call wrappers
# --------------------------------------------------------------------------
def stem(patches, p):
    N, R, K = patches.shape
    C = p["w"].shape[1]
    return pl.pallas_call(
        _stem_kernel,
        out_shape=jax.ShapeDtypeStruct((N, R, C), jnp.float32),
        grid=(N,),
        in_specs=[pl.BlockSpec((1, R, K), lambda n: (n, 0, 0)),
                  _full((K, C)), _full((1, C)), _full((1, C)), _full((1, C))],
        out_specs=pl.BlockSpec((1, R, C), lambda n: (n, 0, 0)),
        compiler_params=_PARALLEL,
    )(patches, p["w"], p["b"].reshape(1, C),
      p["ln_g"].reshape(1, C), p["ln_b"].reshape(1, C))


def cnblock(x_rows, p, *, H, W):
    N, R, C = x_rows.shape
    C4 = 4 * C
    return pl.pallas_call(
        functools.partial(_cnblock_kernel, H=H, W=W),
        out_shape=jax.ShapeDtypeStruct((N, R, C), jnp.float32),
        grid=(N,),
        in_specs=[pl.BlockSpec((1, R, C), lambda n: (n, 0, 0)),  # x (also residual)
                  _full((49, C)), _full((1, C)),                 # depthwise w/b
                  _full((1, C)), _full((1, C)),                  # LN gamma/beta
                  _full((C, C4)), _full((1, C4)),                # w1/b1
                  _full((C4, C)), _full((1, C)),                 # w2/b2
                  _full((1, C))],                                # layer_scale
        out_specs=pl.BlockSpec((1, R, C), lambda n: (n, 0, 0)),
        scratch_shapes=[pltpu.VMEM((H + 6, W + 6, C), jnp.float32),  # padded halo
                        pltpu.VMEM((R, C), jnp.float32)],            # dwconv rows
        compiler_params=_PARALLEL,
    )(x_rows, p["dw_w"], p["dw_b"].reshape(1, C),
      p["ln_g"].reshape(1, C), p["ln_b"].reshape(1, C),
      p["w1"], p["b1"].reshape(1, C4),
      p["w2"], p["b2"].reshape(1, C),
      p["layer_scale"].reshape(1, C))


def downsample(patches, p):
    N, T, R, C0 = patches.shape
    C1 = p["w"].shape[1]
    return pl.pallas_call(
        _downsample_kernel,
        out_shape=jax.ShapeDtypeStruct((N, R, C1), jnp.float32),
        grid=(N,),
        in_specs=[pl.BlockSpec((1, T, R, C0), lambda n: (n, 0, 0, 0)),
                  _full((1, C0)), _full((1, C0)),
                  _full((T, C0, C1)), _full((1, C1))],
        out_specs=pl.BlockSpec((1, R, C1), lambda n: (n, 0, 0)),
        compiler_params=_PARALLEL,
    )(patches, p["ln_g"].reshape(1, C0), p["ln_b"].reshape(1, C0),
      p["w"].reshape(T, C0, C1), p["b"].reshape(1, C1))


def head(x_rows, params):
    N, R, C = x_rows.shape
    lora = params["lora"]
    O = lora["wt"].shape[1]
    r = lora["at"].shape[1]
    # Single MXU operand [W^T | A^T] plus recombination matrix [[I],[scaling*B^T]].
    # Built from frozen params -> constant-folded under jit; identity half is exact,
    # so out = x@W^T + b + scaling*(x@A^T)@B^T matches the torch LoRALinear forward.
    wcat = jnp.concatenate([lora["wt"], lora["at"]], axis=1)            # (C, O+r)
    comb = jnp.concatenate([jnp.eye(O, dtype=jnp.float32),
                            lora["scaling"] * lora["bt"]], axis=0)      # (O+r, O)
    return pl.pallas_call(
        _head_kernel,
        out_shape=jax.ShapeDtypeStruct((N, O), jnp.float32),
        grid=(1,),
        in_specs=[pl.BlockSpec((N, R, C), lambda i: (0, 0, 0)),
                  _full((1, C)), _full((1, C)),
                  _full((C, O + r)), _full((O + r, O)), _full((1, O))],
        out_specs=pl.BlockSpec((N, O), lambda i: (0, 0)),
        compiler_params=_SINGLE,
    )(x_rows, params["pre_ln_g"].reshape(1, C), params["pre_ln_b"].reshape(1, C),
      wcat, comb, lora["b"].reshape(1, O))


# --------------------------------------------------------------------------
# Plain-JAX glue (cheap reshapes only)
# --------------------------------------------------------------------------
def patchify_rows(x_nhwc, k):
    """[N,H,W,C] -> [N, Ho*Wo, k*k*C]; each row = flattened (kh, kw, cin) patch."""
    # TODO(synk): at real ConvNeXt widths, express this gather via the consuming
    # kernel's BlockSpec index_map instead of materializing the im2col tensor.
    N, H, W, C = x_nhwc.shape
    Ho, Wo = H // k, W // k
    p = x_nhwc.reshape(N, Ho, k, Wo, k, C).transpose(0, 1, 3, 2, 4, 5)
    return p.reshape(N, Ho * Wo, k * k * C), (Ho, Wo)


def patchify_taps(x_nhwc, k):
    """[N,H,W,C] -> [N, k*k, Ho*Wo, C]; tap-major layout for per-tap kernels."""
    N, H, W, C = x_nhwc.shape
    Ho, Wo = H // k, W // k
    p = x_nhwc.reshape(N, Ho, k, Wo, k, C).transpose(0, 2, 4, 1, 3, 5)
    return p.reshape(N, k * k, Ho * Wo, C), (Ho, Wo)


def forward(x_nchw, params):
    x = jnp.transpose(x_nchw, (0, 2, 3, 1)).astype(jnp.float32)      # NCHW -> NHWC
    N = x.shape[0]

    # features_extractor: stem conv(4x4/s4) + LayerNorm2d (one fused kernel)
    p, (Ho, Wo) = patchify_rows(x, 4)
    x = stem(p, params["stem"])                                      # [N, Ho*Wo, 16]

    # stage 1 (one fused kernel per CNBlock)
    x = cnblock(x, params["block1"], H=Ho, W=Wo)

    # downsample: LayerNorm2d + conv(2x2/s2) (one fused kernel)
    C = x.shape[-1]
    p, (Ho, Wo) = patchify_taps(x.reshape(N, Ho, Wo, C), 2)
    x = downsample(p, params["down"])                                # [N, Ho*Wo, 32]

    # stage 2
    x = cnblock(x, params["block2"], H=Ho, W=Wo)

    # avgpool + pre_classifier LN + classifier_lora (one fused kernel)
    return head(x, params)


# --------------------------------------------------------------------------
# Deterministic synthetic parameter init (shapes follow the module's __init__)
# --------------------------------------------------------------------------
def init_params(key, num_classes=10, lora_r=8, lora_alpha=16.0):
    c0, c1 = 16, 32
    keys = iter(jax.random.split(key, 64))

    def nrm(shape, scale=0.05):
        return (scale * jax.random.normal(next(keys), shape)).astype(jnp.float32)

    def block_params(c):
        return dict(
            dw_w=nrm((49, c)), dw_b=nrm((c,)),
            ln_g=jnp.ones((c,), jnp.float32), ln_b=jnp.zeros((c,), jnp.float32),
            w1=nrm((c, 4 * c)), b1=nrm((4 * c,)),
            w2=nrm((4 * c, c)), b2=nrm((c,)),
            layer_scale=jnp.full((c,), 1e-6, jnp.float32),  # ConvNeXt layer-scale init
        )

    return dict(
        stem=dict(w=nrm((4 * 4 * 3, c0)), b=nrm((c0,)),
                  ln_g=jnp.ones((c0,), jnp.float32),
                  ln_b=jnp.zeros((c0,), jnp.float32)),
        block1=block_params(c0),
        down=dict(ln_g=jnp.ones((c0,), jnp.float32),
                  ln_b=jnp.zeros((c0,), jnp.float32),
                  w=nrm((2 * 2 * c0, c1)), b=nrm((c1,))),
        block2=block_params(c1),
        pre_ln_g=jnp.ones((c1,), jnp.float32),
        pre_ln_b=jnp.zeros((c1,), jnp.float32),
        lora=dict(
            wt=nrm((c1, num_classes)),                 # W^T  (weight: [out,in] in torch)
            b=jnp.zeros((num_classes,), jnp.float32),  # bias zeros (as in __init__)
            at=nrm((c1, lora_r), 0.01),                # A^T  (A: randn*0.01 in torch)
            bt=nrm((lora_r, num_classes)),             # B^T  (nonzero to exercise path)
            scaling=float(lora_alpha) / float(lora_r),
        ),
    )


if __name__ == "__main__":
    key = jax.random.PRNGKey(0)
    params = init_params(key, num_classes=10, lora_r=8, lora_alpha=16.0)
    x = jax.random.normal(jax.random.fold_in(key, 123), (2, 3, 16, 16), dtype=jnp.float32)

    logits = jax.jit(lambda a: forward(a, params))(x)
    logits = jax.block_until_ready(logits)

    assert logits.shape == (2, 10), logits.shape
    assert bool(jnp.all(jnp.isfinite(logits)))
    print("KERNEL_OK")
</pallas_src>

<mosaic_0001>
module attributes {stable_mosaic.version = 11 : i64} {
  func.func @_downsample_kernel(%arg0: i32, %arg1: memref<1x4x4x16xf32, #tpu.memory_space<vmem>>, %arg2: memref<1x16xf32, #tpu.memory_space<vmem>>, %arg3: memref<1x16xf32, #tpu.memory_space<vmem>>, %arg4: memref<4x16x32xf32, #tpu.memory_space<vmem>>, %arg5: memref<1x32xf32, #tpu.memory_space<vmem>>, %arg6: memref<1x4x32xf32, #tpu.memory_space<vmem>>) attributes {dimension_semantics = [#tpu.dimension_semantics<parallel>], iteration_bounds = array<i64: 2>, scalar_prefetch = 0 : i64, scratch_operands = 0 : i64, tpu.core_type = #tpu.core_type<tc>, window_params = [{transform_indices = @transform_0, window_bounds = array<i64: 1, 4, 4, 16>}, {pipeline_mode = #tpu.pipeline_mode<synchronous>, transform_indices = @transform_1, window_bounds = array<i64: 1, 16>}, {pipeline_mode = #tpu.pipeline_mode<synchronous>, transform_indices = @transform_2, window_bounds = array<i64: 1, 16>}, {pipeline_mode = #tpu.pipeline_mode<synchronous>, transform_indices = @transform_3, window_bounds = array<i64: 4, 16, 32>}, {pipeline_mode = #tpu.pipeline_mode<synchronous>, transform_indices = @transform_4, window_bounds = array<i64: 1, 32>}, {transform_indices = @transform_5, window_bounds = array<i64: 1, 4, 32>}]} {
    %c0 = arith.constant 0 : index
    %c0_0 = arith.constant 0 : index
    %c0_1 = arith.constant 0 : index
    %c0_2 = arith.constant 0 : index
    %0 = vector.load %arg1[%c0, %c0_0, %c0_1, %c0_2] : memref<1x4x4x16xf32, #tpu.memory_space<vmem>>, vector<1x1x4x16xf32>
    %1 = vector.shape_cast %0 : vector<1x1x4x16xf32> to vector<4x16xf32>
    %c0_3 = arith.constant 0 : index
    %c0_4 = arith.constant 0 : index
    %2 = vector.load %arg2[%c0_3, %c0_4] : memref<1x16xf32, #tpu.memory_space<vmem>>, vector<1x16xf32>
    %c0_5 = arith.constant 0 : index
    %c0_6 = arith.constant 0 : index
    %3 = vector.load %arg3[%c0_5, %c0_6] : memref<1x16xf32, #tpu.memory_space<vmem>>, vector<1x16xf32>
    %cst = arith.constant dense<0.000000e+00> : vector<4xf32>
    %4 = vector.multi_reduction <add>, %1, %cst [1] : vector<4x16xf32> to vector<4xf32>
    %5 = vector.shape_cast %4 : vector<4xf32> to vector<4x1xf32>
    %cst_7 = arith.constant 1.600000e+01 : f32
    %6 = vector.broadcast %cst_7 : f32 to vector<4x1xf32>
    %7 = arith.divf %5, %6 : vector<4x1xf32>
    %8 = vector.broadcast %7 : vector<4x1xf32> to vector<4x16xf32>
    %9 = arith.subf %1, %8 : vector<4x16xf32>
    %10 = arith.mulf %9, %9 : vector<4x16xf32>
    %cst_8 = arith.constant dense<0.000000e+00> : vector<4xf32>
    %11 = vector.multi_reduction <add>, %10, %cst_8 [1] : vector<4x16xf32> to vector<4xf32>
    %12 = vector.shape_cast %11 : vector<4xf32> to vector<4x1xf32>
    %cst_9 = arith.constant 1.600000e+01 : f32
    %13 = vector.broadcast %cst_9 : f32 to vector<4x1xf32>
    %14 = arith.divf %12, %13 : vector<4x1xf32>
    %cst_10 = arith.constant 9.99999997E-7 : f32
    %15 = vector.broadcast %cst_10 : f32 to vector<4x1xf32>
    %16 = arith.addf %14, %15 : vector<4x1xf32>
    %17 = math.rsqrt %16 : vector<4x1xf32>
    %18 = vector.broadcast %17 : vector<4x1xf32> to vector<4x16xf32>
    %19 = arith.mulf %9, %18 : vector<4x16xf32>
    %20 = vector.broadcast %2 : vector<1x16xf32> to vector<4x16xf32>
    %21 = arith.mulf %19, %20 : vector<4x16xf32>
    %22 = vector.broadcast %3 : vector<1x16xf32> to vector<4x16xf32>
    %23 = arith.addf %21, %22 : vector<4x16xf32>
    %c0_11 = arith.constant 0 : index
    %c0_12 = arith.constant 0 : index
    %c0_13 = arith.constant 0 : index
    %24 = vector.load %arg4[%c0_11, %c0_12, %c0_13] : memref<4x16x32xf32, #tpu.memory_space<vmem>>, vector<1x16x32xf32>
    %25 = vector.shape_cast %24 : vector<1x16x32xf32> to vector<16x32xf32>
    %cst_14 = arith.constant dense<0.000000e+00> : vector<4x32xf32>
    %26 = tpu.matmul %23, %25, %cst_14 {dimension_numbers = #tpu.dot_dimension_numbers<[1], [0], [0], [1], [0, 0, 1, 1], [], []>} : vector<4x16xf32>, vector<16x32xf32>, vector<4x32xf32> -> vector<4x32xf32>
    %c0_15 = arith.constant 0 : index
    %c1 = arith.constant 1 : index
    %c0_16 = arith.constant 0 : index
    %c0_17 = arith.constant 0 : index
    %27 = vector.load %arg1[%c0_15, %c1, %c0_16, %c0_17] : memref<1x4x4x16xf32, #tpu.memory_space<vmem>>, vector<1x1x4x16xf32>
    %28 = vector.shape_cast %27 : vector<1x1x4x16xf32> to vector<4x16xf32>
    %c0_18 = arith.constant 0 : index
    %c0_19 = arith.constant 0 : index
    %29 = vector.load %arg2[%c0_18, %c0_19] : memref<1x16xf32, #tpu.memory_space<vmem>>, vector<1x16xf32>
    %c0_20 = arith.constant 0 : index
    %c0_21 = arith.constant 0 : index
    %30 = vector.load %arg3[%c0_20, %c0_21] : memref<1x16xf32, #tpu.memory_space<vmem>>, vector<1x16xf32>
    %cst_22 = arith.constant dense<0.000000e+00> : vector<4xf32>
    %31 = vector.multi_reduction <add>, %28, %cst_22 [1] : vector<4x16xf32> to vector<4xf32>
    %32 = vector.shape_cast %31 : vector<4xf32> to vector<4x1xf32>
    %cst_23 = arith.constant 1.600000e+01 : f32
    %33 = vector.broadcast %cst_23 : f32 to vector<4x1xf32>
    %34 = arith.divf %32, %33 : vector<4x1xf32>
    %35 = vector.broadcast %34 : vector<4x1xf32> to vector<4x16xf32>
    %36 = arith.subf %28, %35 : vector<4x16xf32>
    %37 = arith.mulf %36, %36 : vector<4x16xf32>
    %cst_24 = arith.constant dense<0.000000e+00> : vector<4xf32>
    %38 = vector.multi_reduction <add>, %37, %cst_24 [1] : vector<4x16xf32> to vector<4xf32>
    %39 = vector.shape_cast %38 : vector<4xf32> to vector<4x1xf32>
    %cst_25 = arith.constant 1.600000e+01 : f32
    %40 = vector.broadcast %cst_25 : f32 to vector<4x1xf32>
    %41 = arith.divf %39, %40 : vector<4x1xf32>
    %cst_26 = arith.constant 9.99999997E-7 : f32
    %42 = vector.broadcast %cst_26 : f32 to vector<4x1xf32>
    %43 = arith.addf %41, %42 : vector<4x1xf32>
    %44 = math.rsqrt %43 : vector<4x1xf32>
    %45 = vector.broadcast %44 : vector<4x1xf32> to vector<4x16xf32>
    %46 = arith.mulf %36, %45 : vector<4x16xf32>
    %47 = vector.broadcast %29 : vector<1x16xf32> to vector<4x16xf32>
    %48 = arith.mulf %46, %47 : vector<4x16xf32>
    %49 = vector.broadcast %30 : vector<1x16xf32> to vector<4x16xf32>
    %50 = arith.addf %48, %49 : vector<4x16xf32>
    %c1_27 = arith.constant 1 : index
    %c0_28 = arith.constant 0 : index
    %c0_29 = arith.constant 0 : index
    %51 = vector.load %arg4[%c1_27, %c0_28, %c0_29] : memref<4x16x32xf32, #tpu.memory_space<vmem>>, vector<1x16x32xf32>
    %52 = vector.shape_cast %51 : vector<1x16x32xf32> to vector<16x32xf32>
    %cst_30 = arith.constant dense<0.000000e+00> : vector<4x32xf32>
    %53 = tpu.matmul %50, %52, %cst_30 {dimension_numbers = #tpu.dot_dimension_numbers<[1], [0], [0], [1], [0, 0, 1, 1], [], []>} : vector<4x16xf32>, vector<16x32xf32>, vector<4x32xf32> -> vector<4x32xf32>
    %54 = arith.addf %26, %53 : vector<4x32xf32>
    %c0_31 = arith.constant 0 : index
    %c2 = arith.constant 2 : index
    %c0_32 = arith.constant 0 : index
    %c0_33 = arith.constant 0 : index
    %55 = vector.load %arg1[%c0_31, %c2, %c0_32, %c0_33] : memref<1x4x4x16xf32, #tpu.memory_space<vmem>>, vector<1x1x4x16xf32>
    %56 = vector.shape_cast %55 : vector<1x1x4x16xf32> to vector<4x16xf32>
    %c0_34 = arith.constant 0 : index
    %c0_35 = arith.constant 0 : index
    %57 = vector.load %arg2[%c0_34, %c0_35] : memref<1x16xf32, #tpu.memory_space<vmem>>, vector<1x16xf32>
    %c0_36 = arith.constant 0 : index
    %c0_37 = arith.constant 0 : index
    %58 = vector.load %arg3[%c0_36, %c0_37] : memref<1x16xf32, #tpu.memory_space<vmem>>, vector<1x16xf32>
    %cst_38 = arith.constant dense<0.000000e+00> : vector<4xf32>
    %59 = vector.multi_reduction <add>, %56, %cst_38 [1] : vector<4x16xf32> to vector<4xf32>
    %60 = vector.shape_cast %59 : vector<4xf32> to vector<4x1xf32>
    %cst_39 = arith.constant 1.600000e+01 : f32
    %61 = vector.broadcast %cst_39 : f32 to vector<4x1xf32>
    %62 = arith.divf %60, %61 : vector<4x1xf32>
    %63 = vector.broadcast %62 : vector<4x1xf32> to vector<4x16xf32>
    %64 = arith.subf %56, %63 : vector<4x16xf32>
    %65 = arith.mulf %64, %64 : vector<4x16xf32>
    %cst_40 = arith.constant dense<0.000000e+00> : vector<4xf32>
    %66 = vector.multi_reduction <add>, %65, %cst_40 [1] : vector<4x16xf32> to vector<4xf32>
    %67 = vector.shape_cast %66 : vector<4xf32> to vector<4x1xf32>
    %cst_41 = arith.constant 1.600000e+01 : f32
    %68 = vector.broadcast %cst_41 : f32 to vector<4x1xf32>
    %69 = arith.divf %67, %68 : vector<4x1xf32>
    %cst_42 = arith.constant 9.99999997E-7 : f32
    %70 = vector.broadcast %cst_42 : f32 to vector<4x1xf32>
    %71 = arith.addf %69, %70 : vector<4x1xf32>
    %72 = math.rsqrt %71 : vector<4x1xf32>
    %73 = vector.broadcast %72 : vector<4x1xf32> to vector<4x16xf32>
    %74 = arith.mulf %64, %73 : vector<4x16xf32>
    %75 = vector.broadcast %57 : vector<1x16xf32> to vector<4x16xf32>
    %76 = arith.mulf %74, %75 : vector<4x16xf32>
    %77 = vector.broadcast %58 : vector<1x16xf32> to vector<4x16xf32>
    %78 = arith.addf %76, %77 : vector<4x16xf32>
    %c2_43 = arith.constant 2 : index
    %c0_44 = arith.constant 0 : index
    %c0_45 = arith.constant 0 : index
    %79 = vector.load %arg4[%c2_43, %c0_44, %c0_45] : memref<4x16x32xf32, #tpu.memory_space<vmem>>, vector<1x16x32xf32>
    %80 = vector.shape_cast %79 : vector<1x16x32xf32> to vector<16x32xf32>
    %cst_46 = arith.constant dense<0.000000e+00> : vector<4x32xf32>
    %81 = tpu.matmul %78, %80, %cst_46 {dimension_numbers = #tpu.dot_dimension_numbers<[1], [0], [0], [1], [0, 0, 1, 1], [], []>} : vector<4x16xf32>, vector<16x32xf32>, vector<4x32xf32> -> vector<4x32xf32>
    %82 = arith.addf %54, %81 : vector<4x32xf32>
    %c0_47 = arith.constant 0 : index
    %c3 = arith.constant 3 : index
    %c0_48 = arith.constant 0 : index
    %c0_49 = arith.constant 0 : index
    %83 = vector.load %arg1[%c0_47, %c3, %c0_48, %c0_49] : memref<1x4x4x16xf32, #tpu.memory_space<vmem>>, vector<1x1x4x16xf32>
    %84 = vector.shape_cast %83 : vector<1x1x4x16xf32> to vector<4x16xf32>
    %c0_50 = arith.constant 0 : index
    %c0_51 = arith.constant 0 : index
    %85 = vector.load %arg2[%c0_50, %c0_51] : memref<1x16xf32, #tpu.memory_space<vmem>>, vector<1x16xf32>
    %c0_52 = arith.constant 0 : index
    %c0_53 = arith.constant 0 : index
    %86 = vector.load %arg3[%c0_52, %c0_53] : memref<1x16xf32, #tpu.memory_space<vmem>>, vector<1x16xf32>
    %cst_54 = arith.constant dense<0.000000e+00> : vector<4xf32>
    %87 = vector.multi_reduction <add>, %84, %cst_54 [1] : vector<4x16xf32> to vector<4xf32>
    %88 = vector.shape_cast %87 : vector<4xf32> to vector<4x1xf32>
    %cst_55 = arith.constant 1.600000e+01 : f32
    %89 = vector.broadcast %cst_55 : f32 to vector<4x1xf32>
    %90 = arith.divf %88, %89 : vector<4x1xf32>
    %91 = vector.broadcast %90 : vector<4x1xf32> to vector<4x16xf32>
    %92 = arith.subf %84, %91 : vector<4x16xf32>
    %93 = arith.mulf %92, %92 : vector<4x16xf32>
    %cst_56 = arith.constant dense<0.000000e+00> : vector<4xf32>
    %94 = vector.multi_reduction <add>, %93, %cst_56 [1] : vector<4x16xf32> to vector<4xf32>
    %95 = vector.shape_cast %94 : vector<4xf32> to vector<4x1xf32>
    %cst_57 = arith.constant 1.600000e+01 : f32
    %96 = vector.broadcast %cst_57 : f32 to vector<4x1xf32>
    %97 = arith.divf %95, %96 : vector<4x1xf32>
    %cst_58 = arith.constant 9.99999997E-7 : f32
    %98 = vector.broadcast %cst_58 : f32 to vector<4x1xf32>
    %99 = arith.addf %97, %98 : vector<4x1xf32>
    %100 = math.rsqrt %99 : vector<4x1xf32>
    %101 = vector.broadcast %100 : vector<4x1xf32> to vector<4x16xf32>
    %102 = arith.mulf %92, %101 : vector<4x16xf32>
    %103 = vector.broadcast %85 : vector<1x16xf32> to vector<4x16xf32>
    %104 = arith.mulf %102, %103 : vector<4x16xf32>
    %105 = vector.broadcast %86 : vector<1x16xf32> to vector<4x16xf32>
    %106 = arith.addf %104, %105 : vector<4x16xf32>
    %c3_59 = arith.constant 3 : index
    %c0_60 = arith.constant 0 : index
    %c0_61 = arith.constant 0 : index
    %107 = vector.load %arg4[%c3_59, %c0_60, %c0_61] : memref<4x16x32xf32, #tpu.memory_space<vmem>>, vector<1x16x32xf32>
    %108 = vector.shape_cast %107 : vector<1x16x32xf32> to vector<16x32xf32>
    %cst_62 = arith.constant dense<0.000000e+00> : vector<4x32xf32>
    %109 = tpu.matmul %106, %108, %cst_62 {dimension_numbers = #tpu.dot_dimension_numbers<[1], [0], [0], [1], [0, 0, 1, 1], [], []>} : vector<4x16xf32>, vector<16x32xf32>, vector<4x32xf32> -> vector<4x32xf32>
    %110 = arith.addf %82, %109 : vector<4x32xf32>
    %c0_63 = arith.constant 0 : index
    %c0_64 = arith.constant 0 : index
    %111 = vector.load %arg5[%c0_63, %c0_64] : memref<1x32xf32, #tpu.memory_space<vmem>>, vector<1x32xf32>
    %112 = vector.broadcast %111 : vector<1x32xf32> to vector<4x32xf32>
    %113 = arith.addf %110, %112 : vector<4x32xf32>
    %c0_65 = arith.constant 0 : index
    %c0_66 = arith.constant 0 : index
    %c0_67 = arith.constant 0 : index
    %114 = vector.load %arg6[%c0_65, %c0_66, %c0_67] : memref<1x4x32xf32, #tpu.memory_space<vmem>>, vector<1x4x32xf32>
    %115 = vector.shape_cast %114 : vector<1x4x32xf32> to vector<4x32xf32>
    %116 = vector.shape_cast %113 : vector<4x32xf32> to vector<1x4x32xf32>
    tpu.vector_store %arg6[%c0_65, %c0_66, %c0_67], %116 {strides = array<i32>} : memref<1x4x32xf32, #tpu.memory_space<vmem>>, vector<1x4x32xf32>,
    return
  }
  func.func @transform_0(%arg0: i32) -> (i32, i32, i32, i32) {
    %c0_i32 = arith.constant 0 : i32
    %c0_i32_0 = arith.constant 0 : i32
    %c0_i32_1 = arith.constant 0 : i32
    %c0_i32_2 = arith.constant 0 : i32
    return %arg0, %c0_i32, %c0_i32_0, %c0_i32_1 : i32, i32, i32, i32
  }
  func.func @transform_1(%arg0: i32) -> (i32, i32) {
    %c0_i32 = arith.constant 0 : i32
    %c0_i32_0 = arith.constant 0 : i32
    %c0_i32_1 = arith.constant 0 : i32
    return %c0_i32, %c0_i32_0 : i32, i32
  }
  func.func @transform_2(%arg0: i32) -> (i32, i32) {
    %c0_i32 = arith.constant 0 : i32
    %c0_i32_0 = arith.constant 0 : i32
    %c0_i32_1 = arith.constant 0 : i32
    return %c0_i32, %c0_i32_0 : i32, i32
  }
  func.func @transform_3(%arg0: i32) -> (i32, i32, i32) {
    %c0_i32 = arith.constant 0 : i32
    %c0_i32_0 = arith.constant 0 : i32
    %c0_i32_1 = arith.constant 0 : i32
    %c0_i32_2 = arith.constant 0 : i32
    return %c0_i32, %c0_i32_0, %c0_i32_1 : i32, i32, i32
  }
  func.func @transform_4(%arg0: i32) -> (i32, i32) {
    %c0_i32 = arith.constant 0 : i32
    %c0_i32_0 = arith.constant 0 : i32
    %c0_i32_1 = arith.constant 0 : i32
    return %c0_i32, %c0_i32_0 : i32, i32
  }
  func.func @transform_5(%arg0: i32) -> (i32, i32, i32) {
    %c0_i32 = arith.constant 0 : i32
    %c0_i32_0 = arith.constant 0 : i32
    %c0_i32_1 = arith.constant 0 : i32
    return %arg0, %c0_i32, %c0_i32_0 : i32, i32, i32
  }
}

module attributes {stable_mosaic.version = 11 : i64} {
  func.func @_stem_kernel(%arg0: i32, %arg1: memref<1x16x48xf32, #tpu.memory_space<vmem>>, %arg2: memref<48x16xf32, #tpu.memory_space<vmem>>, %arg3: memref<1x16xf32, #tpu.memory_space<vmem>>, %arg4: memref<1x16xf32, #tpu.memory_space<vmem>>, %arg5: memref<1x16xf32, #tpu.memory_space<vmem>>, %arg6: memref<1x16x16xf32, #tpu.memory_space<vmem>>) attributes {dimension_semantics = [#tpu.dimension_semantics<parallel>], iteration_bounds = array<i64: 2>, scalar_prefetch = 0 : i64, scratch_operands = 0 : i64, tpu.core_type = #tpu.core_type<tc>, window_params = [{transform_indices = @transform_0, window_bounds = array<i64: 1, 16, 48>}, {pipeline_mode = #tpu.pipeline_mode<synchronous>, transform_indices = @transform_1, window_bounds = array<i64: 48, 16>}, {pipeline_mode = #tpu.pipeline_mode<synchronous>, transform_indices = @transform_2, window_bounds = array<i64: 1, 16>}, {pipeline_mode = #tpu.pipeline_mode<synchronous>, transform_indices = @transform_3, window_bounds = array<i64: 1, 16>}, {pipeline_mode = #tpu.pipeline_mode<synchronous>, transform_indices = @transform_4, window_bounds = array<i64: 1, 16>}, {transform_indices = @transform_5, window_bounds = array<i64: 1, 16, 16>}]} {
    %c0 = arith.constant 0 : index
    %c0_0 = arith.constant 0 : index
    %c0_1 = arith.constant 0 : index
    %0 = vector.load %arg1[%c0, %c0_0, %c0_1] : memref<1x16x48xf32, #tpu.memory_space<vmem>>, vector<1x16x48xf32>
    %1 = vector.shape_cast %0 : vector<1x16x48xf32> to vector<16x48xf32>
    %c0_2 = arith.constant 0 : index
    %c0_3 = arith.constant 0 : index
    %2 = vector.load %arg2[%c0_2, %c0_3] : memref<48x16xf32, #tpu.memory_space<vmem>>, vector<48x16xf32>
    %cst = arith.constant dense<0.000000e+00> : vector<16x16xf32>
    %3 = tpu.matmul %1, %2, %cst {dimension_numbers = #tpu.dot_dimension_numbers<[1], [0], [0], [1], [0, 0, 1, 1], [], []>} : vector<16x48xf32>, vector<48x16xf32>, vector<16x16xf32> -> vector<16x16xf32>
    %c0_4 = arith.constant 0 : index
    %c0_5 = arith.constant 0 : index
    %4 = vector.load %arg3[%c0_4, %c0_5] : memref<1x16xf32, #tpu.memory_space<vmem>>, vector<1x16xf32>
    %5 = vector.broadcast %4 : vector<1x16xf32> to vector<16x16xf32>
    %6 = arith.addf %3, %5 : vector<16x16xf32>
    %c0_6 = arith.constant 0 : index
    %c0_7 = arith.constant 0 : index
    %7 = vector.load %arg4[%c0_6, %c0_7] : memref<1x16xf32, #tpu.memory_space<vmem>>, vector<1x16xf32>
    %c0_8 = arith.constant 0 : index
    %c0_9 = arith.constant 0 : index
    %8 = vector.load %arg5[%c0_8, %c0_9] : memref<1x16xf32, #tpu.memory_space<vmem>>, vector<1x16xf32>
    %cst_10 = arith.constant dense<0.000000e+00> : vector<16xf32>
    %9 = vector.multi_reduction <add>, %6, %cst_10 [1] : vector<16x16xf32> to vector<16xf32>
    %10 = vector.shape_cast %9 : vector<16xf32> to vector<16x1xf32>
    %cst_11 = arith.constant 1.600000e+01 : f32
    %11 = vector.broadcast %cst_11 : f32 to vector<16x1xf32>
    %12 = arith.divf %10, %11 : vector<16x1xf32>
    %13 = vector.broadcast %12 : vector<16x1xf32> to vector<16x16xf32>
    %14 = arith.subf %6, %13 : vector<16x16xf32>
    %15 = arith.mulf %14, %14 : vector<16x16xf32>
    %cst_12 = arith.constant dense<0.000000e+00> : vector<16xf32>
    %16 = vector.multi_reduction <add>, %15, %cst_12 [1] : vector<16x16xf32> to vector<16xf32>
    %17 = vector.shape_cast %16 : vector<16xf32> to vector<16x1xf32>
    %cst_13 = arith.constant 1.600000e+01 : f32
    %18 = vector.broadcast %cst_13 : f32 to vector<16x1xf32>
    %19 = arith.divf %17, %18 : vector<16x1xf32>
    %cst_14 = arith.constant 9.99999997E-7 : f32
    %20 = vector.broadcast %cst_14 : f32 to vector<16x1xf32>
    %21 = arith.addf %19, %20 : vector<16x1xf32>
    %22 = math.rsqrt %21 : vector<16x1xf32>
    %23 = vector.broadcast %22 : vector<16x1xf32> to vector<16x16xf32>
    %24 = arith.mulf %14, %23 : vector<16x16xf32>
    %25 = vector.broadcast %7 : vector<1x16xf32> to vector<16x16xf32>
    %26 = arith.mulf %24, %25 : vector<16x16xf32>
    %27 = vector.broadcast %8 : vector<1x16xf32> to vector<16x16xf32>
    %28 = arith.addf %26, %27 : vector<16x16xf32>
    %c0_15 = arith.constant 0 : index
    %c0_16 = arith.constant 0 : index
    %c0_17 = arith.constant 0 : index
    %29 = vector.load %arg6[%c0_15, %c0_16, %c0_17] : memref<1x16x16xf32, #tpu.memory_space<vmem>>, vector<1x16x16xf32>
    %30 = vector.shape_cast %29 : vector<1x16x16xf32> to vector<16x16xf32>
    %31 = vector.shape_cast %28 : vector<16x16xf32> to vector<1x16x16xf32>
    tpu.vector_store %arg6[%c0_15, %c0_16, %c0_17], %31 {strides = array<i32>} : memref<1x16x16xf32, #tpu.memory_space<vmem>>, vector<1x16x16xf32>,
    return
  }
  func.func @transform_0(%arg0: i32) -> (i32, i32, i32) {
    %c0_i32 = arith.constant 0 : i32
    %c0_i32_0 = arith.constant 0 : i32
    %c0_i32_1 = arith.constant 0 : i32
    return %arg0, %c0_i32, %c0_i32_0 : i32, i32, i32
  }
  func.func @transform_1(%arg0: i32) -> (i32, i32) {
    %c0_i32 = arith.constant 0 : i32
    %c0_i32_0 = arith.constant 0 : i32
    %c0_i32_1 = arith.constant 0 : i32
    return %c0_i32, %c0_i32_0 : i32, i32
  }
  func.func @transform_2(%arg0: i32) -> (i32, i32) {
    %c0_i32 = arith.constant 0 : i32
    %c0_i32_0 = arith.constant 0 : i32
    %c0_i32_1 = arith.constant 0 : i32
    return %c0_i32, %c0_i32_0 : i32, i32
  }
  func.func @transform_3(%arg0: i32) -> (i32, i32) {
    %c0_i32 = arith.constant 0 : i32
    %c0_i32_0 = arith.constant 0 : i32
    %c0_i32_1 = arith.constant 0 : i32
    return %c0_i32, %c0_i32_0 : i32, i32
  }
  func.func @transform_4(%arg0: i32) -> (i32, i32) {
    %c0_i32 = arith.constant 0 : i32
    %c0_i32_0 = arith.constant 0 : i32
    %c0_i32_1 = arith.constant 0 : i32
    return %c0_i32, %c0_i32_0 : i32, i32
  }
  func.func @transform_5(%arg0: i32) -> (i32, i32, i32) {
    %c0_i32 = arith.constant 0 : i32
    %c0_i32_0 = arith.constant 0 : i32
    %c0_i32_1 = arith.constant 0 : i32
    return %arg0, %c0_i32, %c0_i32_0 : i32, i32, i32
  }
}

module attributes {stable_mosaic.version = 11 : i64} {
  func.func @_cnblock_kernel(%arg0: i32, %arg1: memref<1x16x16xf32, #tpu.memory_space<vmem>>, %arg2: memref<49x16xf32, #tpu.memory_space<vmem>>, %arg3: memref<1x16xf32, #tpu.memory_space<vmem>>, %arg4: memref<1x16xf32, #tpu.memory_space<vmem>>, %arg5: memref<1x16xf32, #tpu.memory_space<vmem>>, %arg6: memref<16x64xf32, #tpu.memory_space<vmem>>, %arg7: memref<1x64xf32, #tpu.memory_space<vmem>>, %arg8: memref<64x16xf32, #tpu.memory_space<vmem>>, %arg9: memref<1x16xf32, #tpu.memory_space<vmem>>, %arg10: memref<1x16xf32, #tpu.memory_space<vmem>>, %arg11: memref<1x16x16xf32, #tpu.memory_space<vmem>>, %arg12: memref<10x10x16xf32, #tpu.memory_space<vmem>>, %arg13: memref<16x16xf32, #tpu.memory_space<vmem>>) attributes {dimension_semantics = [#tpu.dimension_semantics<parallel>], iteration_bounds = array<i64: 2>, scalar_prefetch = 0 : i64, scratch_operands = 2 : i64, tpu.core_type = #tpu.core_type<tc>, window_params = [{transform_indices = @transform_0, window_bounds = array<i64: 1, 16, 16>}, {pipeline_mode = #tpu.pipeline_mode<synchronous>, transform_indices = @transform_1, window_bounds = array<i64: 49, 16>}, {pipeline_mode = #tpu.pipeline_mode<synchronous>, transform_indices = @transform_2, window_bounds = array<i64: 1, 16>}, {pipeline_mode = #tpu.pipeline_mode<synchronous>, transform_indices = @transform_3, window_bounds = array<i64: 1, 16>}, {pipeline_mode = #tpu.pipeline_mode<synchronous>, transform_indices = @transform_4, window_bounds = array<i64: 1, 16>}, {pipeline_mode = #tpu.pipeline_mode<synchronous>, transform_indices = @transform_5, window_bounds = array<i64: 16, 64>}, {pipeline_mode = #tpu.pipeline_mode<synchronous>, transform_indices = @transform_6, window_bounds = array<i64: 1, 64>}, {pipeline_mode = #tpu.pipeline_mode<synchronous>, transform_indices = @transform_7, window_bounds = array<i64: 64, 16>}, {pipeline_mode = #tpu.pipeline_mode<synchronous>, transform_indices = @transform_8, window_bounds = array<i64: 1, 16>}, {pipeline_mode = #tpu.pipeline_mode<synchronous>, transform_indices = @transform_9, window_bounds = array<i64: 1, 16>}, {transform_indices = @transform_10, window_bounds = array<i64: 1, 16, 16>}]} {
    %c0 = arith.constant 0 : index
    %c0_0 = arith.constant 0 : index
    %c0_1 = arith.constant 0 : index
    %0 = vector.load %arg1[%c0, %c0_0, %c0_1] : memref<1x16x16xf32, #tpu.memory_space<vmem>>, vector<1x16x16xf32>
    %1 = vector.shape_cast %0 : vector<1x16x16xf32> to vector<16x16xf32>
    %cst = arith.constant 0.000000e+00 : f32
    %2 = vector.broadcast %cst : f32 to vector<10x10x16xf32>
    %c0_2 = arith.constant 0 : index
    %c0_3 = arith.constant 0 : index
    %c0_4 = arith.constant 0 : index
    %3 = vector.load %arg12[%c0_2, %c0_3, %c0_4] : memref<10x10x16xf32, #tpu.memory_space<vmem>>, vector<10x10x16xf32>
    tpu.vector_store %arg12[%c0_2, %c0_3, %c0_4], %2 {strides = array<i32>} : memref<10x10x16xf32, #tpu.memory_space<vmem>>, vector<10x10x16xf32>,
    %4 = vector.extract_strided_slice %1 {offsets = [0, 0], sizes = [4, 16], strides = [1, 1]} : vector<16x16xf32> to vector<4x16xf32>
    %c3 = arith.constant 3 : index
    %c3_5 = arith.constant 3 : index
    %c0_6 = arith.constant 0 : index
    %5 = vector.load %arg12[%c3, %c3_5, %c0_6] : memref<10x10x16xf32, #tpu.memory_space<vmem>>, vector<1x4x16xf32>
    %6 = vector.shape_cast %5 : vector<1x4x16xf32> to vector<4x16xf32>
    %7 = vector.shape_cast %4 : vector<4x16xf32> to vector<1x4x16xf32>
    tpu.vector_store %arg12[%c3, %c3_5, %c0_6], %7 {strides = array<i32>} : memref<10x10x16xf32, #tpu.memory_space<vmem>>, vector<1x4x16xf32>,
    %8 = vector.extract_strided_slice %1 {offsets = [4, 0], sizes = [4, 16], strides = [1, 1]} : vector<16x16xf32> to vector<4x16xf32>
    %c4 = arith.constant 4 : index
    %c3_7 = arith.constant 3 : index
    %c0_8 = arith.constant 0 : index
    %9 = vector.load %arg12[%c4, %c3_7, %c0_8] : memref<10x10x16xf32, #tpu.memory_space<vmem>>, vector<1x4x16xf32>
    %10 = vector.shape_cast %9 : vector<1x4x16xf32> to vector<4x16xf32>
    %11 = vector.shape_cast %8 : vector<4x16xf32> to vector<1x4x16xf32>
    tpu.vector_store %arg12[%c4, %c3_7, %c0_8], %11 {strides = array<i32>} : memref<10x10x16xf32, #tpu.memory_space<vmem>>, vector<1x4x16xf32>,
    %12 = vector.extract_strided_slice %1 {offsets = [8, 0], sizes = [4, 16], strides = [1, 1]} : vector<16x16xf32> to vector<4x16xf32>
    %c5 = arith.constant 5 : index
    %c3_9 = arith.constant 3 : index
    %c0_10 = arith.constant 0 : index
    %13 = vector.load %arg12[%c5, %c3_9, %c0_10] : memref<10x10x16xf32, #tpu.memory_space<vmem>>, vector<1x4x16xf32>
    %14 = vector.shape_cast %13 : vector<1x4x16xf32> to vector<4x16xf32>
    %15 = vector.shape_cast %12 : vector<4x16xf32> to vector<1x4x16xf32>
    tpu.vector_store %arg12[%c5, %c3_9, %c0_10], %15 {strides = array<i32>} : memref<10x10x16xf32, #tpu.memory_space<vmem>>, vector<1x4x16xf32>,
    %16 = vector.extract_strided_slice %1 {offsets = [12, 0], sizes = [4, 16], strides = [1, 1]} : vector<16x16xf32> to vector<4x16xf32>
    %c6 = arith.constant 6 : index
    %c3_11 = arith.constant 3 : index
    %c0_12 = arith.constant 0 : index
    %17 = vector.load %arg12[%c6, %c3_11, %c0_12] : memref<10x10x16xf32, #tpu.memory_space<vmem>>, vector<1x4x16xf32>
    %18 = vector.shape_cast %17 : vector<1x4x16xf32> to vector<4x16xf32>
    %19 = vector.shape_cast %16 : vector<4x16xf32> to vector<1x4x16xf32>
    tpu.vector_store %arg12[%c6, %c3_11, %c0_12], %19 {strides = array<i32>} : memref<10x10x16xf32, #tpu.memory_space<vmem>>, vector<1x4x16xf32>,
    %c0_13 = arith.constant 0 : index
    %c0_14 = arith.constant 0 : index
    %20 = vector.load %arg2[%c0_13, %c0_14] : memref<49x16xf32, #tpu.memory_space<vmem>>, vector<49x16xf32>
    %cst_15 = arith.constant 0.000000e+00 : f32
    %21 = vector.broadcast %cst_15 : f32 to vector<4x16xf32>
    %c0_16 = arith.constant 0 : index
    %c0_17 = arith.constant 0 : index
    %c0_18 = arith.constant 0 : index
    %22 = vector.load %arg12[%c0_16, %c0_17, %c0_18] : memref<10x10x16xf32, #tpu.memory_space<vmem>>, vector<1x10x16xf32>
    %23 = vector.shape_cast %22 : vector<1x10x16xf32> to vector<10x16xf32>
    %24 = vector.extract_strided_slice %20 {offsets = [0, 0], sizes = [1, 16], strides = [1, 1]} : vector<49x16xf32> to vector<1x16xf32>
    %25 = vector.extract_strided_slice %23 {offsets = [0, 0], sizes = [4, 16], strides = [1, 1]} : vector<10x16xf32> to vector<4x16xf32>
    %26 = vector.broadcast %24 : vector<1x16xf32> to vector<4x16xf32>
    %27 = arith.mulf %25, %26 : vector<4x16xf32>
    %28 = arith.addf %21, %27 : vector<4x16xf32>
    %29 = vector.extract_strided_slice %20 {offsets = [1, 0], sizes = [1, 16], strides = [1, 1]} : vector<49x16xf32> to vector<1x16xf32>
    %30 = vector.extract_strided_slice %23 {offsets = [1, 0], sizes = [4, 16], strides = [1, 1]} : vector<10x16xf32> to vector<4x16xf32>
    %31 = vector.broadcast %29 : vector<1x16xf32> to vector<4x16xf32>
    %32 = arith.mulf %30, %31 : vector<4x16xf32>
    %33 = arith.addf %28, %32 : vector<4x16xf32>
    %34 = vector.extract_strided_slice %20 {offsets = [2, 0], sizes = [1, 16], strides = [1, 1]} : vector<49x16xf32> to vector<1x16xf32>
    %35 = vector.extract_strided_slice %23 {offsets = [2, 0], sizes = [4, 16], strides = [1, 1]} : vector<10x16xf32> to vector<4x16xf32>
    %36 = vector.broadcast %34 : vector<1x16xf32> to vector<4x16xf32>
    %37 = arith.mulf %35, %36 : vector<4x16xf32>
    %38 = arith.addf %33, %37 : vector<4x16xf32>
    %39 = vector.extract_strided_slice %20 {offsets = [3, 0], sizes = [1, 16], strides = [1, 1]} : vector<49x16xf32> to vector<1x16xf32>
    %40 = vector.extract_strided_slice %23 {offsets = [3, 0], sizes = [4, 16], strides = [1, 1]} : vector<10x16xf32> to vector<4x16xf32>
    %41 = vector.broadcast %39 : vector<1x16xf32> to vector<4x16xf32>
    %42 = arith.mulf %40, %41 : vector<4x16xf32>
    %43 = arith.addf %38, %42 : vector<4x16xf32>
    %44 = vector.extract_strided_slice %20 {offsets = [4, 0], sizes = [1, 16], strides = [1, 1]} : vector<49x16xf32> to vector<1x16xf32>
    %45 = vector.extract_strided_slice %23 {offsets = [4, 0], sizes = [4, 16], strides = [1, 1]} : vector<10x16xf32> to vector<4x16xf32>
    %46 = vector.broadcast %44 : vector<1x16xf32> to vector<4x16xf32>
    %47 = arith.mulf %45, %46 : vector<4x16xf32>
    %48 = arith.addf %43, %47 : vector<4x16xf32>
    %49 = vector.extract_strided_slice %20 {offsets = [5, 0], sizes = [1, 16], strides = [1, 1]} : vector<49x16xf32> to vector<1x16xf32>
    %50 = vector.extract_strided_slice %23 {offsets = [5, 0], sizes = [4, 16], strides = [1, 1]} : vector<10x16xf32> to vector<4x16xf32>
    %51 = vector.broadcast %49 : vector<1x16xf32> to vector<4x16xf32>
    %52 = arith.mulf %50, %51 : vector<4x16xf32>
    %53 = arith.addf %48, %52 : vector<4x16xf32>
    %54 = vector.extract_strided_slice %20 {offsets = [6, 0], sizes = [1, 16], strides = [1, 1]} : vector<49x16xf32> to vector<1x16xf32>
    %55 = vector.extract_strided_slice %23 {offsets = [6, 0], sizes = [4, 16], strides = [1, 1]} : vector<10x16xf32> to vector<4x16xf32>
    %56 = vector.broadcast %54 : vector<1x16xf32> to vector<4x16xf32>
    %57 = arith.mulf %55, %56 : vector<4x16xf32>
    %58 = arith.addf %53, %57 : vector<4x16xf32>
    %c1 = arith.constant 1 : index
    %c0_19 = arith.constant 0 : index
    %c0_20 = arith.constant 0 : index
    %59 = vector.load %arg12[%c1, %c0_19, %c0_20] : memref<10x10x16xf32, #tpu.memory_space<vmem>>, vector<1x10x16xf32>
    %60 = vector.shape_cast %59 : vector<1x10x16xf32> to vector<10x16xf32>
    %61 = vector.extract_strided_slice %20 {offsets = [7, 0], sizes = [1, 16], strides = [1, 1]} : vector<49x16xf32> to vector<1x16xf32>
    %62 = vector.extract_strided_slice %60 {offsets = [0, 0], sizes = [4, 16], strides = [1, 1]} : vector<10x16xf32> to vector<4x16xf32>
    %63 = vector.broadcast %61 : vector<1x16xf32> to vector<4x16xf32>
    %64 = arith.mulf %62, %63 : vector<4x16xf32>
    %65 = arith.addf %58, %64 : vector<4x16xf32>
    %66 = vector.extract_strided_slice %20 {offsets = [8, 0], sizes = [1, 16], strides = [1, 1]} : vector<49x16xf32> to vector<1x16xf32>
    %67 = vector.extract_strided_slice %60 {offsets = [1, 0], sizes = [4, 16], strides = [1, 1]} : vector<10x16xf32> to vector<4x16xf32>
    %68 = vector.broadcast %66 : vector<1x16xf32> to vector<4x16xf32>
    %69 = arith.mulf %67, %68 : vector<4x16xf32>
    %70 = arith.addf %65, %69 : vector<4x16xf32>
    %71 = vector.extract_strided_slice %20 {offsets = [9, 0], sizes = [1, 16], strides = [1, 1]} : vector<49x16xf32> to vector<1x16xf32>
    %72 = vector.extract_strided_slice %60 {offsets = [2, 0], sizes = [4, 16], strides = [1, 1]} : vector<10x16xf32> to vector<4x16xf32>
    %73 = vector.broadcast %71 : vector<1x16xf32> to vector<4x16xf32>
    %74 = arith.mulf %72, %73 : vector<4x16xf32>
    %75 = arith.addf %70, %74 : vector<4x16xf32>
    %76 = vector.extract_strided_slice %20 {offsets = [10, 0], sizes = [1, 16], strides = [1, 1]} : vector<49x16xf32> to vector<1x16xf32>
    %77 = vector.extract_strided_slice %60 {offsets = [3, 0], sizes = [4, 16], strides = [1, 1]} : vector<10x16xf32> to vector<4x16xf32>
    %78 = vector.broadcast %76 : vector<1x16xf32> to vector<4x16xf32>
    %79 = arith.mulf %77, %78 : vector<4x16xf32>
    %80 = arith.addf %75, %79 : vector<4x16xf32>
    %81 = vector.extract_strided_slice %20 {offsets = [11, 0], sizes = [1, 16], strides = [1, 1]} : vector<49x16xf32> to vector<1x16xf32>
    %82 = vector.extract_strided_slice %60 {offsets = [4, 0], sizes = [4, 16], strides = [1, 1]} : vector<10x16xf32> to vector<4x16xf32>
    %83 = vector.broadcast %81 : vector<1x16xf32> to vector<4x16xf32>
    %84 = arith.mulf %82, %83 : vector<4x16xf32>
    %85 = arith.addf %80, %84 : vector<4x16xf32>
    %86 = vector.extract_strided_slice %20 {offsets = [12, 0], sizes = [1, 16], strides = [1, 1]} : vector<49x16xf32> to vector<1x16xf32>
    %87 = vector.extract_strided_slice %60 {offsets = [5, 0], sizes = [4, 16], strides = [1, 1]} : vector<10x16xf32> to vector<4x16xf32>
    %88 = vector.broadcast %86 : vector<1x16xf32> to vector<4x16xf32>
    %89 = arith.mulf %87, %88 : vector<4x16xf32>
    %90 = arith.addf %85, %89 : vector<4x16xf32>
    %91 = vector.extract_strided_slice %20 {offsets = [13, 0], sizes = [1, 16], strides = [1, 1]} : vector<49x16xf32> to vector<1x16xf32>
    %92 = vector.extract_strided_slice %60 {offsets = [6, 0], sizes = [4, 16], strides = [1, 1]} : vector<10x16xf32> to vector<4x16xf32>
    %93 = vector.broadcast %91 : vector<1x16xf32> to vector<4x16xf32>
    %94 = arith.mulf %92, %93 : vector<4x16xf32>
    %95 = arith.addf %90, %94 : vector<4x16xf32>
    %c2 = arith.constant 2 : index
    %c0_21 = arith.constant 0 : index
    %c0_22 = arith.constant 0 : index
    %96 = vector.load %arg12[%c2, %c0_21, %c0_22] : memref<10x10x16xf32, #tpu.memory_space<vmem>>, vector<1x10x16xf32>
    %97 = vector.shape_cast %96 : vector<1x10x16xf32> to vector<10x16xf32>
    %98 = vector.extract_strided_slice %20 {offsets = [14, 0], sizes = [1, 16], strides = [1, 1]} : vector<49x16xf32> to vector<1x16xf32>
    %99 = vector.extract_strided_slice %97 {offsets = [0, 0], sizes = [4, 16], strides = [1, 1]} : vector<10x16xf32> to vector<4x16xf32>
    %100 = vector.broadcast %98 : vector<1x16xf32> to vector<4x16xf32>
    %101 = arith.mulf %99, %100 : vector<4x16xf32>
    %102 = arith.addf %95, %101 : vector<4x16xf32>
    %103 = vector.extract_strided_slice %20 {offsets = [15, 0], sizes = [1, 16], strides = [1, 1]} : vector<49x16xf32> to vector<1x16xf32>
    %104 = vector.extract_strided_slice %97 {offsets = [1, 0], sizes = [4, 16], strides = [1, 1]} : vector<10x16xf32> to vector<4x16xf32>
    %105 = vector.broadcast %103 : vector<1x16xf32> to vector<4x16xf32>
    %106 = arith.mulf %104, %105 : vector<4x16xf32>
    %107 = arith.addf %102, %106 : vector<4x16xf32>
    %108 = vector.extract_strided_slice %20 {offsets = [16, 0], sizes = [1, 16], strides = [1, 1]} : vector<49x16xf32> to vector<1x16xf32>
    %109 = vector.extract_strided_slice %97 {offsets = [2, 0], sizes = [4, 16], strides = [1, 1]} : vector<10x16xf32> to vector<4x16xf32>
    %110 = vector.broadcast %108 : vector<1x16xf32> to vector<4x16xf32>
    %111 = arith.mulf %109, %110 : vector<4x16xf32>
    %112 = arith.addf %107, %111 : vector<4x16xf32>
    %113 = vector.extract_strided_slice %20 {offsets = [17, 0], sizes = [1, 16], strides = [1, 1]} : vector<49x16xf32> to vector<1x16xf32>
    %114 = vector.extract_strided_slice %97 {offsets = [3, 0], sizes = [4, 16], strides = [1, 1]} : vector<10x16xf32> to vector<4x16xf32>
    %115 = vector.broadcast %113 : vector<1x16xf32> to vector<4x16xf32>
    %116 = arith.mulf %114, %115 : vector<4x16xf32>
    %117 = arith.addf %112, %116 : vector<4x16xf32>
    %118 = vector.extract_strided_slice %20 {offsets = [18, 0], sizes = [1, 16], strides = [1, 1]} : vector<49x16xf32> to vector<1x16xf32>
    %119 = vector.extract_strided_slice %97 {offsets = [4, 0], sizes = [4, 16], strides = [1, 1]} : vector<10x16xf32> to vector<4x16xf32>
    %120 = vector.broadcast %118 : vector<1x16xf32> to vector<4x16xf32>
    %121 = arith.mulf %119, %120 : vector<4x16xf32>
    %122 = arith.addf %117, %121 : vector<4x16xf32>
    %123 = vector.extract_strided_slice %20 {offsets = [19, 0], sizes = [1, 16], strides = [1, 1]} : vector<49x16xf32> to vector<1x16xf32>
    %124 = vector.extract_strided_slice %97 {offsets = [5, 0], sizes = [4, 16], strides = [1, 1]} : vector<10x16xf32> to vector<4x16xf32>
    %125 = vector.broadcast %123 : vector<1x16xf32> to vector<4x16xf32>
    %126 = arith.mulf %124, %125 : vector<4x16xf32>
    %127 = arith.addf %122, %126 : vector<4x16xf32>
    %128 = vector.extract_strided_slice %20 {offsets = [20, 0], sizes = [1, 16], strides = [1, 1]} : vector<49x16xf32> to vector<1x16xf32>
    %129 = vector.extract_strided_slice %97 {offsets = [6, 0], sizes = [4, 16], strides = [1, 1]} : vector<10x16xf32> to vector<4x16xf32>
    %130 = vector.broadcast %128 : vector<1x16xf32> to vector<4x16xf32>
    %131 = arith.mulf %129, %130 : vector<4x16xf32>
    %132 = arith.addf %127, %131 : vector<4x16xf32>
    %c3_23 = arith.constant 3 : index
    %c0_24 = arith.constant 0 : index
    %c0_25 = arith.constant 0 : index
    %133 = vector.load %arg12[%c3_23, %c0_24, %c0_25] : memref<10x10x16xf32, #tpu.memory_space<vmem>>, vector<1x10x16xf32>
    %134 = vector.shape_cast %133 : vector<1x10x16xf32> to vector<10x16xf32>
    %135 = vector.extract_strided_slice %20 {offsets = [21, 0], sizes = [1, 16], strides = [1, 1]} : vector<49x16xf32> to vector<1x16xf32>
    %136 = vector.extract_strided_slice %134 {offsets = [0, 0], sizes = [4, 16], strides = [1, 1]} : vector<10x16xf32> to vector<4x16xf32>
    %137 = vector.broadcast %135 : vector<1x16xf32> to vector<4x16xf32>
    %138 = arith.mulf %136, %137 : vector<4x16xf32>
    %139 = arith.addf %132, %138 : vector<4x16xf32>
    %140 = vector.extract_strided_slice %20 {offsets = [22, 0], sizes = [1, 16], strides = [1, 1]} : vector<49x16xf32> to vector<1x16xf32>
    %141 = vector.extract_strided_slice %134 {offsets = [1, 0], sizes = [4, 16], strides = [1, 1]} : vector<10x16xf32> to vector<4x16xf32>
    %142 = vector.broadcast %140 : vector<1x16xf32> to vector<4x16xf32>
    %143 = arith.mulf %141, %142 : vector<4x16xf32>
    %144 = arith.addf %139, %143 : vector<4x16xf32>
    %145 = vector.extract_strided_slice %20 {offsets = [23, 0], sizes = [1, 16], strides = [1, 1]} : vector<49x16xf32> to vector<1x16xf32>
    %146 = vector.extract_strided_slice %134 {offsets = [2, 0], sizes = [4, 16], strides = [1, 1]} : vector<10x16xf32> to vector<4x16xf32>
    %147 = vector.broadcast %145 : vector<1x16xf32> to vector<4x16xf32>
    %148 = arith.mulf %146, %147 : vector<4x16xf32>
    %149 = arith.addf %144, %148 : vector<4x16xf32>
    %150 = vector.extract_strided_slice %20 {offsets = [24, 0], sizes = [1, 16], strides = [1, 1]} : vector<49x16xf32> to vector<1x16xf32>
    %151 = vector.extract_strided_slice %134 {offsets = [3, 0], sizes = [4, 16], strides = [1, 1]} : vector<10x16xf32> to vector<4x16xf32>
    %152 = vector.broadcast %150 : vector<1x16xf32> to vector<4x16xf32>
    %153 = arith.mulf %151, %152 : vector<4x16xf32>
    %154 = arith.addf %149, %153 : vector<4x16xf32>
    %155 = vector.extract_strided_slice %20 {offsets = [25, 0], sizes = [1, 16], strides = [1, 1]} : vector<49x16xf32> to vector<1x16xf32>
    %156 = vector.extract_strided_slice %134 {offsets = [4, 0], sizes = [4, 16], strides = [1, 1]} : vector<10x16xf32> to vector<4x16xf32>
    %157 = vector.broadcast %155 : vector<1x16xf32> to vector<4x16xf32>
    %158 = arith.mulf %156, %157 : vector<4x16xf32>
    %159 = arith.addf %154, %158 : vector<4x16xf32>
    %160 = vector.extract_strided_slice %20 {offsets = [26, 0], sizes = [1, 16], strides = [1, 1]} : vector<49x16xf32> to vector<1x16xf32>
    %161 = vector.extract_strided_slice %134 {offsets = [5, 0], sizes = [4, 16], strides = [1, 1]} : vector<10x16xf32> to vector<4x16xf32>
    %162 = vector.broadcast %160 : vector<1x16xf32> to vector<4x16xf32>
    %163 = arith.mulf %161, %162 : vector<4x16xf32>
    %164 = arith.addf %159, %163 : vector<4x16xf32>
    %165 = vector.extract_strided_slice %20 {offsets = [27, 0], sizes = [1, 16], strides = [1, 1]} : vector<49x16xf32> to vector<1x16xf32>
    %166 = vector.extract_strided_slice %134 {offsets = [6, 0], sizes = [4, 16], strides = [1, 1]} : vector<10x16xf32> to vector<4x16xf32>
    %167 = vector.broadcast %165 : vector<1x16xf32> to vector<4x16xf32>
    %168 = arith.mulf %166, %167 : vector<4x16xf32>
    %169 = arith.addf %164, %168 : vector<4x16xf32>
    %c4_26 = arith.constant 4 : index
    %c0_27 = arith.constant 0 : index
    %c0_28 = arith.constant 0 : index
    %170 = vector.load %arg12[%c4_26, %c0_27, %c0_28] : memref<10x10x16xf32, #tpu.memory_space<vmem>>, vector<1x10x16xf32>
    %171 = vector.shape_cast %170 : vector<1x10x16xf32> to vector<10x16xf32>
    %172 = vector.extract_strided_slice %20 {offsets = [28, 0], sizes = [1, 16], strides = [1, 1]} : vector<49x16xf32> to vector<1x16xf32>
    %173 = vector.extract_strided_slice %171 {offsets = [0, 0], sizes = [4, 16], strides = [1, 1]} : vector<10x16xf32> to vector<4x16xf32>
    %174 = vector.broadcast %172 : vector<1x16xf32> to vector<4x16xf32>
    %175 = arith.mulf %173, %174 : vector<4x16xf32>
    %176 = arith.addf %169, %175 : vector<4x16xf32>
    %177 = vector.extract_strided_slice %20 {offsets = [29, 0], sizes = [1, 16], strides = [1, 1]} : vector<49x16xf32> to vector<1x16xf32>
    %178 = vector.extract_strided_slice %171 {offsets = [1, 0], sizes = [4, 16], strides = [1, 1]} : vector<10x16xf32> to vector<4x16xf32>
    %179 = vector.broadcast %177 : vector<1x16xf32> to vector<4x16xf32>
    %180 = arith.mulf %178, %179 : vector<4x16xf32>
    %181 = arith.addf %176, %180 : vector<4x16xf32>
    %182 = vector.extract_strided_slice %20 {offsets = [30, 0], sizes = [1, 16], strides = [1, 1]} : vector<49x16xf32> to vector<1x16xf32>
    %183 = vector.extract_strided_slice %171 {offsets = [2, 0], sizes = [4, 16], strides = [1, 1]} : vector<10x16xf32> to vector<4x16xf32>
    %184 = vector.broadcast %182 : vector<1x16xf32> to vector<4x16xf32>
    %185 = arith.mulf %183, %184 : vector<4x16xf32>
    %186 = arith.addf %181, %185 : vector<4x16xf32>
    %187 = vector.extract_strided_slice %20 {offsets = [31, 0], sizes = [1, 16], strides = [1, 1]} : vector<49x16xf32> to vector<1x16xf32>
    %188 = vector.extract_strided_slice %171 {offsets = [3, 0], sizes = [4, 16], strides = [1, 1]} : vector<10x16xf32> to vector<4x16xf32>
    %189 = vector.broadcast %187 : vector<1x16xf32> to vector<4x16xf32>
    %190 = arith.mulf %188, %189 : vector<4x16xf32>
    %191 = arith.addf %186, %190 : vector<4x16xf32>
    %192 = vector.extract_strided_slice %20 {offsets = [32, 0], sizes = [1, 16], strides = [1, 1]} : vector<49x16xf32> to vector<1x16xf32>
    %193 = vector.extract_strided_slice %171 {offsets = [4, 0], sizes = [4, 16], strides = [1, 1]} : vector<10x16xf32> to vector<4x16xf32>
    %194 = vector.broadcast %192 : vector<1x16xf32> to vector<4x16xf32>
    %195 = arith.mulf %193, %194 : vector<4x16xf32>
    %196 = arith.addf %191, %195 : vector<4x16xf32>
    %197 = vector.extract_strided_slice %20 {offsets = [33, 0], sizes = [1, 16], strides = [1, 1]} : vector<49x16xf32> to vector<1x16xf32>
    %198 = vector.extract_strided_slice %171 {offsets = [5, 0], sizes = [4, 16], strides = [1, 1]} : vector<10x16xf32> to vector<4x16xf32>
    %199 = vector.broadcast %197 : vector<1x16xf32> to vector<4x16xf32>
    %200 = arith.mulf %198, %199 : vector<4x16xf32>
    %201 = arith.addf %196, %200 : vector<4x16xf32>
    %202 = vector.extract_strided_slice %20 {offsets = [34, 0], sizes = [1, 16], strides = [1, 1]} : vector<49x16xf32> to vector<1x16xf32>
    %203 = vector.extract_strided_slice %171 {offsets = [6, 0], sizes = [4, 16], strides = [1, 1]} : vector<10x16xf32> to vector<4x16xf32>
    %204 = vector.broadcast %202 : vector<1x16xf32> to vector<4x16xf32>
    %205 = arith.mulf %203, %204 : vector<4x16xf32>
    %206 = arith.addf %201, %205 : vector<4x16xf32>
    %c5_29 = arith.constant 5 : index
    %c0_30 = arith.constant 0 : index
    %c0_31 = arith.constant 0 : index
    %207 = vector.load %arg12[%c5_29, %c0_30, %c0_31] : memref<10x10x16xf32, #tpu.memory_space<vmem>>, vector<1x10x16xf32>
    %208 = vector.shape_cast %207 : vector<1x10x16xf32> to vector<10x16xf32>
    %209 = vector.extract_strided_slice %20 {offsets = [35, 0], sizes = [1, 16], strides = [1, 1]} : vector<49x16xf32> to vector<1x16xf32>
    %210 = vector.extract_strided_slice %208 {offsets = [0, 0], sizes = [4, 16], strides = [1, 1]} : vector<10x16xf32> to vector<4x16xf32>
    %211 = vector.broadcast %209 : vector<1x16xf32> to vector<4x16xf32>
    %212 = arith.mulf %210, %211 : vector<4x16xf32>
    %213 = arith.addf %206, %212 : vector<4x16xf32>
    %214 = vector.extract_strided_slice %20 {offsets = [36, 0], sizes = [1, 16], strides = [1, 1]} : vector<49x16xf32> to vector<1x16xf32>
    %215 = vector.extract_strided_slice %208 {offsets = [1, 0], sizes = [4, 16], strides = [1, 1]} : vector<10x16xf32> to vector<4x16xf32>
    %216 = vector.broadcast %214 : vector<1x16xf32> to vector<4x16xf32>
    %217 = arith.mulf %215, %216 : vector<4x16xf32>
    %218 = arith.addf %213, %217 : vector<4x16xf32>
    %219 = vector.extract_strided_slice %20 {offsets = [37, 0], sizes = [1, 16], strides = [1, 1]} : vector<49x16xf32> to vector<1x16xf32>
    %220 = vector.extract_strided_slice %208 {offsets = [2, 0], sizes = [4, 16], strides = [1, 1]} : vector<10x16xf32> to vector<4x16xf32>
    %221 = vector.broadcast %219 : vector<1x16xf32> to vector<4x16xf32>
    %222 = arith.mulf %220, %221 : vector<4x16xf32>
    %223 = arith.addf %218, %222 : vector<4x16xf32>
    %224 = vector.extract_strided_slice %20 {offsets = [38, 0], sizes = [1, 16], strides = [1, 1]} : vector<49x16xf32> to vector<1x16xf32>
    %225 = vector.extract_strided_slice %208 {offsets = [3, 0], sizes = [4, 16], strides = [1, 1]} : vector<10x16xf32> to vector<4x16xf32>
    %226 = vector.broadcast %224 : vector<1x16xf32> to vector<4x16xf32>
    %227 = arith.mulf %225, %226 : vector<4x16xf32>
    %228 = arith.addf %223, %227 : vector<4x16xf32>
    %229 = vector.extract_strided_slice %20 {offsets = [39, 0], sizes = [1, 16], strides = [1, 1]} : vector<49x16xf32> to vector<1x16xf32>
    %230 = vector.extract_strided_slice %208 {offsets = [4, 0], sizes = [4, 16], strides = [1, 1]} : vector<10x16xf32> to vector<4x16xf32>
    %231 = vector.broadcast %229 : vector<1x16xf32> to vector<4x16xf32>
    %232 = arith.mulf %230, %231 : vector<4x16xf32>
    %233 = arith.addf %228, %232 : vector<4x16xf32>
    %234 = vector.extract_strided_slice %20 {offsets = [40, 0], sizes = [1, 16], strides = [1, 1]} : vector<49x16xf32> to vector<1x16xf32>
    %235 = vector.extract_strided_slice %208 {offsets = [5, 0], sizes = [4, 16], strides = [1, 1]} : vector<10x16xf32> to vector<4x16xf32>
    %236 = vector.broadcast %234 : vector<1x16xf32> to vector<4x16xf32>
    %237 = arith.mulf %235, %236 : vector<4x16xf32>
    %238 = arith.addf %233, %237 : vector<4x16xf32>
    %239 = vector.extract_strided_slice %20 {offsets = [41, 0], sizes = [1, 16], strides = [1, 1]} : vector<49x16xf32> to vector<1x16xf32>
    %240 = vector.extract_strided_slice %208 {offsets = [6, 0], sizes = [4, 16], strides = [1, 1]} : vector<10x16xf32> to vector<4x16xf32>
    %241 = vector.broadcast %239 : vector<1x16xf32> to vector<4x16xf32>
    %242 = arith.mulf %240, %241 : vector<4x16xf32>
    %243 = arith.addf %238, %242 : vector<4x16xf32>
    %c6_32 = arith.constant 6 : index
    %c0_33 = arith.constant 0 : index
    %c0_34 = arith.constant 0 : index
    %244 = vector.load %arg12[%c6_32, %c0_33, %c0_34] : memref<10x10x16xf32, #tpu.memory_space<vmem>>, vector<1x10x16xf32>
    %245 = vector.shape_cast %244 : vector<1x10x16xf32> to vector<10x16xf32>
    %246 = vector.extract_strided_slice %20 {offsets = [42, 0], sizes = [1, 16], strides = [1, 1]} : vector<49x16xf32> to vector<1x16xf32>
    %247 = vector.extract_strided_slice %245 {offsets = [0, 0], sizes = [4, 16], strides = [1, 1]} : vector<10x16xf32> to vector<4x16xf32>
    %248 = vector.broadcast %246 : vector<1x16xf32> to vector<4x16xf32>
    %249 = arith.mulf %247, %248 : vector<4x16xf32>
    %250 = arith.addf %243, %249 : vector<4x16xf32>
    %251 = vector.extract_strided_slice %20 {offsets = [43, 0], sizes = [1, 16], strides = [1, 1]} : vector<49x16xf32> to vector<1x16xf32>
    %252 = vector.extract_strided_slice %245 {offsets = [1, 0], sizes = [4, 16], strides = [1, 1]} : vector<10x16xf32> to vector<4x16xf32>
    %253 = vector.broadcast %251 : vector<1x16xf32> to vector<4x16xf32>
    %254 = arith.mulf %252, %253 : vector<4x16xf32>
    %255 = arith.addf %250, %254 : vector<4x16xf32>
    %256 = vector.extract_strided_slice %20 {offsets = [44, 0], sizes = [1, 16], strides = [1, 1]} : vector<49x16xf32> to vector<1x16xf32>
    %257 = vector.extract_strided_slice %245 {offsets = [2, 0], sizes = [4, 16], strides = [1, 1]} : vector<10x16xf32> to vector<4x16xf32>
    %258 = vector.broadcast %256 : vector<1x16xf32> to vector<4x16xf32>
    %259 = arith.mulf %257, %258 : vector<4x16xf32>
    %260 = arith.addf %255, %259 : vector<4x16xf32>
    %261 = vector.extract_strided_slice %20 {offsets = [45, 0], sizes = [1, 16], strides = [1, 1]} : vector<49x16xf32> to vector<1x16xf32>
    %262 = vector.extract_strided_slice %245 {offsets = [3, 0], sizes = [4, 16], strides = [1, 1]} : vector<10x16xf32> to vector<4x16xf32>
    %263 = vector.broadcast %261 : vector<1x16xf32> to vector<4x16xf32>
    %264 = arith.mulf %262, %263 : vector<4x16xf32>
    %265 = arith.addf %260, %264 : vector<4x16xf32>
    %266 = vector.extract_strided_slice %20 {offsets = [46, 0], sizes = [1, 16], strides = [1, 1]} : vector<49x16xf32> to vector<1x16xf32>
    %267 = vector.extract_strided_slice %245 {offsets = [4, 0], sizes = [4, 16], strides = [1, 1]} : vector<10x16xf32> to vector<4x16xf32>
    %268 = vector.broadcast %266 : vector<1x16xf32> to vector<4x16xf32>
    %269 = arith.mulf %267, %268 : vector<4x16xf32>
    %270 = arith.addf %265, %269 : vector<4x16xf32>
    %271 = vector.extract_strided_slice %20 {offsets = [47, 0], sizes = [1, 16], strides = [1, 1]} : vector<49x16xf32> to vector<1x16xf32>
    %272 = vector.extract_strided_slice %245 {offsets = [5, 0], sizes = [4, 16], strides = [1, 1]} : vector<10x16xf32> to vector<4x16xf32>
    %273 = vector.broadcast %271 : vector<1x16xf32> to vector<4x16xf32>
    %274 = arith.mulf %272, %273 : vector<4x16xf32>
    %275 = arith.addf %270, %274 : vector<4x16xf32>
    %276 = vector.extract_strided_slice %20 {offsets = [48, 0], sizes = [1, 16], strides = [1, 1]} : vector<49x16xf32> to vector<1x16xf32>
    %277 = vector.extract_strided_slice %245 {offsets = [6, 0], sizes = [4, 16], strides = [1, 1]} : vector<10x16xf32> to vector<4x16xf32>
    %278 = vector.broadcast %276 : vector<1x16xf32> to vector<4x16xf32>
    %279 = arith.mulf %277, %278 : vector<4x16xf32>
    %280 = arith.addf %275, %279 : vector<4x16xf32>
    %c0_35 = arith.constant 0 : index
    %c0_36 = arith.constant 0 : index
    %281 = vector.load %arg3[%c0_35, %c0_36] : memref<1x16xf32, #tpu.memory_space<vmem>>, vector<1x16xf32>
    %282 = vector.broadcast %281 : vector<1x16xf32> to vector<4x16xf32>
    %283 = arith.addf %280, %282 : vector<4x16xf32>
    %c0_37 = arith.constant 0 : index
    %c0_38 = arith.constant 0 : index
    %284 = vector.load %arg13[%c0_37, %c0_38] : memref<16x16xf32, #tpu.memory_space<vmem>>, vector<4x16xf32>
    tpu.vector_store %arg13[%c0_37, %c0_38], %283 {strides = array<i32>} : memref<16x16xf32, #tpu.memory_space<vmem>>, vector<4x16xf32>,
    %cst_39 = arith.constant 0.000000e+00 : f32
    %285 = vector.broadcast %cst_39 : f32 to vector<4x16xf32>
    %c1_40 = arith.constant 1 : index
    %c0_41 = arith.constant 0 : index
    %c0_42 = arith.constant 0 : index
    %286 = vector.load %arg12[%c1_40, %c0_41, %c0_42] : memref<10x10x16xf32, #tpu.memory_space<vmem>>, vector<1x10x16xf32>
    %287 = vector.shape_cast %286 : vector<1x10x16xf32> to vector<10x16xf32>
    %288 = vector.extract_strided_slice %20 {offsets = [0, 0], sizes = [1, 16], strides = [1, 1]} : vector<49x16xf32> to vector<1x16xf32>
    %289 = vector.extract_strided_slice %287 {offsets = [0, 0], sizes = [4, 16], strides = [1, 1]} : vector<10x16xf32> to vector<4x16xf32>
    %290 = vector.broadcast %288 : vector<1x16xf32> to vector<4x16xf32>
    %291 = arith.mulf %289, %290 : vector<4x16xf32>
    %292 = arith.addf %285, %291 : vector<4x16xf32>
    %293 = vector.extract_strided_slice %20 {offsets = [1, 0], sizes = [1, 16], strides = [1, 1]} : vector<49x16xf32> to vector<1x16xf32>
    %294 = vector.extract_strided_slice %287 {offsets = [1, 0], sizes = [4, 16], strides = [1, 1]} : vector<10x16xf32> to vector<4x16xf32>
    %295 = vector.broadcast %293 : vector<1x16xf32> to vector<4x16xf32>
    %296 = arith.mulf %294, %295 : vector<4x16xf32>
    %297 = arith.addf %292, %296 : vector<4x16xf32>
    %298 = vector.extract_strided_slice %20 {offsets = [2, 0], sizes = [1, 16], strides = [1, 1]} : vector<49x16xf32> to vector<1x16xf32>
    %299 = vector.extract_strided_slice %287 {offsets = [2, 0], sizes = [4, 16], strides = [1, 1]} : vector<10x16xf32> to vector<4x16xf32>
    %300 = vector.broadcast %298 : vector<1x16xf32> to vector<4x16xf32>
    %301 = arith.mulf %299, %300 : vector<4x16xf32>
    %302 = arith.addf %297, %301 : vector<4x16xf32>
    %303 = vector.extract_strided_slice %20 {offsets = [3, 0], sizes = [1, 16], strides = [1, 1]} : vector<49x16xf32> to vector<1x16xf32>
    %304 = vector.extract_strided_slice %287 {offsets = [3, 0], sizes = [4, 16], strides = [1, 1]} : vector<10x16xf32> to vector<4x16xf32>
    %305 = vector.broadcast %303 : vector<1x16xf32> to vector<4x16xf32>
    %306 = arith.mulf %304, %305 : vector<4x16xf32>
    %307 = arith.addf %302, %306 : vector<4x16xf32>
    %308 = vector.extract_strided_slice %20 {offsets = [4, 0], sizes = [1, 16], strides = [1, 1]} : vector<49x16xf32> to vector<1x16xf32>
    %309 = vector.extract_strided_slice %287 {offsets = [4, 0], sizes = [4, 16], strides = [1, 1]} : vector<10x16xf32> to vector<4x16xf32>
    %310 = vector.broadcast %308 : vector<1x16xf32> to vector<4x16xf32>
    %311 = arith.mulf %309, %310 : vector<4x16xf32>
    %312 = arith.addf %307, %311 : vector<4x16xf32>
    %313 = vector.extract_strided_slice %20 {offsets = [5, 0], sizes = [1, 16], strides = [1, 1]} : vector<49x16xf32> to vector<1x16xf32>
    %314 = vector.extract_strided_slice %287 {offsets = [5, 0], sizes = [4, 16], strides = [1, 1]} : vector<10x16xf32> to vector<4x16xf32>
    %315 = vector.broadcast %313 : vector<1x16xf32> to vector<4x16xf32>
    %316 = arith.mulf %314, %315 : vector<4x16xf32>
    %317 = arith.addf %312, %316 : vector<4x16xf32>
    %318 = vector.extract_strided_slice %20 {offsets = [6, 0], sizes = [1, 16], strides = [1, 1]} : vector<49x16xf32> to vector<1x16xf32>
    %319 = vector.extract_strided_slice %287 {offsets = [6, 0], sizes = [4, 16], strides = [1, 1]} : vector<10x16xf32> to vector<4x16xf32>
    %320 = vector.broadcast %318 : vector<1x16xf32> to vector<4x16xf32>
    %321 = arith.mulf %319, %320 : vector<4x16xf32>
    %322 = arith.addf %317, %321 : vector<4x16xf32>
    %c2_43 = arith.constant 2 : index
    %c0_44 = arith.constant 0 : index
    %c0_45 = arith.constant 0 : index
    %323 = vector.load %arg12[%c2_43, %c0_44, %c0_45] : memref<10x10x16xf32, #tpu.memory_space<vmem>>, vector<1x10x16xf32>
    %324 = vector.shape_cast %323 : vector<1x10x16xf32> to vector<10x16xf32>
    %325 = vector.extract_strided_slice %20 {offsets = [7, 0], sizes = [1, 16], strides = [1, 1]} : vector<49x16xf32> to vector<1x16xf32>
    %326 = vector.extract_strided_slice %324 {offsets = [0, 0], sizes = [4, 16], strides = [1, 1]} : vector<10x16xf32> to vector<4x16xf32>
    %327 = vector.broadcast %325 : vector<1x16xf32> to vector<4x16xf32>
    %328 = arith.mulf %326, %327 : vector<4x16xf32>
    %329 = arith.addf %322, %328 : vector<4x16xf32>
    %330 = vector.extract_strided_slice %20 {offsets = [8, 0], sizes = [1, 16], strides = [1, 1]} : vector<49x16xf32> to vector<1x16xf32>
    %331 = vector.extract_strided_slice %324 {offsets = [1, 0], sizes = [4, 16], strides = [1, 1]} : vector<10x16xf32> to vector<4x16xf32>
    %332 = vector.broadcast %330 : vector<1x16xf32> to vector<4x16xf32>
    %333 = arith.mulf %331, %332 : vector<4x16xf32>
    %334 = arith.addf %329, %333 : vector<4x16xf32>
    %335 = vector.extract_strided_slice %20 {offsets = [9, 0], sizes = [1, 16], strides = [1, 1]} : vector<49x16xf32> to vector<1x16xf32>
    %336 = vector.extract_strided_slice %324 {offsets = [2, 0], sizes = [4, 16], strides = [1, 1]} : vector<10x16xf32> to vector<4x16xf32>
    %337 = vector.broadcast %335 : vector<1x16xf32> to vector<4x16xf32>
    %338 = arith.mulf %336, %337 : vector<4x16xf32>
    %339 = arith.addf %334, %338 : vector<4x16xf32>
    %340 = vector.extract_strided_slice %20 {offsets = [10, 0], sizes = [1, 16], strides = [1, 1]} : vector<49x16xf32> to vector<1x16xf32>
    %341 = vector.extract_strided_slice %324 {offsets = [3, 0], sizes = [4, 16], strides = [1, 1]} : vector<10x16xf32> to vector<4x16xf32>
    %342 = vector.broadcast %340 : vector<1x16xf32> to vector<4x16xf32>
    %343 = arith.mulf %341, %342 : vector<4x16xf32>
    %344 = arith.addf %339, %343 : vector<4x16xf32>
    %345 = vector.extract_strided_slice %20 {offsets = [11, 0], sizes = [1, 16], strides = [1, 1]} : vector<49x16xf32> to vector<1x16xf32>
    %346 = vector.extract_strided_slice %324 {offsets = [4, 0], sizes = [4, 16], strides = [1, 1]} : vector<10x16xf32> to vector<4x16xf32>
    %347 = vector.broadcast %345 : vector<1x16xf32> to vector<4x16xf32>
    %348 = arith.mulf %346, %347 : vector<4x16xf32>
    %349 = arith.addf %344, %348 : vector<4x16xf32>
    %350 = vector.extract_strided_slice %20 {offsets = [12, 0], sizes = [1, 16], strides = [1, 1]} : vector<49x16xf32> to vector<1x16xf32>
    %351 = vector.extract_strided_slice %324 {offsets = [5, 0], sizes = [4, 16], strides = [1, 1]} : vector<10x16xf32> to vector<4x16xf32>
    %352 = vector.broadcast %350 : vector<1x16xf32> to vector<4x16xf32>
    %353 = arith.mulf %351, %352 : vector<4x16xf32>
    %354 = arith.addf %349, %353 : vector<4x16xf32>
    %355 = vector.extract_strided_slice %20 {offsets = [13, 0], sizes = [1, 16], strides = [1, 1]} : vector<49x16xf32> to vector<1x16xf32>
    %356 = vector.extract_strided_slice %324 {offsets = [6, 0], sizes = [4, 16], strides = [1, 1]} : vector<10x16xf32> to vector<4x16xf32>
    %357 = vector.broadcast %355 : vector<1x16xf32> to vector<4x16xf32>
    %358 = arith.mulf %356, %357 : vector<4x16xf32>
    %359 = arith.addf %354, %358 : vector<4x16xf32>
    %c3_46 = arith.constant 3 : index
    %c0_47 = arith.constant 0 : index
    %c0_48 = arith.constant 0 : index
    %360 = vector.load %arg12[%c3_46, %c0_47, %c0_48] : memref<10x10x16xf32, #tpu.memory_space<vmem>>, vector<1x10x16xf32>
    %361 = vector.shape_cast %360 : vector<1x10x16xf32> to vector<10x16xf32>
    %362 = vector.extract_strided_slice %20 {offsets = [14, 0], sizes = [1, 16], strides = [1, 1]} : vector<49x16xf32> to vector<1x16xf32>
    %363 = vector.extract_strided_slice %361 {offsets = [0, 0], sizes = [4, 16], strides = [1, 1]} : vector<10x16xf32> to vector<4x16xf32>
    %364 = vector.broadcast %362 : vector<1x16xf32> to vector<4x16xf32>
    %365 = arith.mulf %363, %364 : vector<4x16xf32>
    %366 = arith.addf %359, %365 : vector<4x16xf32>
    %367 = vector.extract_strided_slice %20 {offsets = [15, 0], sizes = [1, 16], strides = [1, 1]} : vector<49x16xf32> to vector<1x16xf32>
    %368 = vector.extract_strided_slice %361 {offsets = [1, 0], sizes = [4, 16], strides = [1, 1]} : vector<10x16xf32> to vector<4x16xf32>
    %369 = vector.broadcast %367 : vector<1x16xf32> to vector<4x16xf32>
    %370 = arith.mulf %368, %369 : vector<4x16xf32>
    %371 = arith.addf %366, %370 : vector<4x16xf32>
    %372 = vector.extract_strided_slice %20 {offsets = [16, 0], sizes = [1, 16], strides = [1, 1]} : vector<49x16xf32> to vector<1x16xf32>
    %373 = vector.extract_strided_slice %361 {offsets = [2, 0], sizes = [4, 16], strides = [1, 1]} : vector<10x16xf32> to vector<4x16xf32>
    %374 = vector.broadcast %372 : vector<1x16xf32> to vector<4x16xf32>
    %375 = arith.mulf %373, %374 : vector<4x16xf32>
    %376 = arith.addf %371, %375 : vector<4x16xf32>
    %377 = vector.extract_strided_slice %20 {offsets = [17, 0], sizes = [1, 16], strides = [1, 1]} : vector<49x16xf32> to vector<1x16xf32>
    %378 = vector.extract_strided_slice %361 {offsets = [3, 0], sizes = [4, 16], strides = [1, 1]} : vector<10x16xf32> to vector<4x16xf32>
    %379 = vector.broadcast %377 : vector<1x16xf32> to vector<4x16xf32>
    %380 = arith.mulf %378, %379 : vector<4x16xf32>
    %381 = arith.addf %376, %380 : vector<4x16xf32>
    %382 = vector.extract_strided_slice %20 {offsets = [18, 0], sizes = [1, 16], strides = [1, 1]} : vector<49x16xf32> to vector<1x16xf32>
    %383 = vector.extract_strided_slice %361 {offsets = [4, 0], sizes = [4, 16], strides = [1, 1]} : vector<10x16xf32> to vector<4x16xf32>
    %384 = vector.broadcast %382 : vector<1x16xf32> to vector<4x16xf32>
    %385 = arith.mulf %383, %384 : vector<4x16xf32>
    %386 = arith.addf %381, %385 : vector<4x16xf32>
    %387 = vector.extract_strided_slice %20 {offsets = [19, 0], sizes = [1, 16], strides = [1, 1]} : vector<49x16xf32> to vector<1x16xf32>
    %388 = vector.extract_strided_slice %361 {offsets = [5, 0], sizes = [4, 16], strides = [1, 1]} : vector<10x16xf32> to vector<4x16xf32>
    %389 = vector.broadcast %387 : vector<1x16xf32> to vector<4x16xf32>
    %390 = arith.mulf %388, %389 : vector<4x16xf32>
    %391 = arith.addf %386, %390 : vector<4x16xf32>
    %392 = vector.extract_strided_slice %20 {offsets = [20, 0], sizes = [1, 16], strides = [1, 1]} : vector<49x16xf32> to vector<1x16xf32>
    %393 = vector.extract_strided_slice %361 {offsets = [6, 0], sizes = [4, 16], strides = [1, 1]} : vector<10x16xf32> to vector<4x16xf32>
    %394 = vector.broadcast %392 : vector<1x16xf32> to vector<4x16xf32>
    %395 = arith.mulf %393, %394 : vector<4x16xf32>
    %396 = arith.addf %391, %395 : vector<4x16xf32>
    %c4_49 = arith.constant 4 : index
    %c0_50 = arith.constant 0 : index
    %c0_51 = arith.constant 0 : index
    %397 = vector.load %arg12[%c4_49, %c0_50, %c0_51] : memref<10x10x16xf32, #tpu.memory_space<vmem>>, vector<1x10x16xf32>
    %398 = vector.shape_cast %397 : vector<1x10x16xf32> to vector<10x16xf32>
    %399 = vector.extract_strided_slice %20 {offsets = [21, 0], sizes = [1, 16], strides = [1, 1]} : vector<49x16xf32> to vector<1x16xf32>
    %400 = vector.extract_strided_slice %398 {offsets = [0, 0], sizes = [4, 16], strides = [1, 1]} : vector<10x16xf32> to vector<4x16xf32>
    %401 = vector.broadcast %399 : vector<1x16xf32> to vector<4x16xf32>
    %402 = arith.mulf %400, %401 : vector<4x16xf32>
    %403 = arith.addf %396, %402 : vector<4x16xf32>
    %404 = vector.extract_strided_slice %20 {offsets = [22, 0], sizes = [1, 16], strides = [1, 1]} : vector<49x16xf32> to vector<1x16xf32>
    %405 = vector.extract_strided_slice %398 {offsets = [1, 0], sizes = [4, 16], strides = [1, 1]} : vector<10x16xf32> to vector<4x16xf32>
    %406 = vector.broadcast %404 : vector<1x16xf32> to vector<4x16xf32>
    %407 = arith.mulf %405, %406 : vector<4x16xf32>
    %408 = arith.addf %403, %407 : vector<4x16xf32>
    %409 = vector.extract_strided_slice %20 {offsets = [23, 0], sizes = [1, 16], strides = [1, 1]} : vector<49x16xf32> to vector<1x16xf32>
    %410 = vector.extract_strided_slice %398 {offsets = [2, 0], sizes = [4, 16], strides = [1, 1]} : vector<10x16xf32> to vector<4x16xf32>
    %411 = vector.broadcast %409 : vector<1x16xf32> to vector<4x16xf32>
    %412 = arith.mulf %410, %411 : vector<4x16xf32>
    %413 = arith.addf %408, %412 : vector<4x16xf32>
    %414 = vector.extract_strided_slice %20 {offsets = [24, 0], sizes = [1, 16], strides = [1, 1]} : vector<49x16xf32> to vector<1x16xf32>
    %415 = vector.extract_strided_slice %398 {offsets = [3, 0], sizes = [4, 16], strides = [1, 1]} : vector<10x16xf32> to vector<4x16xf32>
    %416 = vector.broadcast %414 : vector<1x16xf32> to vector<4x16xf32>
    %417 = arith.mulf %415, %416 : vector<4x16xf32>
    %418 = arith.addf %413, %417 : vector<4x16xf32>
    %419 = vector.extract_strided_slice %20 {offsets = [25, 0], sizes = [1, 16], strides = [1, 1]} : vector<49x16xf32> to vector<1x16xf32>
    %420 = vector.extract_strided_slice %398 {offsets = [4, 0], sizes = [4, 16], strides = [1, 1]} : vector<10x16xf32> to vector<4x16xf32>
    %421 = vector.broadcast %419 : vector<1x16xf32> to vector<4x16xf32>
    %422 = arith.mulf %420, %421 : vector<4x16xf32>
    %423 = arith.addf %418, %422 : vector<4x16xf32>
    %424 = vector.extract_strided_slice %20 {offsets = [26, 0], sizes = [1, 16], strides = [1, 1]} : vector<49x16xf32> to vector<1x16xf32>
    %425 = vector.extract_strided_slice %398 {offsets = [5, 0], sizes = [4, 16], strides = [1, 1]} : vector<10x16xf32> to vector<4x16xf32>
    %426 = vector.broadcast %424 : vector<1x16xf32> to vector<4x16xf32>
    %427 = arith.mulf %425, %426 : vector<4x16xf32>
    %428 = arith.addf %423, %427 : vector<4x16xf32>
    %429 = vector.extract_strided_slice %20 {offsets = [27, 0], sizes = [1, 16], strides = [1, 1]} : vector<49x16xf32> to vector<1x16xf32>
    %430 = vector.extract_strided_slice %398 {offsets = [6, 0], sizes = [4, 16], strides = [1, 1]} : vector<10x16xf32> to vector<4x16xf32>
    %431 = vector.broadcast %429 : vector<1x16xf32> to vector<4x16xf32>
    %432 = arith.mulf %430, %431 : vector<4x16xf32>
    %433 = arith.addf %428, %432 : vector<4x16xf32>
    %c5_52 = arith.constant 5 : index
    %c0_53 = arith.constant 0 : index
    %c0_54 = arith.constant 0 : index
    %434 = vector.load %arg12[%c5_52, %c0_53, %c0_54] : memref<10x10x16xf32, #tpu.memory_space<vmem>>, vector<1x10x16xf32>
    %435 = vector.shape_cast %434 : vector<1x10x16xf32> to vector<10x16xf32>
    %436 = vector.extract_strided_slice %20 {offsets = [28, 0], sizes = [1, 16], strides = [1, 1]} : vector<49x16xf32> to vector<1x16xf32>
    %437 = vector.extract_strided_slice %435 {offsets = [0, 0], sizes = [4, 16], strides = [1, 1]} : vector<10x16xf32> to vector<4x16xf32>
    %438 = vector.broadcast %436 : vector<1x16xf32> to vector<4x16xf32>
    %439 = arith.mulf %437, %438 : vector<4x16xf32>
    %440 = arith.addf %433, %439 : vector<4x16xf32>
    %441 = vector.extract_strided_slice %20 {offsets = [29, 0], sizes = [1, 16], strides = [1, 1]} : vector<49x16xf32> to vector<1x16xf32>
    %442 = vector.extract_strided_slice %435 {offsets = [1, 0], sizes = [4, 16], strides = [1, 1]} : vector<10x16xf32> to vector<4x16xf32>
    %443 = vector.broadcast %441 : vector<1x16xf32> to vector<4x16xf32>
    %444 = arith.mulf %442, %443 : vector<4x16xf32>
    %445 = arith.addf %440, %444 : vector<4x16xf32>
    %446 = vector.extract_strided_slice %20 {offsets = [30, 0], sizes = [1, 16], strides = [1, 1]} : vector<49x16xf32> to vector<1x16xf32>
    %447 = vector.extract_strided_slice %435 {offsets = [2, 0], sizes = [4, 16], strides = [1, 1]} : vector<10x16xf32> to vector<4x16xf32>
    %448 = vector.broadcast %446 : vector<1x16xf32> to vector<4x16xf32>
    %449 = arith.mulf %447, %448 : vector<4x16xf32>
    %450 = arith.addf %445, %449 : vector<4x16xf32>
    %451 = vector.extract_strided_slice %20 {offsets = [31, 0], sizes = [1, 16], strides = [1, 1]} : vector<49x16xf32> to vector<1x16xf32>
    %452 = vector.extract_strided_slice %435 {offsets = [3, 0], sizes = [4, 16], strides = [1, 1]} : vector<10x16xf32> to vector<4x16xf32>
    %453 = vector.broadcast %451 : vector<1x16xf32> to vector<4x16xf32>
    %454 = arith.mulf %452, %453 : vector<4x16xf32>
    %455 = arith.addf %450, %454 : vector<4x16xf32>
    %456 = vector.extract_strided_slice %20 {offsets = [32, 0], sizes = [1, 16], strides = [1, 1]} : vector<49x16xf32> to vector<1x16xf32>
    %457 = vector.extract_strided_slice %435 {offsets = [4, 0], sizes = [4, 16], strides = [1, 1]} : vector<10x16xf32> to vector<4x16xf32>
    %458 = vector.broadcast %456 : vector<1x16xf32> to vector<4x16xf32>
    %459 = arith.mulf %457, %458 : vector<4x16xf32>
    %460 = arith.addf %455, %459 : vector<4x16xf32>
    %461 = vector.extract_strided_slice %20 {offsets = [33, 0], sizes = [1, 16], strides = [1, 1]} : vector<49x16xf32> to vector<1x16xf32>
    %462 = vector.extract_strided_slice %435 {offsets = [5, 0], sizes = [4, 16], strides = [1, 1]} : vector<10x16xf32> to vector<4x16xf32>
    %463 = vector.broadcast %461 : vector<1x16xf32> to vector<4x16xf32>
    %464 = arith.mulf %462, %463 : vector<4x16xf32>
    %465 = arith.addf %460, %464 : vector<4x16xf32>
    %466 = vector.extract_strided_slice %20 {offsets = [34, 0], sizes = [1, 16], strides = [1, 1]} : vector<49x16xf32> to vector<1x16xf32>
    %467 = vector.extract_strided_slice %435 {offsets = [6, 0], sizes = [4, 16], strides = [1, 1]} : vector<10x16xf32> to vector<4x16xf32>
    %468 = vector.broadcast %466 : vector<1x16xf32> to vector<4x16xf32>
    %469 = arith.mulf %467, %468 : vector<4x16xf32>
    %470 = arith.addf %465, %469 : vector<4x16xf32>
    %c6_55 = arith.constant 6 : index
    %c0_56 = arith.constant 0 : index
    %c0_57 = arith.constant 0 : index
    %471 = vector.load %arg12[%c6_55, %c0_56, %c0_57] : memref<10x10x16xf32, #tpu.memory_space<vmem>>, vector<1x10x16xf32>
    %472 = vector.shape_cast %471 : vector<1x10x16xf32> to vector<10x16xf32>
    %473 = vector.extract_strided_slice %20 {offsets = [35, 0], sizes = [1, 16], strides = [1, 1]} : vector<49x16xf32> to vector<1x16xf32>
    %474 = vector.extract_strided_slice %472 {offsets = [0, 0], sizes = [4, 16], strides = [1, 1]} : vector<10x16xf32> to vector<4x16xf32>
    %475 = vector.broadcast %473 : vector<1x16xf32> to vector<4x16xf32>
    %476 = arith.mulf %474, %475 : vector<4x16xf32>
    %477 = arith.addf %470, %476 : vector<4x16xf32>
    %478 = vector.extract_strided_slice %20 {offsets = [36, 0], sizes = [1, 16], strides = [1, 1]} : vector<49x16xf32> to vector<1x16xf32>
    %479 = vector.extract_strided_slice %472 {offsets = [1, 0], sizes = [4, 16], strides = [1, 1]} : vector<10x16xf32> to vector<4x16xf32>
    %480 = vector.broadcast %478 : vector<1x16xf32> to vector<4x16xf32>
    %481 = arith.mulf %479, %480 : vector<4x16xf32>
    %482 = arith.addf %477, %481 : vector<4x16xf32>
    %483 = vector.extract_strided_slice %20 {offsets = [37, 0], sizes = [1, 16], strides = [1, 1]} : vector<49x16xf32> to vector<1x16xf32>
    %484 = vector.extract_strided_slice %472 {offsets = [2, 0], sizes = [4, 16], strides = [1, 1]} : vector<10x16xf32> to vector<4x16xf32>
    %485 = vector.broadcast %483 : vector<1x16xf32> to vector<4x16xf32>
    %486 = arith.mulf %484, %485 : vector<4x16xf32>
    %487 = arith.addf %482, %486 : vector<4x16xf32>
    %488 = vector.extract_strided_slice %20 {offsets = [38, 0], sizes = [1, 16], strides = [1, 1]} : vector<49x16xf32> to vector<1x16xf32>
    %489 = vector.extract_strided_slice %472 {offsets = [3, 0], sizes = [4, 16], strides = [1, 1]} : vector<10x16xf32> to vector<4x16xf32>
    %490 = vector.broadcast %488 : vector<1x16xf32> to vector<4x16xf32>
    %491 = arith.mulf %489, %490 : vector<4x16xf32>
    %492 = arith.addf %487, %491 : vector<4x16xf32>
    %493 = vector.extract_strided_slice %20 {offsets = [39, 0], sizes = [1, 16], strides = [1, 1]} : vector<49x16xf32> to vector<1x16xf32>
    %494 = vector.extract_strided_slice %472 {offsets = [4, 0], sizes = [4, 16], strides = [1, 1]} : vector<10x16xf32> to vector<4x16xf32>
    %495 = vector.broadcast %493 : vector<1x16xf32> to vector<4x16xf32>
    %496 = arith.mulf %494, %495 : vector<4x16xf32>
    %497 = arith.addf %492, %496 : vector<4x16xf32>
    %498 = vector.extract_strided_slice %20 {offsets = [40, 0], sizes = [1, 16], strides = [1, 1]} : vector<49x16xf32> to vector<1x16xf32>
    %499 = vector.extract_strided_slice %472 {offsets = [5, 0], sizes = [4, 16], strides = [1, 1]} : vector<10x16xf32> to vector<4x16xf32>
    %500 = vector.broadcast %498 : vector<1x16xf32> to vector<4x16xf32>
    %501 = arith.mulf %499, %500 : vector<4x16xf32>
    %502 = arith.addf %497, %501 : vector<4x16xf32>
    %503 = vector.extract_strided_slice %20 {offsets = [41, 0], sizes = [1, 16], strides = [1, 1]} : vector<49x16xf32> to vector<1x16xf32>
    %504 = vector.extract_strided_slice %472 {offsets = [6, 0], sizes = [4, 16], strides = [1, 1]} : vector<10x16xf32> to vector<4x16xf32>
    %505 = vector.broadcast %503 : vector<1x16xf32> to vector<4x16xf32>
    %506 = arith.mulf %504, %505 : vector<4x16xf32>
    %507 = arith.addf %502, %506 : vector<4x16xf32>
    %c7 = arith.constant 7 : index
    %c0_58 = arith.constant 0 : index
    %c0_59 = arith.constant 0 : index
    %508 = vector.load %arg12[%c7, %c0_58, %c0_59] : memref<10x10x16xf32, #tpu.memory_space<vmem>>, vector<1x10x16xf32>
    %509 = vector.shape_cast %508 : vector<1x10x16xf32> to vector<10x16xf32>
    %510 = vector.extract_strided_slice %20 {offsets = [42, 0], sizes = [1, 16], strides = [1, 1]} : vector<49x16xf32> to vector<1x16xf32>
    %511 = vector.extract_strided_slice %509 {offsets = [0, 0], sizes = [4, 16], strides = [1, 1]} : vector<10x16xf32> to vector<4x16xf32>
    %512 = vector.broadcast %510 : vector<1x16xf32> to vector<4x16xf32>
    %513 = arith.mulf %511, %512 : vector<4x16xf32>
    %514 = arith.addf %507, %513 : vector<4x16xf32>
    %515 = vector.extract_strided_slice %20 {offsets = [43, 0], sizes = [1, 16], strides = [1, 1]} : vector<49x16xf32> to vector<1x16xf32>
    %516 = vector.extract_strided_slice %509 {offsets = [1, 0], sizes = [4, 16], strides = [1, 1]} : vector<10x16xf32> to vector<4x16xf32>
    %517 = vector.broadcast %515 : vector<1x16xf32> to vector<4x16xf32>
    %518 = arith.mulf %516, %517 : vector<4x16xf32>
    %519 = arith.addf %514, %518 : vector<4x16xf32>
    %520 = vector.extract_strided_slice %20 {offsets = [44, 0], sizes = [1, 16], strides = [1, 1]} : vector<49x16xf32> to vector<1x16xf32>
    %521 = vector.extract_strided_slice %509 {offsets = [2, 0], sizes = [4, 16], strides = [1, 1]} : vector<10x16xf32> to vector<4x16xf32>
    %522 = vector.broadcast %520 : vector<1x16xf32> to vector<4x16xf32>
    %523 = arith.mulf %521, %522 : vector<4x16xf32>
    %524 = arith.addf %519, %523 : vector<4x16xf32>
    %525 = vector.extract_strided_slice %20 {offsets = [45, 0], sizes = [1, 16], strides = [1, 1]} : vector<49x16xf32> to vector<1x16xf32>
    %526 = vector.extract_strided_slice %509 {offsets = [3, 0], sizes = [4, 16], strides = [1, 1]} : vector<10x16xf32> to vector<4x16xf32>
    %527 = vector.broadcast %525 : vector<1x16xf32> to vector<4x16xf32>
    %528 = arith.mulf %526, %527 : vector<4x16xf32>
    %529 = arith.addf %524, %528 : vector<4x16xf32>
    %530 = vector.extract_strided_slice %20 {offsets = [46, 0], sizes = [1, 16], strides = [1, 1]} : vector<49x16xf32> to vector<1x16xf32>
    %531 = vector.extract_strided_slice %509 {offsets = [4, 0], sizes = [4, 16], strides = [1, 1]} : vector<10x16xf32> to vector<4x16xf32>
    %532 = vector.broadcast %530 : vector<1x16xf32> to vector<4x16xf32>
    %533 = arith.mulf %531, %532 : vector<4x16xf32>
    %534 = arith.addf %529, %533 : vector<4x16xf32>
    %535 = vector.extract_strided_slice %20 {offsets = [47, 0], sizes = [1, 16], strides = [1, 1]} : vector<49x16xf32> to vector<1x16xf32>
    %536 = vector.extract_strided_slice %509 {offsets = [5, 0], sizes = [4, 16], strides = [1, 1]} : vector<10x16xf32> to vector<4x16xf32>
    %537 = vector.broadcast %535 : vector<1x16xf32> to vector<4x16xf32>
    %538 = arith.mulf %536, %537 : vector<4x16xf32>
    %539 = arith.addf %534, %538 : vector<4x16xf32>
    %540 = vector.extract_strided_slice %20 {offsets = [48, 0], sizes = [1, 16], strides = [1, 1]} : vector<49x16xf32> to vector<1x16xf32>
    %541 = vector.extract_strided_slice %509 {offsets = [6, 0], sizes = [4, 16], strides = [1, 1]} : vector<10x16xf32> to vector<4x16xf32>
    %542 = vector.broadcast %540 : vector<1x16xf32> to vector<4x16xf32>
    %543 = arith.mulf %541, %542 : vector<4x16xf32>
    %544 = arith.addf %539, %543 : vector<4x16xf32>
    %c0_60 = arith.constant 0 : index
    %c0_61 = arith.constant 0 : index
    %545 = vector.load %arg3[%c0_60, %c0_61] : memref<1x16xf32, #tpu.memory_space<vmem>>, vector<1x16xf32>
    %546 = vector.broadcast %545 : vector<1x16xf32> to vector<4x16xf32>
    %547 = arith.addf %544, %546 : vector<4x16xf32>
    %c4_62 = arith.constant 4 : index
    %c0_63 = arith.constant 0 : index
    %548 = vector.load %arg13[%c4_62, %c0_63] : memref<16x16xf32, #tpu.memory_space<vmem>>, vector<4x16xf32>
    tpu.vector_store %arg13[%c4_62, %c0_63], %547 {strides = array<i32>} : memref<16x16xf32, #tpu.memory_space<vmem>>, vector<4x16xf32>,
    %cst_64 = arith.constant 0.000000e+00 : f32
    %549 = vector.broadcast %cst_64 : f32 to vector<4x16xf32>
    %c2_65 = arith.constant 2 : index
    %c0_66 = arith.constant 0 : index
    %c0_67 = arith.constant 0 : index
    %550 = vector.load %arg12[%c2_65, %c0_66, %c0_67] : memref<10x10x16xf32, #tpu.memory_space<vmem>>, vector<1x10x16xf32>
    %551 = vector.shape_cast %550 : vector<1x10x16xf32> to vector<10x16xf32>
    %552 = vector.extract_strided_slice %20 {offsets = [0, 0], sizes = [1, 16], strides = [1, 1]} : vector<49x16xf32> to vector<1x16xf32>
    %553 = vector.extract_strided_slice %551 {offsets = [0, 0], sizes = [4, 16], strides = [1, 1]} : vector<10x16xf32> to vector<4x16xf32>
    %554 = vector.broadcast %552 : vector<1x16xf32> to vector<4x16xf32>
    %555 = arith.mulf %553, %554 : vector<4x16xf32>
    %556 = arith.addf %549, %555 : vector<4x16xf32>
    %557 = vector.extract_strided_slice %20 {offsets = [1, 0], sizes = [1, 16], strides = [1, 1]} : vector<49x16xf32> to vector<1x16xf32>
    %558 = vector.extract_strided_slice %551 {offsets = [1, 0], sizes = [4, 16], strides = [1, 1]} : vector<10x16xf32> to vector<4x16xf32>
    %559 = vector.broadcast %557 : vector<1x16xf32> to vector<4x16xf32>
    %560 = arith.mulf %558, %559 : vector<4x16xf32>
    %561 = arith.addf %556, %560 : vector<4x16xf32>
    %562 = vector.extract_strided_slice %20 {offsets = [2, 0], sizes = [1, 16], strides = [1, 1]} : vector<49x16xf32> to vector<1x16xf32>
    %563 = vector.extract_strided_slice %551 {offsets = [2, 0], sizes = [4, 16], strides = [1, 1]} : vector<10x16xf32> to vector<4x16xf32>
    %564 = vector.broadcast %562 : vector<1x16xf32> to vector<4x16xf32>
    %565 = arith.mulf %563, %564 : vector<4x16xf32>
    %566 = arith.addf %561, %565 : vector<4x16xf32>
    %567 = vector.extract_strided_slice %20 {offsets = [3, 0], sizes = [1, 16], strides = [1, 1]} : vector<49x16xf32> to vector<1x16xf32>
    %568 = vector.extract_strided_slice %551 {offsets = [3, 0], sizes = [4, 16], strides = [1, 1]} : vector<10x16xf32> to vector<4x16xf32>
    %569 = vector.broadcast %567 : vector<1x16xf32> to vector<4x16xf32>
    %570 = arith.mulf %568, %569 : vector<4x16xf32>
    %571 = arith.addf %566, %570 : vector<4x16xf32>
    %572 = vector.extract_strided_slice %20 {offsets = [4, 0], sizes = [1, 16], strides = [1, 1]} : vector<49x16xf32> to vector<1x16xf32>
    %573 = vector.extract_strided_slice %551 {offsets = [4, 0], sizes = [4, 16], strides = [1, 1]} : vector<10x16xf32> to vector<4x16xf32>
    %574 = vector.broadcast %572 : vector<1x16xf32> to vector<4x16xf32>
    %575 = arith.mulf %573, %574 : vector<4x16xf32>
    %576 = arith.addf %571, %575 : vector<4x16xf32>
    %577 = vector.extract_strided_slice %20 {offsets = [5, 0], sizes = [1, 16], strides = [1, 1]} : vector<49x16xf32> to vector<1x16xf32>
    %578 = vector.extract_strided_slice %551 {offsets = [5, 0], sizes = [4, 16], strides = [1, 1]} : vector<10x16xf32> to vector<4x16xf32>
    %579 = vector.broadcast %577 : vector<1x16xf32> to vector<4x16xf32>
    %580 = arith.mulf %578, %579 : vector<4x16xf32>
    %581 = arith.addf %576, %580 : vector<4x16xf32>
    %582 = vector.extract_strided_slice %20 {offsets = [6, 0], sizes = [1, 16], strides = [1, 1]} : vector<49x16xf32> to vector<1x16xf32>
    %583 = vector.extract_strided_slice %551 {offsets = [6, 0], sizes = [4, 16], strides = [1, 1]} : vector<10x16xf32> to vector<4x16xf32>
    %584 = vector.broadcast %582 : vector<1x16xf32> to vector<4x16xf32>
    %585 = arith.mulf %583, %584 : vector<4x16xf32>
    %586 = arith.addf %581, %585 : vector<4x16xf32>
    %c3_68 = arith.constant 3 : index
    %c0_69 = arith.constant 0 : index
    %c0_70 = arith.constant 0 : index
    %587 = vector.load %arg12[%c3_68, %c0_69, %c0_70] : memref<10x10x16xf32, #tpu.memory_space<vmem>>, vector<1x10x16xf32>
    %588 = vector.shape_cast %587 : vector<1x10x16xf32> to vector<10x16xf32>
    %589 = vector.extract_strided_slice %20 {offsets = [7, 0], sizes = [1, 16], strides = [1, 1]} : vector<49x16xf32> to vector<1x16xf32>
    %590 = vector.extract_strided_slice %588 {offsets = [0, 0], sizes = [4, 16], strides = [1, 1]} : vector<10x16xf32> to vector<4x16xf32>
    %591 = vector.broadcast %589 : vector<1x16xf32> to vector<4x16xf32>
    %592 = arith.mulf %590, %591 : vector<4x16xf32>
    %593 = arith.addf %586, %592 : vector<4x16xf32>
    %594 = vector.extract_strided_slice %20 {offsets = [8, 0], sizes = [1, 16], strides = [1, 1]} : vector<49x16xf32> to vector<1x16xf32>
    %595 = vector.extract_strided_slice %588 {offsets = [1, 0], sizes = [4, 16], strides = [1, 1]} : vector<10x16xf32> to vector<4x16xf32>
    %596 = vector.broadcast %594 : vector<1x16xf32> to vector<4x16xf32>
    %597 = arith.mulf %595, %596 : vector<4x16xf32>
    %598 = arith.addf %593, %597 : vector<4x16xf32>
    %599 = vector.extract_strided_slice %20 {offsets = [9, 0], sizes = [1, 16], strides = [1, 1]} : vector<49x16xf32> to vector<1x16xf32>
    %600 = vector.extract_strided_slice %588 {offsets = [2, 0], sizes = [4, 16], strides = [1, 1]} : vector<10x16xf32> to vector<4x16xf32>
    %601 = vector.broadcast %599 : vector<1x16xf32> to vector<4x16xf32>
    %602 = arith.mulf %600, %601 : vector<4x16xf32>
    %603 = arith.addf %598, %602 : vector<4x16xf32>
    %604 = vector.extract_strided_slice %20 {offsets = [10, 0], sizes = [1, 16], strides = [1, 1]} : vector<49x16xf32> to vector<1x16xf32>
    %605 = vector.extract_strided_slice %588 {offsets = [3, 0], sizes = [4, 16], strides = [1, 1]} : vector<10x16xf32> to vector<4x16xf32>
    %606 = vector.broadcast %604 : vector<1x16xf32> to vector<4x16xf32>
    %607 = arith.mulf %605, %606 : vector<4x16xf32>
    %608 = arith.addf %603, %607 : vector<4x16xf32>
    %609 = vector.extract_strided_slice %20 {offsets = [11, 0], sizes = [1, 16], strides = [1, 1]} : vector<49x16xf32> to vector<1x16xf32>
    %610 = vector.extract_strided_slice %588 {offsets = [4, 0], sizes = [4, 16], strides = [1, 1]} : vector<10x16xf32> to vector<4x16xf32>
    %611 = vector.broadcast %609 : vector<1x16xf32> to vector<4x16xf32>
    %612 = arith.mulf %610, %611 : vector<4x16xf32>
    %613 = arith.addf %608, %612 : vector<4x16xf32>
    %614 = vector.extract_strided_slice %20 {offsets = [12, 0], sizes = [1, 16], strides = [1, 1]} : vector<49x16xf32> to vector<1x16xf32>
    %615 = vector.extract_strided_slice %588 {offsets = [5, 0], sizes = [4, 16], strides = [1, 1]} : vector<10x16xf32> to vector<4x16xf32>
    %616 = vector.broadcast %614 : vector<1x16xf32> to vector<4x16xf32>
    %617 = arith.mulf %615, %616 : vector<4x16xf32>
    %618 = arith.addf %613, %617 : vector<4x16xf32>
    %619 = vector.extract_strided_slice %20 {offsets = [13, 0], sizes = [1, 16], strides = [1, 1]} : vector<49x16xf32> to vector<1x16xf32>
    %620 = vector.extract_strided_slice %588 {offsets = [6, 0], sizes = [4, 16], strides = [1, 1]} : vector<10x16xf32> to vector<4x16xf32>
    %621 = vector.broadcast %619 : vector<1x16xf32> to vector<4x16xf32>
    %622 = arith.mulf %620, %621 : vector<4x16xf32>
    %623 = arith.addf %618, %622 : vector<4x16xf32>
    %c4_71 = arith.constant 4 : index
    %c0_72 = arith.constant 0 : index
    %c0_73 = arith.constant 0 : index
    %624 = vector.load %arg12[%c4_71, %c0_72, %c0_73] : memref<10x10x16xf32, #tpu.memory_space<vmem>>, vector<1x10x16xf32>
    %625 = vector.shape_cast %624 : vector<1x10x16xf32> to vector<10x16xf32>
    %626 = vector.extract_strided_slice %20 {offsets = [14, 0], sizes = [1, 16], strides = [1, 1]} : vector<49x16xf32> to vector<1x16xf32>
    %627 = vector.extract_strided_slice %625 {offsets = [0, 0], sizes = [4, 16], strides = [1, 1]} : vector<10x16xf32> to vector<4x16xf32>
    %628 = vector.broadcast %626 : vector<1x16xf32> to vector<4x16xf32>
    %629 = arith.mulf %627, %628 : vector<4x16xf32>
    %630 = arith.addf %623, %629 : vector<4x16xf32>
    %631 = vector.extract_strided_slice %20 {offsets = [15, 0], sizes = [1, 16], strides = [1, 1]} : vector<49x16xf32> to vector<1x16xf32>
    %632 = vector.extract_strided_slice %625 {offsets = [1, 0], sizes = [4, 16], strides = [1, 1]} : vector<10x16xf32> to vector<4x16xf32>
    %633 = vector.broadcast %631 : vector<1x16xf32> to vector<4x16xf32>
    %634 = arith.mulf %632, %633 : vector<4x16xf32>
    %635 = arith.addf %630, %634 : vector<4x16xf32>
    %636 = vector.extract_strided_slice %20 {offsets = [16, 0], sizes = [1, 16], strides = [1, 1]} : vector<49x16xf32> to vector<1x16xf32>
    %637 = vector.extract_strided_slice %625 {offsets = [2, 0], sizes = [4, 16], strides = [1, 1]} : vector<10x16xf32> to vector<4x16xf32>
    %638 = vector.broadcast %636 : vector<1x16xf32> to vector<4x16xf32>
    %639 = arith.mulf %637, %638 : vector<4x16xf32>
    %640 = arith.addf %635, %639 : vector<4x16xf32>
    %641 = vector.extract_strided_slice %20 {offsets = [17, 0], sizes = [1, 16], strides = [1, 1]} : vector<49x16xf32> to vector<1x16xf32>
    %642 = vector.extract_strided_slice %625 {offsets = [3, 0], sizes = [4, 16], strides = [1, 1]} : vector<10x16xf32> to vector<4x16xf32>
    %643 = vector.broadcast %641 : vector<1x16xf32> to vector<4x16xf32>
    %644 = arith.mulf %642, %643 : vector<4x16xf32>
    %645 = arith.addf %640, %644 : vector<4x16xf32>
    %646 = vector.extract_strided_slice %20 {offsets = [18, 0], sizes = [1, 16], strides = [1, 1]} : vector<49x16xf32> to vector<1x16xf32>
    %647 = vector.extract_strided_slice %625 {offsets = [4, 0], sizes = [4, 16], strides = [1, 1]} : vector<10x16xf32> to vector<4x16xf32>
    %648 = vector.broadcast %646 : vector<1x16xf32> to vector<4x16xf32>
    %649 = arith.mulf %647, %648 : vector<4x16xf32>
    %650 = arith.addf %645, %649 : vector<4x16xf32>
    %651 = vector.extract_strided_slice %20 {offsets = [19, 0], sizes = [1, 16], strides = [1, 1]} : vector<49x16xf32> to vector<1x16xf32>
    %652 = vector.extract_strided_slice %625 {offsets = [5, 0], sizes = [4, 16], strides = [1, 1]} : vector<10x16xf32> to vector<4x16xf32>
    %653 = vector.broadcast %651 : vector<1x16xf32> to vector<4x16xf32>
    %654 = arith.mulf %652, %653 : vector<4x16xf32>
    %655 = arith.addf %650, %654 : vector<4x16xf32>
    %656 = vector.extract_strided_slice %20 {offsets = [20, 0], sizes = [1, 16], strides = [1, 1]} : vector<49x16xf32> to vector<1x16xf32>
    %657 = vector.extract_strided_slice %625 {offsets = [6, 0], sizes = [4, 16], strides = [1, 1]} : vector<10x16xf32> to vector<4x16xf32>
    %658 = vector.broadcast %656 : vector<1x16xf32> to vector<4x16xf32>
    %659 = arith.mulf %657, %658 : vector<4x16xf32>
    %660 = arith.addf %655, %659 : vector<4x16xf32>
    %c5_74 = arith.constant 5 : index
    %c0_75 = arith.constant 0 : index
    %c0_76 = arith.constant 0 : index
    %661 = vector.load %arg12[%c5_74, %c0_75, %c0_76] : memref<10x10x16xf32, #tpu.memory_space<vmem>>, vector<1x10x16xf32>
    %662 = vector.shape_cast %661 : vector<1x10x16xf32> to vector<10x16xf32>
    %663 = vector.extract_strided_slice %20 {offsets = [21, 0], sizes = [1, 16], strides = [1, 1]} : vector<49x16xf32> to vector<1x16xf32>
    %664 = vector.extract_strided_slice %662 {offsets = [0, 0], sizes = [4, 16], strides = [1, 1]} : vector<10x16xf32> to vector<4x16xf32>
    %665 = vector.broadcast %663 : vector<1x16xf32> to vector<4x16xf32>
    %666 = arith.mulf %664, %665 : vector<4x16xf32>
    %667 = arith.addf %660, %666 : vector<4x16xf32>
    %668 = vector.extract_strided_slice %20 {offsets = [22, 0], sizes = [1, 16], strides = [1, 1]} : vector<49x16xf32> to vector<1x16xf32>
    %669 = vector.extract_strided_slice %662 {offsets = [1, 0], sizes = [4, 16], strides = [1, 1]} : vector<10x16xf32> to vector<4x16xf32>
    %670 = vector.broadcast %668 : vector<1x16xf32> to vector<4x16xf32>
    %671 = arith.mulf %669, %670 : vector<4x16xf32>
    %672 = arith.addf %667, %671 : vector<4x16xf32>
    %673 = vector.extract_strided_slice %20 {offsets = [23, 0], sizes = [1, 16], strides = [1, 1]} : vector<49x16xf32> to vector<1x16xf32>
    %674 = vector.extract_strided_slice %662 {offsets = [2, 0], sizes = [4, 16], strides = [1, 1]} : vector<10x16xf32> to vector<4x16xf32>
    %675 = vector.broadcast %673 : vector<1x16xf32> to vector<4x16xf32>
    %676 = arith.mulf %674, %675 : vector<4x16xf32>
    %677 = arith.addf %672, %676 : vector<4x16xf32>
    %678 = vector.extract_strided_slice %20 {offsets = [24, 0], sizes = [1, 16], strides = [1, 1]} : vector<49x16xf32> to vector<1x16xf32>
    %679 = vector.extract_strided_slice %662 {offsets = [3, 0], sizes = [4, 16], strides = [1, 1]} : vector<10x16xf32> to vector<4x16xf32>
    %680 = vector.broadcast %678 : vector<1x16xf32> to vector<4x16xf32>
    %681 = arith.mulf %679, %680 : vector<4x16xf32>
    %682 = arith.addf %677, %681 : vector<4x16xf32>
    %683 = vector.extract_strided_slice %20 {offsets = [25, 0], sizes = [1, 16], strides = [1, 1]} : vector<49x16xf32> to vector<1x16xf32>
    %684 = vector.extract_strided_slice %662 {offsets = [4, 0], sizes = [4, 16], strides = [1, 1]} : vector<10x16xf32> to vector<4x16xf32>
    %685 = vector.broadcast %683 : vector<1x16xf32> to vector<4x16xf32>
    %686 = arith.mulf %684, %685 : vector<4x16xf32>
    %687 = arith.addf %682, %686 : vector<4x16xf32>
    %688 = vector.extract_strided_slice %20 {offsets = [26, 0], sizes = [1, 16], strides = [1, 1]} : vector<49x16xf32> to vector<1x16xf32>
    %689 = vector.extract_strided_slice %662 {offsets = [5, 0], sizes = [4, 16], strides = [1, 1]} : vector<10x16xf32> to vector<4x16xf32>
    %690 = vector.broadcast %688 : vector<1x16xf32> to vector<4x16xf32>
    %691 = arith.mulf %689, %690 : vector<4x16xf32>
    %692 = arith.addf %687, %691 : vector<4x16xf32>
    %693 = vector.extract_strided_slice %20 {offsets = [27, 0], sizes = [1, 16], strides = [1, 1]} : vector<49x16xf32> to vector<1x16xf32>
    %694 = vector.extract_strided_slice %662 {offsets = [6, 0], sizes = [4, 16], strides = [1, 1]} : vector<10x16xf32> to vector<4x16xf32>
    %695 = vector.broadcast %693 : vector<1x16xf32> to vector<4x16xf32>
    %696 = arith.mulf %694, %695 : vector<4x16xf32>
    %697 = arith.addf %692, %696 : vector<4x16xf32>
    %c6_77 = arith.constant 6 : index
    %c0_78 = arith.constant 0 : index
    %c0_79 = arith.constant 0 : index
    %698 = vector.load %arg12[%c6_77, %c0_78, %c0_79] : memref<10x10x16xf32, #tpu.memory_space<vmem>>, vector<1x10x16xf32>
    %699 = vector.shape_cast %698 : vector<1x10x16xf32> to vector<10x16xf32>
    %700 = vector.extract_strided_slice %20 {offsets = [28, 0], sizes = [1, 16], strides = [1, 1]} : vector<49x16xf32> to vector<1x16xf32>
    %701 = vector.extract_strided_slice %699 {offsets = [0, 0], sizes = [4, 16], strides = [1, 1]} : vector<10x16xf32> to vector<4x16xf32>
    %702 = vector.broadcast %700 : vector<1x16xf32> to vector<4x16xf32>
    %703 = arith.mulf %701, %702 : vector<4x16xf32>
    %704 = arith.addf %697, %703 : vector<4x16xf32>
    %705 = vector.extract_strided_slice %20 {offsets = [29, 0], sizes = [1, 16], strides = [1, 1]} : vector<49x16xf32> to vector<1x16xf32>
    %706 = vector.extract_strided_slice %699 {offsets = [1, 0], sizes = [4, 16], strides = [1, 1]} : vector<10x16xf32> to vector<4x16xf32>
    %707 = vector.broadcast %705 : vector<1x16xf32> to vector<4x16xf32>
    %708 = arith.mulf %706, %707 : vector<4x16xf32>
    %709 = arith.addf %704, %708 : vector<4x16xf32>
    %710 = vector.extract_strided_slice %20 {offsets = [30, 0], sizes = [1, 16], strides = [1, 1]} : vector<49x16xf32> to vector<1x16xf32>
    %711 = vector.extract_strided_slice %699 {offsets = [2, 0], sizes = [4, 16], strides = [1, 1]} : vector<10x16xf32> to vector<4x16xf32>
    %712 = vector.broadcast %710 : vector<1x16xf32> to vector<4x16xf32>
    %713 = arith.mulf %711, %712 : vector<4x16xf32>
    %714 = arith.addf %709, %713 : vector<4x16xf32>
    %715 = vector.extract_strided_slice %20 {offsets = [31, 0], sizes = [1, 16], strides = [1, 1]} : vector<49x16xf32> to vector<1x16xf32>
    %716 = vector.extract_strided_slice %699 {offsets = [3, 0], sizes = [4, 16], strides = [1, 1]} : vector<10x16xf32> to vector<4x16xf32>
    %717 = vector.broadcast %715 : vector<1x16xf32> to vector<4x16xf32>
    %718 = arith.mulf %716, %717 : vector<4x16xf32>
    %719 = arith.addf %714, %718 : vector<4x16xf32>
    %720 = vector.extract_strided_slice %20 {offsets = [32, 0], sizes = [1, 16], strides = [1, 1]} : vector<49x16xf32> to vector<1x16xf32>
    %721 = vector.extract_strided_slice %699 {offsets = [4, 0], sizes = [4, 16], strides = [1, 1]} : vector<10x16xf32> to vector<4x16xf32>
    %722 = vector.broadcast %720 : vector<1x16xf32> to vector<4x16xf32>
    %723 = arith.mulf %721, %722 : vector<4x16xf32>
    %724 = arith.addf %719, %723 : vector<4x16xf32>
    %725 = vector.extract_strided_slice %20 {offsets = [33, 0], sizes = [1, 16], strides = [1, 1]} : vector<49x16xf32> to vector<1x16xf32>
    %726 = vector.extract_strided_slice %699 {offsets = [5, 0], sizes = [4, 16], strides = [1, 1]} : vector<10x16xf32> to vector<4x16xf32>
    %727 = vector.broadcast %725 : vector<1x16xf32> to vector<4x16xf32>
    %728 = arith.mulf %726, %727 : vector<4x16xf32>
    %729 = arith.addf %724, %728 : vector<4x16xf32>
    %730 = vector.extract_strided_slice %20 {offsets = [34, 0], sizes = [1, 16], strides = [1, 1]} : vector<49x16xf32> to vector<1x16xf32>
    %731 = vector.extract_strided_slice %699 {offsets = [6, 0], sizes = [4, 16], strides = [1, 1]} : vector<10x16xf32> to vector<4x16xf32>
    %732 = vector.broadcast %730 : vector<1x16xf32> to vector<4x16xf32>
    %733 = arith.mulf %731, %732 : vector<4x16xf32>
    %734 = arith.addf %729, %733 : vector<4x16xf32>
    %c7_80 = arith.constant 7 : index
    %c0_81 = arith.constant 0 : index
    %c0_82 = arith.constant 0 : index
    %735 = vector.load %arg12[%c7_80, %c0_81, %c0_82] : memref<10x10x16xf32, #tpu.memory_space<vmem>>, vector<1x10x16xf32>
    %736 = vector.shape_cast %735 : vector<1x10x16xf32> to vector<10x16xf32>
    %737 = vector.extract_strided_slice %20 {offsets = [35, 0], sizes = [1, 16], strides = [1, 1]} : vector<49x16xf32> to vector<1x16xf32>
    %738 = vector.extract_strided_slice %736 {offsets = [0, 0], sizes = [4, 16], strides = [1, 1]} : vector<10x16xf32> to vector<4x16xf32>
    %739 = vector.broadcast %737 : vector<1x16xf32> to vector<4x16xf32>
    %740 = arith.mulf %738, %739 : vector<4x16xf32>
    %741 = arith.addf %734, %740 : vector<4x16xf32>
    %742 = vector.extract_strided_slice %20 {offsets = [36, 0], sizes = [1, 16], strides = [1, 1]} : vector<49x16xf32> to vector<1x16xf32>
    %743 = vector.extract_strided_slice %736 {offsets = [1, 0], sizes = [4, 16], strides = [1, 1]} : vector<10x16xf32> to vector<4x16xf32>
    %744 = vector.broadcast %742 : vector<1x16xf32> to vector<4x16xf32>
    %745 = arith.mulf %743, %744 : vector<4x16xf32>
    %746 = arith.addf %741, %745 : vector<4x16xf32>
    %747 = vector.extract_strided_slice %20 {offsets = [37, 0], sizes = [1, 16], strides = [1, 1]} : vector<49x16xf32> to vector<1x16xf32>
    %748 = vector.extract_strided_slice %736 {offsets = [2, 0], sizes = [4, 16], strides = [1, 1]} : vector<10x16xf32> to vector<4x16xf32>
    %749 = vector.broadcast %747 : vector<1x16xf32> to vector<4x16xf32>
    %750 = arith.mulf %748, %749 : vector<4x16xf32>
    %751 = arith.addf %746, %750 : vector<4x16xf32>
    %752 = vector.extract_strided_slice %20 {offsets = [38, 0], sizes = [1, 16], strides = [1, 1]} : vector<49x16xf32> to vector<1x16xf32>
    %753 = vector.extract_strided_slice %736 {offsets = [3, 0], sizes = [4, 16], strides = [1, 1]} : vector<10x16xf32> to vector<4x16xf32>
    %754 = vector.broadcast %752 : vector<1x16xf32> to vector<4x16xf32>
    %755 = arith.mulf %753, %754 : vector<4x16xf32>
    %756 = arith.addf %751, %755 : vector<4x16xf32>
    %757 = vector.extract_strided_slice %20 {offsets = [39, 0], sizes = [1, 16], strides = [1, 1]} : vector<49x16xf32> to vector<1x16xf32>
    %758 = vector.extract_strided_slice %736 {offsets = [4, 0], sizes = [4, 16], strides = [1, 1]} : vector<10x16xf32> to vector<4x16xf32>
    %759 = vector.broadcast %757 : vector<1x16xf32> to vector<4x16xf32>
    %760 = arith.mulf %758, %759 : vector<4x16xf32>
    %761 = arith.addf %756, %760 : vector<4x16xf32>
    %762 = vector.extract_strided_slice %20 {offsets = [40, 0], sizes = [1, 16], strides = [1, 1]} : vector<49x16xf32> to vector<1x16xf32>
    %763 = vector.extract_strided_slice %736 {offsets = [5, 0], sizes = [4, 16], strides = [1, 1]} : vector<10x16xf32> to vector<4x16xf32>
    %764 = vector.broadcast %762 : vector<1x16xf32> to vector<4x16xf32>
    %765 = arith.mulf %763, %764 : vector<4x16xf32>
    %766 = arith.addf %761, %765 : vector<4x16xf32>
    %767 = vector.extract_strided_slice %20 {offsets = [41, 0], sizes = [1, 16], strides = [1, 1]} : vector<49x16xf32> to vector<1x16xf32>
    %768 = vector.extract_strided_slice %736 {offsets = [6, 0], sizes = [4, 16], strides = [1, 1]} : vector<10x16xf32> to vector<4x16xf32>
    %769 = vector.broadcast %767 : vector<1x16xf32> to vector<4x16xf32>
    %770 = arith.mulf %768, %769 : vector<4x16xf32>
    %771 = arith.addf %766, %770 : vector<4x16xf32>
    %c8 = arith.constant 8 : index
    %c0_83 = arith.constant 0 : index
    %c0_84 = arith.constant 0 : index
    %772 = vector.load %arg12[%c8, %c0_83, %c0_84] : memref<10x10x16xf32, #tpu.memory_space<vmem>>, vector<1x10x16xf32>
    %773 = vector.shape_cast %772 : vector<1x10x16xf32> to vector<10x16xf32>
    %774 = vector.extract_strided_slice %20 {offsets = [42, 0], sizes = [1, 16], strides = [1, 1]} : vector<49x16xf32> to vector<1x16xf32>
    %775 = vector.extract_strided_slice %773 {offsets = [0, 0], sizes = [4, 16], strides = [1, 1]} : vector<10x16xf32> to vector<4x16xf32>
    %776 = vector.broadcast %774 : vector<1x16xf32> to vector<4x16xf32>
    %777 = arith.mulf %775, %776 : vector<4x16xf32>
    %778 = arith.addf %771, %777 : vector<4x16xf32>
    %779 = vector.extract_strided_slice %20 {offsets = [43, 0], sizes = [1, 16], strides = [1, 1]} : vector<49x16xf32> to vector<1x16xf32>
    %780 = vector.extract_strided_slice %773 {offsets = [1, 0], sizes = [4, 16], strides = [1, 1]} : vector<10x16xf32> to vector<4x16xf32>
    %781 = vector.broadcast %779 : vector<1x16xf32> to vector<4x16xf32>
    %782 = arith.mulf %780, %781 : vector<4x16xf32>
    %783 = arith.addf %778, %782 : vector<4x16xf32>
    %784 = vector.extract_strided_slice %20 {offsets = [44, 0], sizes = [1, 16], strides = [1, 1]} : vector<49x16xf32> to vector<1x16xf32>
    %785 = vector.extract_strided_slice %773 {offsets = [2, 0], sizes = [4, 16], strides = [1, 1]} : vector<10x16xf32> to vector<4x16xf32>
    %786 = vector.broadcast %784 : vector<1x16xf32> to vector<4x16xf32>
    %787 = arith.mulf %785, %786 : vector<4x16xf32>
    %788 = arith.addf %783, %787 : vector<4x16xf32>
    %789 = vector.extract_strided_slice %20 {offsets = [45, 0], sizes = [1, 16], strides = [1, 1]} : vector<49x16xf32> to vector<1x16xf32>
    %790 = vector.extract_strided_slice %773 {offsets = [3, 0], sizes = [4, 16], strides = [1, 1]} : vector<10x16xf32> to vector<4x16xf32>
    %791 = vector.broadcast %789 : vector<1x16xf32> to vector<4x16xf32>
    %792 = arith.mulf %790, %791 : vector<4x16xf32>
    %793 = arith.addf %788, %792 : vector<4x16xf32>
    %794 = vector.extract_strided_slice %20 {offsets = [46, 0], sizes = [1, 16], strides = [1, 1]} : vector<49x16xf32> to vector<1x16xf32>
    %795 = vector.extract_strided_slice %773 {offsets = [4, 0], sizes = [4, 16], strides = [1, 1]} : vector<10x16xf32> to vector<4x16xf32>
    %796 = vector.broadcast %794 : vector<1x16xf32> to vector<4x16xf32>
    %797 = arith.mulf %795, %796 : vector<4x16xf32>
    %798 = arith.addf %793, %797 : vector<4x16xf32>
    %799 = vector.extract_strided_slice %20 {offsets = [47, 0], sizes = [1, 16], strides = [1, 1]} : vector<49x16xf32> to vector<1x16xf32>
    %800 = vector.extract_strided_slice %773 {offsets = [5, 0], sizes = [4, 16], strides = [1, 1]} : vector<10x16xf32> to vector<4x16xf32>
    %801 = vector.broadcast %799 : vector<1x16xf32> to vector<4x16xf32>
    %802 = arith.mulf %800, %801 : vector<4x16xf32>
    %803 = arith.addf %798, %802 : vector<4x16xf32>
    %804 = vector.extract_strided_slice %20 {offsets = [48, 0], sizes = [1, 16], strides = [1, 1]} : vector<49x16xf32> to vector<1x16xf32>
    %805 = vector.extract_strided_slice %773 {offsets = [6, 0], sizes = [4, 16], strides = [1, 1]} : vector<10x16xf32> to vector<4x16xf32>
    %806 = vector.broadcast %804 : vector<1x16xf32> to vector<4x16xf32>
    %807 = arith.mulf %805, %806 : vector<4x16xf32>
    %808 = arith.addf %803, %807 : vector<4x16xf32>
    %c0_85 = arith.constant 0 : index
    %c0_86 = arith.constant 0 : index
    %809 = vector.load %arg3[%c0_85, %c0_86] : memref<1x16xf32, #tpu.memory_space<vmem>>, vector<1x16xf32>
    %810 = vector.broadcast %809 : vector<1x16xf32> to vector<4x16xf32>
    %811 = arith.addf %808, %810 : vector<4x16xf32>
    %c8_87 = arith.constant 8 : index
    %c0_88 = arith.constant 0 : index
    %812 = vector.load %arg13[%c8_87, %c0_88] : memref<16x16xf32, #tpu.memory_space<vmem>>, vector<4x16xf32>
    tpu.vector_store %arg13[%c8_87, %c0_88], %811 {strides = array<i32>} : memref<16x16xf32, #tpu.memory_space<vmem>>, vector<4x16xf32>,
    %cst_89 = arith.constant 0.000000e+00 : f32
    %813 = vector.broadcast %cst_89 : f32 to vector<4x16xf32>
    %c3_90 = arith.constant 3 : index
    %c0_91 = arith.constant 0 : index
    %c0_92 = arith.constant 0 : index
    %814 = vector.load %arg12[%c3_90, %c0_91, %c0_92] : memref<10x10x16xf32, #tpu.memory_space<vmem>>, vector<1x10x16xf32>
    %815 = vector.shape_cast %814 : vector<1x10x16xf32> to vector<10x16xf32>
    %816 = vector.extract_strided_slice %20 {offsets = [0, 0], sizes = [1, 16], strides = [1, 1]} : vector<49x16xf32> to vector<1x16xf32>
    %817 = vector.extract_strided_slice %815 {offsets = [0, 0], sizes = [4, 16], strides = [1, 1]} : vector<10x16xf32> to vector<4x16xf32>
    %818 = vector.broadcast %816 : vector<1x16xf32> to vector<4x16xf32>
    %819 = arith.mulf %817, %818 : vector<4x16xf32>
    %820 = arith.addf %813, %819 : vector<4x16xf32>
    %821 = vector.extract_strided_slice %20 {offsets = [1, 0], sizes = [1, 16], strides = [1, 1]} : vector<49x16xf32> to vector<1x16xf32>
    %822 = vector.extract_strided_slice %815 {offsets = [1, 0], sizes = [4, 16], strides = [1, 1]} : vector<10x16xf32> to vector<4x16xf32>
    %823 = vector.broadcast %821 : vector<1x16xf32> to vector<4x16xf32>
    %824 = arith.mulf %822, %823 : vector<4x16xf32>
    %825 = arith.addf %820, %824 : vector<4x16xf32>
    %826 = vector.extract_strided_slice %20 {offsets = [2, 0], sizes = [1, 16], strides = [1, 1]} : vector<49x16xf32> to vector<1x16xf32>
    %827 = vector.extract_strided_slice %815 {offsets = [2, 0], sizes = [4, 16], strides = [1, 1]} : vector<10x16xf32> to vector<4x16xf32>
    %828 = vector.broadcast %826 : vector<1x16xf32> to vector<4x16xf32>
    %829 = arith.mulf %827, %828 : vector<4x16xf32>
    %830 = arith.addf %825, %829 : vector<4x16xf32>
    %831 = vector.extract_strided_slice %20 {offsets = [3, 0], sizes = [1, 16], strides = [1, 1]} : vector<49x16xf32> to vector<1x16xf32>
    %832 = vector.extract_strided_slice %815 {offsets = [3, 0], sizes = [4, 16], strides = [1, 1]} : vector<10x16xf32> to vector<4x16xf32>
    %833 = vector.broadcast %831 : vector<1x16xf32> to vector<4x16xf32>
    %834 = arith.mulf %832, %833 : vector<4x16xf32>
    %835 = arith.addf %830, %834 : vector<4x16xf32>
    %836 = vector.extract_strided_slice %20 {offsets = [4, 0], sizes = [1, 16], strides = [1, 1]} : vector<49x16xf32> to vector<1x16xf32>
    %837 = vector.extract_strided_slice %815 {offsets = [4, 0], sizes = [4, 16], strides = [1, 1]} : vector<10x16xf32> to vector<4x16xf32>
    %838 = vector.broadcast %836 : vector<1x16xf32> to vector<4x16xf32>
    %839 = arith.mulf %837, %838 : vector<4x16xf32>
    %840 = arith.addf %835, %839 : vector<4x16xf32>
    %841 = vector.extract_strided_slice %20 {offsets = [5, 0], sizes = [1, 16], strides = [1, 1]} : vector<49x16xf32> to vector<1x16xf32>
    %842 = vector.extract_strided_slice %815 {offsets = [5, 0], sizes = [4, 16], strides = [1, 1]} : vector<10x16xf32> to vector<4x16xf32>
    %843 = vector.broadcast %841 : vector<1x16xf32> to vector<4x16xf32>
    %844 = arith.mulf %842, %843 : vector<4x16xf32>
    %845 = arith.addf %840, %844 : vector<4x16xf32>
    %846 = vector.extract_strided_slice %20 {offsets = [6, 0], sizes = [1, 16], strides = [1, 1]} : vector<49x16xf32> to vector<1x16xf32>
    %847 = vector.extract_strided_slice %815 {offsets = [6, 0], sizes = [4, 16], strides = [1, 1]} : vector<10x16xf32> to vector<4x16xf32>
    %848 = vector.broadcast %846 : vector<1x16xf32> to vector<4x16xf32>
    %849 = arith.mulf %847, %848 : vector<4x16xf32>
    %850 = arith.addf %845, %849 : vector<4x16xf32>
    %c4_93 = arith.constant 4 : index
    %c0_94 = arith.constant 0 : index
    %c0_95 = arith.constant 0 : index
    %851 = vector.load %arg12[%c4_93, %c0_94, %c0_95] : memref<10x10x16xf32, #tpu.memory_space<vmem>>, vector<1x10x16xf32>
    %852 = vector.shape_cast %851 : vector<1x10x16xf32> to vector<10x16xf32>
    %853 = vector.extract_strided_slice %20 {offsets = [7, 0], sizes = [1, 16], strides = [1, 1]} : vector<49x16xf32> to vector<1x16xf32>
    %854 = vector.extract_strided_slice %852 {offsets = [0, 0], sizes = [4, 16], strides = [1, 1]} : vector<10x16xf32> to vector<4x16xf32>
    %855 = vector.broadcast %853 : vector<1x16xf32> to vector<4x16xf32>
    %856 = arith.mulf %854, %855 : vector<4x16xf32>
    %857 = arith.addf %850, %856 : vector<4x16xf32>
    %858 = vector.extract_strided_slice %20 {offsets = [8, 0], sizes = [1, 16], strides = [1, 1]} : vector<49x16xf32> to vector<1x16xf32>
    %859 = vector.extract_strided_slice %852 {offsets = [1, 0], sizes = [4, 16], strides = [1, 1]} : vector<10x16xf32> to vector<4x16xf32>
    %860 = vector.broadcast %858 : vector<1x16xf32> to vector<4x16xf32>
    %861 = arith.mulf %859, %860 : vector<4x16xf32>
    %862 = arith.addf %857, %861 : vector<4x16xf32>
    %863 = vector.extract_strided_slice %20 {offsets = [9, 0], sizes = [1, 16], strides = [1, 1]} : vector<49x16xf32> to vector<1x16xf32>
    %864 = vector.extract_strided_slice %852 {offsets = [2, 0], sizes = [4, 16], strides = [1, 1]} : vector<10x16xf32> to vector<4x16xf32>
    %865 = vector.broadcast %863 : vector<1x16xf32> to vector<4x16xf32>
    %866 = arith.mulf %864, %865 : vector<4x16xf32>
    %867 = arith.addf %862, %866 : vector<4x16xf32>
    %868 = vector.extract_strided_slice %20 {offsets = [10, 0], sizes = [1, 16], strides = [1, 1]} : vector<49x16xf32> to vector<1x16xf32>
    %869 = vector.extract_strided_slice %852 {offsets = [3, 0], sizes = [4, 16], strides = [1, 1]} : vector<10x16xf32> to vector<4x16xf32>
    %870 = vector.broadcast %868 : vector<1x16xf32> to vector<4x16xf32>
    %871 = arith.mulf %869, %870 : vector<4x16xf32>
    %872 = arith.addf %867, %871 : vector<4x16xf32>
    %873 = vector.extract_strided_slice %20 {offsets = [11, 0], sizes = [1, 16], strides = [1, 1]} : vector<49x16xf32> to vector<1x16xf32>
    %874 = vector.extract_strided_slice %852 {offsets = [4, 0], sizes = [4, 16], strides = [1, 1]} : vector<10x16xf32> to vector<4x16xf32>
    %875 = vector.broadcast %873 : vector<1x16xf32> to vector<4x16xf32>
    %876 = arith.mulf %874, %875 : vector<4x16xf32>
    %877 = arith.addf %872, %876 : vector<4x16xf32>
    %878 = vector.extract_strided_slice %20 {offsets = [12, 0], sizes = [1, 16], strides = [1, 1]} : vector<49x16xf32> to vector<1x16xf32>
    %879 = vector.extract_strided_slice %852 {offsets = [5, 0], sizes = [4, 16], strides = [1, 1]} : vector<10x16xf32> to vector<4x16xf32>
    %880 = vector.broadcast %878 : vector<1x16xf32> to vector<4x16xf32>
    %881 = arith.mulf %879, %880 : vector<4x16xf32>
    %882 = arith.addf %877, %881 : vector<4x16xf32>
    %883 = vector.extract_strided_slice %20 {offsets = [13, 0], sizes = [1, 16], strides = [1, 1]} : vector<49x16xf32> to vector<1x16xf32>
    %884 = vector.extract_strided_slice %852 {offsets = [6, 0], sizes = [4, 16], strides = [1, 1]} : vector<10x16xf32> to vector<4x16xf32>
    %885 = vector.broadcast %883 : vector<1x16xf32> to vector<4x16xf32>
    %886 = arith.mulf %884, %885 : vector<4x16xf32>
    %887 = arith.addf %882, %886 : vector<4x16xf32>
    %c5_96 = arith.constant 5 : index
    %c0_97 = arith.constant 0 : index
    %c0_98 = arith.constant 0 : index
    %888 = vector.load %arg12[%c5_96, %c0_97, %c0_98] : memref<10x10x16xf32, #tpu.memory_space<vmem>>, vector<1x10x16xf32>
    %889 = vector.shape_cast %888 : vector<1x10x16xf32> to vector<10x16xf32>
    %890 = vector.extract_strided_slice %20 {offsets = [14, 0], sizes = [1, 16], strides = [1, 1]} : vector<49x16xf32> to vector<1x16xf32>
    %891 = vector.extract_strided_slice %889 {offsets = [0, 0], sizes = [4, 16], strides = [1, 1]} : vector<10x16xf32> to vector<4x16xf32>
    %892 = vector.broadcast %890 : vector<1x16xf32> to vector<4x16xf32>
    %893 = arith.mulf %891, %892 : vector<4x16xf32>
    %894 = arith.addf %887, %893 : vector<4x16xf32>
    %895 = vector.extract_strided_slice %20 {offsets = [15, 0], sizes = [1, 16], strides = [1, 1]} : vector<49x16xf32> to vector<1x16xf32>
    %896 = vector.extract_strided_slice %889 {offsets = [1, 0], sizes = [4, 16], strides = [1, 1]} : vector<10x16xf32> to vector<4x16xf32>
    %897 = vector.broadcast %895 : vector<1x16xf32> to vector<4x16xf32>
    %898 = arith.mulf %896, %897 : vector<4x16xf32>
    %899 = arith.addf %894, %898 : vector<4x16xf32>
    %900 = vector.extract_strided_slice %20 {offsets = [16, 0], sizes = [1, 16], strides = [1, 1]} : vector<49x16xf32> to vector<1x16xf32>
    %901 = vector.extract_strided_slice %889 {offsets = [2, 0], sizes = [4, 16], strides = [1, 1]} : vector<10x16xf32> to vector<4x16xf32>
    %902 = vector.broadcast %900 : vector<1x16xf32> to vector<4x16xf32>
    %903 = arith.mulf %901, %902 : vector<4x16xf32>
    %904 = arith.addf %899, %903 : vector<4x16xf32>
    %905 = vector.extract_strided_slice %20 {offsets = [17, 0], sizes = [1, 16], strides = [1, 1]} : vector<49x16xf32> to vector<1x16xf32>
    %906 = vector.extract_strided_slice %889 {offsets = [3, 0], sizes = [4, 16], strides = [1, 1]} : vector<10x16xf32> to vector<4x16xf32>
    %907 = vector.broadcast %905 : vector<1x16xf32> to vector<4x16xf32>
    %908 = arith.mulf %906, %907 : vector<4x16xf32>
    %909 = arith.addf %904, %908 : vector<4x16xf32>
    %910 = vector.extract_strided_slice %20 {offsets = [18, 0], sizes = [1, 16], strides = [1, 1]} : vector<49x16xf32> to vector<1x16xf32>
    %911 = vector.extract_strided_slice %889 {offsets = [4, 0], sizes = [4, 16], strides = [1, 1]} : vector<10x16xf32> to vector<4x16xf32>
    %912 = vector.broadcast %910 : vector<1x16xf32> to vector<4x16xf32>
    %913 = arith.mulf %911, %912 : vector<4x16xf32>
    %914 = arith.addf %909, %913 : vector<4x16xf32>
    %915 = vector.extract_strided_slice %20 {offsets = [19, 0], sizes = [1, 16], strides = [1, 1]} : vector<49x16xf32> to vector<1x16xf32>
    %916 = vector.extract_strided_slice %889 {offsets = [5, 0], sizes = [4, 16], strides = [1, 1]} : vector<10x16xf32> to vector<4x16xf32>
    %917 = vector.broadcast %915 : vector<1x16xf32> to vector<4x16xf32>
    %918 = arith.mulf %916, %917 : vector<4x16xf32>
    %919 = arith.addf %914, %918 : vector<4x16xf32>
    %920 = vector.extract_strided_slice %20 {offsets = [20, 0], sizes = [1, 16], strides = [1, 1]} : vector<49x16xf32> to vector<1x16xf32>
    %921 = vector.extract_strided_slice %889 {offsets = [6, 0], sizes = [4, 16], strides = [1, 1]} : vector<10x16xf32> to vector<4x16xf32>
    %922 = vector.broadcast %920 : vector<1x16xf32> to vector<4x16xf32>
    %923 = arith.mulf %921, %922 : vector<4x16xf32>
    %924 = arith.addf %919, %923 : vector<4x16xf32>
    %c6_99 = arith.constant 6 : index
    %c0_100 = arith.constant 0 : index
    %c0_101 = arith.constant 0 : index
    %925 = vector.load %arg12[%c6_99, %c0_100, %c0_101] : memref<10x10x16xf32, #tpu.memory_space<vmem>>, vector<1x10x16xf32>
    %926 = vector.shape_cast %925 : vector<1x10x16xf32> to vector<10x16xf32>
    %927 = vector.extract_strided_slice %20 {offsets = [21, 0], sizes = [1, 16], strides = [1, 1]} : vector<49x16xf32> to vector<1x16xf32>
    %928 = vector.extract_strided_slice %926 {offsets = [0, 0], sizes = [4, 16], strides = [1, 1]} : vector<10x16xf32> to vector<4x16xf32>
    %929 = vector.broadcast %927 : vector<1x16xf32> to vector<4x16xf32>
    %930 = arith.mulf %928, %929 : vector<4x16xf32>
    %931 = arith.addf %924, %930 : vector<4x16xf32>
    %932 = vector.extract_strided_slice %20 {offsets = [22, 0], sizes = [1, 16], strides = [1, 1]} : vector<49x16xf32> to vector<1x16xf32>
    %933 = vector.extract_strided_slice %926 {offsets = [1, 0], sizes = [4, 16], strides = [1, 1]} : vector<10x16xf32> to vector<4x16xf32>
    %934 = vector.broadcast %932 : vector<1x16xf32> to vector<4x16xf32>
    %935 = arith.mulf %933, %934 : vector<4x16xf32>
    %936 = arith.addf %931, %935 : vector<4x16xf32>
    %937 = vector.extract_strided_slice %20 {offsets = [23, 0], sizes = [1, 16], strides = [1, 1]} : vector<49x16xf32> to vector<1x16xf32>
    %938 = vector.extract_strided_slice %926 {offsets = [2, 0], sizes = [4, 16], strides = [1, 1]} : vector<10x16xf32> to vector<4x16xf32>
    %939 = vector.broadcast %937 : vector<1x16xf32> to vector<4x16xf32>
    %940 = arith.mulf %938, %939 : vector<4x16xf32>
    %941 = arith.addf %936, %940 : vector<4x16xf32>
    %942 = vector.extract_strided_slice %20 {offsets = [24, 0], sizes = [1, 16], strides = [1, 1]} : vector<49x16xf32> to vector<1x16xf32>
    %943 = vector.extract_strided_slice %926 {offsets = [3, 0], sizes = [4, 16], strides = [1, 1]} : vector<10x16xf32> to vector<4x16xf32>
    %944 = vector.broadcast %942 : vector<1x16xf32> to vector<4x16xf32>
    %945 = arith.mulf %943, %944 : vector<4x16xf32>
    %946 = arith.addf %941, %945 : vector<4x16xf32>
    %947 = vector.extract_strided_slice %20 {offsets = [25, 0], sizes = [1, 16], strides = [1, 1]} : vector<49x16xf32> to vector<1x16xf32>
    %948 = vector.extract_strided_slice %926 {offsets = [4, 0], sizes = [4, 16], strides = [1, 1]} : vector<10x16xf32> to vector<4x16xf32>
    %949 = vector.broadcast %947 : vector<1x16xf32> to vector<4x16xf32>
    %950 = arith.mulf %948, %949 : vector<4x16xf32>
    %951 = arith.addf %946, %950 : vector<4x16xf32>
    %952 = vector.extract_strided_slice %20 {offsets = [26, 0], sizes = [1, 16], strides = [1, 1]} : vector<49x16xf32> to vector<1x16xf32>
    %953 = vector.extract_strided_slice %926 {offsets = [5, 0], sizes = [4, 16], strides = [1, 1]} : vector<10x16xf32> to vector<4x16xf32>
    %954 = vector.broadcast %952 : vector<1x16xf32> to vector<4x16xf32>
    %955 = arith.mulf %953, %954 : vector<4x16xf32>
    %956 = arith.addf %951, %955 : vector<4x16xf32>
    %957 = vector.extract_strided_slice %20 {offsets = [27, 0], sizes = [1, 16], strides = [1, 1]} : vector<49x16xf32> to vector<1x16xf32>
    %958 = vector.extract_strided_slice %926 {offsets = [6, 0], sizes = [4, 16], strides = [1, 1]} : vector<10x16xf32> to vector<4x16xf32>
    %959 = vector.broadcast %957 : vector<1x16xf32> to vector<4x16xf32>
    %960 = arith.mulf %958, %959 : vector<4x16xf32>
    %961 = arith.addf %956, %960 : vector<4x16xf32>
    %c7_102 = arith.constant 7 : index
    %c0_103 = arith.constant 0 : index
    %c0_104 = arith.constant 0 : index
    %962 = vector.load %arg12[%c7_102, %c0_103, %c0_104] : memref<10x10x16xf32, #tpu.memory_space<vmem>>, vector<1x10x16xf32>
    %963 = vector.shape_cast %962 : vector<1x10x16xf32> to vector<10x16xf32>
    %964 = vector.extract_strided_slice %20 {offsets = [28, 0], sizes = [1, 16], strides = [1, 1]} : vector<49x16xf32> to vector<1x16xf32>
    %965 = vector.extract_strided_slice %963 {offsets = [0, 0], sizes = [4, 16], strides = [1, 1]} : vector<10x16xf32> to vector<4x16xf32>
    %966 = vector.broadcast %964 : vector<1x16xf32> to vector<4x16xf32>
    %967 = arith.mulf %965, %966 : vector<4x16xf32>
    %968 = arith.addf %961, %967 : vector<4x16xf32>
    %969 = vector.extract_strided_slice %20 {offsets = [29, 0], sizes = [1, 16], strides = [1, 1]} : vector<49x16xf32> to vector<1x16xf32>
    %970 = vector.extract_strided_slice %963 {offsets = [1, 0], sizes = [4, 16], strides = [1, 1]} : vector<10x16xf32> to vector<4x16xf32>
    %971 = vector.broadcast %969 : vector<1x16xf32> to vector<4x16xf32>
    %972 = arith.mulf %970, %971 : vector<4x16xf32>
    %973 = arith.addf %968, %972 : vector<4x16xf32>
    %974 = vector.extract_strided_slice %20 {offsets = [30, 0], sizes = [1, 16], strides = [1, 1]} : vector<49x16xf32> to vector<1x16xf32>
    %975 = vector.extract_strided_slice %963 {offsets = [2, 0], sizes = [4, 16], strides = [1, 1]} : vector<10x16xf32> to vector<4x16xf32>
    %976 = vector.broadcast %974 : vector<1x16xf32> to vector<4x16xf32>
    %977 = arith.mulf %975, %976 : vector<4x16xf32>
    %978 = arith.addf %973, %977 : vector<4x16xf32>
    %979 = vector.extract_strided_slice %20 {offsets = [31, 0], sizes = [1, 16], strides = [1, 1]} : vector<49x16xf32> to vector<1x16xf32>
    %980 = vector.extract_strided_slice %963 {offsets = [3, 0], sizes = [4, 16], strides = [1, 1]} : vector<10x16xf32> to vector<4x16xf32>
    %981 = vector.broadcast %979 : vector<1x16xf32> to vector<4x16xf32>
    %982 = arith.mulf %980, %981 : vector<4x16xf32>
    %983 = arith.addf %978, %982 : vector<4x16xf32>
    %984 = vector.extract_strided_slice %20 {offsets = [32, 0], sizes = [1, 16], strides = [1, 1]} : vector<49x16xf32> to vector<1x16xf32>
    %985 = vector.extract_strided_slice %963 {offsets = [4, 0], sizes = [4, 16], strides = [1, 1]} : vector<10x16xf32> to vector<4x16xf32>
    %986 = vector.broadcast %984 : vector<1x16xf32> to vector<4x16xf32>
    %987 = arith.mulf %985, %986 : vector<4x16xf32>
    %988 = arith.addf %983, %987 : vector<4x16xf32>
    %989 = vector.extract_strided_slice %20 {offsets = [33, 0], sizes = [1, 16], strides = [1, 1]} : vector<49x16xf32> to vector<1x16xf32>
    %990 = vector.extract_strided_slice %963 {offsets = [5, 0], sizes = [4, 16], strides = [1, 1]} : vector<10x16xf32> to vector<4x16xf32>
    %991 = vector.broadcast %989 : vector<1x16xf32> to vector<4x16xf32>
    %992 = arith.mulf %990, %991 : vector<4x16xf32>
    %993 = arith.addf %988, %992 : vector<4x16xf32>
    %994 = vector.extract_strided_slice %20 {offsets = [34, 0], sizes = [1, 16], strides = [1, 1]} : vector<49x16xf32> to vector<1x16xf32>
    %995 = vector.extract_strided_slice %963 {offsets = [6, 0], sizes = [4, 16], strides = [1, 1]} : vector<10x16xf32> to vector<4x16xf32>
    %996 = vector.broadcast %994 : vector<1x16xf32> to vector<4x16xf32>
    %997 = arith.mulf %995, %996 : vector<4x16xf32>
    %998 = arith.addf %993, %997 : vector<4x16xf32>
    %c8_105 = arith.constant 8 : index
    %c0_106 = arith.constant 0 : index
    %c0_107 = arith.constant 0 : index
    %999 = vector.load %arg12[%c8_105, %c0_106, %c0_107] : memref<10x10x16xf32, #tpu.memory_space<vmem>>, vector<1x10x16xf32>
    %1000 = vector.shape_cast %999 : vector<1x10x16xf32> to vector<10x16xf32>
    %1001 = vector.extract_strided_slice %20 {offsets = [35, 0], sizes = [1, 16], strides = [1, 1]} : vector<49x16xf32> to vector<1x16xf32>
    %1002 = vector.extract_strided_slice %1000 {offsets = [0, 0], sizes = [4, 16], strides = [1, 1]} : vector<10x16xf32> to vector<4x16xf32>
    %1003 = vector.broadcast %1001 : vector<1x16xf32> to vector<4x16xf32>
    %1004 = arith.mulf %1002, %1003 : vector<4x16xf32>
    %1005 = arith.addf %998, %1004 : vector<4x16xf32>
    %1006 = vector.extract_strided_slice %20 {offsets = [36, 0], sizes = [1, 16], strides = [1, 1]} : vector<49x16xf32> to vector<1x16xf32>
    %1007 = vector.extract_strided_slice %1000 {offsets = [1, 0], sizes = [4, 16], strides = [1, 1]} : vector<10x16xf32> to vector<4x16xf32>
    %1008 = vector.broadcast %1006 : vector<1x16xf32> to vector<4x16xf32>
    %1009 = arith.mulf %1007, %1008 : vector<4x16xf32>
    %1010 = arith.addf %1005, %1009 : vector<4x16xf32>
    %1011 = vector.extract_strided_slice %20 {offsets = [37, 0], sizes = [1, 16], strides = [1, 1]} : vector<49x16xf32> to vector<1x16xf32>
    %1012 = vector.extract_strided_slice %1000 {offsets = [2, 0], sizes = [4, 16], strides = [1, 1]} : vector<10x16xf32> to vector<4x16xf32>
    %1013 = vector.broadcast %1011 : vector<1x16xf32> to vector<4x16xf32>
    %1014 = arith.mulf %1012, %1013 : vector<4x16xf32>
    %1015 = arith.addf %1010, %1014 : vector<4x16xf32>
    %1016 = vector.extract_strided_slice %20 {offsets = [38, 0], sizes = [1, 16], strides = [1, 1]} : vector<49x16xf32> to vector<1x16xf32>
    %1017 = vector.extract_strided_slice %1000 {offsets = [3, 0], sizes = [4, 16], strides = [1, 1]} : vector<10x16xf32> to vector<4x16xf32>
    %1018 = vector.broadcast %1016 : vector<1x16xf32> to vector<4x16xf32>
    %1019 = arith.mulf %1017, %1018 : vector<4x16xf32>
    %1020 = arith.addf %1015, %1019 : vector<4x16xf32>
    %1021 = vector.extract_strided_slice %20 {offsets = [39, 0], sizes = [1, 16], strides = [1, 1]} : vector<49x16xf32> to vector<1x16xf32>
    %1022 = vector.extract_strided_slice %1000 {offsets = [4, 0], sizes = [4, 16], strides = [1, 1]} : vector<10x16xf32> to vector<4x16xf32>
    %1023 = vector.broadcast %1021 : vector<1x16xf32> to vector<4x16xf32>
    %1024 = arith.mulf %1022, %1023 : vector<4x16xf32>
    %1025 = arith.addf %1020, %1024 : vector<4x16xf32>
    %1026 = vector.extract_strided_slice %20 {offsets = [40, 0], sizes = [1, 16], strides = [1, 1]} : vector<49x16xf32> to vector<1x16xf32>
    %1027 = vector.extract_strided_slice %1000 {offsets = [5, 0], sizes = [4, 16], strides = [1, 1]} : vector<10x16xf32> to vector<4x16xf32>
    %1028 = vector.broadcast %1026 : vector<1x16xf32> to vector<4x16xf32>
    %1029 = arith.mulf %1027, %1028 : vector<4x16xf32>
    %1030 = arith.addf %1025, %1029 : vector<4x16xf32>
    %1031 = vector.extract_strided_slice %20 {offsets = [41, 0], sizes = [1, 16], strides = [1, 1]} : vector<49x16xf32> to vector<1x16xf32>
    %1032 = vector.extract_strided_slice %1000 {offsets = [6, 0], sizes = [4, 16], strides = [1, 1]} : vector<10x16xf32> to vector<4x16xf32>
    %1033 = vector.broadcast %1031 : vector<1x16xf32> to vector<4x16xf32>
    %1034 = arith.mulf %1032, %1033 : vector<4x16xf32>
    %1035 = arith.addf %1030, %1034 : vector<4x16xf32>
    %c9 = arith.constant 9 : index
    %c0_108 = arith.constant 0 : index
    %c0_109 = arith.constant 0 : index
    %1036 = vector.load %arg12[%c9, %c0_108, %c0_109] : memref<10x10x16xf32, #tpu.memory_space<vmem>>, vector<1x10x16xf32>
    %1037 = vector.shape_cast %1036 : vector<1x10x16xf32> to vector<10x16xf32>
    %1038 = vector.extract_strided_slice %20 {offsets = [42, 0], sizes = [1, 16], strides = [1, 1]} : vector<49x16xf32> to vector<1x16xf32>
    %1039 = vector.extract_strided_slice %1037 {offsets = [0, 0], sizes = [4, 16], strides = [1, 1]} : vector<10x16xf32> to vector<4x16xf32>
    %1040 = vector.broadcast %1038 : vector<1x16xf32> to vector<4x16xf32>
    %1041 = arith.mulf %1039, %1040 : vector<4x16xf32>
    %1042 = arith.addf %1035, %1041 : vector<4x16xf32>
    %1043 = vector.extract_strided_slice %20 {offsets = [43, 0], sizes = [1, 16], strides = [1, 1]} : vector<49x16xf32> to vector<1x16xf32>
    %1044 = vector.extract_strided_slice %1037 {offsets = [1, 0], sizes = [4, 16], strides = [1, 1]} : vector<10x16xf32> to vector<4x16xf32>
    %1045 = vector.broadcast %1043 : vector<1x16xf32> to vector<4x16xf32>
    %1046 = arith.mulf %1044, %1045 : vector<4x16xf32>
    %1047 = arith.addf %1042, %1046 : vector<4x16xf32>
    %1048 = vector.extract_strided_slice %20 {offsets = [44, 0], sizes = [1, 16], strides = [1, 1]} : vector<49x16xf32> to vector<1x16xf32>
    %1049 = vector.extract_strided_slice %1037 {offsets = [2, 0], sizes = [4, 16], strides = [1, 1]} : vector<10x16xf32> to vector<4x16xf32>
    %1050 = vector.broadcast %1048 : vector<1x16xf32> to vector<4x16xf32>
    %1051 = arith.mulf %1049, %1050 : vector<4x16xf32>
    %1052 = arith.addf %1047, %1051 : vector<4x16xf32>
    %1053 = vector.extract_strided_slice %20 {offsets = [45, 0], sizes = [1, 16], strides = [1, 1]} : vector<49x16xf32> to vector<1x16xf32>
    %1054 = vector.extract_strided_slice %1037 {offsets = [3, 0], sizes = [4, 16], strides = [1, 1]} : vector<10x16xf32> to vector<4x16xf32>
    %1055 = vector.broadcast %1053 : vector<1x16xf32> to vector<4x16xf32>
    %1056 = arith.mulf %1054, %1055 : vector<4x16xf32>
    %1057 = arith.addf %1052, %1056 : vector<4x16xf32>
    %1058 = vector.extract_strided_slice %20 {offsets = [46, 0], sizes = [1, 16], strides = [1, 1]} : vector<49x16xf32> to vector<1x16xf32>
    %1059 = vector.extract_strided_slice %1037 {offsets = [4, 0], sizes = [4, 16], strides = [1, 1]} : vector<10x16xf32> to vector<4x16xf32>
    %1060 = vector.broadcast %1058 : vector<1x16xf32> to vector<4x16xf32>
    %1061 = arith.mulf %1059, %1060 : vector<4x16xf32>
    %1062 = arith.addf %1057, %1061 : vector<4x16xf32>
    %1063 = vector.extract_strided_slice %20 {offsets = [47, 0], sizes = [1, 16], strides = [1, 1]} : vector<49x16xf32> to vector<1x16xf32>
    %1064 = vector.extract_strided_slice %1037 {offsets = [5, 0], sizes = [4, 16], strides = [1, 1]} : vector<10x16xf32> to vector<4x16xf32>
    %1065 = vector.broadcast %1063 : vector<1x16xf32> to vector<4x16xf32>
    %1066 = arith.mulf %1064, %1065 : vector<4x16xf32>
    %1067 = arith.addf %1062, %1066 : vector<4x16xf32>
    %1068 = vector.extract_strided_slice %20 {offsets = [48, 0], sizes = [1, 16], strides = [1, 1]} : vector<49x16xf32> to vector<1x16xf32>
    %1069 = vector.extract_strided_slice %1037 {offsets = [6, 0], sizes = [4, 16], strides = [1, 1]} : vector<10x16xf32> to vector<4x16xf32>
    %1070 = vector.broadcast %1068 : vector<1x16xf32> to vector<4x16xf32>
    %1071 = arith.mulf %1069, %1070 : vector<4x16xf32>
    %1072 = arith.addf %1067, %1071 : vector<4x16xf32>
    %c0_110 = arith.constant 0 : index
    %c0_111 = arith.constant 0 : index
    %1073 = vector.load %arg3[%c0_110, %c0_111] : memref<1x16xf32, #tpu.memory_space<vmem>>, vector<1x16xf32>
    %1074 = vector.broadcast %1073 : vector<1x16xf32> to vector<4x16xf32>
    %1075 = arith.addf %1072, %1074 : vector<4x16xf32>
    %c12 = arith.constant 12 : index
    %c0_112 = arith.constant 0 : index
    %1076 = vector.load %arg13[%c12, %c0_112] : memref<16x16xf32, #tpu.memory_space<vmem>>, vector<4x16xf32>
    tpu.vector_store %arg13[%c12, %c0_112], %1075 {strides = array<i32>} : memref<16x16xf32, #tpu.memory_space<vmem>>, vector<4x16xf32>,
    %c0_113 = arith.constant 0 : index
    %c0_114 = arith.constant 0 : index
    %1077 = vector.load %arg13[%c0_113, %c0_114] : memref<16x16xf32, #tpu.memory_space<vmem>>, vector<16x16xf32>
    %c0_115 = arith.constant 0 : index
    %c0_116 = arith.constant 0 : index
    %1078 = vector.load %arg4[%c0_115, %c0_116] : memref<1x16xf32, #tpu.memory_space<vmem>>, vector<1x16xf32>
    %c0_117 = arith.constant 0 : index
    %c0_118 = arith.constant 0 : index
    %1079 = vector.load %arg5[%c0_117, %c0_118] : memref<1x16xf32, #tpu.memory_space<vmem>>, vector<1x16xf32>
    %cst_119 = arith.constant dense<0.000000e+00> : vector<16xf32>
    %1080 = vector.multi_reduction <add>, %1077, %cst_119 [1] : vector<16x16xf32> to vector<16xf32>
    %1081 = vector.shape_cast %1080 : vector<16xf32> to vector<16x1xf32>
    %cst_120 = arith.constant 1.600000e+01 : f32
    %1082 = vector.broadcast %cst_120 : f32 to vector<16x1xf32>
    %1083 = arith.divf %1081, %1082 : vector<16x1xf32>
    %1084 = vector.broadcast %1083 : vector<16x1xf32> to vector<16x16xf32>
    %1085 = arith.subf %1077, %1084 : vector<16x16xf32>
    %1086 = arith.mulf %1085, %1085 : vector<16x16xf32>
    %cst_121 = arith.constant dense<0.000000e+00> : vector<16xf32>
    %1087 = vector.multi_reduction <add>, %1086, %cst_121 [1] : vector<16x16xf32> to vector<16xf32>
    %1088 = vector.shape_cast %1087 : vector<16xf32> to vector<16x1xf32>
    %cst_122 = arith.constant 1.600000e+01 : f32
    %1089 = vector.broadcast %cst_122 : f32 to vector<16x1xf32>
    %1090 = arith.divf %1088, %1089 : vector<16x1xf32>
    %cst_123 = arith.constant 9.99999997E-7 : f32
    %1091 = vector.broadcast %cst_123 : f32 to vector<16x1xf32>
    %1092 = arith.addf %1090, %1091 : vector<16x1xf32>
    %1093 = math.rsqrt %1092 : vector<16x1xf32>
    %1094 = vector.broadcast %1093 : vector<16x1xf32> to vector<16x16xf32>
    %1095 = arith.mulf %1085, %1094 : vector<16x16xf32>
    %1096 = vector.broadcast %1078 : vector<1x16xf32> to vector<16x16xf32>
    %1097 = arith.mulf %1095, %1096 : vector<16x16xf32>
    %1098 = vector.broadcast %1079 : vector<1x16xf32> to vector<16x16xf32>
    %1099 = arith.addf %1097, %1098 : vector<16x16xf32>
    %c0_124 = arith.constant 0 : index
    %c0_125 = arith.constant 0 : index
    %1100 = vector.load %arg6[%c0_124, %c0_125] : memref<16x64xf32, #tpu.memory_space<vmem>>, vector<16x64xf32>
    %cst_126 = arith.constant dense<0.000000e+00> : vector<16x64xf32>
    %1101 = tpu.matmul %1099, %1100, %cst_126 {dimension_numbers = #tpu.dot_dimension_numbers<[1], [0], [0], [1], [0, 0, 1, 1], [], []>} : vector<16x16xf32>, vector<16x64xf32>, vector<16x64xf32> -> vector<16x64xf32>
    %c0_127 = arith.constant 0 : index
    %c0_128 = arith.constant 0 : index
    %1102 = vector.load %arg7[%c0_127, %c0_128] : memref<1x64xf32, #tpu.memory_space<vmem>>, vector<1x64xf32>
    %1103 = vector.broadcast %1102 : vector<1x64xf32> to vector<16x64xf32>
    %1104 = arith.addf %1101, %1103 : vector<16x64xf32>
    %cst_129 = arith.constant 5.000000e-01 : f32
    %1105 = vector.broadcast %cst_129 : f32 to vector<16x64xf32>
    %1106 = arith.mulf %1105, %1104 : vector<16x64xf32>
    %cst_130 = arith.constant 0.707106769 : f32
    %1107 = vector.broadcast %cst_130 : f32 to vector<16x64xf32>
    %1108 = arith.mulf %1104, %1107 : vector<16x64xf32>
    %1109 = math.absf %1108 : vector<16x64xf32>
    %cst_131 = arith.constant 0.327591091 : f32
    %1110 = vector.broadcast %cst_131 : f32 to vector<16x64xf32>
    %1111 = arith.mulf %1110, %1109 : vector<16x64xf32>
    %cst_132 = arith.constant 1.000000e+00 : f32
    %1112 = vector.broadcast %cst_132 : f32 to vector<16x64xf32>
    %1113 = arith.addf %1112, %1111 : vector<16x64xf32>
    %cst_133 = arith.constant 1.000000e+00 : f32
    %1114 = vector.broadcast %cst_133 : f32 to vector<16x64xf32>
    %1115 = arith.divf %1114, %1113 : vector<16x64xf32>
    %cst_134 = arith.constant 1.06140542 : f32
    %1116 = vector.broadcast %cst_134 : f32 to vector<16x64xf32>
    %1117 = arith.mulf %1115, %1116 : vector<16x64xf32>
    %cst_135 = arith.constant -1.45315206 : f32
    %1118 = vector.broadcast %cst_135 : f32 to vector<16x64xf32>
    %1119 = arith.addf %1118, %1117 : vector<16x64xf32>
    %1120 = arith.mulf %1115, %1119 : vector<16x64xf32>
    %cst_136 = arith.constant 1.42141378 : f32
    %1121 = vector.broadcast %cst_136 : f32 to vector<16x64xf32>
    %1122 = arith.addf %1121, %1120 : vector<16x64xf32>
    %1123 = arith.mulf %1115, %1122 : vector<16x64xf32>
    %cst_137 = arith.constant -0.284496725 : f32
    %1124 = vector.broadcast %cst_137 : f32 to vector<16x64xf32>
    %1125 = arith.addf %1124, %1123 : vector<16x64xf32>
    %1126 = arith.mulf %1115, %1125 : vector<16x64xf32>
    %cst_138 = arith.constant 0.254829586 : f32
    %1127 = vector.broadcast %cst_138 : f32 to vector<16x64xf32>
    %1128 = arith.addf %1127, %1126 : vector<16x64xf32>
    %1129 = arith.mulf %1115, %1128 : vector<16x64xf32>
    %cst_139 = arith.constant 0.000000e+00 : f32
    %1130 = vector.broadcast %cst_139 : f32 to vector<16x64xf32>
    %1131 = arith.subf %1130, %1109 : vector<16x64xf32>
    %1132 = arith.mulf %1131, %1109 : vector<16x64xf32>
    %1133 = math.exp %1132 : vector<16x64xf32>
    %1134 = arith.mulf %1129, %1133 : vector<16x64xf32>
    %cst_140 = arith.constant 1.000000e+00 : f32
    %1135 = vector.broadcast %cst_140 : f32 to vector<16x64xf32>
    %1136 = arith.subf %1135, %1134 : vector<16x64xf32>
    %cst_141 = arith.constant 0.000000e+00 : f32
    %1137 = vector.broadcast %cst_141 : f32 to vector<16x64xf32>
    %1138 = arith.cmpf olt, %1108, %1137 : vector<16x64xf32>
    %cst_142 = arith.constant 0.000000e+00 : f32
    %1139 = vector.broadcast %cst_142 : f32 to vector<16x64xf32>
    %1140 = arith.subf %1139, %1136 : vector<16x64xf32>
    %1141 = arith.select %1138, %1140, %1136 : vector<16x64xi1>, vector<16x64xf32>
    %cst_143 = arith.constant 1.000000e+00 : f32
    %1142 = vector.broadcast %cst_143 : f32 to vector<16x64xf32>
    %1143 = arith.addf %1142, %1141 : vector<16x64xf32>
    %1144 = arith.mulf %1106, %1143 : vector<16x64xf32>
    %c0_144 = arith.constant 0 : index
    %c0_145 = arith.constant 0 : index
    %1145 = vector.load %arg8[%c0_144, %c0_145] : memref<64x16xf32, #tpu.memory_space<vmem>>, vector<64x16xf32>
    %cst_146 = arith.constant dense<0.000000e+00> : vector<16x16xf32>
    %1146 = tpu.matmul %1144, %1145, %cst_146 {dimension_numbers = #tpu.dot_dimension_numbers<[1], [0], [0], [1], [0, 0, 1, 1], [], []>} : vector<16x64xf32>, vector<64x16xf32>, vector<16x16xf32> -> vector<16x16xf32>
    %c0_147 = arith.constant 0 : index
    %c0_148 = arith.constant 0 : index
    %1147 = vector.load %arg9[%c0_147, %c0_148] : memref<1x16xf32, #tpu.memory_space<vmem>>, vector<1x16xf32>
    %1148 = vector.broadcast %1147 : vector<1x16xf32> to vector<16x16xf32>
    %1149 = arith.addf %1146, %1148 : vector<16x16xf32>
    %c0_149 = arith.constant 0 : index
    %c0_150 = arith.constant 0 : index
    %1150 = vector.load %arg10[%c0_149, %c0_150] : memref<1x16xf32, #tpu.memory_space<vmem>>, vector<1x16xf32>
    %1151 = vector.broadcast %1150 : vector<1x16xf32> to vector<16x16xf32>
    %1152 = arith.mulf %1149, %1151 : vector<16x16xf32>
    %1153 = arith.addf %1, %1152 : vector<16x16xf32>
    %c0_151 = arith.constant 0 : index
    %c0_152 = arith.constant 0 : index
    %c0_153 = arith.constant 0 : index
    %1154 = vector.load %arg11[%c0_151, %c0_152, %c0_153] : memref<1x16x16xf32, #tpu.memory_space<vmem>>, vector<1x16x16xf32>
    %1155 = vector.shape_cast %1154 : vector<1x16x16xf32> to vector<16x16xf32>
    %1156 = vector.shape_cast %1153 : vector<16x16xf32> to vector<1x16x16xf32>
    tpu.vector_store %arg11[%c0_151, %c0_152, %c0_153], %1156 {strides = array<i32>} : memref<1x16x16xf32, #tpu.memory_space<vmem>>, vector<1x16x16xf32>,
    return
  }
  func.func @transform_0(%arg0: i32) -> (i32, i32, i32) {
    %c0_i32 = arith.constant 0 : i32
    %c0_i32_0 = arith.constant 0 : i32
    %c0_i32_1 = arith.constant 0 : i32
    return %arg0, %c0_i32, %c0_i32_0 : i32, i32, i32
  }
  func.func @transform_1(%arg0: i32) -> (i32, i32) {
    %c0_i32 = arith.constant 0 : i32
    %c0_i32_0 = arith.constant 0 : i32
    %c0_i32_1 = arith.constant 0 : i32
    return %c0_i32, %c0_i32_0 : i32, i32
  }
  func.func @transform_2(%arg0: i32) -> (i32, i32) {
    %c0_i32 = arith.constant 0 : i32
    %c0_i32_0 = arith.constant 0 : i32
    %c0_i32_1 = arith.constant 0 : i32
    return %c0_i32, %c0_i32_0 : i32, i32
  }
  func.func @transform_3(%arg0: i32) -> (i32, i32) {
    %c0_i32 = arith.constant 0 : i32
    %c0_i32_0 = arith.constant 0 : i32
    %c0_i32_1 = arith.constant 0 : i32
    return %c0_i32, %c0_i32_0 : i32, i32
  }
  func.func @transform_4(%arg0: i32) -> (i32, i32) {
    %c0_i32 = arith.constant 0 : i32
    %c0_i32_0 = arith.constant 0 : i32
    %c0_i32_1 = arith.constant 0 : i32
    return %c0_i32, %c0_i32_0 : i32, i32
  }
  func.func @transform_5(%arg0: i32) -> (i32, i32) {
    %c0_i32 = arith.constant 0 : i32
    %c0_i32_0 = arith.constant 0 : i32
    %c0_i32_1 = arith.constant 0 : i32
    return %c0_i32, %c0_i32_0 : i32, i32
  }
  func.func @transform_6(%arg0: i32) -> (i32, i32) {
    %c0_i32 = arith.constant 0 : i32
    %c0_i32_0 = arith.constant 0 : i32
    %c0_i32_1 = arith.constant 0 : i32
    return %c0_i32, %c0_i32_0 : i32, i32
  }
  func.func @transform_7(%arg0: i32) -> (i32, i32) {
    %c0_i32 = arith.constant 0 : i32
    %c0_i32_0 = arith.constant 0 : i32
    %c0_i32_1 = arith.constant 0 : i32
    return %c0_i32, %c0_i32_0 : i32, i32
  }
  func.func @transform_8(%arg0: i32) -> (i32, i32) {
    %c0_i32 = arith.constant 0 : i32
    %c0_i32_0 = arith.constant 0 : i32
    %c0_i32_1 = arith.constant 0 : i32
    return %c0_i32, %c0_i32_0 : i32, i32
  }
  func.func @transform_9(%arg0: i32) -> (i32, i32) {
    %c0_i32 = arith.constant 0 : i32
    %c0_i32_0 = arith.constant 0 : i32
    %c0_i32_1 = arith.constant 0 : i32
    return %c0_i32, %c0_i32_0 : i32, i32
  }
  func.func @transform_10(%arg0: i32) -> (i32, i32, i32) {
    %c0_i32 = arith.constant 0 : i32
    %c0_i32_0 = arith.constant 0 : i32
    %c0_i32_1 = arith.constant 0 : i32
    return %arg0, %c0_i32, %c0_i32_0 : i32, i32, i32
  }
}

module attributes {stable_mosaic.version = 11 : i64} {
  func.func @_cnblock_kernel(%arg0: i32, %arg1: memref<1x4x32xf32, #tpu.memory_space<vmem>>, %arg2: memref<49x32xf32, #tpu.memory_space<vmem>>, %arg3: memref<1x32xf32, #tpu.memory_space<vmem>>, %arg4: memref<1x32xf32, #tpu.memory_space<vmem>>, %arg5: memref<1x32xf32, #tpu.memory_space<vmem>>, %arg6: memref<32x128xf32, #tpu.memory_space<vmem>>, %arg7: memref<1x128xf32, #tpu.memory_space<vmem>>, %arg8: memref<128x32xf32, #tpu.memory_space<vmem>>, %arg9: memref<1x32xf32, #tpu.memory_space<vmem>>, %arg10: memref<1x32xf32, #tpu.memory_space<vmem>>, %arg11: memref<1x4x32xf32, #tpu.memory_space<vmem>>, %arg12: memref<8x8x32xf32, #tpu.memory_space<vmem>>, %arg13: memref<4x32xf32, #tpu.memory_space<vmem>>) attributes {dimension_semantics = [#tpu.dimension_semantics<parallel>], iteration_bounds = array<i64: 2>, scalar_prefetch = 0 : i64, scratch_operands = 2 : i64, tpu.core_type = #tpu.core_type<tc>, window_params = [{transform_indices = @transform_0, window_bounds = array<i64: 1, 4, 32>}, {pipeline_mode = #tpu.pipeline_mode<synchronous>, transform_indices = @transform_1, window_bounds = array<i64: 49, 32>}, {pipeline_mode = #tpu.pipeline_mode<synchronous>, transform_indices = @transform_2, window_bounds = array<i64: 1, 32>}, {pipeline_mode = #tpu.pipeline_mode<synchronous>, transform_indices = @transform_3, window_bounds = array<i64: 1, 32>}, {pipeline_mode = #tpu.pipeline_mode<synchronous>, transform_indices = @transform_4, window_bounds = array<i64: 1, 32>}, {pipeline_mode = #tpu.pipeline_mode<synchronous>, transform_indices = @transform_5, window_bounds = array<i64: 32, 128>}, {pipeline_mode = #tpu.pipeline_mode<synchronous>, transform_indices = @transform_6, window_bounds = array<i64: 1, 128>}, {pipeline_mode = #tpu.pipeline_mode<synchronous>, transform_indices = @transform_7, window_bounds = array<i64: 128, 32>}, {pipeline_mode = #tpu.pipeline_mode<synchronous>, transform_indices = @transform_8, window_bounds = array<i64: 1, 32>}, {pipeline_mode = #tpu.pipeline_mode<synchronous>, transform_indices = @transform_9, window_bounds = array<i64: 1, 32>}, {transform_indices = @transform_10, window_bounds = array<i64: 1, 4, 32>}]} {
    %c0 = arith.constant 0 : index
    %c0_0 = arith.constant 0 : index
    %c0_1 = arith.constant 0 : index
    %0 = vector.load %arg1[%c0, %c0_0, %c0_1] : memref<1x4x32xf32, #tpu.memory_space<vmem>>, vector<1x4x32xf32>
    %1 = vector.shape_cast %0 : vector<1x4x32xf32> to vector<4x32xf32>
    %cst = arith.constant 0.000000e+00 : f32
    %2 = vector.broadcast %cst : f32 to vector<8x8x32xf32>
    %c0_2 = arith.constant 0 : index
    %c0_3 = arith.constant 0 : index
    %c0_4 = arith.constant 0 : index
    %3 = vector.load %arg12[%c0_2, %c0_3, %c0_4] : memref<8x8x32xf32, #tpu.memory_space<vmem>>, vector<8x8x32xf32>
    tpu.vector_store %arg12[%c0_2, %c0_3, %c0_4], %2 {strides = array<i32>} : memref<8x8x32xf32, #tpu.memory_space<vmem>>, vector<8x8x32xf32>,
    %4 = vector.extract_strided_slice %1 {offsets = [0, 0], sizes = [2, 32], strides = [1, 1]} : vector<4x32xf32> to vector<2x32xf32>
    %c3 = arith.constant 3 : index
    %c3_5 = arith.constant 3 : index
    %c0_6 = arith.constant 0 : index
    %5 = vector.load %arg12[%c3, %c3_5, %c0_6] : memref<8x8x32xf32, #tpu.memory_space<vmem>>, vector<1x2x32xf32>
    %6 = vector.shape_cast %5 : vector<1x2x32xf32> to vector<2x32xf32>
    %7 = vector.shape_cast %4 : vector<2x32xf32> to vector<1x2x32xf32>
    tpu.vector_store %arg12[%c3, %c3_5, %c0_6], %7 {strides = array<i32>} : memref<8x8x32xf32, #tpu.memory_space<vmem>>, vector<1x2x32xf32>,
    %8 = vector.extract_strided_slice %1 {offsets = [2, 0], sizes = [2, 32], strides = [1, 1]} : vector<4x32xf32> to vector<2x32xf32>
    %c4 = arith.constant 4 : index
    %c3_7 = arith.constant 3 : index
    %c0_8 = arith.constant 0 : index
    %9 = vector.load %arg12[%c4, %c3_7, %c0_8] : memref<8x8x32xf32, #tpu.memory_space<vmem>>, vector<1x2x32xf32>
    %10 = vector.shape_cast %9 : vector<1x2x32xf32> to vector<2x32xf32>
    %11 = vector.shape_cast %8 : vector<2x32xf32> to vector<1x2x32xf32>
    tpu.vector_store %arg12[%c4, %c3_7, %c0_8], %11 {strides = array<i32>} : memref<8x8x32xf32, #tpu.memory_space<vmem>>, vector<1x2x32xf32>,
    %c0_9 = arith.constant 0 : index
    %c0_10 = arith.constant 0 : index
    %12 = vector.load %arg2[%c0_9, %c0_10] : memref<49x32xf32, #tpu.memory_space<vmem>>, vector<49x32xf32>
    %cst_11 = arith.constant 0.000000e+00 : f32
    %13 = vector.broadcast %cst_11 : f32 to vector<2x32xf32>
    %c0_12 = arith.constant 0 : index
    %c0_13 = arith.constant 0 : index
    %c0_14 = arith.constant 0 : index
    %14 = vector.load %arg12[%c0_12, %c0_13, %c0_14] : memref<8x8x32xf32, #tpu.memory_space<vmem>>, vector<1x8x32xf32>
    %15 = vector.shape_cast %14 : vector<1x8x32xf32> to vector<8x32xf32>
    %16 = vector.extract_strided_slice %12 {offsets = [0, 0], sizes = [1, 32], strides = [1, 1]} : vector<49x32xf32> to vector<1x32xf32>
    %17 = vector.extract_strided_slice %15 {offsets = [0, 0], sizes = [2, 32], strides = [1, 1]} : vector<8x32xf32> to vector<2x32xf32>
    %18 = vector.broadcast %16 : vector<1x32xf32> to vector<2x32xf32>
    %19 = arith.mulf %17, %18 : vector<2x32xf32>
    %20 = arith.addf %13, %19 : vector<2x32xf32>
    %21 = vector.extract_strided_slice %12 {offsets = [1, 0], sizes = [1, 32], strides = [1, 1]} : vector<49x32xf32> to vector<1x32xf32>
    %22 = vector.extract_strided_slice %15 {offsets = [1, 0], sizes = [2, 32], strides = [1, 1]} : vector<8x32xf32> to vector<2x32xf32>
    %23 = vector.broadcast %21 : vector<1x32xf32> to vector<2x32xf32>
    %24 = arith.mulf %22, %23 : vector<2x32xf32>
    %25 = arith.addf %20, %24 : vector<2x32xf32>
    %26 = vector.extract_strided_slice %12 {offsets = [2, 0], sizes = [1, 32], strides = [1, 1]} : vector<49x32xf32> to vector<1x32xf32>
    %27 = vector.extract_strided_slice %15 {offsets = [2, 0], sizes = [2, 32], strides = [1, 1]} : vector<8x32xf32> to vector<2x32xf32>
    %28 = vector.broadcast %26 : vector<1x32xf32> to vector<2x32xf32>
    %29 = arith.mulf %27, %28 : vector<2x32xf32>
    %30 = arith.addf %25, %29 : vector<2x32xf32>
    %31 = vector.extract_strided_slice %12 {offsets = [3, 0], sizes = [1, 32], strides = [1, 1]} : vector<49x32xf32> to vector<1x32xf32>
    %32 = vector.extract_strided_slice %15 {offsets = [3, 0], sizes = [2, 32], strides = [1, 1]} : vector<8x32xf32> to vector<2x32xf32>
    %33 = vector.broadcast %31 : vector<1x32xf32> to vector<2x32xf32>
    %34 = arith.mulf %32, %33 : vector<2x32xf32>
    %35 = arith.addf %30, %34 : vector<2x32xf32>
    %36 = vector.extract_strided_slice %12 {offsets = [4, 0], sizes = [1, 32], strides = [1, 1]} : vector<49x32xf32> to vector<1x32xf32>
    %37 = vector.extract_strided_slice %15 {offsets = [4, 0], sizes = [2, 32], strides = [1, 1]} : vector<8x32xf32> to vector<2x32xf32>
    %38 = vector.broadcast %36 : vector<1x32xf32> to vector<2x32xf32>
    %39 = arith.mulf %37, %38 : vector<2x32xf32>
    %40 = arith.addf %35, %39 : vector<2x32xf32>
    %41 = vector.extract_strided_slice %12 {offsets = [5, 0], sizes = [1, 32], strides = [1, 1]} : vector<49x32xf32> to vector<1x32xf32>
    %42 = vector.extract_strided_slice %15 {offsets = [5, 0], sizes = [2, 32], strides = [1, 1]} : vector<8x32xf32> to vector<2x32xf32>
    %43 = vector.broadcast %41 : vector<1x32xf32> to vector<2x32xf32>
    %44 = arith.mulf %42, %43 : vector<2x32xf32>
    %45 = arith.addf %40, %44 : vector<2x32xf32>
    %46 = vector.extract_strided_slice %12 {offsets = [6, 0], sizes = [1, 32], strides = [1, 1]} : vector<49x32xf32> to vector<1x32xf32>
    %47 = vector.extract_strided_slice %15 {offsets = [6, 0], sizes = [2, 32], strides = [1, 1]} : vector<8x32xf32> to vector<2x32xf32>
    %48 = vector.broadcast %46 : vector<1x32xf32> to vector<2x32xf32>
    %49 = arith.mulf %47, %48 : vector<2x32xf32>
    %50 = arith.addf %45, %49 : vector<2x32xf32>
    %c1 = arith.constant 1 : index
    %c0_15 = arith.constant 0 : index
    %c0_16 = arith.constant 0 : index
    %51 = vector.load %arg12[%c1, %c0_15, %c0_16] : memref<8x8x32xf32, #tpu.memory_space<vmem>>, vector<1x8x32xf32>
    %52 = vector.shape_cast %51 : vector<1x8x32xf32> to vector<8x32xf32>
    %53 = vector.extract_strided_slice %12 {offsets = [7, 0], sizes = [1, 32], strides = [1, 1]} : vector<49x32xf32> to vector<1x32xf32>
    %54 = vector.extract_strided_slice %52 {offsets = [0, 0], sizes = [2, 32], strides = [1, 1]} : vector<8x32xf32> to vector<2x32xf32>
    %55 = vector.broadcast %53 : vector<1x32xf32> to vector<2x32xf32>
    %56 = arith.mulf %54, %55 : vector<2x32xf32>
    %57 = arith.addf %50, %56 : vector<2x32xf32>
    %58 = vector.extract_strided_slice %12 {offsets = [8, 0], sizes = [1, 32], strides = [1, 1]} : vector<49x32xf32> to vector<1x32xf32>
    %59 = vector.extract_strided_slice %52 {offsets = [1, 0], sizes = [2, 32], strides = [1, 1]} : vector<8x32xf32> to vector<2x32xf32>
    %60 = vector.broadcast %58 : vector<1x32xf32> to vector<2x32xf32>
    %61 = arith.mulf %59, %60 : vector<2x32xf32>
    %62 = arith.addf %57, %61 : vector<2x32xf32>
    %63 = vector.extract_strided_slice %12 {offsets = [9, 0], sizes = [1, 32], strides = [1, 1]} : vector<49x32xf32> to vector<1x32xf32>
    %64 = vector.extract_strided_slice %52 {offsets = [2, 0], sizes = [2, 32], strides = [1, 1]} : vector<8x32xf32> to vector<2x32xf32>
    %65 = vector.broadcast %63 : vector<1x32xf32> to vector<2x32xf32>
    %66 = arith.mulf %64, %65 : vector<2x32xf32>
    %67 = arith.addf %62, %66 : vector<2x32xf32>
    %68 = vector.extract_strided_slice %12 {offsets = [10, 0], sizes = [1, 32], strides = [1, 1]} : vector<49x32xf32> to vector<1x32xf32>
    %69 = vector.extract_strided_slice %52 {offsets = [3, 0], sizes = [2, 32], strides = [1, 1]} : vector<8x32xf32> to vector<2x32xf32>
    %70 = vector.broadcast %68 : vector<1x32xf32> to vector<2x32xf32>
    %71 = arith.mulf %69, %70 : vector<2x32xf32>
    %72 = arith.addf %67, %71 : vector<2x32xf32>
    %73 = vector.extract_strided_slice %12 {offsets = [11, 0], sizes = [1, 32], strides = [1, 1]} : vector<49x32xf32> to vector<1x32xf32>
    %74 = vector.extract_strided_slice %52 {offsets = [4, 0], sizes = [2, 32], strides = [1, 1]} : vector<8x32xf32> to vector<2x32xf32>
    %75 = vector.broadcast %73 : vector<1x32xf32> to vector<2x32xf32>
    %76 = arith.mulf %74, %75 : vector<2x32xf32>
    %77 = arith.addf %72, %76 : vector<2x32xf32>
    %78 = vector.extract_strided_slice %12 {offsets = [12, 0], sizes = [1, 32], strides = [1, 1]} : vector<49x32xf32> to vector<1x32xf32>
    %79 = vector.extract_strided_slice %52 {offsets = [5, 0], sizes = [2, 32], strides = [1, 1]} : vector<8x32xf32> to vector<2x32xf32>
    %80 = vector.broadcast %78 : vector<1x32xf32> to vector<2x32xf32>
    %81 = arith.mulf %79, %80 : vector<2x32xf32>
    %82 = arith.addf %77, %81 : vector<2x32xf32>
    %83 = vector.extract_strided_slice %12 {offsets = [13, 0], sizes = [1, 32], strides = [1, 1]} : vector<49x32xf32> to vector<1x32xf32>
    %84 = vector.extract_strided_slice %52 {offsets = [6, 0], sizes = [2, 32], strides = [1, 1]} : vector<8x32xf32> to vector<2x32xf32>
    %85 = vector.broadcast %83 : vector<1x32xf32> to vector<2x32xf32>
    %86 = arith.mulf %84, %85 : vector<2x32xf32>
    %87 = arith.addf %82, %86 : vector<2x32xf32>
    %c2 = arith.constant 2 : index
    %c0_17 = arith.constant 0 : index
    %c0_18 = arith.constant 0 : index
    %88 = vector.load %arg12[%c2, %c0_17, %c0_18] : memref<8x8x32xf32, #tpu.memory_space<vmem>>, vector<1x8x32xf32>
    %89 = vector.shape_cast %88 : vector<1x8x32xf32> to vector<8x32xf32>
    %90 = vector.extract_strided_slice %12 {offsets = [14, 0], sizes = [1, 32], strides = [1, 1]} : vector<49x32xf32> to vector<1x32xf32>
    %91 = vector.extract_strided_slice %89 {offsets = [0, 0], sizes = [2, 32], strides = [1, 1]} : vector<8x32xf32> to vector<2x32xf32>
    %92 = vector.broadcast %90 : vector<1x32xf32> to vector<2x32xf32>
    %93 = arith.mulf %91, %92 : vector<2x32xf32>
    %94 = arith.addf %87, %93 : vector<2x32xf32>
    %95 = vector.extract_strided_slice %12 {offsets = [15, 0], sizes = [1, 32], strides = [1, 1]} : vector<49x32xf32> to vector<1x32xf32>
    %96 = vector.extract_strided_slice %89 {offsets = [1, 0], sizes = [2, 32], strides = [1, 1]} : vector<8x32xf32> to vector<2x32xf32>
    %97 = vector.broadcast %95 : vector<1x32xf32> to vector<2x32xf32>
    %98 = arith.mulf %96, %97 : vector<2x32xf32>
    %99 = arith.addf %94, %98 : vector<2x32xf32>
    %100 = vector.extract_strided_slice %12 {offsets = [16, 0], sizes = [1, 32], strides = [1, 1]} : vector<49x32xf32> to vector<1x32xf32>
    %101 = vector.extract_strided_slice %89 {offsets = [2, 0], sizes = [2, 32], strides = [1, 1]} : vector<8x32xf32> to vector<2x32xf32>
    %102 = vector.broadcast %100 : vector<1x32xf32> to vector<2x32xf32>
    %103 = arith.mulf %101, %102 : vector<2x32xf32>
    %104 = arith.addf %99, %103 : vector<2x32xf32>
    %105 = vector.extract_strided_slice %12 {offsets = [17, 0], sizes = [1, 32], strides = [1, 1]} : vector<49x32xf32> to vector<1x32xf32>
    %106 = vector.extract_strided_slice %89 {offsets = [3, 0], sizes = [2, 32], strides = [1, 1]} : vector<8x32xf32> to vector<2x32xf32>
    %107 = vector.broadcast %105 : vector<1x32xf32> to vector<2x32xf32>
    %108 = arith.mulf %106, %107 : vector<2x32xf32>
    %109 = arith.addf %104, %108 : vector<2x32xf32>
    %110 = vector.extract_strided_slice %12 {offsets = [18, 0], sizes = [1, 32], strides = [1, 1]} : vector<49x32xf32> to vector<1x32xf32>
    %111 = vector.extract_strided_slice %89 {offsets = [4, 0], sizes = [2, 32], strides = [1, 1]} : vector<8x32xf32> to vector<2x32xf32>
    %112 = vector.broadcast %110 : vector<1x32xf32> to vector<2x32xf32>
    %113 = arith.mulf %111, %112 : vector<2x32xf32>
    %114 = arith.addf %109, %113 : vector<2x32xf32>
    %115 = vector.extract_strided_slice %12 {offsets = [19, 0], sizes = [1, 32], strides = [1, 1]} : vector<49x32xf32> to vector<1x32xf32>
    %116 = vector.extract_strided_slice %89 {offsets = [5, 0], sizes = [2, 32], strides = [1, 1]} : vector<8x32xf32> to vector<2x32xf32>
    %117 = vector.broadcast %115 : vector<1x32xf32> to vector<2x32xf32>
    %118 = arith.mulf %116, %117 : vector<2x32xf32>
    %119 = arith.addf %114, %118 : vector<2x32xf32>
    %120 = vector.extract_strided_slice %12 {offsets = [20, 0], sizes = [1, 32], strides = [1, 1]} : vector<49x32xf32> to vector<1x32xf32>
    %121 = vector.extract_strided_slice %89 {offsets = [6, 0], sizes = [2, 32], strides = [1, 1]} : vector<8x32xf32> to vector<2x32xf32>
    %122 = vector.broadcast %120 : vector<1x32xf32> to vector<2x32xf32>
    %123 = arith.mulf %121, %122 : vector<2x32xf32>
    %124 = arith.addf %119, %123 : vector<2x32xf32>
    %c3_19 = arith.constant 3 : index
    %c0_20 = arith.constant 0 : index
    %c0_21 = arith.constant 0 : index
    %125 = vector.load %arg12[%c3_19, %c0_20, %c0_21] : memref<8x8x32xf32, #tpu.memory_space<vmem>>, vector<1x8x32xf32>
    %126 = vector.shape_cast %125 : vector<1x8x32xf32> to vector<8x32xf32>
    %127 = vector.extract_strided_slice %12 {offsets = [21, 0], sizes = [1, 32], strides = [1, 1]} : vector<49x32xf32> to vector<1x32xf32>
    %128 = vector.extract_strided_slice %126 {offsets = [0, 0], sizes = [2, 32], strides = [1, 1]} : vector<8x32xf32> to vector<2x32xf32>
    %129 = vector.broadcast %127 : vector<1x32xf32> to vector<2x32xf32>
    %130 = arith.mulf %128, %129 : vector<2x32xf32>
    %131 = arith.addf %124, %130 : vector<2x32xf32>
    %132 = vector.extract_strided_slice %12 {offsets = [22, 0], sizes = [1, 32], strides = [1, 1]} : vector<49x32xf32> to vector<1x32xf32>
    %133 = vector.extract_strided_slice %126 {offsets = [1, 0], sizes = [2, 32], strides = [1, 1]} : vector<8x32xf32> to vector<2x32xf32>
    %134 = vector.broadcast %132 : vector<1x32xf32> to vector<2x32xf32>
    %135 = arith.mulf %133, %134 : vector<2x32xf32>
    %136 = arith.addf %131, %135 : vector<2x32xf32>
    %137 = vector.extract_strided_slice %12 {offsets = [23, 0], sizes = [1, 32], strides = [1, 1]} : vector<49x32xf32> to vector<1x32xf32>
    %138 = vector.extract_strided_slice %126 {offsets = [2, 0], sizes = [2, 32], strides = [1, 1]} : vector<8x32xf32> to vector<2x32xf32>
    %139 = vector.broadcast %137 : vector<1x32xf32> to vector<2x32xf32>
    %140 = arith.mulf %138, %139 : vector<2x32xf32>
    %141 = arith.addf %136, %140 : vector<2x32xf32>
    %142 = vector.extract_strided_slice %12 {offsets = [24, 0], sizes = [1, 32], strides = [1, 1]} : vector<49x32xf32> to vector<1x32xf32>
    %143 = vector.extract_strided_slice %126 {offsets = [3, 0], sizes = [2, 32], strides = [1, 1]} : vector<8x32xf32> to vector<2x32xf32>
    %144 = vector.broadcast %142 : vector<1x32xf32> to vector<2x32xf32>
    %145 = arith.mulf %143, %144 : vector<2x32xf32>
    %146 = arith.addf %141, %145 : vector<2x32xf32>
    %147 = vector.extract_strided_slice %12 {offsets = [25, 0], sizes = [1, 32], strides = [1, 1]} : vector<49x32xf32> to vector<1x32xf32>
    %148 = vector.extract_strided_slice %126 {offsets = [4, 0], sizes = [2, 32], strides = [1, 1]} : vector<8x32xf32> to vector<2x32xf32>
    %149 = vector.broadcast %147 : vector<1x32xf32> to vector<2x32xf32>
    %150 = arith.mulf %148, %149 : vector<2x32xf32>
    %151 = arith.addf %146, %150 : vector<2x32xf32>
    %152 = vector.extract_strided_slice %12 {offsets = [26, 0], sizes = [1, 32], strides = [1, 1]} : vector<49x32xf32> to vector<1x32xf32>
    %153 = vector.extract_strided_slice %126 {offsets = [5, 0], sizes = [2, 32], strides = [1, 1]} : vector<8x32xf32> to vector<2x32xf32>
    %154 = vector.broadcast %152 : vector<1x32xf32> to vector<2x32xf32>
    %155 = arith.mulf %153, %154 : vector<2x32xf32>
    %156 = arith.addf %151, %155 : vector<2x32xf32>
    %157 = vector.extract_strided_slice %12 {offsets = [27, 0], sizes = [1, 32], strides = [1, 1]} : vector<49x32xf32> to vector<1x32xf32>
    %158 = vector.extract_strided_slice %126 {offsets = [6, 0], sizes = [2, 32], strides = [1, 1]} : vector<8x32xf32> to vector<2x32xf32>
    %159 = vector.broadcast %157 : vector<1x32xf32> to vector<2x32xf32>
    %160 = arith.mulf %158, %159 : vector<2x32xf32>
    %161 = arith.addf %156, %160 : vector<2x32xf32>
    %c4_22 = arith.constant 4 : index
    %c0_23 = arith.constant 0 : index
    %c0_24 = arith.constant 0 : index
    %162 = vector.load %arg12[%c4_22, %c0_23, %c0_24] : memref<8x8x32xf32, #tpu.memory_space<vmem>>, vector<1x8x32xf32>
    %163 = vector.shape_cast %162 : vector<1x8x32xf32> to vector<8x32xf32>
    %164 = vector.extract_strided_slice %12 {offsets = [28, 0], sizes = [1, 32], strides = [1, 1]} : vector<49x32xf32> to vector<1x32xf32>
    %165 = vector.extract_strided_slice %163 {offsets = [0, 0], sizes = [2, 32], strides = [1, 1]} : vector<8x32xf32> to vector<2x32xf32>
    %166 = vector.broadcast %164 : vector<1x32xf32> to vector<2x32xf32>
    %167 = arith.mulf %165, %166 : vector<2x32xf32>
    %168 = arith.addf %161, %167 : vector<2x32xf32>
    %169 = vector.extract_strided_slice %12 {offsets = [29, 0], sizes = [1, 32], strides = [1, 1]} : vector<49x32xf32> to vector<1x32xf32>
    %170 = vector.extract_strided_slice %163 {offsets = [1, 0], sizes = [2, 32], strides = [1, 1]} : vector<8x32xf32> to vector<2x32xf32>
    %171 = vector.broadcast %169 : vector<1x32xf32> to vector<2x32xf32>
    %172 = arith.mulf %170, %171 : vector<2x32xf32>
    %173 = arith.addf %168, %172 : vector<2x32xf32>
    %174 = vector.extract_strided_slice %12 {offsets = [30, 0], sizes = [1, 32], strides = [1, 1]} : vector<49x32xf32> to vector<1x32xf32>
    %175 = vector.extract_strided_slice %163 {offsets = [2, 0], sizes = [2, 32], strides = [1, 1]} : vector<8x32xf32> to vector<2x32xf32>
    %176 = vector.broadcast %174 : vector<1x32xf32> to vector<2x32xf32>
    %177 = arith.mulf %175, %176 : vector<2x32xf32>
    %178 = arith.addf %173, %177 : vector<2x32xf32>
    %179 = vector.extract_strided_slice %12 {offsets = [31, 0], sizes = [1, 32], strides = [1, 1]} : vector<49x32xf32> to vector<1x32xf32>
    %180 = vector.extract_strided_slice %163 {offsets = [3, 0], sizes = [2, 32], strides = [1, 1]} : vector<8x32xf32> to vector<2x32xf32>
    %181 = vector.broadcast %179 : vector<1x32xf32> to vector<2x32xf32>
    %182 = arith.mulf %180, %181 : vector<2x32xf32>
    %183 = arith.addf %178, %182 : vector<2x32xf32>
    %184 = vector.extract_strided_slice %12 {offsets = [32, 0], sizes = [1, 32], strides = [1, 1]} : vector<49x32xf32> to vector<1x32xf32>
    %185 = vector.extract_strided_slice %163 {offsets = [4, 0], sizes = [2, 32], strides = [1, 1]} : vector<8x32xf32> to vector<2x32xf32>
    %186 = vector.broadcast %184 : vector<1x32xf32> to vector<2x32xf32>
    %187 = arith.mulf %185, %186 : vector<2x32xf32>
    %188 = arith.addf %183, %187 : vector<2x32xf32>
    %189 = vector.extract_strided_slice %12 {offsets = [33, 0], sizes = [1, 32], strides = [1, 1]} : vector<49x32xf32> to vector<1x32xf32>
    %190 = vector.extract_strided_slice %163 {offsets = [5, 0], sizes = [2, 32], strides = [1, 1]} : vector<8x32xf32> to vector<2x32xf32>
    %191 = vector.broadcast %189 : vector<1x32xf32> to vector<2x32xf32>
    %192 = arith.mulf %190, %191 : vector<2x32xf32>
    %193 = arith.addf %188, %192 : vector<2x32xf32>
    %194 = vector.extract_strided_slice %12 {offsets = [34, 0], sizes = [1, 32], strides = [1, 1]} : vector<49x32xf32> to vector<1x32xf32>
    %195 = vector.extract_strided_slice %163 {offsets = [6, 0], sizes = [2, 32], strides = [1, 1]} : vector<8x32xf32> to vector<2x32xf32>
    %196 = vector.broadcast %194 : vector<1x32xf32> to vector<2x32xf32>
    %197 = arith.mulf %195, %196 : vector<2x32xf32>
    %198 = arith.addf %193, %197 : vector<2x32xf32>
    %c5 = arith.constant 5 : index
    %c0_25 = arith.constant 0 : index
    %c0_26 = arith.constant 0 : index
    %199 = vector.load %arg12[%c5, %c0_25, %c0_26] : memref<8x8x32xf32, #tpu.memory_space<vmem>>, vector<1x8x32xf32>
    %200 = vector.shape_cast %199 : vector<1x8x32xf32> to vector<8x32xf32>
    %201 = vector.extract_strided_slice %12 {offsets = [35, 0], sizes = [1, 32], strides = [1, 1]} : vector<49x32xf32> to vector<1x32xf32>
    %202 = vector.extract_strided_slice %200 {offsets = [0, 0], sizes = [2, 32], strides = [1, 1]} : vector<8x32xf32> to vector<2x32xf32>
    %203 = vector.broadcast %201 : vector<1x32xf32> to vector<2x32xf32>
    %204 = arith.mulf %202, %203 : vector<2x32xf32>
    %205 = arith.addf %198, %204 : vector<2x32xf32>
    %206 = vector.extract_strided_slice %12 {offsets = [36, 0], sizes = [1, 32], strides = [1, 1]} : vector<49x32xf32> to vector<1x32xf32>
    %207 = vector.extract_strided_slice %200 {offsets = [1, 0], sizes = [2, 32], strides = [1, 1]} : vector<8x32xf32> to vector<2x32xf32>
    %208 = vector.broadcast %206 : vector<1x32xf32> to vector<2x32xf32>
    %209 = arith.mulf %207, %208 : vector<2x32xf32>
    %210 = arith.addf %205, %209 : vector<2x32xf32>
    %211 = vector.extract_strided_slice %12 {offsets = [37, 0], sizes = [1, 32], strides = [1, 1]} : vector<49x32xf32> to vector<1x32xf32>
    %212 = vector.extract_strided_slice %200 {offsets = [2, 0], sizes = [2, 32], strides = [1, 1]} : vector<8x32xf32> to vector<2x32xf32>
    %213 = vector.broadcast %211 : vector<1x32xf32> to vector<2x32xf32>
    %214 = arith.mulf %212, %213 : vector<2x32xf32>
    %215 = arith.addf %210, %214 : vector<2x32xf32>
    %216 = vector.extract_strided_slice %12 {offsets = [38, 0], sizes = [1, 32], strides = [1, 1]} : vector<49x32xf32> to vector<1x32xf32>
    %217 = vector.extract_strided_slice %200 {offsets = [3, 0], sizes = [2, 32], strides = [1, 1]} : vector<8x32xf32> to vector<2x32xf32>
    %218 = vector.broadcast %216 : vector<1x32xf32> to vector<2x32xf32>
    %219 = arith.mulf %217, %218 : vector<2x32xf32>
    %220 = arith.addf %215, %219 : vector<2x32xf32>
    %221 = vector.extract_strided_slice %12 {offsets = [39, 0], sizes = [1, 32], strides = [1, 1]} : vector<49x32xf32> to vector<1x32xf32>
    %222 = vector.extract_strided_slice %200 {offsets = [4, 0], sizes = [2, 32], strides = [1, 1]} : vector<8x32xf32> to vector<2x32xf32>
    %223 = vector.broadcast %221 : vector<1x32xf32> to vector<2x32xf32>
    %224 = arith.mulf %222, %223 : vector<2x32xf32>
    %225 = arith.addf %220, %224 : vector<2x32xf32>
    %226 = vector.extract_strided_slice %12 {offsets = [40, 0], sizes = [1, 32], strides = [1, 1]} : vector<49x32xf32> to vector<1x32xf32>
    %227 = vector.extract_strided_slice %200 {offsets = [5, 0], sizes = [2, 32], strides = [1, 1]} : vector<8x32xf32> to vector<2x32xf32>
    %228 = vector.broadcast %226 : vector<1x32xf32> to vector<2x32xf32>
    %229 = arith.mulf %227, %228 : vector<2x32xf32>
    %230 = arith.addf %225, %229 : vector<2x32xf32>
    %231 = vector.extract_strided_slice %12 {offsets = [41, 0], sizes = [1, 32], strides = [1, 1]} : vector<49x32xf32> to vector<1x32xf32>
    %232 = vector.extract_strided_slice %200 {offsets = [6, 0], sizes = [2, 32], strides = [1, 1]} : vector<8x32xf32> to vector<2x32xf32>
    %233 = vector.broadcast %231 : vector<1x32xf32> to vector<2x32xf32>
    %234 = arith.mulf %232, %233 : vector<2x32xf32>
    %235 = arith.addf %230, %234 : vector<2x32xf32>
    %c6 = arith.constant 6 : index
    %c0_27 = arith.constant 0 : index
    %c0_28 = arith.constant 0 : index
    %236 = vector.load %arg12[%c6, %c0_27, %c0_28] : memref<8x8x32xf32, #tpu.memory_space<vmem>>, vector<1x8x32xf32>
    %237 = vector.shape_cast %236 : vector<1x8x32xf32> to vector<8x32xf32>
    %238 = vector.extract_strided_slice %12 {offsets = [42, 0], sizes = [1, 32], strides = [1, 1]} : vector<49x32xf32> to vector<1x32xf32>
    %239 = vector.extract_strided_slice %237 {offsets = [0, 0], sizes = [2, 32], strides = [1, 1]} : vector<8x32xf32> to vector<2x32xf32>
    %240 = vector.broadcast %238 : vector<1x32xf32> to vector<2x32xf32>
    %241 = arith.mulf %239, %240 : vector<2x32xf32>
    %242 = arith.addf %235, %241 : vector<2x32xf32>
    %243 = vector.extract_strided_slice %12 {offsets = [43, 0], sizes = [1, 32], strides = [1, 1]} : vector<49x32xf32> to vector<1x32xf32>
    %244 = vector.extract_strided_slice %237 {offsets = [1, 0], sizes = [2, 32], strides = [1, 1]} : vector<8x32xf32> to vector<2x32xf32>
    %245 = vector.broadcast %243 : vector<1x32xf32> to vector<2x32xf32>
    %246 = arith.mulf %244, %245 : vector<2x32xf32>
    %247 = arith.addf %242, %246 : vector<2x32xf32>
    %248 = vector.extract_strided_slice %12 {offsets = [44, 0], sizes = [1, 32], strides = [1, 1]} : vector<49x32xf32> to vector<1x32xf32>
    %249 = vector.extract_strided_slice %237 {offsets = [2, 0], sizes = [2, 32], strides = [1, 1]} : vector<8x32xf32> to vector<2x32xf32>
    %250 = vector.broadcast %248 : vector<1x32xf32> to vector<2x32xf32>
    %251 = arith.mulf %249, %250 : vector<2x32xf32>
    %252 = arith.addf %247, %251 : vector<2x32xf32>
    %253 = vector.extract_strided_slice %12 {offsets = [45, 0], sizes = [1, 32], strides = [1, 1]} : vector<49x32xf32> to vector<1x32xf32>
    %254 = vector.extract_strided_slice %237 {offsets = [3, 0], sizes = [2, 32], strides = [1, 1]} : vector<8x32xf32> to vector<2x32xf32>
    %255 = vector.broadcast %253 : vector<1x32xf32> to vector<2x32xf32>
    %256 = arith.mulf %254, %255 : vector<2x32xf32>
    %257 = arith.addf %252, %256 : vector<2x32xf32>
    %258 = vector.extract_strided_slice %12 {offsets = [46, 0], sizes = [1, 32], strides = [1, 1]} : vector<49x32xf32> to vector<1x32xf32>
    %259 = vector.extract_strided_slice %237 {offsets = [4, 0], sizes = [2, 32], strides = [1, 1]} : vector<8x32xf32> to vector<2x32xf32>
    %260 = vector.broadcast %258 : vector<1x32xf32> to vector<2x32xf32>
    %261 = arith.mulf %259, %260 : vector<2x32xf32>
    %262 = arith.addf %257, %261 : vector<2x32xf32>
    %263 = vector.extract_strided_slice %12 {offsets = [47, 0], sizes = [1, 32], strides = [1, 1]} : vector<49x32xf32> to vector<1x32xf32>
    %264 = vector.extract_strided_slice %237 {offsets = [5, 0], sizes = [2, 32], strides = [1, 1]} : vector<8x32xf32> to vector<2x32xf32>
    %265 = vector.broadcast %263 : vector<1x32xf32> to vector<2x32xf32>
    %266 = arith.mulf %264, %265 : vector<2x32xf32>
    %267 = arith.addf %262, %266 : vector<2x32xf32>
    %268 = vector.extract_strided_slice %12 {offsets = [48, 0], sizes = [1, 32], strides = [1, 1]} : vector<49x32xf32> to vector<1x32xf32>
    %269 = vector.extract_strided_slice %237 {offsets = [6, 0], sizes = [2, 32], strides = [1, 1]} : vector<8x32xf32> to vector<2x32xf32>
    %270 = vector.broadcast %268 : vector<1x32xf32> to vector<2x32xf32>
    %271 = arith.mulf %269, %270 : vector<2x32xf32>
    %272 = arith.addf %267, %271 : vector<2x32xf32>
    %c0_29 = arith.constant 0 : index
    %c0_30 = arith.constant 0 : index
    %273 = vector.load %arg3[%c0_29, %c0_30] : memref<1x32xf32, #tpu.memory_space<vmem>>, vector<1x32xf32>
    %274 = vector.broadcast %273 : vector<1x32xf32> to vector<2x32xf32>
    %275 = arith.addf %272, %274 : vector<2x32xf32>
    %c0_31 = arith.constant 0 : index
    %c0_32 = arith.constant 0 : index
    %276 = vector.load %arg13[%c0_31, %c0_32] : memref<4x32xf32, #tpu.memory_space<vmem>>, vector<2x32xf32>
    tpu.vector_store %arg13[%c0_31, %c0_32], %275 {strides = array<i32>} : memref<4x32xf32, #tpu.memory_space<vmem>>, vector<2x32xf32>,
    %cst_33 = arith.constant 0.000000e+00 : f32
    %277 = vector.broadcast %cst_33 : f32 to vector<2x32xf32>
    %c1_34 = arith.constant 1 : index
    %c0_35 = arith.constant 0 : index
    %c0_36 = arith.constant 0 : index
    %278 = vector.load %arg12[%c1_34, %c0_35, %c0_36] : memref<8x8x32xf32, #tpu.memory_space<vmem>>, vector<1x8x32xf32>
    %279 = vector.shape_cast %278 : vector<1x8x32xf32> to vector<8x32xf32>
    %280 = vector.extract_strided_slice %12 {offsets = [0, 0], sizes = [1, 32], strides = [1, 1]} : vector<49x32xf32> to vector<1x32xf32>
    %281 = vector.extract_strided_slice %279 {offsets = [0, 0], sizes = [2, 32], strides = [1, 1]} : vector<8x32xf32> to vector<2x32xf32>
    %282 = vector.broadcast %280 : vector<1x32xf32> to vector<2x32xf32>
    %283 = arith.mulf %281, %282 : vector<2x32xf32>
    %284 = arith.addf %277, %283 : vector<2x32xf32>
    %285 = vector.extract_strided_slice %12 {offsets = [1, 0], sizes = [1, 32], strides = [1, 1]} : vector<49x32xf32> to vector<1x32xf32>
    %286 = vector.extract_strided_slice %279 {offsets = [1, 0], sizes = [2, 32], strides = [1, 1]} : vector<8x32xf32> to vector<2x32xf32>
    %287 = vector.broadcast %285 : vector<1x32xf32> to vector<2x32xf32>
    %288 = arith.mulf %286, %287 : vector<2x32xf32>
    %289 = arith.addf %284, %288 : vector<2x32xf32>
    %290 = vector.extract_strided_slice %12 {offsets = [2, 0], sizes = [1, 32], strides = [1, 1]} : vector<49x32xf32> to vector<1x32xf32>
    %291 = vector.extract_strided_slice %279 {offsets = [2, 0], sizes = [2, 32], strides = [1, 1]} : vector<8x32xf32> to vector<2x32xf32>
    %292 = vector.broadcast %290 : vector<1x32xf32> to vector<2x32xf32>
    %293 = arith.mulf %291, %292 : vector<2x32xf32>
    %294 = arith.addf %289, %293 : vector<2x32xf32>
    %295 = vector.extract_strided_slice %12 {offsets = [3, 0], sizes = [1, 32], strides = [1, 1]} : vector<49x32xf32> to vector<1x32xf32>
    %296 = vector.extract_strided_slice %279 {offsets = [3, 0], sizes = [2, 32], strides = [1, 1]} : vector<8x32xf32> to vector<2x32xf32>
    %297 = vector.broadcast %295 : vector<1x32xf32> to vector<2x32xf32>
    %298 = arith.mulf %296, %297 : vector<2x32xf32>
    %299 = arith.addf %294, %298 : vector<2x32xf32>
    %300 = vector.extract_strided_slice %12 {offsets = [4, 0], sizes = [1, 32], strides = [1, 1]} : vector<49x32xf32> to vector<1x32xf32>
    %301 = vector.extract_strided_slice %279 {offsets = [4, 0], sizes = [2, 32], strides = [1, 1]} : vector<8x32xf32> to vector<2x32xf32>
    %302 = vector.broadcast %300 : vector<1x32xf32> to vector<2x32xf32>
    %303 = arith.mulf %301, %302 : vector<2x32xf32>
    %304 = arith.addf %299, %303 : vector<2x32xf32>
    %305 = vector.extract_strided_slice %12 {offsets = [5, 0], sizes = [1, 32], strides = [1, 1]} : vector<49x32xf32> to vector<1x32xf32>
    %306 = vector.extract_strided_slice %279 {offsets = [5, 0], sizes = [2, 32], strides = [1, 1]} : vector<8x32xf32> to vector<2x32xf32>
    %307 = vector.broadcast %305 : vector<1x32xf32> to vector<2x32xf32>
    %308 = arith.mulf %306, %307 : vector<2x32xf32>
    %309 = arith.addf %304, %308 : vector<2x32xf32>
    %310 = vector.extract_strided_slice %12 {offsets = [6, 0], sizes = [1, 32], strides = [1, 1]} : vector<49x32xf32> to vector<1x32xf32>
    %311 = vector.extract_strided_slice %279 {offsets = [6, 0], sizes = [2, 32], strides = [1, 1]} : vector<8x32xf32> to vector<2x32xf32>
    %312 = vector.broadcast %310 : vector<1x32xf32> to vector<2x32xf32>
    %313 = arith.mulf %311, %312 : vector<2x32xf32>
    %314 = arith.addf %309, %313 : vector<2x32xf32>
    %c2_37 = arith.constant 2 : index
    %c0_38 = arith.constant 0 : index
    %c0_39 = arith.constant 0 : index
    %315 = vector.load %arg12[%c2_37, %c0_38, %c0_39] : memref<8x8x32xf32, #tpu.memory_space<vmem>>, vector<1x8x32xf32>
    %316 = vector.shape_cast %315 : vector<1x8x32xf32> to vector<8x32xf32>
    %317 = vector.extract_strided_slice %12 {offsets = [7, 0], sizes = [1, 32], strides = [1, 1]} : vector<49x32xf32> to vector<1x32xf32>
    %318 = vector.extract_strided_slice %316 {offsets = [0, 0], sizes = [2, 32], strides = [1, 1]} : vector<8x32xf32> to vector<2x32xf32>
    %319 = vector.broadcast %317 : vector<1x32xf32> to vector<2x32xf32>
    %320 = arith.mulf %318, %319 : vector<2x32xf32>
    %321 = arith.addf %314, %320 : vector<2x32xf32>
    %322 = vector.extract_strided_slice %12 {offsets = [8, 0], sizes = [1, 32], strides = [1, 1]} : vector<49x32xf32> to vector<1x32xf32>
    %323 = vector.extract_strided_slice %316 {offsets = [1, 0], sizes = [2, 32], strides = [1, 1]} : vector<8x32xf32> to vector<2x32xf32>
    %324 = vector.broadcast %322 : vector<1x32xf32> to vector<2x32xf32>
    %325 = arith.mulf %323, %324 : vector<2x32xf32>
    %326 = arith.addf %321, %325 : vector<2x32xf32>
    %327 = vector.extract_strided_slice %12 {offsets = [9, 0], sizes = [1, 32], strides = [1, 1]} : vector<49x32xf32> to vector<1x32xf32>
    %328 = vector.extract_strided_slice %316 {offsets = [2, 0], sizes = [2, 32], strides = [1, 1]} : vector<8x32xf32> to vector<2x32xf32>
    %329 = vector.broadcast %327 : vector<1x32xf32> to vector<2x32xf32>
    %330 = arith.mulf %328, %329 : vector<2x32xf32>
    %331 = arith.addf %326, %330 : vector<2x32xf32>
    %332 = vector.extract_strided_slice %12 {offsets = [10, 0], sizes = [1, 32], strides = [1, 1]} : vector<49x32xf32> to vector<1x32xf32>
    %333 = vector.extract_strided_slice %316 {offsets = [3, 0], sizes = [2, 32], strides = [1, 1]} : vector<8x32xf32> to vector<2x32xf32>
    %334 = vector.broadcast %332 : vector<1x32xf32> to vector<2x32xf32>
    %335 = arith.mulf %333, %334 : vector<2x32xf32>
    %336 = arith.addf %331, %335 : vector<2x32xf32>
    %337 = vector.extract_strided_slice %12 {offsets = [11, 0], sizes = [1, 32], strides = [1, 1]} : vector<49x32xf32> to vector<1x32xf32>
    %338 = vector.extract_strided_slice %316 {offsets = [4, 0], sizes = [2, 32], strides = [1, 1]} : vector<8x32xf32> to vector<2x32xf32>
    %339 = vector.broadcast %337 : vector<1x32xf32> to vector<2x32xf32>
    %340 = arith.mulf %338, %339 : vector<2x32xf32>
    %341 = arith.addf %336, %340 : vector<2x32xf32>
    %342 = vector.extract_strided_slice %12 {offsets = [12, 0], sizes = [1, 32], strides = [1, 1]} : vector<49x32xf32> to vector<1x32xf32>
    %343 = vector.extract_strided_slice %316 {offsets = [5, 0], sizes = [2, 32], strides = [1, 1]} : vector<8x32xf32> to vector<2x32xf32>
    %344 = vector.broadcast %342 : vector<1x32xf32> to vector<2x32xf32>
    %345 = arith.mulf %343, %344 : vector<2x32xf32>
    %346 = arith.addf %341, %345 : vector<2x32xf32>
    %347 = vector.extract_strided_slice %12 {offsets = [13, 0], sizes = [1, 32], strides = [1, 1]} : vector<49x32xf32> to vector<1x32xf32>
    %348 = vector.extract_strided_slice %316 {offsets = [6, 0], sizes = [2, 32], strides = [1, 1]} : vector<8x32xf32> to vector<2x32xf32>
    %349 = vector.broadcast %347 : vector<1x32xf32> to vector<2x32xf32>
    %350 = arith.mulf %348, %349 : vector<2x32xf32>
    %351 = arith.addf %346, %350 : vector<2x32xf32>
    %c3_40 = arith.constant 3 : index
    %c0_41 = arith.constant 0 : index
    %c0_42 = arith.constant 0 : index
    %352 = vector.load %arg12[%c3_40, %c0_41, %c0_42] : memref<8x8x32xf32, #tpu.memory_space<vmem>>, vector<1x8x32xf32>
    %353 = vector.shape_cast %352 : vector<1x8x32xf32> to vector<8x32xf32>
    %354 = vector.extract_strided_slice %12 {offsets = [14, 0], sizes = [1, 32], strides = [1, 1]} : vector<49x32xf32> to vector<1x32xf32>
    %355 = vector.extract_strided_slice %353 {offsets = [0, 0], sizes = [2, 32], strides = [1, 1]} : vector<8x32xf32> to vector<2x32xf32>
    %356 = vector.broadcast %354 : vector<1x32xf32> to vector<2x32xf32>
    %357 = arith.mulf %355, %356 : vector<2x32xf32>
    %358 = arith.addf %351, %357 : vector<2x32xf32>
    %359 = vector.extract_strided_slice %12 {offsets = [15, 0], sizes = [1, 32], strides = [1, 1]} : vector<49x32xf32> to vector<1x32xf32>
    %360 = vector.extract_strided_slice %353 {offsets = [1, 0], sizes = [2, 32], strides = [1, 1]} : vector<8x32xf32> to vector<2x32xf32>
    %361 = vector.broadcast %359 : vector<1x32xf32> to vector<2x32xf32>
    %362 = arith.mulf %360, %361 : vector<2x32xf32>
    %363 = arith.addf %358, %362 : vector<2x32xf32>
    %364 = vector.extract_strided_slice %12 {offsets = [16, 0], sizes = [1, 32], strides = [1, 1]} : vector<49x32xf32> to vector<1x32xf32>
    %365 = vector.extract_strided_slice %353 {offsets = [2, 0], sizes = [2, 32], strides = [1, 1]} : vector<8x32xf32> to vector<2x32xf32>
    %366 = vector.broadcast %364 : vector<1x32xf32> to vector<2x32xf32>
    %367 = arith.mulf %365, %366 : vector<2x32xf32>
    %368 = arith.addf %363, %367 : vector<2x32xf32>
    %369 = vector.extract_strided_slice %12 {offsets = [17, 0], sizes = [1, 32], strides = [1, 1]} : vector<49x32xf32> to vector<1x32xf32>
    %370 = vector.extract_strided_slice %353 {offsets = [3, 0], sizes = [2, 32], strides = [1, 1]} : vector<8x32xf32> to vector<2x32xf32>
    %371 = vector.broadcast %369 : vector<1x32xf32> to vector<2x32xf32>
    %372 = arith.mulf %370, %371 : vector<2x32xf32>
    %373 = arith.addf %368, %372 : vector<2x32xf32>
    %374 = vector.extract_strided_slice %12 {offsets = [18, 0], sizes = [1, 32], strides = [1, 1]} : vector<49x32xf32> to vector<1x32xf32>
    %375 = vector.extract_strided_slice %353 {offsets = [4, 0], sizes = [2, 32], strides = [1, 1]} : vector<8x32xf32> to vector<2x32xf32>
    %376 = vector.broadcast %374 : vector<1x32xf32> to vector<2x32xf32>
    %377 = arith.mulf %375, %376 : vector<2x32xf32>
    %378 = arith.addf %373, %377 : vector<2x32xf32>
    %379 = vector.extract_strided_slice %12 {offsets = [19, 0], sizes = [1, 32], strides = [1, 1]} : vector<49x32xf32> to vector<1x32xf32>
    %380 = vector.extract_strided_slice %353 {offsets = [5, 0], sizes = [2, 32], strides = [1, 1]} : vector<8x32xf32> to vector<2x32xf32>
    %381 = vector.broadcast %379 : vector<1x32xf32> to vector<2x32xf32>
    %382 = arith.mulf %380, %381 : vector<2x32xf32>
    %383 = arith.addf %378, %382 : vector<2x32xf32>
    %384 = vector.extract_strided_slice %12 {offsets = [20, 0], sizes = [1, 32], strides = [1, 1]} : vector<49x32xf32> to vector<1x32xf32>
    %385 = vector.extract_strided_slice %353 {offsets = [6, 0], sizes = [2, 32], strides = [1, 1]} : vector<8x32xf32> to vector<2x32xf32>
    %386 = vector.broadcast %384 : vector<1x32xf32> to vector<2x32xf32>
    %387 = arith.mulf %385, %386 : vector<2x32xf32>
    %388 = arith.addf %383, %387 : vector<2x32xf32>
    %c4_43 = arith.constant 4 : index
    %c0_44 = arith.constant 0 : index
    %c0_45 = arith.constant 0 : index
    %389 = vector.load %arg12[%c4_43, %c0_44, %c0_45] : memref<8x8x32xf32, #tpu.memory_space<vmem>>, vector<1x8x32xf32>
    %390 = vector.shape_cast %389 : vector<1x8x32xf32> to vector<8x32xf32>
    %391 = vector.extract_strided_slice %12 {offsets = [21, 0], sizes = [1, 32], strides = [1, 1]} : vector<49x32xf32> to vector<1x32xf32>
    %392 = vector.extract_strided_slice %390 {offsets = [0, 0], sizes = [2, 32], strides = [1, 1]} : vector<8x32xf32> to vector<2x32xf32>
    %393 = vector.broadcast %391 : vector<1x32xf32> to vector<2x32xf32>
    %394 = arith.mulf %392, %393 : vector<2x32xf32>
    %395 = arith.addf %388, %394 : vector<2x32xf32>
    %396 = vector.extract_strided_slice %12 {offsets = [22, 0], sizes = [1, 32], strides = [1, 1]} : vector<49x32xf32> to vector<1x32xf32>
    %397 = vector.extract_strided_slice %390 {offsets = [1, 0], sizes = [2, 32], strides = [1, 1]} : vector<8x32xf32> to vector<2x32xf32>
    %398 = vector.broadcast %396 : vector<1x32xf32> to vector<2x32xf32>
    %399 = arith.mulf %397, %398 : vector<2x32xf32>
    %400 = arith.addf %395, %399 : vector<2x32xf32>
    %401 = vector.extract_strided_slice %12 {offsets = [23, 0], sizes = [1, 32], strides = [1, 1]} : vector<49x32xf32> to vector<1x32xf32>
    %402 = vector.extract_strided_slice %390 {offsets = [2, 0], sizes = [2, 32], strides = [1, 1]} : vector<8x32xf32> to vector<2x32xf32>
    %403 = vector.broadcast %401 : vector<1x32xf32> to vector<2x32xf32>
    %404 = arith.mulf %402, %403 : vector<2x32xf32>
    %405 = arith.addf %400, %404 : vector<2x32xf32>
    %406 = vector.extract_strided_slice %12 {offsets = [24, 0], sizes = [1, 32], strides = [1, 1]} : vector<49x32xf32> to vector<1x32xf32>
    %407 = vector.extract_strided_slice %390 {offsets = [3, 0], sizes = [2, 32], strides = [1, 1]} : vector<8x32xf32> to vector<2x32xf32>
    %408 = vector.broadcast %406 : vector<1x32xf32> to vector<2x32xf32>
    %409 = arith.mulf %407, %408 : vector<2x32xf32>
    %410 = arith.addf %405, %409 : vector<2x32xf32>
    %411 = vector.extract_strided_slice %12 {offsets = [25, 0], sizes = [1, 32], strides = [1, 1]} : vector<49x32xf32> to vector<1x32xf32>
    %412 = vector.extract_strided_slice %390 {offsets = [4, 0], sizes = [2, 32], strides = [1, 1]} : vector<8x32xf32> to vector<2x32xf32>
    %413 = vector.broadcast %411 : vector<1x32xf32> to vector<2x32xf32>
    %414 = arith.mulf %412, %413 : vector<2x32xf32>
    %415 = arith.addf %410, %414 : vector<2x32xf32>
    %416 = vector.extract_strided_slice %12 {offsets = [26, 0], sizes = [1, 32], strides = [1, 1]} : vector<49x32xf32> to vector<1x32xf32>
    %417 = vector.extract_strided_slice %390 {offsets = [5, 0], sizes = [2, 32], strides = [1, 1]} : vector<8x32xf32> to vector<2x32xf32>
    %418 = vector.broadcast %416 : vector<1x32xf32> to vector<2x32xf32>
    %419 = arith.mulf %417, %418 : vector<2x32xf32>
    %420 = arith.addf %415, %419 : vector<2x32xf32>
    %421 = vector.extract_strided_slice %12 {offsets = [27, 0], sizes = [1, 32], strides = [1, 1]} : vector<49x32xf32> to vector<1x32xf32>
    %422 = vector.extract_strided_slice %390 {offsets = [6, 0], sizes = [2, 32], strides = [1, 1]} : vector<8x32xf32> to vector<2x32xf32>
    %423 = vector.broadcast %421 : vector<1x32xf32> to vector<2x32xf32>
    %424 = arith.mulf %422, %423 : vector<2x32xf32>
    %425 = arith.addf %420, %424 : vector<2x32xf32>
    %c5_46 = arith.constant 5 : index
    %c0_47 = arith.constant 0 : index
    %c0_48 = arith.constant 0 : index
    %426 = vector.load %arg12[%c5_46, %c0_47, %c0_48] : memref<8x8x32xf32, #tpu.memory_space<vmem>>, vector<1x8x32xf32>
    %427 = vector.shape_cast %426 : vector<1x8x32xf32> to vector<8x32xf32>
    %428 = vector.extract_strided_slice %12 {offsets = [28, 0], sizes = [1, 32], strides = [1, 1]} : vector<49x32xf32> to vector<1x32xf32>
    %429 = vector.extract_strided_slice %427 {offsets = [0, 0], sizes = [2, 32], strides = [1, 1]} : vector<8x32xf32> to vector<2x32xf32>
    %430 = vector.broadcast %428 : vector<1x32xf32> to vector<2x32xf32>
    %431 = arith.mulf %429, %430 : vector<2x32xf32>
    %432 = arith.addf %425, %431 : vector<2x32xf32>
    %433 = vector.extract_strided_slice %12 {offsets = [29, 0], sizes = [1, 32], strides = [1, 1]} : vector<49x32xf32> to vector<1x32xf32>
    %434 = vector.extract_strided_slice %427 {offsets = [1, 0], sizes = [2, 32], strides = [1, 1]} : vector<8x32xf32> to vector<2x32xf32>
    %435 = vector.broadcast %433 : vector<1x32xf32> to vector<2x32xf32>
    %436 = arith.mulf %434, %435 : vector<2x32xf32>
    %437 = arith.addf %432, %436 : vector<2x32xf32>
    %438 = vector.extract_strided_slice %12 {offsets = [30, 0], sizes = [1, 32], strides = [1, 1]} : vector<49x32xf32> to vector<1x32xf32>
    %439 = vector.extract_strided_slice %427 {offsets = [2, 0], sizes = [2, 32], strides = [1, 1]} : vector<8x32xf32> to vector<2x32xf32>
    %440 = vector.broadcast %438 : vector<1x32xf32> to vector<2x32xf32>
    %441 = arith.mulf %439, %440 : vector<2x32xf32>
    %442 = arith.addf %437, %441 : vector<2x32xf32>
    %443 = vector.extract_strided_slice %12 {offsets = [31, 0], sizes = [1, 32], strides = [1, 1]} : vector<49x32xf32> to vector<1x32xf32>
    %444 = vector.extract_strided_slice %427 {offsets = [3, 0], sizes = [2, 32], strides = [1, 1]} : vector<8x32xf32> to vector<2x32xf32>
    %445 = vector.broadcast %443 : vector<1x32xf32> to vector<2x32xf32>
    %446 = arith.mulf %444, %445 : vector<2x32xf32>
    %447 = arith.addf %442, %446 : vector<2x32xf32>
    %448 = vector.extract_strided_slice %12 {offsets = [32, 0], sizes = [1, 32], strides = [1, 1]} : vector<49x32xf32> to vector<1x32xf32>
    %449 = vector.extract_strided_slice %427 {offsets = [4, 0], sizes = [2, 32], strides = [1, 1]} : vector<8x32xf32> to vector<2x32xf32>
    %450 = vector.broadcast %448 : vector<1x32xf32> to vector<2x32xf32>
    %451 = arith.mulf %449, %450 : vector<2x32xf32>
    %452 = arith.addf %447, %451 : vector<2x32xf32>
    %453 = vector.extract_strided_slice %12 {offsets = [33, 0], sizes = [1, 32], strides = [1, 1]} : vector<49x32xf32> to vector<1x32xf32>
    %454 = vector.extract_strided_slice %427 {offsets = [5, 0], sizes = [2, 32], strides = [1, 1]} : vector<8x32xf32> to vector<2x32xf32>
    %455 = vector.broadcast %453 : vector<1x32xf32> to vector<2x32xf32>
    %456 = arith.mulf %454, %455 : vector<2x32xf32>
    %457 = arith.addf %452, %456 : vector<2x32xf32>
    %458 = vector.extract_strided_slice %12 {offsets = [34, 0], sizes = [1, 32], strides = [1, 1]} : vector<49x32xf32> to vector<1x32xf32>
    %459 = vector.extract_strided_slice %427 {offsets = [6, 0], sizes = [2, 32], strides = [1, 1]} : vector<8x32xf32> to vector<2x32xf32>
    %460 = vector.broadcast %458 : vector<1x32xf32> to vector<2x32xf32>
    %461 = arith.mulf %459, %460 : vector<2x32xf32>
    %462 = arith.addf %457, %461 : vector<2x32xf32>
    %c6_49 = arith.constant 6 : index
    %c0_50 = arith.constant 0 : index
    %c0_51 = arith.constant 0 : index
    %463 = vector.load %arg12[%c6_49, %c0_50, %c0_51] : memref<8x8x32xf32, #tpu.memory_space<vmem>>, vector<1x8x32xf32>
    %464 = vector.shape_cast %463 : vector<1x8x32xf32> to vector<8x32xf32>
    %465 = vector.extract_strided_slice %12 {offsets = [35, 0], sizes = [1, 32], strides = [1, 1]} : vector<49x32xf32> to vector<1x32xf32>
    %466 = vector.extract_strided_slice %464 {offsets = [0, 0], sizes = [2, 32], strides = [1, 1]} : vector<8x32xf32> to vector<2x32xf32>
    %467 = vector.broadcast %465 : vector<1x32xf32> to vector<2x32xf32>
    %468 = arith.mulf %466, %467 : vector<2x32xf32>
    %469 = arith.addf %462, %468 : vector<2x32xf32>
    %470 = vector.extract_strided_slice %12 {offsets = [36, 0], sizes = [1, 32], strides = [1, 1]} : vector<49x32xf32> to vector<1x32xf32>
    %471 = vector.extract_strided_slice %464 {offsets = [1, 0], sizes = [2, 32], strides = [1, 1]} : vector<8x32xf32> to vector<2x32xf32>
    %472 = vector.broadcast %470 : vector<1x32xf32> to vector<2x32xf32>
    %473 = arith.mulf %471, %472 : vector<2x32xf32>
    %474 = arith.addf %469, %473 : vector<2x32xf32>
    %475 = vector.extract_strided_slice %12 {offsets = [37, 0], sizes = [1, 32], strides = [1, 1]} : vector<49x32xf32> to vector<1x32xf32>
    %476 = vector.extract_strided_slice %464 {offsets = [2, 0], sizes = [2, 32], strides = [1, 1]} : vector<8x32xf32> to vector<2x32xf32>
    %477 = vector.broadcast %475 : vector<1x32xf32> to vector<2x32xf32>
    %478 = arith.mulf %476, %477 : vector<2x32xf32>
    %479 = arith.addf %474, %478 : vector<2x32xf32>
    %480 = vector.extract_strided_slice %12 {offsets = [38, 0], sizes = [1, 32], strides = [1, 1]} : vector<49x32xf32> to vector<1x32xf32>
    %481 = vector.extract_strided_slice %464 {offsets = [3, 0], sizes = [2, 32], strides = [1, 1]} : vector<8x32xf32> to vector<2x32xf32>
    %482 = vector.broadcast %480 : vector<1x32xf32> to vector<2x32xf32>
    %483 = arith.mulf %481, %482 : vector<2x32xf32>
    %484 = arith.addf %479, %483 : vector<2x32xf32>
    %485 = vector.extract_strided_slice %12 {offsets = [39, 0], sizes = [1, 32], strides = [1, 1]} : vector<49x32xf32> to vector<1x32xf32>
    %486 = vector.extract_strided_slice %464 {offsets = [4, 0], sizes = [2, 32], strides = [1, 1]} : vector<8x32xf32> to vector<2x32xf32>
    %487 = vector.broadcast %485 : vector<1x32xf32> to vector<2x32xf32>
    %488 = arith.mulf %486, %487 : vector<2x32xf32>
    %489 = arith.addf %484, %488 : vector<2x32xf32>
    %490 = vector.extract_strided_slice %12 {offsets = [40, 0], sizes = [1, 32], strides = [1, 1]} : vector<49x32xf32> to vector<1x32xf32>
    %491 = vector.extract_strided_slice %464 {offsets = [5, 0], sizes = [2, 32], strides = [1, 1]} : vector<8x32xf32> to vector<2x32xf32>
    %492 = vector.broadcast %490 : vector<1x32xf32> to vector<2x32xf32>
    %493 = arith.mulf %491, %492 : vector<2x32xf32>
    %494 = arith.addf %489, %493 : vector<2x32xf32>
    %495 = vector.extract_strided_slice %12 {offsets = [41, 0], sizes = [1, 32], strides = [1, 1]} : vector<49x32xf32> to vector<1x32xf32>
    %496 = vector.extract_strided_slice %464 {offsets = [6, 0], sizes = [2, 32], strides = [1, 1]} : vector<8x32xf32> to vector<2x32xf32>
    %497 = vector.broadcast %495 : vector<1x32xf32> to vector<2x32xf32>
    %498 = arith.mulf %496, %497 : vector<2x32xf32>
    %499 = arith.addf %494, %498 : vector<2x32xf32>
    %c7 = arith.constant 7 : index
    %c0_52 = arith.constant 0 : index
    %c0_53 = arith.constant 0 : index
    %500 = vector.load %arg12[%c7, %c0_52, %c0_53] : memref<8x8x32xf32, #tpu.memory_space<vmem>>, vector<1x8x32xf32>
    %501 = vector.shape_cast %500 : vector<1x8x32xf32> to vector<8x32xf32>
    %502 = vector.extract_strided_slice %12 {offsets = [42, 0], sizes = [1, 32], strides = [1, 1]} : vector<49x32xf32> to vector<1x32xf32>
    %503 = vector.extract_strided_slice %501 {offsets = [0, 0], sizes = [2, 32], strides = [1, 1]} : vector<8x32xf32> to vector<2x32xf32>
    %504 = vector.broadcast %502 : vector<1x32xf32> to vector<2x32xf32>
    %505 = arith.mulf %503, %504 : vector<2x32xf32>
    %506 = arith.addf %499, %505 : vector<2x32xf32>
    %507 = vector.extract_strided_slice %12 {offsets = [43, 0], sizes = [1, 32], strides = [1, 1]} : vector<49x32xf32> to vector<1x32xf32>
    %508 = vector.extract_strided_slice %501 {offsets = [1, 0], sizes = [2, 32], strides = [1, 1]} : vector<8x32xf32> to vector<2x32xf32>
    %509 = vector.broadcast %507 : vector<1x32xf32> to vector<2x32xf32>
    %510 = arith.mulf %508, %509 : vector<2x32xf32>
    %511 = arith.addf %506, %510 : vector<2x32xf32>
    %512 = vector.extract_strided_slice %12 {offsets = [44, 0], sizes = [1, 32], strides = [1, 1]} : vector<49x32xf32> to vector<1x32xf32>
    %513 = vector.extract_strided_slice %501 {offsets = [2, 0], sizes = [2, 32], strides = [1, 1]} : vector<8x32xf32> to vector<2x32xf32>
    %514 = vector.broadcast %512 : vector<1x32xf32> to vector<2x32xf32>
    %515 = arith.mulf %513, %514 : vector<2x32xf32>
    %516 = arith.addf %511, %515 : vector<2x32xf32>
    %517 = vector.extract_strided_slice %12 {offsets = [45, 0], sizes = [1, 32], strides = [1, 1]} : vector<49x32xf32> to vector<1x32xf32>
    %518 = vector.extract_strided_slice %501 {offsets = [3, 0], sizes = [2, 32], strides = [1, 1]} : vector<8x32xf32> to vector<2x32xf32>
    %519 = vector.broadcast %517 : vector<1x32xf32> to vector<2x32xf32>
    %520 = arith.mulf %518, %519 : vector<2x32xf32>
    %521 = arith.addf %516, %520 : vector<2x32xf32>
    %522 = vector.extract_strided_slice %12 {offsets = [46, 0], sizes = [1, 32], strides = [1, 1]} : vector<49x32xf32> to vector<1x32xf32>
    %523 = vector.extract_strided_slice %501 {offsets = [4, 0], sizes = [2, 32], strides = [1, 1]} : vector<8x32xf32> to vector<2x32xf32>
    %524 = vector.broadcast %522 : vector<1x32xf32> to vector<2x32xf32>
    %525 = arith.mulf %523, %524 : vector<2x32xf32>
    %526 = arith.addf %521, %525 : vector<2x32xf32>
    %527 = vector.extract_strided_slice %12 {offsets = [47, 0], sizes = [1, 32], strides = [1, 1]} : vector<49x32xf32> to vector<1x32xf32>
    %528 = vector.extract_strided_slice %501 {offsets = [5, 0], sizes = [2, 32], strides = [1, 1]} : vector<8x32xf32> to vector<2x32xf32>
    %529 = vector.broadcast %527 : vector<1x32xf32> to vector<2x32xf32>
    %530 = arith.mulf %528, %529 : vector<2x32xf32>
    %531 = arith.addf %526, %530 : vector<2x32xf32>
    %532 = vector.extract_strided_slice %12 {offsets = [48, 0], sizes = [1, 32], strides = [1, 1]} : vector<49x32xf32> to vector<1x32xf32>
    %533 = vector.extract_strided_slice %501 {offsets = [6, 0], sizes = [2, 32], strides = [1, 1]} : vector<8x32xf32> to vector<2x32xf32>
    %534 = vector.broadcast %532 : vector<1x32xf32> to vector<2x32xf32>
    %535 = arith.mulf %533, %534 : vector<2x32xf32>
    %536 = arith.addf %531, %535 : vector<2x32xf32>
    %c0_54 = arith.constant 0 : index
    %c0_55 = arith.constant 0 : index
    %537 = vector.load %arg3[%c0_54, %c0_55] : memref<1x32xf32, #tpu.memory_space<vmem>>, vector<1x32xf32>
    %538 = vector.broadcast %537 : vector<1x32xf32> to vector<2x32xf32>
    %539 = arith.addf %536, %538 : vector<2x32xf32>
    %c2_56 = arith.constant 2 : index
    %c0_57 = arith.constant 0 : index
    %540 = vector.load %arg13[%c2_56, %c0_57] : memref<4x32xf32, #tpu.memory_space<vmem>>, vector<2x32xf32>
    tpu.vector_store %arg13[%c2_56, %c0_57], %539 {strides = array<i32>} : memref<4x32xf32, #tpu.memory_space<vmem>>, vector<2x32xf32>,
    %c0_58 = arith.constant 0 : index
    %c0_59 = arith.constant 0 : index
    %541 = vector.load %arg13[%c0_58, %c0_59] : memref<4x32xf32, #tpu.memory_space<vmem>>, vector<4x32xf32>
    %c0_60 = arith.constant 0 : index
    %c0_61 = arith.constant 0 : index
    %542 = vector.load %arg4[%c0_60, %c0_61] : memref<1x32xf32, #tpu.memory_space<vmem>>, vector<1x32xf32>
    %c0_62 = arith.constant 0 : index
    %c0_63 = arith.constant 0 : index
    %543 = vector.load %arg5[%c0_62, %c0_63] : memref<1x32xf32, #tpu.memory_space<vmem>>, vector<1x32xf32>
    %cst_64 = arith.constant dense<0.000000e+00> : vector<4xf32>
    %544 = vector.multi_reduction <add>, %541, %cst_64 [1] : vector<4x32xf32> to vector<4xf32>
    %545 = vector.shape_cast %544 : vector<4xf32> to vector<4x1xf32>
    %cst_65 = arith.constant 3.200000e+01 : f32
    %546 = vector.broadcast %cst_65 : f32 to vector<4x1xf32>
    %547 = arith.divf %545, %546 : vector<4x1xf32>
    %548 = vector.broadcast %547 : vector<4x1xf32> to vector<4x32xf32>
    %549 = arith.subf %541, %548 : vector<4x32xf32>
    %550 = arith.mulf %549, %549 : vector<4x32xf32>
    %cst_66 = arith.constant dense<0.000000e+00> : vector<4xf32>
    %551 = vector.multi_reduction <add>, %550, %cst_66 [1] : vector<4x32xf32> to vector<4xf32>
    %552 = vector.shape_cast %551 : vector<4xf32> to vector<4x1xf32>
    %cst_67 = arith.constant 3.200000e+01 : f32
    %553 = vector.broadcast %cst_67 : f32 to vector<4x1xf32>
    %554 = arith.divf %552, %553 : vector<4x1xf32>
    %cst_68 = arith.constant 9.99999997E-7 : f32
    %555 = vector.broadcast %cst_68 : f32 to vector<4x1xf32>
    %556 = arith.addf %554, %555 : vector<4x1xf32>
    %557 = math.rsqrt %556 : vector<4x1xf32>
    %558 = vector.broadcast %557 : vector<4x1xf32> to vector<4x32xf32>
    %559 = arith.mulf %549, %558 : vector<4x32xf32>
    %560 = vector.broadcast %542 : vector<1x32xf32> to vector<4x32xf32>
    %561 = arith.mulf %559, %560 : vector<4x32xf32>
    %562 = vector.broadcast %543 : vector<1x32xf32> to vector<4x32xf32>
    %563 = arith.addf %561, %562 : vector<4x32xf32>
    %c0_69 = arith.constant 0 : index
    %c0_70 = arith.constant 0 : index
    %564 = vector.load %arg6[%c0_69, %c0_70] : memref<32x128xf32, #tpu.memory_space<vmem>>, vector<32x128xf32>
    %cst_71 = arith.constant dense<0.000000e+00> : vector<4x128xf32>
    %565 = tpu.matmul %563, %564, %cst_71 {dimension_numbers = #tpu.dot_dimension_numbers<[1], [0], [0], [1], [0, 0, 1, 1], [], []>} : vector<4x32xf32>, vector<32x128xf32>, vector<4x128xf32> -> vector<4x128xf32>
    %c0_72 = arith.constant 0 : index
    %c0_73 = arith.constant 0 : index
    %566 = vector.load %arg7[%c0_72, %c0_73] : memref<1x128xf32, #tpu.memory_space<vmem>>, vector<1x128xf32>
    %567 = vector.broadcast %566 : vector<1x128xf32> to vector<4x128xf32>
    %568 = arith.addf %565, %567 : vector<4x128xf32>
    %cst_74 = arith.constant 5.000000e-01 : f32
    %569 = vector.broadcast %cst_74 : f32 to vector<4x128xf32>
    %570 = arith.mulf %569, %568 : vector<4x128xf32>
    %cst_75 = arith.constant 0.707106769 : f32
    %571 = vector.broadcast %cst_75 : f32 to vector<4x128xf32>
    %572 = arith.mulf %568, %571 : vector<4x128xf32>
    %573 = math.absf %572 : vector<4x128xf32>
    %cst_76 = arith.constant 0.327591091 : f32
    %574 = vector.broadcast %cst_76 : f32 to vector<4x128xf32>
    %575 = arith.mulf %574, %573 : vector<4x128xf32>
    %cst_77 = arith.constant 1.000000e+00 : f32
    %576 = vector.broadcast %cst_77 : f32 to vector<4x128xf32>
    %577 = arith.addf %576, %575 : vector<4x128xf32>
    %cst_78 = arith.constant 1.000000e+00 : f32
    %578 = vector.broadcast %cst_78 : f32 to vector<4x128xf32>
    %579 = arith.divf %578, %577 : vector<4x128xf32>
    %cst_79 = arith.constant 1.06140542 : f32
    %580 = vector.broadcast %cst_79 : f32 to vector<4x128xf32>
    %581 = arith.mulf %579, %580 : vector<4x128xf32>
    %cst_80 = arith.constant -1.45315206 : f32
    %582 = vector.broadcast %cst_80 : f32 to vector<4x128xf32>
    %583 = arith.addf %582, %581 : vector<4x128xf32>
    %584 = arith.mulf %579, %583 : vector<4x128xf32>
    %cst_81 = arith.constant 1.42141378 : f32
    %585 = vector.broadcast %cst_81 : f32 to vector<4x128xf32>
    %586 = arith.addf %585, %584 : vector<4x128xf32>
    %587 = arith.mulf %579, %586 : vector<4x128xf32>
    %cst_82 = arith.constant -0.284496725 : f32
    %588 = vector.broadcast %cst_82 : f32 to vector<4x128xf32>
    %589 = arith.addf %588, %587 : vector<4x128xf32>
    %590 = arith.mulf %579, %589 : vector<4x128xf32>
    %cst_83 = arith.constant 0.254829586 : f32
    %591 = vector.broadcast %cst_83 : f32 to vector<4x128xf32>
    %592 = arith.addf %591, %590 : vector<4x128xf32>
    %593 = arith.mulf %579, %592 : vector<4x128xf32>
    %cst_84 = arith.constant 0.000000e+00 : f32
    %594 = vector.broadcast %cst_84 : f32 to vector<4x128xf32>
    %595 = arith.subf %594, %573 : vector<4x128xf32>
    %596 = arith.mulf %595, %573 : vector<4x128xf32>
    %597 = math.exp %596 : vector<4x128xf32>
    %598 = arith.mulf %593, %597 : vector<4x128xf32>
    %cst_85 = arith.constant 1.000000e+00 : f32
    %599 = vector.broadcast %cst_85 : f32 to vector<4x128xf32>
    %600 = arith.subf %599, %598 : vector<4x128xf32>
    %cst_86 = arith.constant 0.000000e+00 : f32
    %601 = vector.broadcast %cst_86 : f32 to vector<4x128xf32>
    %602 = arith.cmpf olt, %572, %601 : vector<4x128xf32>
    %cst_87 = arith.constant 0.000000e+00 : f32
    %603 = vector.broadcast %cst_87 : f32 to vector<4x128xf32>
    %604 = arith.subf %603, %600 : vector<4x128xf32>
    %605 = arith.select %602, %604, %600 : vector<4x128xi1>, vector<4x128xf32>
    %cst_88 = arith.constant 1.000000e+00 : f32
    %606 = vector.broadcast %cst_88 : f32 to vector<4x128xf32>
    %607 = arith.addf %606, %605 : vector<4x128xf32>
    %608 = arith.mulf %570, %607 : vector<4x128xf32>
    %c0_89 = arith.constant 0 : index
    %c0_90 = arith.constant 0 : index
    %609 = vector.load %arg8[%c0_89, %c0_90] : memref<128x32xf32, #tpu.memory_space<vmem>>, vector<128x32xf32>
    %cst_91 = arith.constant dense<0.000000e+00> : vector<4x32xf32>
    %610 = tpu.matmul %608, %609, %cst_91 {dimension_numbers = #tpu.dot_dimension_numbers<[1], [0], [0], [1], [0, 0, 1, 1], [], []>} : vector<4x128xf32>, vector<128x32xf32>, vector<4x32xf32> -> vector<4x32xf32>
    %c0_92 = arith.constant 0 : index
    %c0_93 = arith.constant 0 : index
    %611 = vector.load %arg9[%c0_92, %c0_93] : memref<1x32xf32, #tpu.memory_space<vmem>>, vector<1x32xf32>
    %612 = vector.broadcast %611 : vector<1x32xf32> to vector<4x32xf32>
    %613 = arith.addf %610, %612 : vector<4x32xf32>
    %c0_94 = arith.constant 0 : index
    %c0_95 = arith.constant 0 : index
    %614 = vector.load %arg10[%c0_94, %c0_95] : memref<1x32xf32, #tpu.memory_space<vmem>>, vector<1x32xf32>
    %615 = vector.broadcast %614 : vector<1x32xf32> to vector<4x32xf32>
    %616 = arith.mulf %613, %615 : vector<4x32xf32>
    %617 = arith.addf %1, %616 : vector<4x32xf32>
    %c0_96 = arith.constant 0 : index
    %c0_97 = arith.constant 0 : index
    %c0_98 = arith.constant 0 : index
    %618 = vector.load %arg11[%c0_96, %c0_97, %c0_98] : memref<1x4x32xf32, #tpu.memory_space<vmem>>, vector<1x4x32xf32>
    %619 = vector.shape_cast %618 : vector<1x4x32xf32> to vector<4x32xf32>
    %620 = vector.shape_cast %617 : vector<4x32xf32> to vector<1x4x32xf32>
    tpu.vector_store %arg11[%c0_96, %c0_97, %c0_98], %620 {strides = array<i32>} : memref<1x4x32xf32, #tpu.memory_space<vmem>>, vector<1x4x32xf32>,
    return
  }
  func.func @transform_0(%arg0: i32) -> (i32, i32, i32) {
    %c0_i32 = arith.constant 0 : i32
    %c0_i32_0 = arith.constant 0 : i32
    %c0_i32_1 = arith.constant 0 : i32
    return %arg0, %c0_i32, %c0_i32_0 : i32, i32, i32
  }
  func.func @transform_1(%arg0: i32) -> (i32, i32) {
    %c0_i32 = arith.constant 0 : i32
    %c0_i32_0 = arith.constant 0 : i32
    %c0_i32_1 = arith.constant 0 : i32
    return %c0_i32, %c0_i32_0 : i32, i32
  }
  func.func @transform_2(%arg0: i32) -> (i32, i32) {
    %c0_i32 = arith.constant 0 : i32
    %c0_i32_0 = arith.constant 0 : i32
    %c0_i32_1 = arith.constant 0 : i32
    return %c0_i32, %c0_i32_0 : i32, i32
  }
  func.func @transform_3(%arg0: i32) -> (i32, i32) {
    %c0_i32 = arith.constant 0 : i32
    %c0_i32_0 = arith.constant 0 : i32
    %c0_i32_1 = arith.constant 0 : i32
    return %c0_i32, %c0_i32_0 : i32, i32
  }
  func.func @transform_4(%arg0: i32) -> (i32, i32) {
    %c0_i32 = arith.constant 0 : i32
    %c0_i32_0 = arith.constant 0 : i32
    %c0_i32_1 = arith.constant 0 : i32
    return %c0_i32, %c0_i32_0 : i32, i32
  }
  func.func @transform_5(%arg0: i32) -> (i32, i32) {
    %c0_i32 = arith.constant 0 : i32
    %c0_i32_0 = arith.constant 0 : i32
    %c0_i32_1 = arith.constant 0 : i32
    return %c0_i32, %c0_i32_0 : i32, i32
  }
  func.func @transform_6(%arg0: i32) -> (i32, i32) {
    %c0_i32 = arith.constant 0 : i32
    %c0_i32_0 = arith.constant 0 : i32
    %c0_i32_1 = arith.constant 0 : i32
    return %c0_i32, %c0_i32_0 : i32, i32
  }
  func.func @transform_7(%arg0: i32) -> (i32, i32) {
    %c0_i32 = arith.constant 0 : i32
    %c0_i32_0 = arith.constant 0 : i32
    %c0_i32_1 = arith.constant 0 : i32
    return %c0_i32, %c0_i32_0 : i32, i32
  }
  func.func @transform_8(%arg0: i32) -> (i32, i32) {
    %c0_i32 = arith.constant 0 : i32
    %c0_i32_0 = arith.constant 0 : i32
    %c0_i32_1 = arith.constant 0 : i32
    return %c0_i32, %c0_i32_0 : i32, i32
  }
  func.func @transform_9(%arg0: i32) -> (i32, i32) {
    %c0_i32 = arith.constant 0 : i32
    %c0_i32_0 = arith.constant 0 : i32
    %c0_i32_1 = arith.constant 0 : i32
    return %c0_i32, %c0_i32_0 : i32, i32
  }
  func.func @transform_10(%arg0: i32) -> (i32, i32, i32) {
    %c0_i32 = arith.constant 0 : i32
    %c0_i32_0 = arith.constant 0 : i32
    %c0_i32_1 = arith.constant 0 : i32
    return %arg0, %c0_i32, %c0_i32_0 : i32, i32, i32
  }
}

module attributes {stable_mosaic.version = 11 : i64} {
  func.func @_head_kernel(%arg0: i32, %arg1: memref<2x4x32xf32, #tpu.memory_space<vmem>>, %arg2: memref<1x32xf32, #tpu.memory_space<vmem>>, %arg3: memref<1x32xf32, #tpu.memory_space<vmem>>, %arg4: memref<32x18xf32, #tpu.memory_space<vmem>>, %arg5: memref<18x10xf32, #tpu.memory_space<vmem>>, %arg6: memref<1x10xf32, #tpu.memory_space<vmem>>, %arg7: memref<2x10xf32, #tpu.memory_space<vmem>>) attributes {dimension_semantics = [#tpu.dimension_semantics<arbitrary>], iteration_bounds = array<i64: 1>, scalar_prefetch = 0 : i64, scratch_operands = 0 : i64, tpu.core_type = #tpu.core_type<tc>, window_params = [{pipeline_mode = #tpu.pipeline_mode<synchronous>, transform_indices = @transform_0, window_bounds = array<i64: 2, 4, 32>}, {pipeline_mode = #tpu.pipeline_mode<synchronous>, transform_indices = @transform_1, window_bounds = array<i64: 1, 32>}, {pipeline_mode = #tpu.pipeline_mode<synchronous>, transform_indices = @transform_2, window_bounds = array<i64: 1, 32>}, {pipeline_mode = #tpu.pipeline_mode<synchronous>, transform_indices = @transform_3, window_bounds = array<i64: 32, 18>}, {pipeline_mode = #tpu.pipeline_mode<synchronous>, transform_indices = @transform_4, window_bounds = array<i64: 18, 10>}, {pipeline_mode = #tpu.pipeline_mode<synchronous>, transform_indices = @transform_5, window_bounds = array<i64: 1, 10>}, {pipeline_mode = #tpu.pipeline_mode<synchronous>, transform_indices = @transform_6, window_bounds = array<i64: 2, 10>}]} {
    %c0 = arith.constant 0 : index
    %c0_0 = arith.constant 0 : index
    %c0_1 = arith.constant 0 : index
    %0 = vector.load %arg1[%c0, %c0_0, %c0_1] : memref<2x4x32xf32, #tpu.memory_space<vmem>>, vector<2x4x32xf32>
    %cst = arith.constant dense<0.000000e+00> : vector<2x32xf32>
    %1 = vector.multi_reduction <add>, %0, %cst [1] : vector<2x4x32xf32> to vector<2x32xf32>
    %cst_2 = arith.constant 4.000000e+00 : f32
    %2 = vector.broadcast %cst_2 : f32 to vector<2x32xf32>
    %3 = arith.divf %1, %2 : vector<2x32xf32>
    %c0_3 = arith.constant 0 : index
    %c0_4 = arith.constant 0 : index
    %4 = vector.load %arg2[%c0_3, %c0_4] : memref<1x32xf32, #tpu.memory_space<vmem>>, vector<1x32xf32>
    %c0_5 = arith.constant 0 : index
    %c0_6 = arith.constant 0 : index
    %5 = vector.load %arg3[%c0_5, %c0_6] : memref<1x32xf32, #tpu.memory_space<vmem>>, vector<1x32xf32>
    %cst_7 = arith.constant dense<0.000000e+00> : vector<2xf32>
    %6 = vector.multi_reduction <add>, %3, %cst_7 [1] : vector<2x32xf32> to vector<2xf32>
    %7 = vector.shape_cast %6 : vector<2xf32> to vector<2x1xf32>
    %cst_8 = arith.constant 3.200000e+01 : f32
    %8 = vector.broadcast %cst_8 : f32 to vector<2x1xf32>
    %9 = arith.divf %7, %8 : vector<2x1xf32>
    %10 = vector.broadcast %9 : vector<2x1xf32> to vector<2x32xf32>
    %11 = arith.subf %3, %10 : vector<2x32xf32>
    %12 = arith.mulf %11, %11 : vector<2x32xf32>
    %cst_9 = arith.constant dense<0.000000e+00> : vector<2xf32>
    %13 = vector.multi_reduction <add>, %12, %cst_9 [1] : vector<2x32xf32> to vector<2xf32>
    %14 = vector.shape_cast %13 : vector<2xf32> to vector<2x1xf32>
    %cst_10 = arith.constant 3.200000e+01 : f32
    %15 = vector.broadcast %cst_10 : f32 to vector<2x1xf32>
    %16 = arith.divf %14, %15 : vector<2x1xf32>
    %cst_11 = arith.constant 9.99999997E-7 : f32
    %17 = vector.broadcast %cst_11 : f32 to vector<2x1xf32>
    %18 = arith.addf %16, %17 : vector<2x1xf32>
    %19 = math.rsqrt %18 : vector<2x1xf32>
    %20 = vector.broadcast %19 : vector<2x1xf32> to vector<2x32xf32>
    %21 = arith.mulf %11, %20 : vector<2x32xf32>
    %22 = vector.broadcast %4 : vector<1x32xf32> to vector<2x32xf32>
    %23 = arith.mulf %21, %22 : vector<2x32xf32>
    %24 = vector.broadcast %5 : vector<1x32xf32> to vector<2x32xf32>
    %25 = arith.addf %23, %24 : vector<2x32xf32>
    %c0_12 = arith.constant 0 : index
    %c0_13 = arith.constant 0 : index
    %26 = vector.load %arg4[%c0_12, %c0_13] : memref<32x18xf32, #tpu.memory_space<vmem>>, vector<32x18xf32>
    %cst_14 = arith.constant dense<0.000000e+00> : vector<2x18xf32>
    %27 = tpu.matmul %25, %26, %cst_14 {dimension_numbers = #tpu.dot_dimension_numbers<[1], [0], [0], [1], [0, 0, 1, 1], [], []>} : vector<2x32xf32>, vector<32x18xf32>, vector<2x18xf32> -> vector<2x18xf32>
    %c0_15 = arith.constant 0 : index
    %c0_16 = arith.constant 0 : index
    %28 = vector.load %arg5[%c0_15, %c0_16] : memref<18x10xf32, #tpu.memory_space<vmem>>, vector<18x10xf32>
    %cst_17 = arith.constant dense<0.000000e+00> : vector<2x10xf32>
    %29 = tpu.matmul %27, %28, %cst_17 {dimension_numbers = #tpu.dot_dimension_numbers<[1], [0], [0], [1], [0, 0, 1, 1], [], []>} : vector<2x18xf32>, vector<18x10xf32>, vector<2x10xf32> -> vector<2x10xf32>
    %c0_18 = arith.constant 0 : index
    %c0_19 = arith.constant 0 : index
    %30 = vector.load %arg6[%c0_18, %c0_19] : memref<1x10xf32, #tpu.memory_space<vmem>>, vector<1x10xf32>
    %31 = vector.broadcast %30 : vector<1x10xf32> to vector<2x10xf32>
    %32 = arith.addf %29, %31 : vector<2x10xf32>
    %c0_20 = arith.constant 0 : index
    %c0_21 = arith.constant 0 : index
    %33 = vector.load %arg7[%c0_20, %c0_21] : memref<2x10xf32, #tpu.memory_space<vmem>>, vector<2x10xf32>
    tpu.vector_store %arg7[%c0_20, %c0_21], %32 {strides = array<i32>} : memref<2x10xf32, #tpu.memory_space<vmem>>, vector<2x10xf32>,
    return
  }
  func.func @transform_0(%arg0: i32) -> (i32, i32, i32) {
    %c0_i32 = arith.constant 0 : i32
    %c0_i32_0 = arith.constant 0 : i32
    %c0_i32_1 = arith.constant 0 : i32
    %c0_i32_2 = arith.constant 0 : i32
    return %c0_i32, %c0_i32_0, %c0_i32_1 : i32, i32, i32
  }
  func.func @transform_1(%arg0: i32) -> (i32, i32) {
    %c0_i32 = arith.constant 0 : i32
    %c0_i32_0 = arith.constant 0 : i32
    %c0_i32_1 = arith.constant 0 : i32
    return %c0_i32, %c0_i32_0 : i32, i32
  }
  func.func @transform_2(%arg0: i32) -> (i32, i32) {
    %c0_i32 = arith.constant 0 : i32
    %c0_i32_0 = arith.constant 0 : i32
    %c0_i32_1 = arith.constant 0 : i32
    return %c0_i32, %c0_i32_0 : i32, i32
  }
  func.func @transform_3(%arg0: i32) -> (i32, i32) {
    %c0_i32 = arith.constant 0 : i32
    %c0_i32_0 = arith.constant 0 : i32
    %c0_i32_1 = arith.constant 0 : i32
    return %c0_i32, %c0_i32_0 : i32, i32
  }
  func.func @transform_4(%arg0: i32) -> (i32, i32) {
    %c0_i32 = arith.constant 0 : i32
    %c0_i32_0 = arith.constant 0 : i32
    %c0_i32_1 = arith.constant 0 : i32
    return %c0_i32, %c0_i32_0 : i32, i32
  }
  func.func @transform_5(%arg0: i32) -> (i32, i32) {
    %c0_i32 = arith.constant 0 : i32
    %c0_i32_0 = arith.constant 0 : i32
    %c0_i32_1 = arith.constant 0 : i32
    return %c0_i32, %c0_i32_0 : i32, i32
  }
  func.func @transform_6(%arg0: i32) -> (i32, i32) {
    %c0_i32 = arith.constant 0 : i32
    %c0_i32_0 = arith.constant 0 : i32
    %c0_i32_1 = arith.constant 0 : i32
    return %c0_i32, %c0_i32_0 : i32, i32
  }
}

</mosaic_0001>

<llo_original>
// kernel: _lambda_.5
$region0: #{_lambda_.5}
  #allocation0 [shape = 'u32[]', space=smem, size = 0x4, offset = 0x4, fixed_abs, tag = 'smem constant byte address 0x4 - core index']
  #allocation1 [shape = 'u32[72,128]{1,0:T(1,128)}', space=vmem, size = 0x9000, scoped, tag = 'internal scratch']
  %s0 = inlined_call_operand.vmem [shape: f32[2,16,48], index: 0, kind: input, shape index: {}]
  %s1 = inlined_call_operand.vmem [shape: f32[48,16], index: 1, kind: input, shape index: {}]
  %s2 = inlined_call_operand.vmem [shape: f32[1,16], index: 2, kind: input, shape index: {}]
  %s3 = inlined_call_operand.vmem [shape: f32[1,16], index: 3, kind: input, shape index: {}]
  %s4 = inlined_call_operand.vmem [shape: f32[1,16], index: 4, kind: input, shape index: {}]
  %s5 = inlined_call_operand.vmem [shape: f32[2,16,16], index: 5, kind: output, shape index: {}]
  %s6 = sld [smem:[#allocation0]]
  $region53: #{_lambda_.5} parent=0
    _
  %s8 = ssub.s32 1, %s6
  %s9 = scalar_select 0, %s8, %s6
  loop: start=0, step=1, limit=4
  $region2: #{_lambda_.5} parent=0 // loop_pre_header
    _
  $region3: #{_lambda_.5} parent=0 // loop_header
    %s11 = sphi 0, %s15
    %p12 = scmp.ge.s32.totalorder %s11, 4
    %s21 = sphi 0, %s23
    %s24 = sphi 0, %s21
    %s25 = sphi 0, %s24
    %s41 = sphi 0, %s25
    %s45 = sphi 0, %s45
    %s47 = sphi 0, %s45
    %s48 = sphi 0, %s47
    %s62 = sphi 0, %s48
    %s66 = sphi 0, %s66
    %s68 = sphi 0, %s66
    %s69 = sphi 0, %s68
    %s83 = sphi 0, %s69
    %s87 = sphi 0, %s87
    %s89 = sphi 0, %s87
    %s90 = sphi 0, %s89
    %s104 = sphi 0, %s90
    %s108 = sphi 0, %s108
    %s110 = sphi 0, %s108
    %s111 = sphi 0, %s110
    %s125 = sphi 0, %s111
    %s131 = sphi 0, %s133
    %s134 = sphi 0, %s131
    %s135 = sphi 0, %s134
    %s151 = sphi 0, %s135
  $region4: #{_lambda_.5} parent=0 // loop_header_branch
    %14 = sbr.rel (%p12) target = $region8
  $region5: #{_lambda_.5} parent=0 // loop_body
    %s16 = ssub.s32 %s11, 1
    %s17 = ssub.s32 %s11, 2
    %s18 = sadd.s32 %s11, 1
    %s19 = ssub.s32 %s11, %s18
    %p20 = scmp.eq.s32.totalorder %s19, 0
    %s22 = sadd.s32 %s21, 1
    %s23 = scalar_select %p20, %s21, %s22
    %p26 = pneg %p20
    %p27 = scmp.eq.s32.totalorder %s11, 1
    %p28 = por %p26, %p27
    %p29 = scmp.ne.s32.totalorder %s21, %s24
    %p30 = scmp.eq.s32.totalorder %s11, 0
    %p31 = por %p29, %p30
    %p32 = scmp.ne.s32.totalorder %s21, %s24
    %p33 = scmp.eq.s32.totalorder %s16, 1
    %p34 = por %p32, %p33
    %p35 = scmp.ne.s32.totalorder %s24, %s25
    %p36 = scmp.eq.s32.totalorder %s16, 0
    %p37 = por %p35, %p36
    %p38 = scmp.ne.s32.totalorder %s24, %s25
    %p39 = scmp.eq.s32.totalorder %s17, 1
    %p40 = por %p38, %p39
    %p42 = scmp.ne.s32.totalorder %s25, %s41
    %p43 = scmp.eq.s32.totalorder %s17, 0
    %p44 = por %p42, %p43
    %s46 = sadd.s32 %s45, 1
    %p49 = scmp.eq.s32.totalorder %s11, 1
    %p50 = scmp.ne.s32.totalorder %s45, %s47
    %p51 = scmp.eq.s32.totalorder %s11, 0
    %p52 = por %p50, %p51
    %p53 = scmp.ne.s32.totalorder %s45, %s47
    %p54 = scmp.eq.s32.totalorder %s16, 1
    %p55 = por %p53, %p54
    %p56 = scmp.ne.s32.totalorder %s47, %s48
    %p57 = scmp.eq.s32.totalorder %s16, 0
    %p58 = por %p56, %p57
    %p59 = scmp.ne.s32.totalorder %s47, %s48
    %p60 = scmp.eq.s32.totalorder %s17, 1
    %p61 = por %p59, %p60
    %p63 = scmp.ne.s32.totalorder %s48, %s62
    %p64 = scmp.eq.s32.totalorder %s17, 0
    %p65 = por %p63, %p64
    %s67 = sadd.s32 %s66, 1
    %p70 = scmp.eq.s32.totalorder %s11, 1
    %p71 = scmp.ne.s32.totalorder %s66, %s68
    %p72 = scmp.eq.s32.totalorder %s11, 0
    %p73 = por %p71, %p72
    %p74 = scmp.ne.s32.totalorder %s66, %s68
    %p75 = scmp.eq.s32.totalorder %s16, 1
    %p76 = por %p74, %p75
    %p77 = scmp.ne.s32.totalorder %s68, %s69
    %p78 = scmp.eq.s32.totalorder %s16, 0
    %p79 = por %p77, %p78
    %p80 = scmp.ne.s32.totalorder %s68, %s69
    %p81 = scmp.eq.s32.totalorder %s17, 1
    %p82 = por %p80, %p81
    %p84 = scmp.ne.s32.totalorder %s69, %s83
    %p85 = scmp.eq.s32.totalorder %s17, 0
    %p86 = por %p84, %p85
    %s88 = sadd.s32 %s87, 1
    %p91 = scmp.eq.s32.totalorder %s11, 1
    %p92 = scmp.ne.s32.totalorder %s87, %s89
    %p93 = scmp.eq.s32.totalorder %s11, 0
    %p94 = por %p92, %p93
    %p95 = scmp.ne.s32.totalorder %s87, %s89
    %p96 = scmp.eq.s32.totalorder %s16, 1
    %p97 = por %p95, %p96
    %p98 = scmp.ne.s32.totalorder %s89, %s90
    %p99 = scmp.eq.s32.totalorder %s16, 0
    %p100 = por %p98, %p99
    %p101 = scmp.ne.s32.totalorder %s89, %s90
    %p102 = scmp.eq.s32.totalorder %s17, 1
    %p103 = por %p101, %p102
    %p105 = scmp.ne.s32.totalorder %s90, %s104
    %p106 = scmp.eq.s32.totalorder %s17, 0
    %p107 = por %p105, %p106
    %s109 = sadd.s32 %s108, 1
    %p112 = scmp.eq.s32.totalorder %s11, 1
    %p113 = scmp.ne.s32.totalorder %s108, %s110
    %p114 = scmp.eq.s32.totalorder %s11, 0
    %p115 = por %p113, %p114
    %p116 = scmp.ne.s32.totalorder %s108, %s110
    %p117 = scmp.eq.s32.totalorder %s16, 1
    %p118 = por %p116, %p117
    %p119 = scmp.ne.s32.totalorder %s110, %s111
    %p120 = scmp.eq.s32.totalorder %s16, 0
    %p121 = por %p119, %p120
    %p122 = scmp.ne.s32.totalorder %s110, %s111
    %p123 = scmp.eq.s32.totalorder %s17, 1
    %p124 = por %p122, %p123
    %p126 = scmp.ne.s32.totalorder %s111, %s125
    %p127 = scmp.eq.s32.totalorder %s17, 0
    %p128 = por %p126, %p127
    %s129 = ssub.s32 %s11, %s18
    %p130 = scmp.eq.s32.totalorder %s129, 0
    %s132 = sadd.s32 %s131, 1
    %s133 = scalar_select %p130, %s131, %s132
    %p136 = pneg %p130
    %p137 = scmp.eq.s32.totalorder %s11, 1
    %p138 = por %p136, %p137
    %p139 = scmp.ne.s32.totalorder %s131, %s134
    %p140 = scmp.eq.s32.totalorder %s11, 0
    %p141 = por %p139, %p140
    %p142 = scmp.ne.s32.totalorder %s131, %s134
    %p143 = scmp.eq.s32.totalorder %s16, 1
    %p144 = por %p142, %p143
    %p145 = scmp.ne.s32.totalorder %s134, %s135
    %p146 = scmp.eq.s32.totalorder %s16, 0
    %p147 = por %p145, %p146
    %p148 = scmp.ne.s32.totalorder %s134, %s135
    %p149 = scmp.eq.s32.totalorder %s17, 1
    %p150 = por %p148, %p149
    %p152 = scmp.ne.s32.totalorder %s135, %s151
    %p153 = scmp.eq.s32.totalorder %s17, 0
    %p154 = por %p152, %p153
    %p155 = scmp.le.s32.totalorder 1, %s11
    %p156 = scmp.lt.s32.totalorder %s11, 3
    %p157 = pnand %p155, %p156
    %p158 = pneg %p157
    // Predicated region
    $region9: #{_lambda_.5} parent=5 // pred_check
      _
    $region10: #{_lambda_.5} parent=5 // pred_check_branch
      %160 = sbr.rel (%p157) target = $region12
    $region11: #{_lambda_.5} parent=5 // pred_region
      %s161 = ssub.s32 %s11, 1
      // Predicated region
      $region13: #{_lambda_.5} parent=11 // pred_check
        %p162 = pneg %p58
      $region14: #{_lambda_.5} parent=11 // pred_check_branch
        %164 = sbr.rel (%p162) target = $region16
      $region15: #{_lambda_.5} parent=11 // pred_region
        _
      $region16: #{_lambda_.5} parent=11 // pred_fallthru
        _
      // Predicated region
      $region17: #{_lambda_.5} parent=11 // pred_check
        %p165 = pneg %p79
      $region18: #{_lambda_.5} parent=11 // pred_check_branch
        %167 = sbr.rel (%p165) target = $region20
      $region19: #{_lambda_.5} parent=11 // pred_region
        _
      $region20: #{_lambda_.5} parent=11 // pred_fallthru
        _
      // Predicated region
      $region21: #{_lambda_.5} parent=11 // pred_check
        %p168 = pneg %p100
      $region22: #{_lambda_.5} parent=11 // pred_check_branch
        %170 = sbr.rel (%p168) target = $region24
      $region23: #{_lambda_.5} parent=11 // pred_region
        _
      $region24: #{_lambda_.5} parent=11 // pred_fallthru
        _
      // Predicated region
      $region25: #{_lambda_.5} parent=11 // pred_check
        %p171 = pneg %p121
      $region26: #{_lambda_.5} parent=11 // pred_check_branch
        %173 = sbr.rel (%p171) target = $region28
      $region27: #{_lambda_.5} parent=11 // pred_region
        _
      $region28: #{_lambda_.5} parent=11 // pred_fallthru
        _
    $region12: #{_lambda_.5} parent=5 // pred_fallthru
      _
    %p174 = scmp.lt.s32.totalorder %s11, 2
    // Predicated region
    $region29: #{_lambda_.5} parent=5 // pred_check
      %p175 = pneg %p174
    $region30: #{_lambda_.5} parent=5 // pred_check_branch
      %177 = sbr.rel (%p175) target = $region32
    $region31: #{_lambda_.5} parent=5 // pred_region
      // Predicated region
      $region33: #{_lambda_.5} parent=31 // pred_check
        %p178 = pneg %p31
      $region34: #{_lambda_.5} parent=31 // pred_check_branch
        %180 = sbr.rel (%p178) target = $region36
      $region35: #{_lambda_.5} parent=31 // pred_region
        %p181 = scmp.lt.s32.totalorder %s11, 1
        %s182 = scalar_select %p181, %s11, 1
        %s183 = smul.addr %s182, 2
        %s184 = smul.addr %s183, 8
        %s185 = scalar_lea.vmem %s0, %s184
      $region36: #{_lambda_.5} parent=31 // pred_fallthru
        _
    $region32: #{_lambda_.5} parent=5 // pred_fallthru
      _
    %p186 = scmp.le.s32.totalorder 1, %s11
    %p187 = scmp.lt.s32.totalorder %s11, 3
    %p188 = pnand %p186, %p187
    %p189 = pneg %p188
    // Predicated region
    $region37: #{_lambda_.5} parent=5 // pred_check
      _
    $region38: #{_lambda_.5} parent=5 // pred_check_branch
      %191 = sbr.rel (%p188) target = $region40
    $region39: #{_lambda_.5} parent=5 // pred_region
      %s192 = ssub.s32 %s11, 1
      %p193 = scmp.lt.s32.totalorder %s16, 1
      %s194 = scalar_select %p193, %s16, 1
      %s195 = smul.addr %s194, 2
      %s196 = smul.addr %s195, 8
      %s197 = scalar_lea.vmem %s0, %s196
      %p198 = pneg %p37
      %p199 = pneg %p34
      %p200 = pneg %p58
      %p201 = pneg %p55
      %p202 = pneg %p79
      %p203 = pneg %p76
      %p204 = pneg %p100
      %p205 = pneg %p97
      %p206 = pneg %p121
      %p207 = pneg %p118
      %p208 = pneg %p147
      %p209 = pneg %p144
      %p210 = scmp.lt.s32.totalorder %s16, 1
      %s211 = scalar_select %p210, %s16, 1
      %s212 = smul.addr %s211, 2
      %s213 = smul.addr %s212, 8
      %s214 = scalar_lea.vmem %s5, %s213
      %p215 = scmp.lt.s32.totalorder %s16, 1
      %s216 = scalar_select %p215, %s16, 1
      %s217 = smul.addr %s216, 2
      %s218 = smul.addr %s217, 8
      %s219 = scalar_lea.vmem %s0, %s218
      %p220 = scmp.lt.s32.totalorder %s16, 1
      %s221 = scalar_select %p220, %s16, 1
      %s222 = smul.addr %s221, 2
      %s223 = smul.addr %s222, 8
      %s224 = scalar_lea.vmem %s5, %s223
      %v225 = vld [vmem:[%s219] sm:$0xff]
      %v226 = vld [vmem:[%s219 + $0x8] sm:$0xff]
      %v227 = vld [vmem:[%s1] sm:$0xff]
      %v228 = vld [vmem:[%s1 + $0x8] sm:$0xff]
      %v229 = vld [vmem:[%s1 + $0x10] sm:$0xff]
      %v230 = vld [vmem:[%s1 + $0x18] sm:$0xff]
      %v231 = vld [vmem:[%s1 + $0x20] sm:$0xff]
      %v232 = vld [vmem:[%s1 + $0x28] sm:$0xff]
      %v233 = vld [vmem:[%s2] sm:$0x1]
      %v235 = vperm.slane %v233, 0
      %vm237 = vcmask 392192
      %v239 = vsel %vm237, %v225, 0
      %v242 = vsel %vm237, %v226, 0
      %244 = vmatpush.msra.mxu0 0.0
      %245 = vmatpush.msra.mxu0 0.0
      %246 = vmatpush.msra.mxu0 0.0
      %247 = vmatpush.msra.mxu0 0.0
      %248 = vmatpush.msra.mxu0 0.0
      %249 = vmatpush.msra.mxu0 0.0
      %250 = vmatpush.msra.mxu0 0.0
      %251 = vmatpush.msra.mxu0 0.0
      %252 = vmatpush.msra.mxu0 0.0
      %253 = vmatpush.msra.mxu0 0.0
      %254 = vmatpush.msra.mxu0 %v232
      %255 = vmatpush.msra.mxu0 %v231
      %256 = vmatpush.msra.mxu0 %v230
      %257 = vmatpush.msra.mxu0 %v229
      %258 = vmatpush.msra.mxu0 %v228
      %259 = vmatpush.msra.mxu0 %v227
      %260 = vmatmul.f32.gmra.mxu0 %v239
      %v261 = vpop.f32.mrf.mxu0
      %v262 = vadd.f32 %v235, %v261
      %263 = vmatmul.f32.gmra.mxu0 %v242
      %v264 = vpop.f32.mrf.mxu0
      %v265 = vadd.f32 %v235, %v264
      %266 = vdwg.mxu0
      %v267 = vld [vmem:[%s3] sm:$0x1]
      %v268 = vld [vmem:[%s4] sm:$0x1]
      %vm269 = vcmask 130048
      %v270 = vsel %vm269, %v262, 0.0
      %271 = vadd.xlane.f32.xlu0 %v270
      %v272 = vpop.xlane.xlu0 %271
      %v273 = vsel %vm269, %v265, 0.0
      %274 = vadd.xlane.f32.xlu0 %v273
      %v275 = vpop.xlane.xlu0 %274
      %v276 = vrcp.pop 16.0
      %v277 = vmul.f32 16.0, %v276
      %v278 = vsub.f32 1.0, %v277
      %v279 = vmul.f32 %v276, %v278
      %v280 = vadd.f32 %v276, %v279
      %vm281 = vweird.f32 %v276
      %v282 = vsel %vm281, %v276, %v280
      %v283 = vmul.f32 %v272, %v282
      %v284 = vmul.f32 %v275, %v282
      %v285 = vsub.f32 %v262, %v283
      %v286 = vsub.f32 %v265, %v284
      %v287 = vmul.f32 %v285, %v285
      %v288 = vmul.f32 %v286, %v286
      %v289 = vsel %vm269, %v287, 0.0
      %290 = vadd.xlane.f32.xlu0 %v289
      %v291 = vpop.xlane.xlu0 %290
      %v292 = vsel %vm269, %v288, 0.0
      %293 = vadd.xlane.f32.xlu0 %v292
      %v294 = vpop.xlane.xlu0 %293
      %v295 = vmul.f32 %v291, %v282
      %v296 = vmul.f32 %v294, %v282
      %v297 = vadd.f32 %v295, 1e-06
      %v298 = vadd.f32 %v296, 1e-06
      %v299 = vrsqrt.pop %v297
      %v300 = vmul.f32 %v299, %v297
      %v301 = vmul.f32 %v300, %v299
      %v302 = vmul.f32 0.5, %v301
      %v303 = vsub.f32 1.5, %v302
      %v304 = vmul.f32 %v299, %v303
      %vm305 = vweird.f32 %v297
      %vm306 = vweird.f32 %v299
      %vm307 = vmor %vm305, %vm306
      %v308 = vsel %vm307, %v299, %v304
      %v309 = vrsqrt.pop %v298
      %v310 = vmul.f32 %v309, %v298
      %v311 = vmul.f32 %v310, %v309
      %v312 = vmul.f32 0.5, %v311
      %v313 = vsub.f32 1.5, %v312
      %v314 = vmul.f32 %v309, %v313
      %vm315 = vweird.f32 %v298
      %vm316 = vweird.f32 %v309
      %vm317 = vmor %vm315, %vm316
      %v318 = vsel %vm317, %v309, %v314
      %v319 = vmul.f32 %v285, %v308
      %v320 = vmul.f32 %v286, %v318
      %v322 = vperm.slane %v267, 0
      %v324 = vmul.f32 %v319, %v322
      %v325 = vmul.f32 %v320, %v322
      %v327 = vperm.slane %v268, 0
      %v329 = vadd.f32 %v324, %v327
      %v330 = vadd.f32 %v325, %v327
      %331 = vst.msk [vmem:[%s224] sm:$0xff] %vm269, %v329
      %332 = vst.msk [vmem:[%s224 + $0x8] sm:$0xff] %vm269, %v330
      %p333 = scmp.lt.s32.totalorder %s16, 1
      %s334 = scalar_select %p333, %s16, 1
      %s335 = smul.addr %s334, 2
      %s336 = smul.addr %s335, 8
      %s337 = scalar_lea.vmem %s5, %s336
      // Predicated region
      $region41: #{_lambda_.5} parent=39 // pred_check
        %p338 = pneg %p144
      $region42: #{_lambda_.5} parent=39 // pred_check_branch
        %340 = sbr.rel (%p338) target = $region44
      $region43: #{_lambda_.5} parent=39 // pred_region
        _
      $region44: #{_lambda_.5} parent=39 // pred_fallthru
        _
    $region40: #{_lambda_.5} parent=5 // pred_fallthru
      _
    %p341 = scmp.le.s32.totalorder 2, %s11
    // Predicated region
    $region45: #{_lambda_.5} parent=5 // pred_check
      %p342 = pneg %p341
    $region46: #{_lambda_.5} parent=5 // pred_check_branch
      %344 = sbr.rel (%p342) target = $region48
    $region47: #{_lambda_.5} parent=5 // pred_region
      %s345 = ssub.s32 %s11, 2
      // Predicated region
      $region49: #{_lambda_.5} parent=47 // pred_check
        %p346 = pneg %p150
      $region50: #{_lambda_.5} parent=47 // pred_check_branch
        %348 = sbr.rel (%p346) target = $region52
      $region51: #{_lambda_.5} parent=47 // pred_region
        %p349 = scmp.lt.s32.totalorder %s17, 1
        %s350 = scalar_select %p349, %s17, 1
        %s351 = smul.addr %s350, 2
        %s352 = smul.addr %s351, 8
        %s353 = scalar_lea.vmem %s5, %s352
      $region52: #{_lambda_.5} parent=47 // pred_fallthru
        _
    $region48: #{_lambda_.5} parent=5 // pred_fallthru
      _
  $region6: #{_lambda_.5} parent=0 // loop_footer
    %s15 = sadd.s32 1, %s11
  $region7: #{_lambda_.5} parent=0 // loop_footer_branch
    %10 = sbr.rel target = $region3
  $region8: #{_lambda_.5} parent=0 // loop_exit
    _

// kernel: _lambda_.7
$region0: #{_lambda_.7}
  #allocation0 [shape = 'u32[]', space=smem, size = 0x4, offset = 0x4, fixed_abs, tag = 'smem constant byte address 0x4 - core index']
  #allocation1 [shape = 'u32[72,128]{1,0:T(1,128)}', space=vmem, size = 0x9000, scoped, tag = 'internal scratch']
  %s0 = inlined_call_operand.vmem [shape: f32[2,4,4,16], index: 0, kind: input, shape index: {}]
  %s1 = inlined_call_operand.vmem [shape: f32[1,16], index: 1, kind: input, shape index: {}]
  %s2 = inlined_call_operand.vmem [shape: f32[1,16], index: 2, kind: input, shape index: {}]
  %s3 = inlined_call_operand.vmem [shape: f32[4,16,32], index: 3, kind: input, shape index: {}]
  %s4 = inlined_call_operand.vmem [shape: f32[1,32], index: 4, kind: input, shape index: {}]
  %s5 = inlined_call_operand.vmem [shape: f32[2,4,32], index: 5, kind: output, shape index: {}]
  %s6 = sld [smem:[#allocation0]]
  $region53: #{_lambda_.7} parent=0
    _
  %s8 = ssub.s32 1, %s6
  %s9 = scalar_select 0, %s8, %s6
  loop: start=0, step=1, limit=4
  $region2: #{_lambda_.7} parent=0 // loop_pre_header
    _
  $region3: #{_lambda_.7} parent=0 // loop_header
    %s11 = sphi 0, %s15
    %p12 = scmp.ge.s32.totalorder %s11, 4
    %s21 = sphi 0, %s23
    %s24 = sphi 0, %s21
    %s25 = sphi 0, %s24
    %s41 = sphi 0, %s25
    %s45 = sphi 0, %s45
    %s47 = sphi 0, %s45
    %s48 = sphi 0, %s47
    %s62 = sphi 0, %s48
    %s66 = sphi 0, %s66
    %s68 = sphi 0, %s66
    %s69 = sphi 0, %s68
    %s83 = sphi 0, %s69
    %s87 = sphi 0, %s87
    %s89 = sphi 0, %s87
    %s90 = sphi 0, %s89
    %s104 = sphi 0, %s90
    %s108 = sphi 0, %s108
    %s110 = sphi 0, %s108
    %s111 = sphi 0, %s110
    %s125 = sphi 0, %s111
    %s131 = sphi 0, %s133
    %s134 = sphi 0, %s131
    %s135 = sphi 0, %s134
    %s151 = sphi 0, %s135
  $region4: #{_lambda_.7} parent=0 // loop_header_branch
    %14 = sbr.rel (%p12) target = $region8
  $region5: #{_lambda_.7} parent=0 // loop_body
    %s16 = ssub.s32 %s11, 1
    %s17 = ssub.s32 %s11, 2
    %s18 = sadd.s32 %s11, 1
    %s19 = ssub.s32 %s11, %s18
    %p20 = scmp.eq.s32.totalorder %s19, 0
    %s22 = sadd.s32 %s21, 1
    %s23 = scalar_select %p20, %s21, %s22
    %p26 = pneg %p20
    %p27 = scmp.eq.s32.totalorder %s11, 1
    %p28 = por %p26, %p27
    %p29 = scmp.ne.s32.totalorder %s21, %s24
    %p30 = scmp.eq.s32.totalorder %s11, 0
    %p31 = por %p29, %p30
    %p32 = scmp.ne.s32.totalorder %s21, %s24
    %p33 = scmp.eq.s32.totalorder %s16, 1
    %p34 = por %p32, %p33
    %p35 = scmp.ne.s32.totalorder %s24, %s25
    %p36 = scmp.eq.s32.totalorder %s16, 0
    %p37 = por %p35, %p36
    %p38 = scmp.ne.s32.totalorder %s24, %s25
    %p39 = scmp.eq.s32.totalorder %s17, 1
    %p40 = por %p38, %p39
    %p42 = scmp.ne.s32.totalorder %s25, %s41
    %p43 = scmp.eq.s32.totalorder %s17, 0
    %p44 = por %p42, %p43
    %s46 = sadd.s32 %s45, 1
    %p49 = scmp.eq.s32.totalorder %s11, 1
    %p50 = scmp.ne.s32.totalorder %s45, %s47
    %p51 = scmp.eq.s32.totalorder %s11, 0
    %p52 = por %p50, %p51
    %p53 = scmp.ne.s32.totalorder %s45, %s47
    %p54 = scmp.eq.s32.totalorder %s16, 1
    %p55 = por %p53, %p54
    %p56 = scmp.ne.s32.totalorder %s47, %s48
    %p57 = scmp.eq.s32.totalorder %s16, 0
    %p58 = por %p56, %p57
    %p59 = scmp.ne.s32.totalorder %s47, %s48
    %p60 = scmp.eq.s32.totalorder %s17, 1
    %p61 = por %p59, %p60
    %p63 = scmp.ne.s32.totalorder %s48, %s62
    %p64 = scmp.eq.s32.totalorder %s17, 0
    %p65 = por %p63, %p64
    %s67 = sadd.s32 %s66, 1
    %p70 = scmp.eq.s32.totalorder %s11, 1
    %p71 = scmp.ne.s32.totalorder %s66, %s68
    %p72 = scmp.eq.s32.totalorder %s11, 0
    %p73 = por %p71, %p72
    %p74 = scmp.ne.s32.totalorder %s66, %s68
    %p75 = scmp.eq.s32.totalorder %s16, 1
    %p76 = por %p74, %p75
    %p77 = scmp.ne.s32.totalorder %s68, %s69
    %p78 = scmp.eq.s32.totalorder %s16, 0
    %p79 = por %p77, %p78
    %p80 = scmp.ne.s32.totalorder %s68, %s69
    %p81 = scmp.eq.s32.totalorder %s17, 1
    %p82 = por %p80, %p81
    %p84 = scmp.ne.s32.totalorder %s69, %s83
    %p85 = scmp.eq.s32.totalorder %s17, 0
    %p86 = por %p84, %p85
    %s88 = sadd.s32 %s87, 1
    %p91 = scmp.eq.s32.totalorder %s11, 1
    %p92 = scmp.ne.s32.totalorder %s87, %s89
    %p93 = scmp.eq.s32.totalorder %s11, 0
    %p94 = por %p92, %p93
    %p95 = scmp.ne.s32.totalorder %s87, %s89
    %p96 = scmp.eq.s32.totalorder %s16, 1
    %p97 = por %p95, %p96
    %p98 = scmp.ne.s32.totalorder %s89, %s90
    %p99 = scmp.eq.s32.totalorder %s16, 0
    %p100 = por %p98, %p99
    %p101 = scmp.ne.s32.totalorder %s89, %s90
    %p102 = scmp.eq.s32.totalorder %s17, 1
    %p103 = por %p101, %p102
    %p105 = scmp.ne.s32.totalorder %s90, %s104
    %p106 = scmp.eq.s32.totalorder %s17, 0
    %p107 = por %p105, %p106
    %s109 = sadd.s32 %s108, 1
    %p112 = scmp.eq.s32.totalorder %s11, 1
    %p113 = scmp.ne.s32.totalorder %s108, %s110
    %p114 = scmp.eq.s32.totalorder %s11, 0
    %p115 = por %p113, %p114
    %p116 = scmp.ne.s32.totalorder %s108, %s110
    %p117 = scmp.eq.s32.totalorder %s16, 1
    %p118 = por %p116, %p117
    %p119 = scmp.ne.s32.totalorder %s110, %s111
    %p120 = scmp.eq.s32.totalorder %s16, 0
    %p121 = por %p119, %p120
    %p122 = scmp.ne.s32.totalorder %s110, %s111
    %p123 = scmp.eq.s32.totalorder %s17, 1
    %p124 = por %p122, %p123
    %p126 = scmp.ne.s32.totalorder %s111, %s125
    %p127 = scmp.eq.s32.totalorder %s17, 0
    %p128 = por %p126, %p127
    %s129 = ssub.s32 %s11, %s18
    %p130 = scmp.eq.s32.totalorder %s129, 0
    %s132 = sadd.s32 %s131, 1
    %s133 = scalar_select %p130, %s131, %s132
    %p136 = pneg %p130
    %p137 = scmp.eq.s32.totalorder %s11, 1
    %p138 = por %p136, %p137
    %p139 = scmp.ne.s32.totalorder %s131, %s134
    %p140 = scmp.eq.s32.totalorder %s11, 0
    %p141 = por %p139, %p140
    %p142 = scmp.ne.s32.totalorder %s131, %s134
    %p143 = scmp.eq.s32.totalorder %s16, 1
    %p144 = por %p142, %p143
    %p145 = scmp.ne.s32.totalorder %s134, %s135
    %p146 = scmp.eq.s32.totalorder %s16, 0
    %p147 = por %p145, %p146
    %p148 = scmp.ne.s32.totalorder %s134, %s135
    %p149 = scmp.eq.s32.totalorder %s17, 1
    %p150 = por %p148, %p149
    %p152 = scmp.ne.s32.totalorder %s135, %s151
    %p153 = scmp.eq.s32.totalorder %s17, 0
    %p154 = por %p152, %p153
    %p155 = scmp.le.s32.totalorder 1, %s11
    %p156 = scmp.lt.s32.totalorder %s11, 3
    %p157 = pnand %p155, %p156
    %p158 = pneg %p157
    // Predicated region
    $region9: #{_lambda_.7} parent=5 // pred_check
      _
    $region10: #{_lambda_.7} parent=5 // pred_check_branch
      %160 = sbr.rel (%p157) target = $region12
    $region11: #{_lambda_.7} parent=5 // pred_region
      %s161 = ssub.s32 %s11, 1
      // Predicated region
      $region13: #{_lambda_.7} parent=11 // pred_check
        %p162 = pneg %p58
      $region14: #{_lambda_.7} parent=11 // pred_check_branch
        %164 = sbr.rel (%p162) target = $region16
      $region15: #{_lambda_.7} parent=11 // pred_region
        _
      $region16: #{_lambda_.7} parent=11 // pred_fallthru
        _
      // Predicated region
      $region17: #{_lambda_.7} parent=11 // pred_check
        %p165 = pneg %p79
      $region18: #{_lambda_.7} parent=11 // pred_check_branch
        %167 = sbr.rel (%p165) target = $region20
      $region19: #{_lambda_.7} parent=11 // pred_region
        _
      $region20: #{_lambda_.7} parent=11 // pred_fallthru
        _
      // Predicated region
      $region21: #{_lambda_.7} parent=11 // pred_check
        %p168 = pneg %p100
      $region22: #{_lambda_.7} parent=11 // pred_check_branch
        %170 = sbr.rel (%p168) target = $region24
      $region23: #{_lambda_.7} parent=11 // pred_region
        _
      $region24: #{_lambda_.7} parent=11 // pred_fallthru
        _
      // Predicated region
      $region25: #{_lambda_.7} parent=11 // pred_check
        %p171 = pneg %p121
      $region26: #{_lambda_.7} parent=11 // pred_check_branch
        %173 = sbr.rel (%p171) target = $region28
      $region27: #{_lambda_.7} parent=11 // pred_region
        _
      $region28: #{_lambda_.7} parent=11 // pred_fallthru
        _
    $region12: #{_lambda_.7} parent=5 // pred_fallthru
      _
    %p174 = scmp.lt.s32.totalorder %s11, 2
    // Predicated region
    $region29: #{_lambda_.7} parent=5 // pred_check
      %p175 = pneg %p174
    $region30: #{_lambda_.7} parent=5 // pred_check_branch
      %177 = sbr.rel (%p175) target = $region32
    $region31: #{_lambda_.7} parent=5 // pred_region
      // Predicated region
      $region33: #{_lambda_.7} parent=31 // pred_check
        %p178 = pneg %p31
      $region34: #{_lambda_.7} parent=31 // pred_check_branch
        %180 = sbr.rel (%p178) target = $region36
      $region35: #{_lambda_.7} parent=31 // pred_region
        %p181 = scmp.lt.s32.totalorder %s11, 1
        %s182 = scalar_select %p181, %s11, 1
        %s183 = smul.addr %s182, 4
        %s184 = smul.addr %s183, 4
        %s185 = scalar_lea.vmem %s0, %s184
      $region36: #{_lambda_.7} parent=31 // pred_fallthru
        _
    $region32: #{_lambda_.7} parent=5 // pred_fallthru
      _
    %p186 = scmp.le.s32.totalorder 1, %s11
    %p187 = scmp.lt.s32.totalorder %s11, 3
    %p188 = pnand %p186, %p187
    %p189 = pneg %p188
    // Predicated region
    $region37: #{_lambda_.7} parent=5 // pred_check
      _
    $region38: #{_lambda_.7} parent=5 // pred_check_branch
      %191 = sbr.rel (%p188) target = $region40
    $region39: #{_lambda_.7} parent=5 // pred_region
      %s192 = ssub.s32 %s11, 1
      %p193 = scmp.lt.s32.totalorder %s16, 1
      %s194 = scalar_select %p193, %s16, 1
      %s195 = smul.addr %s194, 4
      %s196 = smul.addr %s195, 4
      %s197 = scalar_lea.vmem %s0, %s196
      %p198 = pneg %p37
      %p199 = pneg %p34
      %p200 = pneg %p58
      %p201 = pneg %p55
      %p202 = pneg %p79
      %p203 = pneg %p76
      %p204 = pneg %p100
      %p205 = pneg %p97
      %p206 = pneg %p121
      %p207 = pneg %p118
      %p208 = pneg %p147
      %p209 = pneg %p144
      %p210 = scmp.lt.s32.totalorder %s16, 1
      %s211 = scalar_select %p210, %s16, 1
      %s212 = smul.addr %s211, 4
      %s213 = scalar_lea.vmem %s5, %s212
      %p214 = scmp.lt.s32.totalorder %s16, 1
      %s215 = scalar_select %p214, %s16, 1
      %s216 = smul.addr %s215, 4
      %s217 = smul.addr %s216, 4
      %s218 = scalar_lea.vmem %s0, %s217
      %p219 = scmp.lt.s32.totalorder %s16, 1
      %s220 = scalar_select %p219, %s16, 1
      %s221 = smul.addr %s220, 4
      %s222 = scalar_lea.vmem %s5, %s221
      %v223 = vld [vmem:[%s218] sm:$0xf]
      %v224 = vld [vmem:[%s1] sm:$0x1]
      %v225 = vld [vmem:[%s2] sm:$0x1]
      %vm226 = vcmask 125952
      %v227 = vsel %vm226, %v223, 0.0
      %228 = vadd.xlane.f32.xlu0 %v227
      %v229 = vpop.xlane.xlu0 %228
      %v230 = vrcp.pop 16.0
      %v231 = vmul.f32 16.0, %v230
      %v232 = vsub.f32 1.0, %v231
      %v233 = vmul.f32 %v230, %v232
      %v234 = vadd.f32 %v230, %v233
      %vm235 = vweird.f32 %v230
      %v236 = vsel %vm235, %v230, %v234
      %v237 = vmul.f32 %v229, %v236
      %v238 = vsub.f32 %v223, %v237
      %v239 = vmul.f32 %v238, %v238
      %v240 = vsel %vm226, %v239, 0.0
      %241 = vadd.xlane.f32.xlu0 %v240
      %v242 = vpop.xlane.xlu0 %241
      %v243 = vmul.f32 %v242, %v236
      %v244 = vadd.f32 %v243, 1e-06
      %v245 = vrsqrt.pop %v244
      %v246 = vmul.f32 %v245, %v244
      %v247 = vmul.f32 %v246, %v245
      %v248 = vmul.f32 0.5, %v247
      %v249 = vsub.f32 1.5, %v248
      %v250 = vmul.f32 %v245, %v249
      %vm251 = vweird.f32 %v244
      %vm252 = vweird.f32 %v245
      %vm253 = vmor %vm251, %vm252
      %v254 = vsel %vm253, %v245, %v250
      %v255 = vmul.f32 %v238, %v254
      %v257 = vperm.slane %v224, 0
      %v259 = vmul.f32 %v255, %v257
      %v261 = vperm.slane %v225, 0
      %v263 = vadd.f32 %v259, %v261
      %v264 = vld [vmem:[%s3] sm:$0xff]
      %v265 = vld [vmem:[%s3 + $0x8] sm:$0xff]
      %s266 = scalar_lea.vmem %s218, 4
      %v267 = vld [vmem:[%s266] sm:$0xf]
      %v268 = vsel %vm226, %v267, 0.0
      %269 = vadd.xlane.f32.xlu0 %v268
      %v270 = vpop.xlane.xlu0 %269
      %v271 = vmul.f32 %v270, %v236
      %v272 = vsub.f32 %v267, %v271
      %v273 = vmul.f32 %v272, %v272
      %v274 = vsel %vm226, %v273, 0.0
      %275 = vadd.xlane.f32.xlu0 %v274
      %v276 = vpop.xlane.xlu0 %275
      %v277 = vmul.f32 %v276, %v236
      %v278 = vadd.f32 %v277, 1e-06
      %v279 = vrsqrt.pop %v278
      %v280 = vmul.f32 %v279, %v278
      %v281 = vmul.f32 %v280, %v279
      %v282 = vmul.f32 0.5, %v281
      %v283 = vsub.f32 1.5, %v282
      %v284 = vmul.f32 %v279, %v283
      %vm285 = vweird.f32 %v278
      %vm286 = vweird.f32 %v279
      %vm287 = vmor %vm285, %vm286
      %v288 = vsel %vm287, %v279, %v284
      %v289 = vmul.f32 %v272, %v288
      %v290 = vmul.f32 %v289, %v257
      %v291 = vadd.f32 %v290, %v261
      %s292 = scalar_lea.vmem %s3, 16
      %v293 = vld [vmem:[%s292] sm:$0xff]
      %v294 = vld [vmem:[%s292 + $0x8] sm:$0xff]
      %vm295 = vcmask 130048
      %v297 = vsel %vm295, %v291, 0
      %299 = vmatpush.msra.mxu0 0.0
      %300 = vmatpush.msra.mxu0 0.0
      %301 = vmatpush.msra.mxu0 0.0
      %302 = vmatpush.msra.mxu0 0.0
      %303 = vmatpush.msra.mxu0 0.0
      %304 = vmatpush.msra.mxu0 0.0
      %305 = vmatpush.msra.mxu0 0.0
      %306 = vmatpush.msra.mxu0 0.0
      %307 = vmatpush.msra.mxu0 0.0
      %308 = vmatpush.msra.mxu0 0.0
      %309 = vmatpush.msra.mxu0 0.0
      %310 = vmatpush.msra.mxu0 0.0
      %311 = vmatpush.msra.mxu0 0.0
      %312 = vmatpush.msra.mxu0 0.0
      %313 = vmatpush.msra.mxu0 %v294
      %314 = vmatpush.msra.mxu0 %v293
      %315 = vmatmul.f32.gmra.mxu0 %v297
      %v316 = vpop.f32.mrf.mxu0
      %v317 = vadd.f32 0.0, %v316
      %318 = vdwg.mxu0
      %v320 = vsel %vm295, %v263, 0
      %322 = vmatpush.msra.mxu0 0.0
      %323 = vmatpush.msra.mxu0 0.0
      %324 = vmatpush.msra.mxu0 0.0
      %325 = vmatpush.msra.mxu0 0.0
      %326 = vmatpush.msra.mxu0 0.0
      %327 = vmatpush.msra.mxu0 0.0
      %328 = vmatpush.msra.mxu0 0.0
      %329 = vmatpush.msra.mxu0 0.0
      %330 = vmatpush.msra.mxu0 0.0
      %331 = vmatpush.msra.mxu0 0.0
      %332 = vmatpush.msra.mxu0 0.0
      %333 = vmatpush.msra.mxu0 0.0
      %334 = vmatpush.msra.mxu0 0.0
      %335 = vmatpush.msra.mxu0 0.0
      %336 = vmatpush.msra.mxu0 %v265
      %337 = vmatpush.msra.mxu0 %v264
      %338 = vmatmul.f32.gmra.mxu0 %v320
      %v339 = vpop.f32.mrf.mxu0
      %v340 = vadd.f32 %v317, %v339
      %341 = vdwg.mxu0
      %s342 = scalar_lea.vmem %s218, 8
      %v343 = vld [vmem:[%s342] sm:$0xf]
      %v344 = vsel %vm226, %v343, 0.0
      %345 = vadd.xlane.f32.xlu0 %v344
      %v346 = vpop.xlane.xlu0 %345
      %v347 = vmul.f32 %v346, %v236
      %v348 = vsub.f32 %v343, %v347
      %v349 = vmul.f32 %v348, %v348
      %v350 = vsel %vm226, %v349, 0.0
      %351 = vadd.xlane.f32.xlu0 %v350
      %v352 = vpop.xlane.xlu0 %351
      %v353 = vmul.f32 %v352, %v236
      %v354 = vadd.f32 %v353, 1e-06
      %v355 = vrsqrt.pop %v354
      %v356 = vmul.f32 %v355, %v354
      %v357 = vmul.f32 %v356, %v355
      %v358 = vmul.f32 0.5, %v357
      %v359 = vsub.f32 1.5, %v358
      %v360 = vmul.f32 %v355, %v359
      %vm361 = vweird.f32 %v354
      %vm362 = vweird.f32 %v355
      %vm363 = vmor %vm361, %vm362
      %v364 = vsel %vm363, %v355, %v360
      %v365 = vmul.f32 %v348, %v364
      %v366 = vmul.f32 %v365, %v257
      %v367 = vadd.f32 %v366, %v261
      %s368 = scalar_lea.vmem %s3, 32
      %v369 = vld [vmem:[%s368] sm:$0xff]
      %v370 = vld [vmem:[%s368 + $0x8] sm:$0xff]
      %v372 = vsel %vm295, %v367, 0
      %374 = vmatpush.msra.mxu0 0.0
      %375 = vmatpush.msra.mxu0 0.0
      %376 = vmatpush.msra.mxu0 0.0
      %377 = vmatpush.msra.mxu0 0.0
      %378 = vmatpush.msra.mxu0 0.0
      %379 = vmatpush.msra.mxu0 0.0
      %380 = vmatpush.msra.mxu0 0.0
      %381 = vmatpush.msra.mxu0 0.0
      %382 = vmatpush.msra.mxu0 0.0
      %383 = vmatpush.msra.mxu0 0.0
      %384 = vmatpush.msra.mxu0 0.0
      %385 = vmatpush.msra.mxu0 0.0
      %386 = vmatpush.msra.mxu0 0.0
      %387 = vmatpush.msra.mxu0 0.0
      %388 = vmatpush.msra.mxu0 %v370
      %389 = vmatpush.msra.mxu0 %v369
      %390 = vmatmul.f32.gmra.mxu0 %v372
      %v391 = vpop.f32.mrf.mxu0
      %v392 = vadd.f32 0.0, %v391
      %393 = vdwg.mxu0
      %v394 = vadd.f32 %v340, %v392
      %s395 = scalar_lea.vmem %s218, 12
      %v396 = vld [vmem:[%s395] sm:$0xf]
      %v397 = vsel %vm226, %v396, 0.0
      %398 = vadd.xlane.f32.xlu0 %v397
      %v399 = vpop.xlane.xlu0 %398
      %v400 = vmul.f32 %v399, %v236
      %v401 = vsub.f32 %v396, %v400
      %v402 = vmul.f32 %v401, %v401
      %v403 = vsel %vm226, %v402, 0.0
      %404 = vadd.xlane.f32.xlu0 %v403
      %v405 = vpop.xlane.xlu0 %404
      %v406 = vmul.f32 %v405, %v236
      %v407 = vadd.f32 %v406, 1e-06
      %v408 = vrsqrt.pop %v407
      %v409 = vmul.f32 %v408, %v407
      %v410 = vmul.f32 %v409, %v408
      %v411 = vmul.f32 0.5, %v410
      %v412 = vsub.f32 1.5, %v411
      %v413 = vmul.f32 %v408, %v412
      %vm414 = vweird.f32 %v407
      %vm415 = vweird.f32 %v408
      %vm416 = vmor %vm414, %vm415
      %v417 = vsel %vm416, %v408, %v413
      %v418 = vmul.f32 %v401, %v417
      %v419 = vmul.f32 %v418, %v257
      %v420 = vadd.f32 %v419, %v261
      %s421 = scalar_lea.vmem %s3, 48
      %v422 = vld [vmem:[%s421] sm:$0xff]
      %v423 = vld [vmem:[%s421 + $0x8] sm:$0xff]
      %v425 = vsel %vm295, %v420, 0
      %427 = vmatpush.msra.mxu0 0.0
      %428 = vmatpush.msra.mxu0 0.0
      %429 = vmatpush.msra.mxu0 0.0
      %430 = vmatpush.msra.mxu0 0.0
      %431 = vmatpush.msra.mxu0 0.0
      %432 = vmatpush.msra.mxu0 0.0
      %433 = vmatpush.msra.mxu0 0.0
      %434 = vmatpush.msra.mxu0 0.0
      %435 = vmatpush.msra.mxu0 0.0
      %436 = vmatpush.msra.mxu0 0.0
      %437 = vmatpush.msra.mxu0 0.0
      %438 = vmatpush.msra.mxu0 0.0
      %439 = vmatpush.msra.mxu0 0.0
      %440 = vmatpush.msra.mxu0 0.0
      %441 = vmatpush.msra.mxu0 %v423
      %442 = vmatpush.msra.mxu0 %v422
      %443 = vmatmul.f32.gmra.mxu0 %v425
      %v444 = vpop.f32.mrf.mxu0
      %v445 = vadd.f32 0.0, %v444
      %446 = vdwg.mxu0
      %v447 = vadd.f32 %v394, %v445
      %v448 = vld [vmem:[%s4] sm:$0x1]
      %v450 = vperm.slane %v448, 0
      %v452 = vadd.f32 %v447, %v450
      %vm453 = vcmask 257024
      %454 = vst.msk [vmem:[%s222] sm:$0xf] %vm453, %v452
      %p455 = scmp.lt.s32.totalorder %s16, 1
      %s456 = scalar_select %p455, %s16, 1
      %s457 = smul.addr %s456, 4
      %s458 = scalar_lea.vmem %s5, %s457
      // Predicated region
      $region41: #{_lambda_.7} parent=39 // pred_check
        %p459 = pneg %p144
      $region42: #{_lambda_.7} parent=39 // pred_check_branch
        %461 = sbr.rel (%p459) target = $region44
      $region43: #{_lambda_.7} parent=39 // pred_region
        _
      $region44: #{_lambda_.7} parent=39 // pred_fallthru
        _
    $region40: #{_lambda_.7} parent=5 // pred_fallthru
      _
    %p462 = scmp.le.s32.totalorder 2, %s11
    // Predicated region
    $region45: #{_lambda_.7} parent=5 // pred_check
      %p463 = pneg %p462
    $region46: #{_lambda_.7} parent=5 // pred_check_branch
      %465 = sbr.rel (%p463) target = $region48
    $region47: #{_lambda_.7} parent=5 // pred_region
      %s466 = ssub.s32 %s11, 2
      // Predicated region
      $region49: #{_lambda_.7} parent=47 // pred_check
        %p467 = pneg %p150
      $region50: #{_lambda_.7} parent=47 // pred_check_branch
        %469 = sbr.rel (%p467) target = $region52
      $region51: #{_lambda_.7} parent=47 // pred_region
        %p470 = scmp.lt.s32.totalorder %s17, 1
        %s471 = scalar_select %p470, %s17, 1
        %s472 = smul.addr %s471, 4
        %s473 = scalar_lea.vmem %s5, %s472
      $region52: #{_lambda_.7} parent=47 // pred_fallthru
        _
    $region48: #{_lambda_.7} parent=5 // pred_fallthru
      _
  $region6: #{_lambda_.7} parent=0 // loop_footer
    %s15 = sadd.s32 1, %s11
  $region7: #{_lambda_.7} parent=0 // loop_footer_branch
    %10 = sbr.rel target = $region3
  $region8: #{_lambda_.7} parent=0 // loop_exit
    _

// kernel: _lambda_.9
$region0: #{_lambda_.9}
  #allocation0 [shape = 'u32[]', space=smem, size = 0x4, offset = 0x4, fixed_abs, tag = 'smem constant byte address 0x4 - core index']
  #allocation1 [shape = 'u32[72,128]{1,0:T(1,128)}', space=vmem, size = 0x9000, scoped, tag = 'internal scratch']
  %s0 = inlined_call_operand.vmem [shape: f32[2,4,32], index: 0, kind: input, shape index: {}]
  %s1 = inlined_call_operand.vmem [shape: f32[1,32], index: 1, kind: input, shape index: {}]
  %s2 = inlined_call_operand.vmem [shape: f32[1,32], index: 2, kind: input, shape index: {}]
  %s3 = inlined_call_operand.vmem [shape: f32[32,18], index: 3, kind: input, shape index: {}]
  %s4 = inlined_call_operand.vmem [shape: f32[18,10], index: 4, kind: input, shape index: {}]
  %s5 = inlined_call_operand.vmem [shape: f32[1,10], index: 5, kind: input, shape index: {}]
  %s6 = inlined_call_operand.hbm [shape: f32[2,10], index: 6, kind: output, shape index: {}]
  %s7 = sld [smem:[#allocation0]]
  $region34: #{_lambda_.9} parent=0
    _
  %s9 = ssub.s32 1, %s7
  %s10 = scalar_select 0, %s9, %s7
  $region1: #{_lambda_.9} parent=0
    #allocation2 [shape = 'u8[1024]{0}', space=vmem, size = 0x400, scoped, tag = 'output window, operand 0, single buffered']
    #allocation3 [shape = 's32[1]{0}', space=sflag, size = 0x4, scoped, tag = 'scoped memory for _lambda_.9']
    %11 = vsyncpa [#allocation3], 0
    // Predicated region
    $region2: #{_lambda_.9} parent=1 // pred_check
      _
    $region3: #{_lambda_.9} parent=1 // pred_check_branch
      %13 = sbr.rel (0) target = $region5
    $region4: #{_lambda_.9} parent=1 // pred_region
      _
    $region5: #{_lambda_.9} parent=1 // pred_fallthru
      _
    // Predicated region
    $region6: #{_lambda_.9} parent=1 // pred_check
      _
    $region7: #{_lambda_.9} parent=1 // pred_check_branch
      %15 = sbr.rel (0) target = $region9
    $region8: #{_lambda_.9} parent=1 // pred_region
      _
    $region9: #{_lambda_.9} parent=1 // pred_fallthru
      _
    // Predicated region
    $region10: #{_lambda_.9} parent=1 // pred_check
      _
    $region11: #{_lambda_.9} parent=1 // pred_check_branch
      %17 = sbr.rel (0) target = $region13
    $region12: #{_lambda_.9} parent=1 // pred_region
      _
    $region13: #{_lambda_.9} parent=1 // pred_fallthru
      _
    // Predicated region
    $region14: #{_lambda_.9} parent=1 // pred_check
      _
    $region15: #{_lambda_.9} parent=1 // pred_check_branch
      %19 = sbr.rel (0) target = $region17
    $region16: #{_lambda_.9} parent=1 // pred_region
      _
    $region17: #{_lambda_.9} parent=1 // pred_fallthru
      _
    // Predicated region
    $region18: #{_lambda_.9} parent=1 // pred_check
      _
    $region19: #{_lambda_.9} parent=1 // pred_check_branch
      %21 = sbr.rel (0) target = $region21
    $region20: #{_lambda_.9} parent=1 // pred_region
      _
    $region21: #{_lambda_.9} parent=1 // pred_fallthru
      _
    // Predicated region
    $region22: #{_lambda_.9} parent=1 // pred_check
      _
    $region23: #{_lambda_.9} parent=1 // pred_check_branch
      %23 = sbr.rel (0) target = $region25
    $region24: #{_lambda_.9} parent=1 // pred_region
      _
    $region25: #{_lambda_.9} parent=1 // pred_fallthru
      _
    %v24 = vld [vmem:[%s0] sm:$0xf]
    %v25 = vld [vmem:[%s0 + $0x4] sm:$0xf]
    %vm26 = vcmask 257024
    %v27 = vsel %vm26, %v24, 0.0
    %v28 = vrot.slane %v27, 4
    %v29 = vadd.f32 %v27, %v28
    %v30 = vrot.slane %v29, 2
    %v31 = vadd.f32 %v29, %v30
    %v32 = vrot.slane %v31, 1
    %v33 = vadd.f32 %v31, %v32
    %v34 = vsel %vm26, %v25, 0.0
    %v35 = vrot.slane %v34, 4
    %v36 = vadd.f32 %v34, %v35
    %v37 = vrot.slane %v36, 2
    %v38 = vadd.f32 %v36, %v37
    %v39 = vrot.slane %v38, 1
    %v40 = vadd.f32 %v38, %v39
    %v41 = vrcp.pop 4.0
    %v42 = vmul.f32 4.0, %v41
    %v43 = vsub.f32 1.0, %v42
    %v44 = vmul.f32 %v41, %v43
    %v45 = vadd.f32 %v41, %v44
    %vm46 = vweird.f32 %v41
    %v47 = vsel %vm46, %v41, %v45
    %v48 = vmul.f32 %v33, %v47
    %v49 = vmul.f32 %v40, %v47
    %v50 = vld [vmem:[%s1] sm:$0x1]
    %v51 = vld [vmem:[%s2] sm:$0x1]
    %vm54 = vcmask 1041409
    %v55 = vsel %vm54, %v49, %v48
    %vm57 = vcmask 254976
    %v58 = vsel %vm57, %v55, 0.0
    %59 = vadd.xlane.f32.xlu0 %v58
    %v60 = vpop.xlane.xlu0 %59
    %v61 = vrcp.pop 32.0
    %v62 = vmul.f32 32.0, %v61
    %v63 = vsub.f32 1.0, %v62
    %v64 = vmul.f32 %v61, %v63
    %v65 = vadd.f32 %v61, %v64
    %vm66 = vweird.f32 %v61
    %v67 = vsel %vm66, %v61, %v65
    %v68 = vmul.f32 %v60, %v67
    %v70 = vrot.slane %v68, 1
    %v73 = vsub.f32 %v48, %v68
    %v74 = vsub.f32 %v49, %v70
    %v75 = vmul.f32 %v73, %v73
    %v76 = vmul.f32 %v74, %v74
    %v79 = vrot.slane %v76, 7
    %v80 = vsel %vm54, %v79, %v75
    %v82 = vsel %vm57, %v80, 0.0
    %83 = vadd.xlane.f32.xlu0 %v82
    %v84 = vpop.xlane.xlu0 %83
    %v85 = vmul.f32 %v84, %v67
    %v86 = vadd.f32 %v85, 1e-06
    %v87 = vrsqrt.pop %v86
    %v88 = vmul.f32 %v87, %v86
    %v89 = vmul.f32 %v88, %v87
    %v90 = vmul.f32 0.5, %v89
    %v91 = vsub.f32 1.5, %v90
    %v92 = vmul.f32 %v87, %v91
    %vm93 = vweird.f32 %v86
    %vm94 = vweird.f32 %v87
    %vm95 = vmor %vm93, %vm94
    %v96 = vsel %vm95, %v87, %v92
    %v98 = vrot.slane %v96, 1
    %v101 = vmul.f32 %v73, %v96
    %v102 = vmul.f32 %v74, %v98
    %v104 = vperm.slane %v50, 0
    %v106 = vmul.f32 %v101, %v104
    %v107 = vmul.f32 %v102, %v104
    %v109 = vperm.slane %v51, 0
    %v111 = vadd.f32 %v106, %v109
    %v112 = vadd.f32 %v107, %v109
    %v113 = vld [vmem:[%s3] sm:$0xff]
    %v114 = vld [vmem:[%s3 + $0x8] sm:$0xff]
    %v115 = vld [vmem:[%s3 + $0x10] sm:$0xff]
    %v116 = vld [vmem:[%s3 + $0x18] sm:$0xff]
    %v119 = vrot.slane %v112, 7
    %v120 = vsel %vm54, %v119, %v111
    %vm121 = vcmask 261120
    %v122 = vsel %vm121, %v120, 0
    %124 = vmatpush.msra.mxu0 0.0
    %125 = vmatpush.msra.mxu0 0.0
    %126 = vmatpush.msra.mxu0 0.0
    %127 = vmatpush.msra.mxu0 0.0
    %128 = vmatpush.msra.mxu0 0.0
    %129 = vmatpush.msra.mxu0 0.0
    %130 = vmatpush.msra.mxu0 0.0
    %131 = vmatpush.msra.mxu0 0.0
    %132 = vmatpush.msra.mxu0 0.0
    %133 = vmatpush.msra.mxu0 0.0
    %134 = vmatpush.msra.mxu0 0.0
    %135 = vmatpush.msra.mxu0 0.0
    %136 = vmatpush.msra.mxu0 %v116
    %137 = vmatpush.msra.mxu0 %v115
    %138 = vmatpush.msra.mxu0 %v114
    %139 = vmatpush.msra.mxu0 %v113
    %140 = vmatmul.f32.gmra.mxu0 %v122
    %v141 = vpop.f32.mrf.mxu0
    %v142 = vadd.f32 0.0, %v141
    %143 = vdwg.mxu0
    %v144 = vld [vmem:[%s4] sm:$0xff]
    %v145 = vld [vmem:[%s4 + $0x8] sm:$0xff]
    %v146 = vld [vmem:[%s4 + $0x10] sm:$0x3]
    %v147 = vld [vmem:[%s5] sm:$0x1]
    %v149 = vperm.slane %v147, 0
    %vm151 = vcmask 146432
    %v153 = vsel %vm151, %v142, 0
    %vm155 = vcmask 1041408
    %v157 = vsel %vm155, %v146, 0
    %159 = vmatpush.msra.mxu0 0.0
    %160 = vmatpush.msra.mxu0 0.0
    %161 = vmatpush.msra.mxu0 0.0
    %162 = vmatpush.msra.mxu0 0.0
    %163 = vmatpush.msra.mxu0 0.0
    %164 = vmatpush.msra.mxu0 0.0
    %165 = vmatpush.msra.mxu0 0.0
    %166 = vmatpush.msra.mxu0 0.0
    %167 = vmatpush.msra.mxu0 0.0
    %168 = vmatpush.msra.mxu0 0.0
    %169 = vmatpush.msra.mxu0 0.0
    %170 = vmatpush.msra.mxu0 0.0
    %171 = vmatpush.msra.mxu0 0.0
    %172 = vmatpush.msra.mxu0 %v157
    %173 = vmatpush.msra.mxu0 %v145
    %174 = vmatpush.msra.mxu0 %v144
    %175 = vmatmul.f32.gmra.mxu0 %v153
    %v176 = vpop.f32.mrf.mxu0
    %v177 = vadd.f32 %v149, %v176
    %178 = vdwg.mxu0
    %vm179 = vcmask 74752
    %180 = vst.msk [vmem:[#allocation2] sm:$0x3] %vm179, %v177
    // Predicated region
    $region26: #{_lambda_.9} parent=1 // pred_check
      _
    $region27: #{_lambda_.9} parent=1 // pred_check_branch
      %182 = sbr.rel (0) target = $region29
    $region28: #{_lambda_.9} parent=1 // pred_region
      %184 = vsyncadd [#allocation3], 0
      %s186 = sshll.u32 [#allocation2], 4
      %s187 = int_to_ptr.vmem [resolvable:$true] %s186
      %s188 = sshll.u32 %s6, 4
      %s189 = int_to_ptr.hbm [resolvable:$true] %s188
      %191 = dma.vmem_to_hbm [thread:$0]  %s187, 32, %s189, [#allocation3]
    $region29: #{_lambda_.9} parent=1 // pred_fallthru
      _
    // Predicated region
    $region30: #{_lambda_.9} parent=1 // pred_check
      _
    $region31: #{_lambda_.9} parent=1 // pred_check_branch
      %193 = sbr.rel (0) target = $region33
    $region32: #{_lambda_.9} parent=1 // pred_region
      %195 = dma.done [#allocation3], 32
    $region33: #{_lambda_.9} parent=1 // pred_fallthru
      _
    %196 = vsyncpa [#allocation3], 1

// kernel: _lambda_.8
$region0: #{_lambda_.8}
  #allocation0 [shape = 'u32[]', space=smem, size = 0x4, offset = 0x4, fixed_abs, tag = 'smem constant byte address 0x4 - core index']
  #allocation1 [shape = 'u32[72,128]{1,0:T(1,128)}', space=vmem, size = 0x9000, scoped, tag = 'internal scratch']
  #allocation2 [shape = 'f32[8,8,32]{2,1,0:T(8,128)}', space=vmem, size = 0x8000, scoped, tag = 'scratch operand']
  #allocation3 [shape = 'f32[4,32]{1,0:T(4,128)}', space=vmem, size = 0x800, scoped, tag = 'scratch operand']
  %s0 = inlined_call_operand.vmem [shape: f32[2,4,32], index: 0, kind: input, shape index: {}]
  %s1 = inlined_call_operand.vmem [shape: f32[49,32], index: 1, kind: input, shape index: {}]
  %s2 = inlined_call_operand.vmem [shape: f32[1,32], index: 2, kind: input, shape index: {}]
  %s3 = inlined_call_operand.vmem [shape: f32[1,32], index: 3, kind: input, shape index: {}]
  %s4 = inlined_call_operand.vmem [shape: f32[1,32], index: 4, kind: input, shape index: {}]
  %s5 = inlined_call_operand.vmem [shape: f32[32,128], index: 5, kind: input, shape index: {}]
  %s6 = inlined_call_operand.vmem [shape: f32[1,128], index: 6, kind: input, shape index: {}]
  %s7 = inlined_call_operand.vmem [shape: f32[128,32], index: 7, kind: input, shape index: {}]
  %s8 = inlined_call_operand.vmem [shape: f32[1,32], index: 8, kind: input, shape index: {}]
  %s9 = inlined_call_operand.vmem [shape: f32[1,32], index: 9, kind: input, shape index: {}]
  %s10 = inlined_call_operand.vmem [shape: f32[2,4,32], index: 10, kind: output, shape index: {}]
  %s11 = sld [smem:[#allocation0]]
  $region73: #{_lambda_.8} parent=0
    _
  %s13 = ssub.s32 1, %s11
  %s14 = scalar_select 0, %s13, %s11
  loop: start=0, step=1, limit=4
  $region2: #{_lambda_.8} parent=0 // loop_pre_header
    _
  $region3: #{_lambda_.8} parent=0 // loop_header
    %s16 = sphi 0, %s20
    %p17 = scmp.ge.s32.totalorder %s16, 4
    %s26 = sphi 0, %s28
    %s29 = sphi 0, %s26
    %s30 = sphi 0, %s29
    %s46 = sphi 0, %s30
    %s50 = sphi 0, %s50
    %s52 = sphi 0, %s50
    %s53 = sphi 0, %s52
    %s67 = sphi 0, %s53
    %s71 = sphi 0, %s71
    %s73 = sphi 0, %s71
    %s74 = sphi 0, %s73
    %s88 = sphi 0, %s74
    %s92 = sphi 0, %s92
    %s94 = sphi 0, %s92
    %s95 = sphi 0, %s94
    %s109 = sphi 0, %s95
    %s113 = sphi 0, %s113
    %s115 = sphi 0, %s113
    %s116 = sphi 0, %s115
    %s130 = sphi 0, %s116
    %s134 = sphi 0, %s134
    %s136 = sphi 0, %s134
    %s137 = sphi 0, %s136
    %s151 = sphi 0, %s137
    %s155 = sphi 0, %s155
    %s157 = sphi 0, %s155
    %s158 = sphi 0, %s157
    %s172 = sphi 0, %s158
    %s176 = sphi 0, %s176
    %s178 = sphi 0, %s176
    %s179 = sphi 0, %s178
    %s193 = sphi 0, %s179
    %s197 = sphi 0, %s197
    %s199 = sphi 0, %s197
    %s200 = sphi 0, %s199
    %s214 = sphi 0, %s200
    %s218 = sphi 0, %s218
    %s220 = sphi 0, %s218
    %s221 = sphi 0, %s220
    %s235 = sphi 0, %s221
    %s241 = sphi 0, %s243
    %s244 = sphi 0, %s241
    %s245 = sphi 0, %s244
    %s261 = sphi 0, %s245
  $region4: #{_lambda_.8} parent=0 // loop_header_branch
    %19 = sbr.rel (%p17) target = $region8
  $region5: #{_lambda_.8} parent=0 // loop_body
    %s21 = ssub.s32 %s16, 1
    %s22 = ssub.s32 %s16, 2
    %s23 = sadd.s32 %s16, 1
    %s24 = ssub.s32 %s16, %s23
    %p25 = scmp.eq.s32.totalorder %s24, 0
    %s27 = sadd.s32 %s26, 1
    %s28 = scalar_select %p25, %s26, %s27
    %p31 = pneg %p25
    %p32 = scmp.eq.s32.totalorder %s16, 1
    %p33 = por %p31, %p32
    %p34 = scmp.ne.s32.totalorder %s26, %s29
    %p35 = scmp.eq.s32.totalorder %s16, 0
    %p36 = por %p34, %p35
    %p37 = scmp.ne.s32.totalorder %s26, %s29
    %p38 = scmp.eq.s32.totalorder %s21, 1
    %p39 = por %p37, %p38
    %p40 = scmp.ne.s32.totalorder %s29, %s30
    %p41 = scmp.eq.s32.totalorder %s21, 0
    %p42 = por %p40, %p41
    %p43 = scmp.ne.s32.totalorder %s29, %s30
    %p44 = scmp.eq.s32.totalorder %s22, 1
    %p45 = por %p43, %p44
    %p47 = scmp.ne.s32.totalorder %s30, %s46
    %p48 = scmp.eq.s32.totalorder %s22, 0
    %p49 = por %p47, %p48
    %s51 = sadd.s32 %s50, 1
    %p54 = scmp.eq.s32.totalorder %s16, 1
    %p55 = scmp.ne.s32.totalorder %s50, %s52
    %p56 = scmp.eq.s32.totalorder %s16, 0
    %p57 = por %p55, %p56
    %p58 = scmp.ne.s32.totalorder %s50, %s52
    %p59 = scmp.eq.s32.totalorder %s21, 1
    %p60 = por %p58, %p59
    %p61 = scmp.ne.s32.totalorder %s52, %s53
    %p62 = scmp.eq.s32.totalorder %s21, 0
    %p63 = por %p61, %p62
    %p64 = scmp.ne.s32.totalorder %s52, %s53
    %p65 = scmp.eq.s32.totalorder %s22, 1
    %p66 = por %p64, %p65
    %p68 = scmp.ne.s32.totalorder %s53, %s67
    %p69 = scmp.eq.s32.totalorder %s22, 0
    %p70 = por %p68, %p69
    %s72 = sadd.s32 %s71, 1
    %p75 = scmp.eq.s32.totalorder %s16, 1
    %p76 = scmp.ne.s32.totalorder %s71, %s73
    %p77 = scmp.eq.s32.totalorder %s16, 0
    %p78 = por %p76, %p77
    %p79 = scmp.ne.s32.totalorder %s71, %s73
    %p80 = scmp.eq.s32.totalorder %s21, 1
    %p81 = por %p79, %p80
    %p82 = scmp.ne.s32.totalorder %s73, %s74
    %p83 = scmp.eq.s32.totalorder %s21, 0
    %p84 = por %p82, %p83
    %p85 = scmp.ne.s32.totalorder %s73, %s74
    %p86 = scmp.eq.s32.totalorder %s22, 1
    %p87 = por %p85, %p86
    %p89 = scmp.ne.s32.totalorder %s74, %s88
    %p90 = scmp.eq.s32.totalorder %s22, 0
    %p91 = por %p89, %p90
    %s93 = sadd.s32 %s92, 1
    %p96 = scmp.eq.s32.totalorder %s16, 1
    %p97 = scmp.ne.s32.totalorder %s92, %s94
    %p98 = scmp.eq.s32.totalorder %s16, 0
    %p99 = por %p97, %p98
    %p100 = scmp.ne.s32.totalorder %s92, %s94
    %p101 = scmp.eq.s32.totalorder %s21, 1
    %p102 = por %p100, %p101
    %p103 = scmp.ne.s32.totalorder %s94, %s95
    %p104 = scmp.eq.s32.totalorder %s21, 0
    %p105 = por %p103, %p104
    %p106 = scmp.ne.s32.totalorder %s94, %s95
    %p107 = scmp.eq.s32.totalorder %s22, 1
    %p108 = por %p106, %p107
    %p110 = scmp.ne.s32.totalorder %s95, %s109
    %p111 = scmp.eq.s32.totalorder %s22, 0
    %p112 = por %p110, %p111
    %s114 = sadd.s32 %s113, 1
    %p117 = scmp.eq.s32.totalorder %s16, 1
    %p118 = scmp.ne.s32.totalorder %s113, %s115
    %p119 = scmp.eq.s32.totalorder %s16, 0
    %p120 = por %p118, %p119
    %p121 = scmp.ne.s32.totalorder %s113, %s115
    %p122 = scmp.eq.s32.totalorder %s21, 1
    %p123 = por %p121, %p122
    %p124 = scmp.ne.s32.totalorder %s115, %s116
    %p125 = scmp.eq.s32.totalorder %s21, 0
    %p126 = por %p124, %p125
    %p127 = scmp.ne.s32.totalorder %s115, %s116
    %p128 = scmp.eq.s32.totalorder %s22, 1
    %p129 = por %p127, %p128
    %p131 = scmp.ne.s32.totalorder %s116, %s130
    %p132 = scmp.eq.s32.totalorder %s22, 0
    %p133 = por %p131, %p132
    %s135 = sadd.s32 %s134, 1
    %p138 = scmp.eq.s32.totalorder %s16, 1
    %p139 = scmp.ne.s32.totalorder %s134, %s136
    %p140 = scmp.eq.s32.totalorder %s16, 0
    %p141 = por %p139, %p140
    %p142 = scmp.ne.s32.totalorder %s134, %s136
    %p143 = scmp.eq.s32.totalorder %s21, 1
    %p144 = por %p142, %p143
    %p145 = scmp.ne.s32.totalorder %s136, %s137
    %p146 = scmp.eq.s32.totalorder %s21, 0
    %p147 = por %p145, %p146
    %p148 = scmp.ne.s32.totalorder %s136, %s137
    %p149 = scmp.eq.s32.totalorder %s22, 1
    %p150 = por %p148, %p149
    %p152 = scmp.ne.s32.totalorder %s137, %s151
    %p153 = scmp.eq.s32.totalorder %s22, 0
    %p154 = por %p152, %p153
    %s156 = sadd.s32 %s155, 1
    %p159 = scmp.eq.s32.totalorder %s16, 1
    %p160 = scmp.ne.s32.totalorder %s155, %s157
    %p161 = scmp.eq.s32.totalorder %s16, 0
    %p162 = por %p160, %p161
    %p163 = scmp.ne.s32.totalorder %s155, %s157
    %p164 = scmp.eq.s32.totalorder %s21, 1
    %p165 = por %p163, %p164
    %p166 = scmp.ne.s32.totalorder %s157, %s158
    %p167 = scmp.eq.s32.totalorder %s21, 0
    %p168 = por %p166, %p167
    %p169 = scmp.ne.s32.totalorder %s157, %s158
    %p170 = scmp.eq.s32.totalorder %s22, 1
    %p171 = por %p169, %p170
    %p173 = scmp.ne.s32.totalorder %s158, %s172
    %p174 = scmp.eq.s32.totalorder %s22, 0
    %p175 = por %p173, %p174
    %s177 = sadd.s32 %s176, 1
    %p180 = scmp.eq.s32.totalorder %s16, 1
    %p181 = scmp.ne.s32.totalorder %s176, %s178
    %p182 = scmp.eq.s32.totalorder %s16, 0
    %p183 = por %p181, %p182
    %p184 = scmp.ne.s32.totalorder %s176, %s178
    %p185 = scmp.eq.s32.totalorder %s21, 1
    %p186 = por %p184, %p185
    %p187 = scmp.ne.s32.totalorder %s178, %s179
    %p188 = scmp.eq.s32.totalorder %s21, 0
    %p189 = por %p187, %p188
    %p190 = scmp.ne.s32.totalorder %s178, %s179
    %p191 = scmp.eq.s32.totalorder %s22, 1
    %p192 = por %p190, %p191
    %p194 = scmp.ne.s32.totalorder %s179, %s193
    %p195 = scmp.eq.s32.totalorder %s22, 0
    %p196 = por %p194, %p195
    %s198 = sadd.s32 %s197, 1
    %p201 = scmp.eq.s32.totalorder %s16, 1
    %p202 = scmp.ne.s32.totalorder %s197, %s199
    %p203 = scmp.eq.s32.totalorder %s16, 0
    %p204 = por %p202, %p203
    %p205 = scmp.ne.s32.totalorder %s197, %s199
    %p206 = scmp.eq.s32.totalorder %s21, 1
    %p207 = por %p205, %p206
    %p208 = scmp.ne.s32.totalorder %s199, %s200
    %p209 = scmp.eq.s32.totalorder %s21, 0
    %p210 = por %p208, %p209
    %p211 = scmp.ne.s32.totalorder %s199, %s200
    %p212 = scmp.eq.s32.totalorder %s22, 1
    %p213 = por %p211, %p212
    %p215 = scmp.ne.s32.totalorder %s200, %s214
    %p216 = scmp.eq.s32.totalorder %s22, 0
    %p217 = por %p215, %p216
    %s219 = sadd.s32 %s218, 1
    %p222 = scmp.eq.s32.totalorder %s16, 1
    %p223 = scmp.ne.s32.totalorder %s218, %s220
    %p224 = scmp.eq.s32.totalorder %s16, 0
    %p225 = por %p223, %p224
    %p226 = scmp.ne.s32.totalorder %s218, %s220
    %p227 = scmp.eq.s32.totalorder %s21, 1
    %p228 = por %p226, %p227
    %p229 = scmp.ne.s32.totalorder %s220, %s221
    %p230 = scmp.eq.s32.totalorder %s21, 0
    %p231 = por %p229, %p230
    %p232 = scmp.ne.s32.totalorder %s220, %s221
    %p233 = scmp.eq.s32.totalorder %s22, 1
    %p234 = por %p232, %p233
    %p236 = scmp.ne.s32.totalorder %s221, %s235
    %p237 = scmp.eq.s32.totalorder %s22, 0
    %p238 = por %p236, %p237
    %s239 = ssub.s32 %s16, %s23
    %p240 = scmp.eq.s32.totalorder %s239, 0
    %s242 = sadd.s32 %s241, 1
    %s243 = scalar_select %p240, %s241, %s242
    %p246 = pneg %p240
    %p247 = scmp.eq.s32.totalorder %s16, 1
    %p248 = por %p246, %p247
    %p249 = scmp.ne.s32.totalorder %s241, %s244
    %p250 = scmp.eq.s32.totalorder %s16, 0
    %p251 = por %p249, %p250
    %p252 = scmp.ne.s32.totalorder %s241, %s244
    %p253 = scmp.eq.s32.totalorder %s21, 1
    %p254 = por %p252, %p253
    %p255 = scmp.ne.s32.totalorder %s244, %s245
    %p256 = scmp.eq.s32.totalorder %s21, 0
    %p257 = por %p255, %p256
    %p258 = scmp.ne.s32.totalorder %s244, %s245
    %p259 = scmp.eq.s32.totalorder %s22, 1
    %p260 = por %p258, %p259
    %p262 = scmp.ne.s32.totalorder %s245, %s261
    %p263 = scmp.eq.s32.totalorder %s22, 0
    %p264 = por %p262, %p263
    %p265 = scmp.le.s32.totalorder 1, %s16
    %p266 = scmp.lt.s32.totalorder %s16, 3
    %p267 = pnand %p265, %p266
    %p268 = pneg %p267
    // Predicated region
    $region9: #{_lambda_.8} parent=5 // pred_check
      _
    $region10: #{_lambda_.8} parent=5 // pred_check_branch
      %270 = sbr.rel (%p267) target = $region12
    $region11: #{_lambda_.8} parent=5 // pred_region
      %s271 = ssub.s32 %s16, 1
      // Predicated region
      $region13: #{_lambda_.8} parent=11 // pred_check
        %p272 = pneg %p63
      $region14: #{_lambda_.8} parent=11 // pred_check_branch
        %274 = sbr.rel (%p272) target = $region16
      $region15: #{_lambda_.8} parent=11 // pred_region
        _
      $region16: #{_lambda_.8} parent=11 // pred_fallthru
        _
      // Predicated region
      $region17: #{_lambda_.8} parent=11 // pred_check
        %p275 = pneg %p84
      $region18: #{_lambda_.8} parent=11 // pred_check_branch
        %277 = sbr.rel (%p275) target = $region20
      $region19: #{_lambda_.8} parent=11 // pred_region
        _
      $region20: #{_lambda_.8} parent=11 // pred_fallthru
        _
      // Predicated region
      $region21: #{_lambda_.8} parent=11 // pred_check
        %p278 = pneg %p105
      $region22: #{_lambda_.8} parent=11 // pred_check_branch
        %280 = sbr.rel (%p278) target = $region24
      $region23: #{_lambda_.8} parent=11 // pred_region
        _
      $region24: #{_lambda_.8} parent=11 // pred_fallthru
        _
      // Predicated region
      $region25: #{_lambda_.8} parent=11 // pred_check
        %p281 = pneg %p126
      $region26: #{_lambda_.8} parent=11 // pred_check_branch
        %283 = sbr.rel (%p281) target = $region28
      $region27: #{_lambda_.8} parent=11 // pred_region
        _
      $region28: #{_lambda_.8} parent=11 // pred_fallthru
        _
      // Predicated region
      $region29: #{_lambda_.8} parent=11 // pred_check
        %p284 = pneg %p147
      $region30: #{_lambda_.8} parent=11 // pred_check_branch
        %286 = sbr.rel (%p284) target = $region32
      $region31: #{_lambda_.8} parent=11 // pred_region
        _
      $region32: #{_lambda_.8} parent=11 // pred_fallthru
        _
      // Predicated region
      $region33: #{_lambda_.8} parent=11 // pred_check
        %p287 = pneg %p168
      $region34: #{_lambda_.8} parent=11 // pred_check_branch
        %289 = sbr.rel (%p287) target = $region36
      $region35: #{_lambda_.8} parent=11 // pred_region
        _
      $region36: #{_lambda_.8} parent=11 // pred_fallthru
        _
      // Predicated region
      $region37: #{_lambda_.8} parent=11 // pred_check
        %p290 = pneg %p189
      $region38: #{_lambda_.8} parent=11 // pred_check_branch
        %292 = sbr.rel (%p290) target = $region40
      $region39: #{_lambda_.8} parent=11 // pred_region
        _
      $region40: #{_lambda_.8} parent=11 // pred_fallthru
        _
      // Predicated region
      $region41: #{_lambda_.8} parent=11 // pred_check
        %p293 = pneg %p210
      $region42: #{_lambda_.8} parent=11 // pred_check_branch
        %295 = sbr.rel (%p293) target = $region44
      $region43: #{_lambda_.8} parent=11 // pred_region
        _
      $region44: #{_lambda_.8} parent=11 // pred_fallthru
        _
      // Predicated region
      $region45: #{_lambda_.8} parent=11 // pred_check
        %p296 = pneg %p231
      $region46: #{_lambda_.8} parent=11 // pred_check_branch
        %298 = sbr.rel (%p296) target = $region48
      $region47: #{_lambda_.8} parent=11 // pred_region
        _
      $region48: #{_lambda_.8} parent=11 // pred_fallthru
        _
    $region12: #{_lambda_.8} parent=5 // pred_fallthru
      _
    %p299 = scmp.lt.s32.totalorder %s16, 2
    // Predicated region
    $region49: #{_lambda_.8} parent=5 // pred_check
      %p300 = pneg %p299
    $region50: #{_lambda_.8} parent=5 // pred_check_branch
      %302 = sbr.rel (%p300) target = $region52
    $region51: #{_lambda_.8} parent=5 // pred_region
      // Predicated region
      $region53: #{_lambda_.8} parent=51 // pred_check
        %p303 = pneg %p36
      $region54: #{_lambda_.8} parent=51 // pred_check_branch
        %305 = sbr.rel (%p303) target = $region56
      $region55: #{_lambda_.8} parent=51 // pred_region
        %p306 = scmp.lt.s32.totalorder %s16, 1
        %s307 = scalar_select %p306, %s16, 1
        %s308 = smul.addr %s307, 4
        %s309 = scalar_lea.vmem %s0, %s308
      $region56: #{_lambda_.8} parent=51 // pred_fallthru
        _
    $region52: #{_lambda_.8} parent=5 // pred_fallthru
      _
    %p310 = scmp.le.s32.totalorder 1, %s16
    %p311 = scmp.lt.s32.totalorder %s16, 3
    %p312 = pnand %p310, %p311
    %p313 = pneg %p312
    // Predicated region
    $region57: #{_lambda_.8} parent=5 // pred_check
      _
    $region58: #{_lambda_.8} parent=5 // pred_check_branch
      %315 = sbr.rel (%p312) target = $region60
    $region59: #{_lambda_.8} parent=5 // pred_region
      %s316 = ssub.s32 %s16, 1
      %p317 = scmp.lt.s32.totalorder %s21, 1
      %s318 = scalar_select %p317, %s21, 1
      %s319 = smul.addr %s318, 4
      %s320 = scalar_lea.vmem %s0, %s319
      %p321 = pneg %p42
      %p322 = pneg %p39
      %p323 = pneg %p63
      %p324 = pneg %p60
      %p325 = pneg %p84
      %p326 = pneg %p81
      %p327 = pneg %p105
      %p328 = pneg %p102
      %p329 = pneg %p126
      %p330 = pneg %p123
      %p331 = pneg %p147
      %p332 = pneg %p144
      %p333 = pneg %p168
      %p334 = pneg %p165
      %p335 = pneg %p189
      %p336 = pneg %p186
      %p337 = pneg %p210
      %p338 = pneg %p207
      %p339 = pneg %p231
      %p340 = pneg %p228
      %p341 = pneg %p257
      %p342 = pneg %p254
      %p343 = scmp.lt.s32.totalorder %s21, 1
      %s344 = scalar_select %p343, %s21, 1
      %s345 = smul.addr %s344, 4
      %s346 = scalar_lea.vmem %s10, %s345
      %p347 = scmp.lt.s32.totalorder %s21, 1
      %s348 = scalar_select %p347, %s21, 1
      %s349 = smul.addr %s348, 4
      %s350 = scalar_lea.vmem %s0, %s349
      %p351 = scmp.lt.s32.totalorder %s21, 1
      %s352 = scalar_select %p351, %s21, 1
      %s353 = smul.addr %s352, 4
      %s354 = scalar_lea.vmem %s10, %s353
      %v355 = vld [vmem:[%s350] sm:$0xf]
      %vm356 = vcmask 261120
      %357 = vst.msk [vmem:[#allocation2] sm:$0xff] %vm356, 0.0
      %358 = vst.msk [vmem:[#allocation2 + $0x8] sm:$0xff] %vm356, 0.0
      %359 = vst.msk [vmem:[#allocation2 + $0x10] sm:$0xff] %vm356, 0.0
      %360 = vst.msk [vmem:[#allocation2 + $0x18] sm:$0xff] %vm356, 0.0
      %361 = vst.msk [vmem:[#allocation2 + $0x20] sm:$0xff] %vm356, 0.0
      %362 = vst.msk [vmem:[#allocation2 + $0x28] sm:$0xff] %vm356, 0.0
      %363 = vst.msk [vmem:[#allocation2 + $0x30] sm:$0xff] %vm356, 0.0
      %364 = vst.msk [vmem:[#allocation2 + $0x38] sm:$0xff] %vm356, 0.0
      %s365 = scalar_lea.vmem [#allocation2], 24
      %vm366 = vcmask 254976
      %367 = vst.msk [vmem:[%s365 + $0x3] sm:$0x3] %vm366, %v355
      %s368 = scalar_lea.vmem [#allocation2], 32
      %vm369 = vcmask 257026
      %370 = vst.msk [vmem:[%s368 + $0x1] sm:$0xc] %vm369, %v355
      %v371 = vld [vmem:[%s1] sm:$0xff]
      %v372 = vld [vmem:[%s1 + $0x8] sm:$0xff]
      %v373 = vld [vmem:[%s1 + $0x10] sm:$0xff]
      %v374 = vld [vmem:[%s1 + $0x18] sm:$0xff]
      %v375 = vld [vmem:[%s1 + $0x20] sm:$0xff]
      %v376 = vld [vmem:[%s1 + $0x28] sm:$0xff]
      %v377 = vld [vmem:[%s1 + $0x30] sm:$0x1]
      %v378 = vld [vmem:[#allocation2] sm:$0xff]
      %v379 = vperm.slane %v371, 0
      %v380 = vmul.f32 %v378, %v379
      %v381 = vadd.f32 %v380, 0.0
      %v382 = vperm.slane %v371, 1
      %v383 = vmul.f32 %v378, %v382
      %v385 = vrot.slane %v383, 1
      %v387 = vadd.f32 %v381, %v385
      %v388 = vperm.slane %v371, 2
      %v389 = vmul.f32 %v378, %v388
      %v391 = vrot.slane %v389, 2
      %v393 = vadd.f32 %v387, %v391
      %v394 = vperm.slane %v371, 3
      %v395 = vmul.f32 %v378, %v394
      %v397 = vrot.slane %v395, 3
      %v399 = vadd.f32 %v393, %v397
      %v400 = vperm.slane %v371, 4
      %v401 = vmul.f32 %v378, %v400
      %v403 = vrot.slane %v401, 4
      %v405 = vadd.f32 %v399, %v403
      %v406 = vperm.slane %v371, 5
      %v407 = vmul.f32 %v378, %v406
      %v409 = vrot.slane %v407, 5
      %v411 = vadd.f32 %v405, %v409
      %v412 = vperm.slane %v371, 6
      %v413 = vmul.f32 %v378, %v412
      %v415 = vrot.slane %v413, 6
      %v417 = vadd.f32 %v411, %v415
      %s418 = scalar_lea.vmem [#allocation2], 8
      %v419 = vld [vmem:[%s418] sm:$0xff]
      %v420 = vperm.slane %v371, 7
      %v421 = vmul.f32 %v419, %v420
      %v422 = vadd.f32 %v417, %v421
      %v423 = vperm.slane %v372, 0
      %v424 = vmul.f32 %v419, %v423
      %v426 = vrot.slane %v424, 1
      %v428 = vadd.f32 %v422, %v426
      %v429 = vperm.slane %v372, 1
      %v430 = vmul.f32 %v419, %v429
      %v432 = vrot.slane %v430, 2
      %v434 = vadd.f32 %v428, %v432
      %v435 = vperm.slane %v372, 2
      %v436 = vmul.f32 %v419, %v435
      %v438 = vrot.slane %v436, 3
      %v440 = vadd.f32 %v434, %v438
      %v441 = vperm.slane %v372, 3
      %v442 = vmul.f32 %v419, %v441
      %v444 = vrot.slane %v442, 4
      %v446 = vadd.f32 %v440, %v444
      %v447 = vperm.slane %v372, 4
      %v448 = vmul.f32 %v419, %v447
      %v450 = vrot.slane %v448, 5
      %v452 = vadd.f32 %v446, %v450
      %v453 = vperm.slane %v372, 5
      %v454 = vmul.f32 %v419, %v453
      %v456 = vrot.slane %v454, 6
      %v458 = vadd.f32 %v452, %v456
      %s459 = scalar_lea.vmem [#allocation2], 16
      %v460 = vld [vmem:[%s459] sm:$0xff]
      %v461 = vperm.slane %v372, 6
      %v462 = vmul.f32 %v460, %v461
      %v463 = vadd.f32 %v458, %v462
      %v464 = vperm.slane %v372, 7
      %v465 = vmul.f32 %v460, %v464
      %v467 = vrot.slane %v465, 1
      %v469 = vadd.f32 %v463, %v467
      %v470 = vperm.slane %v373, 0
      %v471 = vmul.f32 %v460, %v470
      %v473 = vrot.slane %v471, 2
      %v475 = vadd.f32 %v469, %v473
      %v476 = vperm.slane %v373, 1
      %v477 = vmul.f32 %v460, %v476
      %v479 = vrot.slane %v477, 3
      %v481 = vadd.f32 %v475, %v479
      %v482 = vperm.slane %v373, 2
      %v483 = vmul.f32 %v460, %v482
      %v485 = vrot.slane %v483, 4
      %v487 = vadd.f32 %v481, %v485
      %v488 = vperm.slane %v373, 3
      %v489 = vmul.f32 %v460, %v488
      %v491 = vrot.slane %v489, 5
      %v493 = vadd.f32 %v487, %v491
      %v494 = vperm.slane %v373, 4
      %v495 = vmul.f32 %v460, %v494
      %v497 = vrot.slane %v495, 6
      %v499 = vadd.f32 %v493, %v497
      %v500 = vld [vmem:[%s365] sm:$0xff]
      %v501 = vperm.slane %v373, 5
      %v502 = vmul.f32 %v500, %v501
      %v503 = vadd.f32 %v499, %v502
      %v504 = vperm.slane %v373, 6
      %v505 = vmul.f32 %v500, %v504
      %v507 = vrot.slane %v505, 1
      %v509 = vadd.f32 %v503, %v507
      %v510 = vperm.slane %v373, 7
      %v511 = vmul.f32 %v500, %v510
      %v513 = vrot.slane %v511, 2
      %v515 = vadd.f32 %v509, %v513
      %v516 = vperm.slane %v374, 0
      %v517 = vmul.f32 %v500, %v516
      %v519 = vrot.slane %v517, 3
      %v521 = vadd.f32 %v515, %v519
      %v522 = vperm.slane %v374, 1
      %v523 = vmul.f32 %v500, %v522
      %v525 = vrot.slane %v523, 4
      %v527 = vadd.f32 %v521, %v525
      %v528 = vperm.slane %v374, 2
      %v529 = vmul.f32 %v500, %v528
      %v531 = vrot.slane %v529, 5
      %v533 = vadd.f32 %v527, %v531
      %v534 = vperm.slane %v374, 3
      %v535 = vmul.f32 %v500, %v534
      %v537 = vrot.slane %v535, 6
      %v539 = vadd.f32 %v533, %v537
      %v540 = vld [vmem:[%s368] sm:$0xff]
      %v541 = vperm.slane %v374, 4
      %v542 = vmul.f32 %v540, %v541
      %v543 = vadd.f32 %v539, %v542
      %v544 = vperm.slane %v374, 5
      %v545 = vmul.f32 %v540, %v544
      %v547 = vrot.slane %v545, 1
      %v549 = vadd.f32 %v543, %v547
      %v550 = vperm.slane %v374, 6
      %v551 = vmul.f32 %v540, %v550
      %v553 = vrot.slane %v551, 2
      %v555 = vadd.f32 %v549, %v553
      %v556 = vperm.slane %v374, 7
      %v557 = vmul.f32 %v540, %v556
      %v559 = vrot.slane %v557, 3
      %v561 = vadd.f32 %v555, %v559
      %v562 = vperm.slane %v375, 0
      %v563 = vmul.f32 %v540, %v562
      %v565 = vrot.slane %v563, 4
      %v567 = vadd.f32 %v561, %v565
      %v568 = vperm.slane %v375, 1
      %v569 = vmul.f32 %v540, %v568
      %v571 = vrot.slane %v569, 5
      %v573 = vadd.f32 %v567, %v571
      %v574 = vperm.slane %v375, 2
      %v575 = vmul.f32 %v540, %v574
      %v577 = vrot.slane %v575, 6
      %v579 = vadd.f32 %v573, %v577
      %s580 = scalar_lea.vmem [#allocation2], 40
      %v581 = vld [vmem:[%s580] sm:$0xff]
      %v582 = vperm.slane %v375, 3
      %v583 = vmul.f32 %v581, %v582
      %v584 = vadd.f32 %v579, %v583
      %v585 = vperm.slane %v375, 4
      %v586 = vmul.f32 %v581, %v585
      %v588 = vrot.slane %v586, 1
      %v590 = vadd.f32 %v584, %v588
      %v591 = vperm.slane %v375, 5
      %v592 = vmul.f32 %v581, %v591
      %v594 = vrot.slane %v592, 2
      %v596 = vadd.f32 %v590, %v594
      %v597 = vperm.slane %v375, 6
      %v598 = vmul.f32 %v581, %v597
      %v600 = vrot.slane %v598, 3
      %v602 = vadd.f32 %v596, %v600
      %v603 = vperm.slane %v375, 7
      %v604 = vmul.f32 %v581, %v603
      %v606 = vrot.slane %v604, 4
      %v608 = vadd.f32 %v602, %v606
      %v609 = vperm.slane %v376, 0
      %v610 = vmul.f32 %v581, %v609
      %v612 = vrot.slane %v610, 5
      %v614 = vadd.f32 %v608, %v612
      %v615 = vperm.slane %v376, 1
      %v616 = vmul.f32 %v581, %v615
      %v618 = vrot.slane %v616, 6
      %v620 = vadd.f32 %v614, %v618
      %s621 = scalar_lea.vmem [#allocation2], 48
      %v622 = vld [vmem:[%s621] sm:$0xff]
      %v623 = vperm.slane %v376, 2
      %v624 = vmul.f32 %v622, %v623
      %v625 = vadd.f32 %v620, %v624
      %v626 = vperm.slane %v376, 3
      %v627 = vmul.f32 %v622, %v626
      %v629 = vrot.slane %v627, 1
      %v631 = vadd.f32 %v625, %v629
      %v632 = vperm.slane %v376, 4
      %v633 = vmul.f32 %v622, %v632
      %v635 = vrot.slane %v633, 2
      %v637 = vadd.f32 %v631, %v635
      %v638 = vperm.slane %v376, 5
      %v639 = vmul.f32 %v622, %v638
      %v641 = vrot.slane %v639, 3
      %v643 = vadd.f32 %v637, %v641
      %v644 = vperm.slane %v376, 6
      %v645 = vmul.f32 %v622, %v644
      %v647 = vrot.slane %v645, 4
      %v649 = vadd.f32 %v643, %v647
      %v650 = vperm.slane %v376, 7
      %v651 = vmul.f32 %v622, %v650
      %v653 = vrot.slane %v651, 5
      %v655 = vadd.f32 %v649, %v653
      %v656 = vperm.slane %v377, 0
      %v657 = vmul.f32 %v622, %v656
      %v659 = vrot.slane %v657, 6
      %v661 = vadd.f32 %v655, %v659
      %v662 = vld [vmem:[%s2] sm:$0x1]
      %v664 = vperm.slane %v662, 0
      %v666 = vadd.f32 %v661, %v664
      %667 = vst.msk [vmem:[#allocation3] sm:$0x3] %vm366, %v666
      %v668 = vld [vmem:[%s418] sm:$0xff]
      %v669 = vmul.f32 %v668, %v379
      %v670 = vadd.f32 %v669, 0.0
      %v671 = vmul.f32 %v668, %v382
      %v673 = vrot.slane %v671, 1
      %v675 = vadd.f32 %v670, %v673
      %v676 = vmul.f32 %v668, %v388
      %v678 = vrot.slane %v676, 2
      %v680 = vadd.f32 %v675, %v678
      %v681 = vmul.f32 %v668, %v394
      %v683 = vrot.slane %v681, 3
      %v685 = vadd.f32 %v680, %v683
      %v686 = vmul.f32 %v668, %v400
      %v688 = vrot.slane %v686, 4
      %v690 = vadd.f32 %v685, %v688
      %v691 = vmul.f32 %v668, %v406
      %v693 = vrot.slane %v691, 5
      %v695 = vadd.f32 %v690, %v693
      %v696 = vmul.f32 %v668, %v412
      %v698 = vrot.slane %v696, 6
      %v700 = vadd.f32 %v695, %v698
      %v701 = vld [vmem:[%s459] sm:$0xff]
      %v702 = vmul.f32 %v701, %v420
      %v703 = vadd.f32 %v700, %v702
      %v704 = vmul.f32 %v701, %v423
      %v706 = vrot.slane %v704, 1
      %v708 = vadd.f32 %v703, %v706
      %v709 = vmul.f32 %v701, %v429
      %v711 = vrot.slane %v709, 2
      %v713 = vadd.f32 %v708, %v711
      %v714 = vmul.f32 %v701, %v435
      %v716 = vrot.slane %v714, 3
      %v718 = vadd.f32 %v713, %v716
      %v719 = vmul.f32 %v701, %v441
      %v721 = vrot.slane %v719, 4
      %v723 = vadd.f32 %v718, %v721
      %v724 = vmul.f32 %v701, %v447
      %v726 = vrot.slane %v724, 5
      %v728 = vadd.f32 %v723, %v726
      %v729 = vmul.f32 %v701, %v453
      %v731 = vrot.slane %v729, 6
      %v733 = vadd.f32 %v728, %v731
      %v734 = vld [vmem:[%s365] sm:$0xff]
      %v735 = vmul.f32 %v734, %v461
      %v736 = vadd.f32 %v733, %v735
      %v737 = vmul.f32 %v734, %v464
      %v739 = vrot.slane %v737, 1
      %v741 = vadd.f32 %v736, %v739
      %v742 = vmul.f32 %v734, %v470
      %v744 = vrot.slane %v742, 2
      %v746 = vadd.f32 %v741, %v744
      %v747 = vmul.f32 %v734, %v476
      %v749 = vrot.slane %v747, 3
      %v751 = vadd.f32 %v746, %v749
      %v752 = vmul.f32 %v734, %v482
      %v754 = vrot.slane %v752, 4
      %v756 = vadd.f32 %v751, %v754
      %v757 = vmul.f32 %v734, %v488
      %v759 = vrot.slane %v757, 5
      %v761 = vadd.f32 %v756, %v759
      %v762 = vmul.f32 %v734, %v494
      %v764 = vrot.slane %v762, 6
      %v766 = vadd.f32 %v761, %v764
      %v767 = vld [vmem:[%s368] sm:$0xff]
      %v768 = vmul.f32 %v767, %v501
      %v769 = vadd.f32 %v766, %v768
      %v770 = vmul.f32 %v767, %v504
      %v772 = vrot.slane %v770, 1
      %v774 = vadd.f32 %v769, %v772
      %v775 = vmul.f32 %v767, %v510
      %v777 = vrot.slane %v775, 2
      %v779 = vadd.f32 %v774, %v777
      %v780 = vmul.f32 %v767, %v516
      %v782 = vrot.slane %v780, 3
      %v784 = vadd.f32 %v779, %v782
      %v785 = vmul.f32 %v767, %v522
      %v787 = vrot.slane %v785, 4
      %v789 = vadd.f32 %v784, %v787
      %v790 = vmul.f32 %v767, %v528
      %v792 = vrot.slane %v790, 5
      %v794 = vadd.f32 %v789, %v792
      %v795 = vmul.f32 %v767, %v534
      %v797 = vrot.slane %v795, 6
      %v799 = vadd.f32 %v794, %v797
      %v800 = vld [vmem:[%s580] sm:$0xff]
      %v801 = vmul.f32 %v800, %v541
      %v802 = vadd.f32 %v799, %v801
      %v803 = vmul.f32 %v800, %v544
      %v805 = vrot.slane %v803, 1
      %v807 = vadd.f32 %v802, %v805
      %v808 = vmul.f32 %v800, %v550
      %v810 = vrot.slane %v808, 2
      %v812 = vadd.f32 %v807, %v810
      %v813 = vmul.f32 %v800, %v556
      %v815 = vrot.slane %v813, 3
      %v817 = vadd.f32 %v812, %v815
      %v818 = vmul.f32 %v800, %v562
      %v820 = vrot.slane %v818, 4
      %v822 = vadd.f32 %v817, %v820
      %v823 = vmul.f32 %v800, %v568
      %v825 = vrot.slane %v823, 5
      %v827 = vadd.f32 %v822, %v825
      %v828 = vmul.f32 %v800, %v574
      %v830 = vrot.slane %v828, 6
      %v832 = vadd.f32 %v827, %v830
      %v833 = vld [vmem:[%s621] sm:$0xff]
      %v834 = vmul.f32 %v833, %v582
      %v835 = vadd.f32 %v832, %v834
      %v836 = vmul.f32 %v833, %v585
      %v838 = vrot.slane %v836, 1
      %v840 = vadd.f32 %v835, %v838
      %v841 = vmul.f32 %v833, %v591
      %v843 = vrot.slane %v841, 2
      %v845 = vadd.f32 %v840, %v843
      %v846 = vmul.f32 %v833, %v597
      %v848 = vrot.slane %v846, 3
      %v850 = vadd.f32 %v845, %v848
      %v851 = vmul.f32 %v833, %v603
      %v853 = vrot.slane %v851, 4
      %v855 = vadd.f32 %v850, %v853
      %v856 = vmul.f32 %v833, %v609
      %v858 = vrot.slane %v856, 5
      %v860 = vadd.f32 %v855, %v858
      %v861 = vmul.f32 %v833, %v615
      %v863 = vrot.slane %v861, 6
      %v865 = vadd.f32 %v860, %v863
      %s866 = scalar_lea.vmem [#allocation2], 56
      %v867 = vld [vmem:[%s866] sm:$0xff]
      %v868 = vmul.f32 %v867, %v623
      %v869 = vadd.f32 %v865, %v868
      %v870 = vmul.f32 %v867, %v626
      %v872 = vrot.slane %v870, 1
      %v874 = vadd.f32 %v869, %v872
      %v875 = vmul.f32 %v867, %v632
      %v877 = vrot.slane %v875, 2
      %v879 = vadd.f32 %v874, %v877
      %v880 = vmul.f32 %v867, %v638
      %v882 = vrot.slane %v880, 3
      %v884 = vadd.f32 %v879, %v882
      %v885 = vmul.f32 %v867, %v644
      %v887 = vrot.slane %v885, 4
      %v889 = vadd.f32 %v884, %v887
      %v890 = vmul.f32 %v867, %v650
      %v892 = vrot.slane %v890, 5
      %v894 = vadd.f32 %v889, %v892
      %v895 = vmul.f32 %v867, %v656
      %v897 = vrot.slane %v895, 6
      %v899 = vadd.f32 %v894, %v897
      %v900 = vld [vmem:[%s2] sm:$0x1]
      %v902 = vperm.slane %v900, 0
      %v904 = vadd.f32 %v899, %v902
      %905 = vst.msk [vmem:[#allocation3 + $0x2] sm:$0x3] %vm366, %v904
      %v906 = vld [vmem:[#allocation3] sm:$0xf]
      %v907 = vld [vmem:[%s3] sm:$0x1]
      %v908 = vld [vmem:[%s4] sm:$0x1]
      %vm909 = vcmask 257024
      %v910 = vsel %vm909, %v906, 0.0
      %911 = vadd.xlane.f32.xlu0 %v910
      %v912 = vpop.xlane.xlu0 %911
      %v913 = vrcp.pop 32.0
      %v914 = vmul.f32 32.0, %v913
      %v915 = vsub.f32 1.0, %v914
      %v916 = vmul.f32 %v913, %v915
      %v917 = vadd.f32 %v913, %v916
      %vm918 = vweird.f32 %v913
      %v919 = vsel %vm918, %v913, %v917
      %v920 = vmul.f32 %v912, %v919
      %v921 = vsub.f32 %v906, %v920
      %v922 = vmul.f32 %v921, %v921
      %v923 = vsel %vm909, %v922, 0.0
      %924 = vadd.xlane.f32.xlu0 %v923
      %v925 = vpop.xlane.xlu0 %924
      %v926 = vmul.f32 %v925, %v919
      %v927 = vadd.f32 %v926, 1e-06
      %v928 = vrsqrt.pop %v927
      %v929 = vmul.f32 %v928, %v927
      %v930 = vmul.f32 %v929, %v928
      %v931 = vmul.f32 0.5, %v930
      %v932 = vsub.f32 1.5, %v931
      %v933 = vmul.f32 %v928, %v932
      %vm934 = vweird.f32 %v927
      %vm935 = vweird.f32 %v928
      %vm936 = vmor %vm934, %vm935
      %v937 = vsel %vm936, %v928, %v933
      %v938 = vmul.f32 %v921, %v937
      %v940 = vperm.slane %v907, 0
      %v942 = vmul.f32 %v938, %v940
      %v944 = vperm.slane %v908, 0
      %v946 = vadd.f32 %v942, %v944
      %v947 = vld [vmem:[%s5] sm:$0xff]
      %v948 = vld [vmem:[%s5 + $0x8] sm:$0xff]
      %v949 = vld [vmem:[%s5 + $0x10] sm:$0xff]
      %v950 = vld [vmem:[%s5 + $0x18] sm:$0xff]
      %v951 = vld [vmem:[%s6] sm:$0x1]
      %v953 = vperm.slane %v951, 0
      %v956 = vsel %vm356, %v946, 0
      %958 = vmatpush.msra.mxu0 0.0
      %959 = vmatpush.msra.mxu0 0.0
      %960 = vmatpush.msra.mxu0 0.0
      %961 = vmatpush.msra.mxu0 0.0
      %962 = vmatpush.msra.mxu0 0.0
      %963 = vmatpush.msra.mxu0 0.0
      %964 = vmatpush.msra.mxu0 0.0
      %965 = vmatpush.msra.mxu0 0.0
      %966 = vmatpush.msra.mxu0 0.0
      %967 = vmatpush.msra.mxu0 0.0
      %968 = vmatpush.msra.mxu0 0.0
      %969 = vmatpush.msra.mxu0 0.0
      %970 = vmatpush.msra.mxu0 %v950
      %971 = vmatpush.msra.mxu0 %v949
      %972 = vmatpush.msra.mxu0 %v948
      %973 = vmatpush.msra.mxu0 %v947
      %974 = vmatmul.f32.gmra.mxu0 %v956
      %v975 = vpop.f32.mrf.mxu0
      %v976 = vadd.f32 %v953, %v975
      %977 = vdwg.mxu0
      %v978 = vmul.f32 %v976, 0.5
      %v979 = vmul.f32 %v976, 0.70710677
      %v980 = vand.u32 2147483647, %v979
      %v981 = vmul.f32 %v980, 0.3275911
      %v982 = vadd.f32 %v981, 1.0
      %v983 = vrcp.pop %v982
      %v984 = vmul.f32 %v982, %v983
      %v985 = vsub.f32 1.0, %v984
      %v986 = vmul.f32 %v983, %v985
      %v987 = vadd.f32 %v983, %v986
      %vm988 = vweird.f32 %v982
      %vm989 = vweird.f32 %v983
      %vm990 = vmor %vm988, %vm989
      %v991 = vsel %vm990, %v983, %v987
      %v992 = vand.u32 2147483647, %v982
      %vm993 = vcmp.eq.f32.partialorder %v992, 8.507059e+37
      %v994 = vand.u32 %v982, 2147483648
      %v995 = vor.u32 1.1754944e-38, %v994
      %v996 = vsel %vm993, %v995, %v991
      %v997 = vmul.f32 1.0, %v996
      %v998 = vmul.f32 %v997, 1.0614054
      %v999 = vadd.f32 %v998, -1.4531521
      %v1000 = vmul.f32 %v997, %v999
      %v1001 = vadd.f32 %v1000, 1.4214138
      %v1002 = vmul.f32 %v997, %v1001
      %v1003 = vadd.f32 %v1002, -0.28449672
      %v1004 = vmul.f32 %v997, %v1003
      %v1005 = vadd.f32 %v1004, 0.2548296
      %v1006 = vmul.f32 %v997, %v1005
      %v1007 = vsub.f32 0.0, %v980
      %v1008 = vmul.f32 %v1007, %v980
      %v1009 = vmul.f32 %v1008, 1.442695
      %v1010 = vpow.pop %v1009
      %v1011 = vmul.f32 %v1006, %v1010
      %v1012 = vsub.f32 1.0, %v1011
      %vm1013 = vcmp.lt.f32.partialorder %v979, 0.0
      %v1014 = vsub.f32 0.0, %v1012
      %v1015 = vsel %vm1013, %v1014, %v1012
      %v1016 = vadd.f32 %v1015, 1.0
      %v1017 = vmul.f32 %v978, %v1016
      %v1018 = vld [vmem:[%s7] sm:$0xff]
      %v1019 = vld [vmem:[%s7 + $0x8] sm:$0xff]
      %v1020 = vld [vmem:[%s7 + $0x10] sm:$0xff]
      %v1021 = vld [vmem:[%s7 + $0x18] sm:$0xff]
      %v1022 = vld [vmem:[%s7 + $0x20] sm:$0xff]
      %v1023 = vld [vmem:[%s7 + $0x28] sm:$0xff]
      %v1024 = vld [vmem:[%s7 + $0x30] sm:$0xff]
      %v1025 = vld [vmem:[%s7 + $0x38] sm:$0xff]
      %v1026 = vld [vmem:[%s7 + $0x40] sm:$0xff]
      %v1027 = vld [vmem:[%s7 + $0x48] sm:$0xff]
      %v1028 = vld [vmem:[%s7 + $0x50] sm:$0xff]
      %v1029 = vld [vmem:[%s7 + $0x58] sm:$0xff]
      %v1030 = vld [vmem:[%s7 + $0x60] sm:$0xff]
      %v1031 = vld [vmem:[%s7 + $0x68] sm:$0xff]
      %v1032 = vld [vmem:[%s7 + $0x70] sm:$0xff]
      %v1033 = vld [vmem:[%s7 + $0x78] sm:$0xff]
      %v1034 = vld [vmem:[%s8] sm:$0x1]
      %v1036 = vperm.slane %v1034, 0
      %1038 = vmatpush.msra.mxu0 %v1033
      %1039 = vmatpush.msra.mxu0 %v1032
      %1040 = vmatpush.msra.mxu0 %v1031
      %1041 = vmatpush.msra.mxu0 %v1030
      %1042 = vmatpush.msra.mxu0 %v1029
      %1043 = vmatpush.msra.mxu0 %v1028
      %1044 = vmatpush.msra.mxu0 %v1027
      %1045 = vmatpush.msra.mxu0 %v1026
      %1046 = vmatpush.msra.mxu0 %v1025
      %1047 = vmatpush.msra.mxu0 %v1024
      %1048 = vmatpush.msra.mxu0 %v1023
      %1049 = vmatpush.msra.mxu0 %v1022
      %1050 = vmatpush.msra.mxu0 %v1021
      %1051 = vmatpush.msra.mxu0 %v1020
      %1052 = vmatpush.msra.mxu0 %v1019
      %1053 = vmatpush.msra.mxu0 %v1018
      %1054 = vmatmul.f32.gmra.mxu0 %v1017
      %v1055 = vpop.f32.mrf.mxu0
      %v1056 = vadd.f32 %v1036, %v1055
      %1057 = vdwg.mxu0
      %v1058 = vld [vmem:[%s9] sm:$0x1]
      %v1060 = vperm.slane %v1058, 0
      %v1062 = vmul.f32 %v1056, %v1060
      %v1063 = vadd.f32 %v355, %v1062
      %1064 = vst.msk [vmem:[%s354] sm:$0xf] %vm909, %v1063
      %p1065 = scmp.lt.s32.totalorder %s21, 1
      %s1066 = scalar_select %p1065, %s21, 1
      %s1067 = smul.addr %s1066, 4
      %s1068 = scalar_lea.vmem %s10, %s1067
      // Predicated region
      $region61: #{_lambda_.8} parent=59 // pred_check
        %p1069 = pneg %p254
      $region62: #{_lambda_.8} parent=59 // pred_check_branch
        %1071 = sbr.rel (%p1069) target = $region64
      $region63: #{_lambda_.8} parent=59 // pred_region
        _
      $region64: #{_lambda_.8} parent=59 // pred_fallthru
        _
    $region60: #{_lambda_.8} parent=5 // pred_fallthru
      _
    %p1072 = scmp.le.s32.totalorder 2, %s16
    // Predicated region
    $region65: #{_lambda_.8} parent=5 // pred_check
      %p1073 = pneg %p1072
    $region66: #{_lambda_.8} parent=5 // pred_check_branch
      %1075 = sbr.rel (%p1073) target = $region68
    $region67: #{_lambda_.8} parent=5 // pred_region
      %s1076 = ssub.s32 %s16, 2
      // Predicated region
      $region69: #{_lambda_.8} parent=67 // pred_check
        %p1077 = pneg %p260
      $region70: #{_lambda_.8} parent=67 // pred_check_branch
        %1079 = sbr.rel (%p1077) target = $region72
      $region71: #{_lambda_.8} parent=67 // pred_region
        %p1080 = scmp.lt.s32.totalorder %s22, 1
        %s1081 = scalar_select %p1080, %s22, 1
        %s1082 = smul.addr %s1081, 4
        %s1083 = scalar_lea.vmem %s10, %s1082
      $region72: #{_lambda_.8} parent=67 // pred_fallthru
        _
    $region68: #{_lambda_.8} parent=5 // pred_fallthru
      _
  $region6: #{_lambda_.8} parent=0 // loop_footer
    %s20 = sadd.s32 1, %s16
  $region7: #{_lambda_.8} parent=0 // loop_footer_branch
    %15 = sbr.rel target = $region3
  $region8: #{_lambda_.8} parent=0 // loop_exit
    _

// kernel: _lambda_.6
$region0: #{_lambda_.6}
  #allocation0 [shape = 'u32[]', space=smem, size = 0x4, offset = 0x4, fixed_abs, tag = 'smem constant byte address 0x4 - core index']
  #allocation1 [shape = 'u32[72,128]{1,0:T(1,128)}', space=vmem, size = 0x9000, scoped, tag = 'internal scratch']
  #allocation2 [shape = 'f32[10,10,16]{2,1,0:T(8,128)}', space=vmem, size = 0x14000, scoped, tag = 'scratch operand']
  #allocation3 [shape = 'f32[16,16]{1,0:T(8,128)}', space=vmem, size = 0x2000, scoped, tag = 'scratch operand']
  %s0 = inlined_call_operand.vmem [shape: f32[2,16,16], index: 0, kind: input, shape index: {}]
  %s1 = inlined_call_operand.vmem [shape: f32[49,16], index: 1, kind: input, shape index: {}]
  %s2 = inlined_call_operand.vmem [shape: f32[1,16], index: 2, kind: input, shape index: {}]
  %s3 = inlined_call_operand.vmem [shape: f32[1,16], index: 3, kind: input, shape index: {}]
  %s4 = inlined_call_operand.vmem [shape: f32[1,16], index: 4, kind: input, shape index: {}]
  %s5 = inlined_call_operand.vmem [shape: f32[16,64], index: 5, kind: input, shape index: {}]
  %s6 = inlined_call_operand.vmem [shape: f32[1,64], index: 6, kind: input, shape index: {}]
  %s7 = inlined_call_operand.vmem [shape: f32[64,16], index: 7, kind: input, shape index: {}]
  %s8 = inlined_call_operand.vmem [shape: f32[1,16], index: 8, kind: input, shape index: {}]
  %s9 = inlined_call_operand.vmem [shape: f32[1,16], index: 9, kind: input, shape index: {}]
  %s10 = inlined_call_operand.vmem [shape: f32[2,16,16], index: 10, kind: output, shape index: {}]
  %s11 = sld [smem:[#allocation0]]
  $region73: #{_lambda_.6} parent=0
    _
  %s13 = ssub.s32 1, %s11
  %s14 = scalar_select 0, %s13, %s11
  loop: start=0, step=1, limit=4
  $region2: #{_lambda_.6} parent=0 // loop_pre_header
    _
  $region3: #{_lambda_.6} parent=0 // loop_header
    %s16 = sphi 0, %s20
    %p17 = scmp.ge.s32.totalorder %s16, 4
    %s26 = sphi 0, %s28
    %s29 = sphi 0, %s26
    %s30 = sphi 0, %s29
    %s46 = sphi 0, %s30
    %s50 = sphi 0, %s50
    %s52 = sphi 0, %s50
    %s53 = sphi 0, %s52
    %s67 = sphi 0, %s53
    %s71 = sphi 0, %s71
    %s73 = sphi 0, %s71
    %s74 = sphi 0, %s73
    %s88 = sphi 0, %s74
    %s92 = sphi 0, %s92
    %s94 = sphi 0, %s92
    %s95 = sphi 0, %s94
    %s109 = sphi 0, %s95
    %s113 = sphi 0, %s113
    %s115 = sphi 0, %s113
    %s116 = sphi 0, %s115
    %s130 = sphi 0, %s116
    %s134 = sphi 0, %s134
    %s136 = sphi 0, %s134
    %s137 = sphi 0, %s136
    %s151 = sphi 0, %s137
    %s155 = sphi 0, %s155
    %s157 = sphi 0, %s155
    %s158 = sphi 0, %s157
    %s172 = sphi 0, %s158
    %s176 = sphi 0, %s176
    %s178 = sphi 0, %s176
    %s179 = sphi 0, %s178
    %s193 = sphi 0, %s179
    %s197 = sphi 0, %s197
    %s199 = sphi 0, %s197
    %s200 = sphi 0, %s199
    %s214 = sphi 0, %s200
    %s218 = sphi 0, %s218
    %s220 = sphi 0, %s218
    %s221 = sphi 0, %s220
    %s235 = sphi 0, %s221
    %s241 = sphi 0, %s243
    %s244 = sphi 0, %s241
    %s245 = sphi 0, %s244
    %s261 = sphi 0, %s245
  $region4: #{_lambda_.6} parent=0 // loop_header_branch
    %19 = sbr.rel (%p17) target = $region8
  $region5: #{_lambda_.6} parent=0 // loop_body
    %s21 = ssub.s32 %s16, 1
    %s22 = ssub.s32 %s16, 2
    %s23 = sadd.s32 %s16, 1
    %s24 = ssub.s32 %s16, %s23
    %p25 = scmp.eq.s32.totalorder %s24, 0
    %s27 = sadd.s32 %s26, 1
    %s28 = scalar_select %p25, %s26, %s27
    %p31 = pneg %p25
    %p32 = scmp.eq.s32.totalorder %s16, 1
    %p33 = por %p31, %p32
    %p34 = scmp.ne.s32.totalorder %s26, %s29
    %p35 = scmp.eq.s32.totalorder %s16, 0
    %p36 = por %p34, %p35
    %p37 = scmp.ne.s32.totalorder %s26, %s29
    %p38 = scmp.eq.s32.totalorder %s21, 1
    %p39 = por %p37, %p38
    %p40 = scmp.ne.s32.totalorder %s29, %s30
    %p41 = scmp.eq.s32.totalorder %s21, 0
    %p42 = por %p40, %p41
    %p43 = scmp.ne.s32.totalorder %s29, %s30
    %p44 = scmp.eq.s32.totalorder %s22, 1
    %p45 = por %p43, %p44
    %p47 = scmp.ne.s32.totalorder %s30, %s46
    %p48 = scmp.eq.s32.totalorder %s22, 0
    %p49 = por %p47, %p48
    %s51 = sadd.s32 %s50, 1
    %p54 = scmp.eq.s32.totalorder %s16, 1
    %p55 = scmp.ne.s32.totalorder %s50, %s52
    %p56 = scmp.eq.s32.totalorder %s16, 0
    %p57 = por %p55, %p56
    %p58 = scmp.ne.s32.totalorder %s50, %s52
    %p59 = scmp.eq.s32.totalorder %s21, 1
    %p60 = por %p58, %p59
    %p61 = scmp.ne.s32.totalorder %s52, %s53
    %p62 = scmp.eq.s32.totalorder %s21, 0
    %p63 = por %p61, %p62
    %p64 = scmp.ne.s32.totalorder %s52, %s53
    %p65 = scmp.eq.s32.totalorder %s22, 1
    %p66 = por %p64, %p65
    %p68 = scmp.ne.s32.totalorder %s53, %s67
    %p69 = scmp.eq.s32.totalorder %s22, 0
    %p70 = por %p68, %p69
    %s72 = sadd.s32 %s71, 1
    %p75 = scmp.eq.s32.totalorder %s16, 1
    %p76 = scmp.ne.s32.totalorder %s71, %s73
    %p77 = scmp.eq.s32.totalorder %s16, 0
    %p78 = por %p76, %p77
    %p79 = scmp.ne.s32.totalorder %s71, %s73
    %p80 = scmp.eq.s32.totalorder %s21, 1
    %p81 = por %p79, %p80
    %p82 = scmp.ne.s32.totalorder %s73, %s74
    %p83 = scmp.eq.s32.totalorder %s21, 0
    %p84 = por %p82, %p83
    %p85 = scmp.ne.s32.totalorder %s73, %s74
    %p86 = scmp.eq.s32.totalorder %s22, 1
    %p87 = por %p85, %p86
    %p89 = scmp.ne.s32.totalorder %s74, %s88
    %p90 = scmp.eq.s32.totalorder %s22, 0
    %p91 = por %p89, %p90
    %s93 = sadd.s32 %s92, 1
    %p96 = scmp.eq.s32.totalorder %s16, 1
    %p97 = scmp.ne.s32.totalorder %s92, %s94
    %p98 = scmp.eq.s32.totalorder %s16, 0
    %p99 = por %p97, %p98
    %p100 = scmp.ne.s32.totalorder %s92, %s94
    %p101 = scmp.eq.s32.totalorder %s21, 1
    %p102 = por %p100, %p101
    %p103 = scmp.ne.s32.totalorder %s94, %s95
    %p104 = scmp.eq.s32.totalorder %s21, 0
    %p105 = por %p103, %p104
    %p106 = scmp.ne.s32.totalorder %s94, %s95
    %p107 = scmp.eq.s32.totalorder %s22, 1
    %p108 = por %p106, %p107
    %p110 = scmp.ne.s32.totalorder %s95, %s109
    %p111 = scmp.eq.s32.totalorder %s22, 0
    %p112 = por %p110, %p111
    %s114 = sadd.s32 %s113, 1
    %p117 = scmp.eq.s32.totalorder %s16, 1
    %p118 = scmp.ne.s32.totalorder %s113, %s115
    %p119 = scmp.eq.s32.totalorder %s16, 0
    %p120 = por %p118, %p119
    %p121 = scmp.ne.s32.totalorder %s113, %s115
    %p122 = scmp.eq.s32.totalorder %s21, 1
    %p123 = por %p121, %p122
    %p124 = scmp.ne.s32.totalorder %s115, %s116
    %p125 = scmp.eq.s32.totalorder %s21, 0
    %p126 = por %p124, %p125
    %p127 = scmp.ne.s32.totalorder %s115, %s116
    %p128 = scmp.eq.s32.totalorder %s22, 1
    %p129 = por %p127, %p128
    %p131 = scmp.ne.s32.totalorder %s116, %s130
    %p132 = scmp.eq.s32.totalorder %s22, 0
    %p133 = por %p131, %p132
    %s135 = sadd.s32 %s134, 1
    %p138 = scmp.eq.s32.totalorder %s16, 1
    %p139 = scmp.ne.s32.totalorder %s134, %s136
    %p140 = scmp.eq.s32.totalorder %s16, 0
    %p141 = por %p139, %p140
    %p142 = scmp.ne.s32.totalorder %s134, %s136
    %p143 = scmp.eq.s32.totalorder %s21, 1
    %p144 = por %p142, %p143
    %p145 = scmp.ne.s32.totalorder %s136, %s137
    %p146 = scmp.eq.s32.totalorder %s21, 0
    %p147 = por %p145, %p146
    %p148 = scmp.ne.s32.totalorder %s136, %s137
    %p149 = scmp.eq.s32.totalorder %s22, 1
    %p150 = por %p148, %p149
    %p152 = scmp.ne.s32.totalorder %s137, %s151
    %p153 = scmp.eq.s32.totalorder %s22, 0
    %p154 = por %p152, %p153
    %s156 = sadd.s32 %s155, 1
    %p159 = scmp.eq.s32.totalorder %s16, 1
    %p160 = scmp.ne.s32.totalorder %s155, %s157
    %p161 = scmp.eq.s32.totalorder %s16, 0
    %p162 = por %p160, %p161
    %p163 = scmp.ne.s32.totalorder %s155, %s157
    %p164 = scmp.eq.s32.totalorder %s21, 1
    %p165 = por %p163, %p164
    %p166 = scmp.ne.s32.totalorder %s157, %s158
    %p167 = scmp.eq.s32.totalorder %s21, 0
    %p168 = por %p166, %p167
    %p169 = scmp.ne.s32.totalorder %s157, %s158
    %p170 = scmp.eq.s32.totalorder %s22, 1
    %p171 = por %p169, %p170
    %p173 = scmp.ne.s32.totalorder %s158, %s172
    %p174 = scmp.eq.s32.totalorder %s22, 0
    %p175 = por %p173, %p174
    %s177 = sadd.s32 %s176, 1
    %p180 = scmp.eq.s32.totalorder %s16, 1
    %p181 = scmp.ne.s32.totalorder %s176, %s178
    %p182 = scmp.eq.s32.totalorder %s16, 0
    %p183 = por %p181, %p182
    %p184 = scmp.ne.s32.totalorder %s176, %s178
    %p185 = scmp.eq.s32.totalorder %s21, 1
    %p186 = por %p184, %p185
    %p187 = scmp.ne.s32.totalorder %s178, %s179
    %p188 = scmp.eq.s32.totalorder %s21, 0
    %p189 = por %p187, %p188
    %p190 = scmp.ne.s32.totalorder %s178, %s179
    %p191 = scmp.eq.s32.totalorder %s22, 1
    %p192 = por %p190, %p191
    %p194 = scmp.ne.s32.totalorder %s179, %s193
    %p195 = scmp.eq.s32.totalorder %s22, 0
    %p196 = por %p194, %p195
    %s198 = sadd.s32 %s197, 1
    %p201 = scmp.eq.s32.totalorder %s16, 1
    %p202 = scmp.ne.s32.totalorder %s197, %s199
    %p203 = scmp.eq.s32.totalorder %s16, 0
    %p204 = por %p202, %p203
    %p205 = scmp.ne.s32.totalorder %s197, %s199
    %p206 = scmp.eq.s32.totalorder %s21, 1
    %p207 = por %p205, %p206
    %p208 = scmp.ne.s32.totalorder %s199, %s200
    %p209 = scmp.eq.s32.totalorder %s21, 0
    %p210 = por %p208, %p209
    %p211 = scmp.ne.s32.totalorder %s199, %s200
    %p212 = scmp.eq.s32.totalorder %s22, 1
    %p213 = por %p211, %p212
    %p215 = scmp.ne.s32.totalorder %s200, %s214
    %p216 = scmp.eq.s32.totalorder %s22, 0
    %p217 = por %p215, %p216
    %s219 = sadd.s32 %s218, 1
    %p222 = scmp.eq.s32.totalorder %s16, 1
    %p223 = scmp.ne.s32.totalorder %s218, %s220
    %p224 = scmp.eq.s32.totalorder %s16, 0
    %p225 = por %p223, %p224
    %p226 = scmp.ne.s32.totalorder %s218, %s220
    %p227 = scmp.eq.s32.totalorder %s21, 1
    %p228 = por %p226, %p227
    %p229 = scmp.ne.s32.totalorder %s220, %s221
    %p230 = scmp.eq.s32.totalorder %s21, 0
    %p231 = por %p229, %p230
    %p232 = scmp.ne.s32.totalorder %s220, %s221
    %p233 = scmp.eq.s32.totalorder %s22, 1
    %p234 = por %p232, %p233
    %p236 = scmp.ne.s32.totalorder %s221, %s235
    %p237 = scmp.eq.s32.totalorder %s22, 0
    %p238 = por %p236, %p237
    %s239 = ssub.s32 %s16, %s23
    %p240 = scmp.eq.s32.totalorder %s239, 0
    %s242 = sadd.s32 %s241, 1
    %s243 = scalar_select %p240, %s241, %s242
    %p246 = pneg %p240
    %p247 = scmp.eq.s32.totalorder %s16, 1
    %p248 = por %p246, %p247
    %p249 = scmp.ne.s32.totalorder %s241, %s244
    %p250 = scmp.eq.s32.totalorder %s16, 0
    %p251 = por %p249, %p250
    %p252 = scmp.ne.s32.totalorder %s241, %s244
    %p253 = scmp.eq.s32.totalorder %s21, 1
    %p254 = por %p252, %p253
    %p255 = scmp.ne.s32.totalorder %s244, %s245
    %p256 = scmp.eq.s32.totalorder %s21, 0
    %p257 = por %p255, %p256
    %p258 = scmp.ne.s32.totalorder %s244, %s245
    %p259 = scmp.eq.s32.totalorder %s22, 1
    %p260 = por %p258, %p259
    %p262 = scmp.ne.s32.totalorder %s245, %s261
    %p263 = scmp.eq.s32.totalorder %s22, 0
    %p264 = por %p262, %p263
    %p265 = scmp.le.s32.totalorder 1, %s16
    %p266 = scmp.lt.s32.totalorder %s16, 3
    %p267 = pnand %p265, %p266
    %p268 = pneg %p267
    // Predicated region
    $region9: #{_lambda_.6} parent=5 // pred_check
      _
    $region10: #{_lambda_.6} parent=5 // pred_check_branch
      %270 = sbr.rel (%p267) target = $region12
    $region11: #{_lambda_.6} parent=5 // pred_region
      %s271 = ssub.s32 %s16, 1
      // Predicated region
      $region13: #{_lambda_.6} parent=11 // pred_check
        %p272 = pneg %p63
      $region14: #{_lambda_.6} parent=11 // pred_check_branch
        %274 = sbr.rel (%p272) target = $region16
      $region15: #{_lambda_.6} parent=11 // pred_region
        _
      $region16: #{_lambda_.6} parent=11 // pred_fallthru
        _
      // Predicated region
      $region17: #{_lambda_.6} parent=11 // pred_check
        %p275 = pneg %p84
      $region18: #{_lambda_.6} parent=11 // pred_check_branch
        %277 = sbr.rel (%p275) target = $region20
      $region19: #{_lambda_.6} parent=11 // pred_region
        _
      $region20: #{_lambda_.6} parent=11 // pred_fallthru
        _
      // Predicated region
      $region21: #{_lambda_.6} parent=11 // pred_check
        %p278 = pneg %p105
      $region22: #{_lambda_.6} parent=11 // pred_check_branch
        %280 = sbr.rel (%p278) target = $region24
      $region23: #{_lambda_.6} parent=11 // pred_region
        _
      $region24: #{_lambda_.6} parent=11 // pred_fallthru
        _
      // Predicated region
      $region25: #{_lambda_.6} parent=11 // pred_check
        %p281 = pneg %p126
      $region26: #{_lambda_.6} parent=11 // pred_check_branch
        %283 = sbr.rel (%p281) target = $region28
      $region27: #{_lambda_.6} parent=11 // pred_region
        _
      $region28: #{_lambda_.6} parent=11 // pred_fallthru
        _
      // Predicated region
      $region29: #{_lambda_.6} parent=11 // pred_check
        %p284 = pneg %p147
      $region30: #{_lambda_.6} parent=11 // pred_check_branch
        %286 = sbr.rel (%p284) target = $region32
      $region31: #{_lambda_.6} parent=11 // pred_region
        _
      $region32: #{_lambda_.6} parent=11 // pred_fallthru
        _
      // Predicated region
      $region33: #{_lambda_.6} parent=11 // pred_check
        %p287 = pneg %p168
      $region34: #{_lambda_.6} parent=11 // pred_check_branch
        %289 = sbr.rel (%p287) target = $region36
      $region35: #{_lambda_.6} parent=11 // pred_region
        _
      $region36: #{_lambda_.6} parent=11 // pred_fallthru
        _
      // Predicated region
      $region37: #{_lambda_.6} parent=11 // pred_check
        %p290 = pneg %p189
      $region38: #{_lambda_.6} parent=11 // pred_check_branch
        %292 = sbr.rel (%p290) target = $region40
      $region39: #{_lambda_.6} parent=11 // pred_region
        _
      $region40: #{_lambda_.6} parent=11 // pred_fallthru
        _
      // Predicated region
      $region41: #{_lambda_.6} parent=11 // pred_check
        %p293 = pneg %p210
      $region42: #{_lambda_.6} parent=11 // pred_check_branch
        %295 = sbr.rel (%p293) target = $region44
      $region43: #{_lambda_.6} parent=11 // pred_region
        _
      $region44: #{_lambda_.6} parent=11 // pred_fallthru
        _
      // Predicated region
      $region45: #{_lambda_.6} parent=11 // pred_check
        %p296 = pneg %p231
      $region46: #{_lambda_.6} parent=11 // pred_check_branch
        %298 = sbr.rel (%p296) target = $region48
      $region47: #{_lambda_.6} parent=11 // pred_region
        _
      $region48: #{_lambda_.6} parent=11 // pred_fallthru
        _
    $region12: #{_lambda_.6} parent=5 // pred_fallthru
      _
    %p299 = scmp.lt.s32.totalorder %s16, 2
    // Predicated region
    $region49: #{_lambda_.6} parent=5 // pred_check
      %p300 = pneg %p299
    $region50: #{_lambda_.6} parent=5 // pred_check_branch
      %302 = sbr.rel (%p300) target = $region52
    $region51: #{_lambda_.6} parent=5 // pred_region
      // Predicated region
      $region53: #{_lambda_.6} parent=51 // pred_check
        %p303 = pneg %p36
      $region54: #{_lambda_.6} parent=51 // pred_check_branch
        %305 = sbr.rel (%p303) target = $region56
      $region55: #{_lambda_.6} parent=51 // pred_region
        %p306 = scmp.lt.s32.totalorder %s16, 1
        %s307 = scalar_select %p306, %s16, 1
        %s308 = smul.addr %s307, 2
        %s309 = smul.addr %s308, 8
        %s310 = scalar_lea.vmem %s0, %s309
      $region56: #{_lambda_.6} parent=51 // pred_fallthru
        _
    $region52: #{_lambda_.6} parent=5 // pred_fallthru
      _
    %p311 = scmp.le.s32.totalorder 1, %s16
    %p312 = scmp.lt.s32.totalorder %s16, 3
    %p313 = pnand %p311, %p312
    %p314 = pneg %p313
    // Predicated region
    $region57: #{_lambda_.6} parent=5 // pred_check
      _
    $region58: #{_lambda_.6} parent=5 // pred_check_branch
      %316 = sbr.rel (%p313) target = $region60
    $region59: #{_lambda_.6} parent=5 // pred_region
      %s317 = ssub.s32 %s16, 1
      %p318 = scmp.lt.s32.totalorder %s21, 1
      %s319 = scalar_select %p318, %s21, 1
      %s320 = smul.addr %s319, 2
      %s321 = smul.addr %s320, 8
      %s322 = scalar_lea.vmem %s0, %s321
      %p323 = pneg %p42
      %p324 = pneg %p39
      %p325 = pneg %p63
      %p326 = pneg %p60
      %p327 = pneg %p84
      %p328 = pneg %p81
      %p329 = pneg %p105
      %p330 = pneg %p102
      %p331 = pneg %p126
      %p332 = pneg %p123
      %p333 = pneg %p147
      %p334 = pneg %p144
      %p335 = pneg %p168
      %p336 = pneg %p165
      %p337 = pneg %p189
      %p338 = pneg %p186
      %p339 = pneg %p210
      %p340 = pneg %p207
      %p341 = pneg %p231
      %p342 = pneg %p228
      %p343 = pneg %p257
      %p344 = pneg %p254
      %p345 = scmp.lt.s32.totalorder %s21, 1
      %s346 = scalar_select %p345, %s21, 1
      %s347 = smul.addr %s346, 2
      %s348 = smul.addr %s347, 8
      %s349 = scalar_lea.vmem %s10, %s348
      %p350 = scmp.lt.s32.totalorder %s21, 1
      %s351 = scalar_select %p350, %s21, 1
      %s352 = smul.addr %s351, 2
      %s353 = smul.addr %s352, 8
      %s354 = scalar_lea.vmem %s0, %s353
      %p355 = scmp.lt.s32.totalorder %s21, 1
      %s356 = scalar_select %p355, %s21, 1
      %s357 = smul.addr %s356, 2
      %s358 = smul.addr %s357, 8
      %s359 = scalar_lea.vmem %s10, %s358
      %v360 = vld [vmem:[%s354] sm:$0xff]
      %v361 = vld [vmem:[%s354 + $0x8] sm:$0xff]
      %vm362 = vcmask 130048
      %363 = vst.msk [vmem:[#allocation2] sm:$0xff] %vm362, 0.0
      %vm364 = vcmask 123904
      %365 = vst.msk [vmem:[#allocation2 + $0x8] sm:$0x3] %vm364, 0.0
      %366 = vst.msk [vmem:[#allocation2 + $0x10] sm:$0xff] %vm362, 0.0
      %367 = vst.msk [vmem:[#allocation2 + $0x18] sm:$0x3] %vm364, 0.0
      %368 = vst.msk [vmem:[#allocation2 + $0x20] sm:$0xff] %vm362, 0.0
      %369 = vst.msk [vmem:[#allocation2 + $0x28] sm:$0x3] %vm364, 0.0
      %370 = vst.msk [vmem:[#allocation2 + $0x30] sm:$0xff] %vm362, 0.0
      %371 = vst.msk [vmem:[#allocation2 + $0x38] sm:$0x3] %vm364, 0.0
      %372 = vst.msk [vmem:[#allocation2 + $0x40] sm:$0xff] %vm362, 0.0
      %373 = vst.msk [vmem:[#allocation2 + $0x48] sm:$0x3] %vm364, 0.0
      %374 = vst.msk [vmem:[#allocation2 + $0x50] sm:$0xff] %vm362, 0.0
      %375 = vst.msk [vmem:[#allocation2 + $0x58] sm:$0x3] %vm364, 0.0
      %376 = vst.msk [vmem:[#allocation2 + $0x60] sm:$0xff] %vm362, 0.0
      %377 = vst.msk [vmem:[#allocation2 + $0x68] sm:$0x3] %vm364, 0.0
      %378 = vst.msk [vmem:[#allocation2 + $0x70] sm:$0xff] %vm362, 0.0
      %379 = vst.msk [vmem:[#allocation2 + $0x78] sm:$0x3] %vm364, 0.0
      %380 = vst.msk [vmem:[#allocation2 + $0x80] sm:$0xff] %vm362, 0.0
      %381 = vst.msk [vmem:[#allocation2 + $0x88] sm:$0x3] %vm364, 0.0
      %382 = vst.msk [vmem:[#allocation2 + $0x90] sm:$0xff] %vm362, 0.0
      %383 = vst.msk [vmem:[#allocation2 + $0x98] sm:$0x3] %vm364, 0.0
      %s384 = scalar_lea.vmem [#allocation2], 48
      %vm385 = vcmask 125952
      %386 = vst.msk [vmem:[%s384 + $0x3] sm:$0xf] %vm385, %v360
      %s387 = scalar_lea.vmem [#allocation2], 64
      %vm388 = vcmask 130052
      %389 = vst.msk [vmem:[%s387 - $0x1] sm:$0xf0] %vm388, %v360
      %s390 = scalar_lea.vmem [#allocation2], 80
      %391 = vst.msk [vmem:[%s390 + $0x3] sm:$0xf] %vm385, %v361
      %s392 = scalar_lea.vmem [#allocation2], 96
      %393 = vst.msk [vmem:[%s392 - $0x1] sm:$0xf0] %vm388, %v361
      %v394 = vld [vmem:[%s1] sm:$0xff]
      %v395 = vld [vmem:[%s1 + $0x8] sm:$0xff]
      %v396 = vld [vmem:[%s1 + $0x10] sm:$0xff]
      %v397 = vld [vmem:[%s1 + $0x18] sm:$0xff]
      %v398 = vld [vmem:[%s1 + $0x20] sm:$0xff]
      %v399 = vld [vmem:[%s1 + $0x28] sm:$0xff]
      %v400 = vld [vmem:[%s1 + $0x30] sm:$0x1]
      %v401 = vld [vmem:[#allocation2] sm:$0xff]
      %v402 = vld [vmem:[#allocation2 + $0x8] sm:$0x3]
      %v403 = vperm.slane %v394, 0
      %v404 = vmul.f32 %v401, %v403
      %v405 = vadd.f32 %v404, 0.0
      %v406 = vperm.slane %v394, 1
      %v407 = vmul.f32 %v401, %v406
      %v409 = vrot.slane %v407, 1
      %v411 = vadd.f32 %v405, %v409
      %v412 = vperm.slane %v394, 2
      %v413 = vmul.f32 %v401, %v412
      %v415 = vrot.slane %v413, 2
      %v417 = vadd.f32 %v411, %v415
      %v418 = vperm.slane %v394, 3
      %v419 = vmul.f32 %v401, %v418
      %v421 = vrot.slane %v419, 3
      %v423 = vadd.f32 %v417, %v421
      %v424 = vperm.slane %v394, 4
      %v425 = vmul.f32 %v401, %v424
      %v427 = vrot.slane %v425, 4
      %v429 = vadd.f32 %v423, %v427
      %v430 = vperm.slane %v394, 5
      %v431 = vmul.f32 %v401, %v430
      %v432 = vmul.f32 %v402, %v430
      %vm435 = vcmask 1042432
      %v436 = vrot.slane %v431, 5
      %v437 = vrot.slane %v432, 5
      %v438 = vsel %vm435, %v436, %v437
      %v440 = vadd.f32 %v429, %v438
      %v441 = vperm.slane %v394, 6
      %v442 = vmul.f32 %v401, %v441
      %v443 = vmul.f32 %v402, %v441
      %vm446 = vcmask 1041408
      %v447 = vrot.slane %v442, 6
      %v448 = vrot.slane %v443, 6
      %v449 = vsel %vm446, %v447, %v448
      %v451 = vadd.f32 %v440, %v449
      %s452 = scalar_lea.vmem [#allocation2], 16
      %v453 = vld [vmem:[%s452] sm:$0xff]
      %v454 = vld [vmem:[%s452 + $0x8] sm:$0x3]
      %v455 = vperm.slane %v394, 7
      %v456 = vmul.f32 %v453, %v455
      %v457 = vadd.f32 %v451, %v456
      %v458 = vperm.slane %v395, 0
      %v459 = vmul.f32 %v453, %v458
      %v461 = vrot.slane %v459, 1
      %v463 = vadd.f32 %v457, %v461
      %v464 = vperm.slane %v395, 1
      %v465 = vmul.f32 %v453, %v464
      %v467 = vrot.slane %v465, 2
      %v469 = vadd.f32 %v463, %v467
      %v470 = vperm.slane %v395, 2
      %v471 = vmul.f32 %v453, %v470
      %v473 = vrot.slane %v471, 3
      %v475 = vadd.f32 %v469, %v473
      %v476 = vperm.slane %v395, 3
      %v477 = vmul.f32 %v453, %v476
      %v479 = vrot.slane %v477, 4
      %v481 = vadd.f32 %v475, %v479
      %v482 = vperm.slane %v395, 4
      %v483 = vmul.f32 %v453, %v482
      %v484 = vmul.f32 %v454, %v482
      %v487 = vrot.slane %v483, 5
      %v488 = vrot.slane %v484, 5
      %v489 = vsel %vm435, %v487, %v488
      %v491 = vadd.f32 %v481, %v489
      %v492 = vperm.slane %v395, 5
      %v493 = vmul.f32 %v453, %v492
      %v494 = vmul.f32 %v454, %v492
      %v497 = vrot.slane %v493, 6
      %v498 = vrot.slane %v494, 6
      %v499 = vsel %vm446, %v497, %v498
      %v501 = vadd.f32 %v491, %v499
      %s502 = scalar_lea.vmem [#allocation2], 32
      %v503 = vld [vmem:[%s502] sm:$0xff]
      %v504 = vld [vmem:[%s502 + $0x8] sm:$0x3]
      %v505 = vperm.slane %v395, 6
      %v506 = vmul.f32 %v503, %v505
      %v507 = vadd.f32 %v501, %v506
      %v508 = vperm.slane %v395, 7
      %v509 = vmul.f32 %v503, %v508
      %v511 = vrot.slane %v509, 1
      %v513 = vadd.f32 %v507, %v511
      %v514 = vperm.slane %v396, 0
      %v515 = vmul.f32 %v503, %v514
      %v517 = vrot.slane %v515, 2
      %v519 = vadd.f32 %v513, %v517
      %v520 = vperm.slane %v396, 1
      %v521 = vmul.f32 %v503, %v520
      %v523 = vrot.slane %v521, 3
      %v525 = vadd.f32 %v519, %v523
      %v526 = vperm.slane %v396, 2
      %v527 = vmul.f32 %v503, %v526
      %v529 = vrot.slane %v527, 4
      %v531 = vadd.f32 %v525, %v529
      %v532 = vperm.slane %v396, 3
      %v533 = vmul.f32 %v503, %v532
      %v534 = vmul.f32 %v504, %v532
      %v537 = vrot.slane %v533, 5
      %v538 = vrot.slane %v534, 5
      %v539 = vsel %vm435, %v537, %v538
      %v541 = vadd.f32 %v531, %v539
      %v542 = vperm.slane %v396, 4
      %v543 = vmul.f32 %v503, %v542
      %v544 = vmul.f32 %v504, %v542
      %v547 = vrot.slane %v543, 6
      %v548 = vrot.slane %v544, 6
      %v549 = vsel %vm446, %v547, %v548
      %v551 = vadd.f32 %v541, %v549
      %v552 = vld [vmem:[%s384] sm:$0xff]
      %v553 = vld [vmem:[%s384 + $0x8] sm:$0x3]
      %v554 = vperm.slane %v396, 5
      %v555 = vmul.f32 %v552, %v554
      %v556 = vadd.f32 %v551, %v555
      %v557 = vperm.slane %v396, 6
      %v558 = vmul.f32 %v552, %v557
      %v560 = vrot.slane %v558, 1
      %v562 = vadd.f32 %v556, %v560
      %v563 = vperm.slane %v396, 7
      %v564 = vmul.f32 %v552, %v563
      %v566 = vrot.slane %v564, 2
      %v568 = vadd.f32 %v562, %v566
      %v569 = vperm.slane %v397, 0
      %v570 = vmul.f32 %v552, %v569
      %v572 = vrot.slane %v570, 3
      %v574 = vadd.f32 %v568, %v572
      %v575 = vperm.slane %v397, 1
      %v576 = vmul.f32 %v552, %v575
      %v578 = vrot.slane %v576, 4
      %v580 = vadd.f32 %v574, %v578
      %v581 = vperm.slane %v397, 2
      %v582 = vmul.f32 %v552, %v581
      %v583 = vmul.f32 %v553, %v581
      %v586 = vrot.slane %v582, 5
      %v587 = vrot.slane %v583, 5
      %v588 = vsel %vm435, %v586, %v587
      %v590 = vadd.f32 %v580, %v588
      %v591 = vperm.slane %v397, 3
      %v592 = vmul.f32 %v552, %v591
      %v593 = vmul.f32 %v553, %v591
      %v596 = vrot.slane %v592, 6
      %v597 = vrot.slane %v593, 6
      %v598 = vsel %vm446, %v596, %v597
      %v600 = vadd.f32 %v590, %v598
      %v601 = vld [vmem:[%s387] sm:$0xff]
      %v602 = vld [vmem:[%s387 + $0x8] sm:$0x3]
      %v603 = vperm.slane %v397, 4
      %v604 = vmul.f32 %v601, %v603
      %v605 = vadd.f32 %v600, %v604
      %v606 = vperm.slane %v397, 5
      %v607 = vmul.f32 %v601, %v606
      %v609 = vrot.slane %v607, 1
      %v611 = vadd.f32 %v605, %v609
      %v612 = vperm.slane %v397, 6
      %v613 = vmul.f32 %v601, %v612
      %v615 = vrot.slane %v613, 2
      %v617 = vadd.f32 %v611, %v615
      %v618 = vperm.slane %v397, 7
      %v619 = vmul.f32 %v601, %v618
      %v621 = vrot.slane %v619, 3
      %v623 = vadd.f32 %v617, %v621
      %v624 = vperm.slane %v398, 0
      %v625 = vmul.f32 %v601, %v624
      %v627 = vrot.slane %v625, 4
      %v629 = vadd.f32 %v623, %v627
      %v630 = vperm.slane %v398, 1
      %v631 = vmul.f32 %v601, %v630
      %v632 = vmul.f32 %v602, %v630
      %v635 = vrot.slane %v631, 5
      %v636 = vrot.slane %v632, 5
      %v637 = vsel %vm435, %v635, %v636
      %v639 = vadd.f32 %v629, %v637
      %v640 = vperm.slane %v398, 2
      %v641 = vmul.f32 %v601, %v640
      %v642 = vmul.f32 %v602, %v640
      %v645 = vrot.slane %v641, 6
      %v646 = vrot.slane %v642, 6
      %v647 = vsel %vm446, %v645, %v646
      %v649 = vadd.f32 %v639, %v647
      %v650 = vld [vmem:[%s390] sm:$0xff]
      %v651 = vld [vmem:[%s390 + $0x8] sm:$0x3]
      %v652 = vperm.slane %v398, 3
      %v653 = vmul.f32 %v650, %v652
      %v654 = vadd.f32 %v649, %v653
      %v655 = vperm.slane %v398, 4
      %v656 = vmul.f32 %v650, %v655
      %v658 = vrot.slane %v656, 1
      %v660 = vadd.f32 %v654, %v658
      %v661 = vperm.slane %v398, 5
      %v662 = vmul.f32 %v650, %v661
      %v664 = vrot.slane %v662, 2
      %v666 = vadd.f32 %v660, %v664
      %v667 = vperm.slane %v398, 6
      %v668 = vmul.f32 %v650, %v667
      %v670 = vrot.slane %v668, 3
      %v672 = vadd.f32 %v666, %v670
      %v673 = vperm.slane %v398, 7
      %v674 = vmul.f32 %v650, %v673
      %v676 = vrot.slane %v674, 4
      %v678 = vadd.f32 %v672, %v676
      %v679 = vperm.slane %v399, 0
      %v680 = vmul.f32 %v650, %v679
      %v681 = vmul.f32 %v651, %v679
      %v684 = vrot.slane %v680, 5
      %v685 = vrot.slane %v681, 5
      %v686 = vsel %vm435, %v684, %v685
      %v688 = vadd.f32 %v678, %v686
      %v689 = vperm.slane %v399, 1
      %v690 = vmul.f32 %v650, %v689
      %v691 = vmul.f32 %v651, %v689
      %v694 = vrot.slane %v690, 6
      %v695 = vrot.slane %v691, 6
      %v696 = vsel %vm446, %v694, %v695
      %v698 = vadd.f32 %v688, %v696
      %v699 = vld [vmem:[%s392] sm:$0xff]
      %v700 = vld [vmem:[%s392 + $0x8] sm:$0x3]
      %v701 = vperm.slane %v399, 2
      %v702 = vmul.f32 %v699, %v701
      %v703 = vadd.f32 %v698, %v702
      %v704 = vperm.slane %v399, 3
      %v705 = vmul.f32 %v699, %v704
      %v707 = vrot.slane %v705, 1
      %v709 = vadd.f32 %v703, %v707
      %v710 = vperm.slane %v399, 4
      %v711 = vmul.f32 %v699, %v710
      %v713 = vrot.slane %v711, 2
      %v715 = vadd.f32 %v709, %v713
      %v716 = vperm.slane %v399, 5
      %v717 = vmul.f32 %v699, %v716
      %v719 = vrot.slane %v717, 3
      %v721 = vadd.f32 %v715, %v719
      %v722 = vperm.slane %v399, 6
      %v723 = vmul.f32 %v699, %v722
      %v725 = vrot.slane %v723, 4
      %v727 = vadd.f32 %v721, %v725
      %v728 = vperm.slane %v399, 7
      %v729 = vmul.f32 %v699, %v728
      %v730 = vmul.f32 %v700, %v728
      %v733 = vrot.slane %v729, 5
      %v734 = vrot.slane %v730, 5
      %v735 = vsel %vm435, %v733, %v734
      %v737 = vadd.f32 %v727, %v735
      %v738 = vperm.slane %v400, 0
      %v739 = vmul.f32 %v699, %v738
      %v740 = vmul.f32 %v700, %v738
      %v743 = vrot.slane %v739, 6
      %v744 = vrot.slane %v740, 6
      %v745 = vsel %vm446, %v743, %v744
      %v747 = vadd.f32 %v737, %v745
      %v748 = vld [vmem:[%s2] sm:$0x1]
      %v750 = vperm.slane %v748, 0
      %v752 = vadd.f32 %v747, %v750
      %753 = vst.msk [vmem:[#allocation3] sm:$0xf] %vm385, %v752
      %v754 = vld [vmem:[%s452] sm:$0xff]
      %v755 = vld [vmem:[%s452 + $0x8] sm:$0x3]
      %v756 = vmul.f32 %v754, %v403
      %v757 = vadd.f32 %v756, 0.0
      %v758 = vmul.f32 %v754, %v406
      %v760 = vrot.slane %v758, 1
      %v762 = vadd.f32 %v757, %v760
      %v763 = vmul.f32 %v754, %v412
      %v765 = vrot.slane %v763, 2
      %v767 = vadd.f32 %v762, %v765
      %v768 = vmul.f32 %v754, %v418
      %v770 = vrot.slane %v768, 3
      %v772 = vadd.f32 %v767, %v770
      %v773 = vmul.f32 %v754, %v424
      %v775 = vrot.slane %v773, 4
      %v777 = vadd.f32 %v772, %v775
      %v778 = vmul.f32 %v754, %v430
      %v779 = vmul.f32 %v755, %v430
      %v782 = vrot.slane %v778, 5
      %v783 = vrot.slane %v779, 5
      %v784 = vsel %vm435, %v782, %v783
      %v786 = vadd.f32 %v777, %v784
      %v787 = vmul.f32 %v754, %v441
      %v788 = vmul.f32 %v755, %v441
      %v791 = vrot.slane %v787, 6
      %v792 = vrot.slane %v788, 6
      %v793 = vsel %vm446, %v791, %v792
      %v795 = vadd.f32 %v786, %v793
      %v796 = vld [vmem:[%s502] sm:$0xff]
      %v797 = vld [vmem:[%s502 + $0x8] sm:$0x3]
      %v798 = vmul.f32 %v796, %v455
      %v799 = vadd.f32 %v795, %v798
      %v800 = vmul.f32 %v796, %v458
      %v802 = vrot.slane %v800, 1
      %v804 = vadd.f32 %v799, %v802
      %v805 = vmul.f32 %v796, %v464
      %v807 = vrot.slane %v805, 2
      %v809 = vadd.f32 %v804, %v807
      %v810 = vmul.f32 %v796, %v470
      %v812 = vrot.slane %v810, 3
      %v814 = vadd.f32 %v809, %v812
      %v815 = vmul.f32 %v796, %v476
      %v817 = vrot.slane %v815, 4
      %v819 = vadd.f32 %v814, %v817
      %v820 = vmul.f32 %v796, %v482
      %v821 = vmul.f32 %v797, %v482
      %v824 = vrot.slane %v820, 5
      %v825 = vrot.slane %v821, 5
      %v826 = vsel %vm435, %v824, %v825
      %v828 = vadd.f32 %v819, %v826
      %v829 = vmul.f32 %v796, %v492
      %v830 = vmul.f32 %v797, %v492
      %v833 = vrot.slane %v829, 6
      %v834 = vrot.slane %v830, 6
      %v835 = vsel %vm446, %v833, %v834
      %v837 = vadd.f32 %v828, %v835
      %v838 = vld [vmem:[%s384] sm:$0xff]
      %v839 = vld [vmem:[%s384 + $0x8] sm:$0x3]
      %v840 = vmul.f32 %v838, %v505
      %v841 = vadd.f32 %v837, %v840
      %v842 = vmul.f32 %v838, %v508
      %v844 = vrot.slane %v842, 1
      %v846 = vadd.f32 %v841, %v844
      %v847 = vmul.f32 %v838, %v514
      %v849 = vrot.slane %v847, 2
      %v851 = vadd.f32 %v846, %v849
      %v852 = vmul.f32 %v838, %v520
      %v854 = vrot.slane %v852, 3
      %v856 = vadd.f32 %v851, %v854
      %v857 = vmul.f32 %v838, %v526
      %v859 = vrot.slane %v857, 4
      %v861 = vadd.f32 %v856, %v859
      %v862 = vmul.f32 %v838, %v532
      %v863 = vmul.f32 %v839, %v532
      %v866 = vrot.slane %v862, 5
      %v867 = vrot.slane %v863, 5
      %v868 = vsel %vm435, %v866, %v867
      %v870 = vadd.f32 %v861, %v868
      %v871 = vmul.f32 %v838, %v542
      %v872 = vmul.f32 %v839, %v542
      %v875 = vrot.slane %v871, 6
      %v876 = vrot.slane %v872, 6
      %v877 = vsel %vm446, %v875, %v876
      %v879 = vadd.f32 %v870, %v877
      %v880 = vld [vmem:[%s387] sm:$0xff]
      %v881 = vld [vmem:[%s387 + $0x8] sm:$0x3]
      %v882 = vmul.f32 %v880, %v554
      %v883 = vadd.f32 %v879, %v882
      %v884 = vmul.f32 %v880, %v557
      %v886 = vrot.slane %v884, 1
      %v888 = vadd.f32 %v883, %v886
      %v889 = vmul.f32 %v880, %v563
      %v891 = vrot.slane %v889, 2
      %v893 = vadd.f32 %v888, %v891
      %v894 = vmul.f32 %v880, %v569
      %v896 = vrot.slane %v894, 3
      %v898 = vadd.f32 %v893, %v896
      %v899 = vmul.f32 %v880, %v575
      %v901 = vrot.slane %v899, 4
      %v903 = vadd.f32 %v898, %v901
      %v904 = vmul.f32 %v880, %v581
      %v905 = vmul.f32 %v881, %v581
      %v908 = vrot.slane %v904, 5
      %v909 = vrot.slane %v905, 5
      %v910 = vsel %vm435, %v908, %v909
      %v912 = vadd.f32 %v903, %v910
      %v913 = vmul.f32 %v880, %v591
      %v914 = vmul.f32 %v881, %v591
      %v917 = vrot.slane %v913, 6
      %v918 = vrot.slane %v914, 6
      %v919 = vsel %vm446, %v917, %v918
      %v921 = vadd.f32 %v912, %v919
      %v922 = vld [vmem:[%s390] sm:$0xff]
      %v923 = vld [vmem:[%s390 + $0x8] sm:$0x3]
      %v924 = vmul.f32 %v922, %v603
      %v925 = vadd.f32 %v921, %v924
      %v926 = vmul.f32 %v922, %v606
      %v928 = vrot.slane %v926, 1
      %v930 = vadd.f32 %v925, %v928
      %v931 = vmul.f32 %v922, %v612
      %v933 = vrot.slane %v931, 2
      %v935 = vadd.f32 %v930, %v933
      %v936 = vmul.f32 %v922, %v618
      %v938 = vrot.slane %v936, 3
      %v940 = vadd.f32 %v935, %v938
      %v941 = vmul.f32 %v922, %v624
      %v943 = vrot.slane %v941, 4
      %v945 = vadd.f32 %v940, %v943
      %v946 = vmul.f32 %v922, %v630
      %v947 = vmul.f32 %v923, %v630
      %v950 = vrot.slane %v946, 5
      %v951 = vrot.slane %v947, 5
      %v952 = vsel %vm435, %v950, %v951
      %v954 = vadd.f32 %v945, %v952
      %v955 = vmul.f32 %v922, %v640
      %v956 = vmul.f32 %v923, %v640
      %v959 = vrot.slane %v955, 6
      %v960 = vrot.slane %v956, 6
      %v961 = vsel %vm446, %v959, %v960
      %v963 = vadd.f32 %v954, %v961
      %v964 = vld [vmem:[%s392] sm:$0xff]
      %v965 = vld [vmem:[%s392 + $0x8] sm:$0x3]
      %v966 = vmul.f32 %v964, %v652
      %v967 = vadd.f32 %v963, %v966
      %v968 = vmul.f32 %v964, %v655
      %v970 = vrot.slane %v968, 1
      %v972 = vadd.f32 %v967, %v970
      %v973 = vmul.f32 %v964, %v661
      %v975 = vrot.slane %v973, 2
      %v977 = vadd.f32 %v972, %v975
      %v978 = vmul.f32 %v964, %v667
      %v980 = vrot.slane %v978, 3
      %v982 = vadd.f32 %v977, %v980
      %v983 = vmul.f32 %v964, %v673
      %v985 = vrot.slane %v983, 4
      %v987 = vadd.f32 %v982, %v985
      %v988 = vmul.f32 %v964, %v679
      %v989 = vmul.f32 %v965, %v679
      %v992 = vrot.slane %v988, 5
      %v993 = vrot.slane %v989, 5
      %v994 = vsel %vm435, %v992, %v993
      %v996 = vadd.f32 %v987, %v994
      %v997 = vmul.f32 %v964, %v689
      %v998 = vmul.f32 %v965, %v689
      %v1001 = vrot.slane %v997, 6
      %v1002 = vrot.slane %v998, 6
      %v1003 = vsel %vm446, %v1001, %v1002
      %v1005 = vadd.f32 %v996, %v1003
      %s1006 = scalar_lea.vmem [#allocation2], 112
      %v1007 = vld [vmem:[%s1006] sm:$0xff]
      %v1008 = vld [vmem:[%s1006 + $0x8] sm:$0x3]
      %v1009 = vmul.f32 %v1007, %v701
      %v1010 = vadd.f32 %v1005, %v1009
      %v1011 = vmul.f32 %v1007, %v704
      %v1013 = vrot.slane %v1011, 1
      %v1015 = vadd.f32 %v1010, %v1013
      %v1016 = vmul.f32 %v1007, %v710
      %v1018 = vrot.slane %v1016, 2
      %v1020 = vadd.f32 %v1015, %v1018
      %v1021 = vmul.f32 %v1007, %v716
      %v1023 = vrot.slane %v1021, 3
      %v1025 = vadd.f32 %v1020, %v1023
      %v1026 = vmul.f32 %v1007, %v722
      %v1028 = vrot.slane %v1026, 4
      %v1030 = vadd.f32 %v1025, %v1028
      %v1031 = vmul.f32 %v1007, %v728
      %v1032 = vmul.f32 %v1008, %v728
      %v1035 = vrot.slane %v1031, 5
      %v1036 = vrot.slane %v1032, 5
      %v1037 = vsel %vm435, %v1035, %v1036
      %v1039 = vadd.f32 %v1030, %v1037
      %v1040 = vmul.f32 %v1007, %v738
      %v1041 = vmul.f32 %v1008, %v738
      %v1044 = vrot.slane %v1040, 6
      %v1045 = vrot.slane %v1041, 6
      %v1046 = vsel %vm446, %v1044, %v1045
      %v1048 = vadd.f32 %v1039, %v1046
      %v1049 = vld [vmem:[%s2] sm:$0x1]
      %v1051 = vperm.slane %v1049, 0
      %v1053 = vadd.f32 %v1048, %v1051
      %1054 = vst.msk [vmem:[#allocation3 + $0x4] sm:$0xf] %vm385, %v1053
      %v1055 = vld [vmem:[%s502] sm:$0xff]
      %v1056 = vld [vmem:[%s502 + $0x8] sm:$0x3]
      %v1057 = vmul.f32 %v1055, %v403
      %v1058 = vadd.f32 %v1057, 0.0
      %v1059 = vmul.f32 %v1055, %v406
      %v1061 = vrot.slane %v1059, 1
      %v1063 = vadd.f32 %v1058, %v1061
      %v1064 = vmul.f32 %v1055, %v412
      %v1066 = vrot.slane %v1064, 2
      %v1068 = vadd.f32 %v1063, %v1066
      %v1069 = vmul.f32 %v1055, %v418
      %v1071 = vrot.slane %v1069, 3
      %v1073 = vadd.f32 %v1068, %v1071
      %v1074 = vmul.f32 %v1055, %v424
      %v1076 = vrot.slane %v1074, 4
      %v1078 = vadd.f32 %v1073, %v1076
      %v1079 = vmul.f32 %v1055, %v430
      %v1080 = vmul.f32 %v1056, %v430
      %v1083 = vrot.slane %v1079, 5
      %v1084 = vrot.slane %v1080, 5
      %v1085 = vsel %vm435, %v1083, %v1084
      %v1087 = vadd.f32 %v1078, %v1085
      %v1088 = vmul.f32 %v1055, %v441
      %v1089 = vmul.f32 %v1056, %v441
      %v1092 = vrot.slane %v1088, 6
      %v1093 = vrot.slane %v1089, 6
      %v1094 = vsel %vm446, %v1092, %v1093
      %v1096 = vadd.f32 %v1087, %v1094
      %v1097 = vld [vmem:[%s384] sm:$0xff]
      %v1098 = vld [vmem:[%s384 + $0x8] sm:$0x3]
      %v1099 = vmul.f32 %v1097, %v455
      %v1100 = vadd.f32 %v1096, %v1099
      %v1101 = vmul.f32 %v1097, %v458
      %v1103 = vrot.slane %v1101, 1
      %v1105 = vadd.f32 %v1100, %v1103
      %v1106 = vmul.f32 %v1097, %v464
      %v1108 = vrot.slane %v1106, 2
      %v1110 = vadd.f32 %v1105, %v1108
      %v1111 = vmul.f32 %v1097, %v470
      %v1113 = vrot.slane %v1111, 3
      %v1115 = vadd.f32 %v1110, %v1113
      %v1116 = vmul.f32 %v1097, %v476
      %v1118 = vrot.slane %v1116, 4
      %v1120 = vadd.f32 %v1115, %v1118
      %v1121 = vmul.f32 %v1097, %v482
      %v1122 = vmul.f32 %v1098, %v482
      %v1125 = vrot.slane %v1121, 5
      %v1126 = vrot.slane %v1122, 5
      %v1127 = vsel %vm435, %v1125, %v1126
      %v1129 = vadd.f32 %v1120, %v1127
      %v1130 = vmul.f32 %v1097, %v492
      %v1131 = vmul.f32 %v1098, %v492
      %v1134 = vrot.slane %v1130, 6
      %v1135 = vrot.slane %v1131, 6
      %v1136 = vsel %vm446, %v1134, %v1135
      %v1138 = vadd.f32 %v1129, %v1136
      %v1139 = vld [vmem:[%s387] sm:$0xff]
      %v1140 = vld [vmem:[%s387 + $0x8] sm:$0x3]
      %v1141 = vmul.f32 %v1139, %v505
      %v1142 = vadd.f32 %v1138, %v1141
      %v1143 = vmul.f32 %v1139, %v508
      %v1145 = vrot.slane %v1143, 1
      %v1147 = vadd.f32 %v1142, %v1145
      %v1148 = vmul.f32 %v1139, %v514
      %v1150 = vrot.slane %v1148, 2
      %v1152 = vadd.f32 %v1147, %v1150
      %v1153 = vmul.f32 %v1139, %v520
      %v1155 = vrot.slane %v1153, 3
      %v1157 = vadd.f32 %v1152, %v1155
      %v1158 = vmul.f32 %v1139, %v526
      %v1160 = vrot.slane %v1158, 4
      %v1162 = vadd.f32 %v1157, %v1160
      %v1163 = vmul.f32 %v1139, %v532
      %v1164 = vmul.f32 %v1140, %v532
      %v1167 = vrot.slane %v1163, 5
      %v1168 = vrot.slane %v1164, 5
      %v1169 = vsel %vm435, %v1167, %v1168
      %v1171 = vadd.f32 %v1162, %v1169
      %v1172 = vmul.f32 %v1139, %v542
      %v1173 = vmul.f32 %v1140, %v542
      %v1176 = vrot.slane %v1172, 6
      %v1177 = vrot.slane %v1173, 6
      %v1178 = vsel %vm446, %v1176, %v1177
      %v1180 = vadd.f32 %v1171, %v1178
      %v1181 = vld [vmem:[%s390] sm:$0xff]
      %v1182 = vld [vmem:[%s390 + $0x8] sm:$0x3]
      %v1183 = vmul.f32 %v1181, %v554
      %v1184 = vadd.f32 %v1180, %v1183
      %v1185 = vmul.f32 %v1181, %v557
      %v1187 = vrot.slane %v1185, 1
      %v1189 = vadd.f32 %v1184, %v1187
      %v1190 = vmul.f32 %v1181, %v563
      %v1192 = vrot.slane %v1190, 2
      %v1194 = vadd.f32 %v1189, %v1192
      %v1195 = vmul.f32 %v1181, %v569
      %v1197 = vrot.slane %v1195, 3
      %v1199 = vadd.f32 %v1194, %v1197
      %v1200 = vmul.f32 %v1181, %v575
      %v1202 = vrot.slane %v1200, 4
      %v1204 = vadd.f32 %v1199, %v1202
      %v1205 = vmul.f32 %v1181, %v581
      %v1206 = vmul.f32 %v1182, %v581
      %v1209 = vrot.slane %v1205, 5
      %v1210 = vrot.slane %v1206, 5
      %v1211 = vsel %vm435, %v1209, %v1210
      %v1213 = vadd.f32 %v1204, %v1211
      %v1214 = vmul.f32 %v1181, %v591
      %v1215 = vmul.f32 %v1182, %v591
      %v1218 = vrot.slane %v1214, 6
      %v1219 = vrot.slane %v1215, 6
      %v1220 = vsel %vm446, %v1218, %v1219
      %v1222 = vadd.f32 %v1213, %v1220
      %v1223 = vld [vmem:[%s392] sm:$0xff]
      %v1224 = vld [vmem:[%s392 + $0x8] sm:$0x3]
      %v1225 = vmul.f32 %v1223, %v603
      %v1226 = vadd.f32 %v1222, %v1225
      %v1227 = vmul.f32 %v1223, %v606
      %v1229 = vrot.slane %v1227, 1
      %v1231 = vadd.f32 %v1226, %v1229
      %v1232 = vmul.f32 %v1223, %v612
      %v1234 = vrot.slane %v1232, 2
      %v1236 = vadd.f32 %v1231, %v1234
      %v1237 = vmul.f32 %v1223, %v618
      %v1239 = vrot.slane %v1237, 3
      %v1241 = vadd.f32 %v1236, %v1239
      %v1242 = vmul.f32 %v1223, %v624
      %v1244 = vrot.slane %v1242, 4
      %v1246 = vadd.f32 %v1241, %v1244
      %v1247 = vmul.f32 %v1223, %v630
      %v1248 = vmul.f32 %v1224, %v630
      %v1251 = vrot.slane %v1247, 5
      %v1252 = vrot.slane %v1248, 5
      %v1253 = vsel %vm435, %v1251, %v1252
      %v1255 = vadd.f32 %v1246, %v1253
      %v1256 = vmul.f32 %v1223, %v640
      %v1257 = vmul.f32 %v1224, %v640
      %v1260 = vrot.slane %v1256, 6
      %v1261 = vrot.slane %v1257, 6
      %v1262 = vsel %vm446, %v1260, %v1261
      %v1264 = vadd.f32 %v1255, %v1262
      %v1265 = vld [vmem:[%s1006] sm:$0xff]
      %v1266 = vld [vmem:[%s1006 + $0x8] sm:$0x3]
      %v1267 = vmul.f32 %v1265, %v652
      %v1268 = vadd.f32 %v1264, %v1267
      %v1269 = vmul.f32 %v1265, %v655
      %v1271 = vrot.slane %v1269, 1
      %v1273 = vadd.f32 %v1268, %v1271
      %v1274 = vmul.f32 %v1265, %v661
      %v1276 = vrot.slane %v1274, 2
      %v1278 = vadd.f32 %v1273, %v1276
      %v1279 = vmul.f32 %v1265, %v667
      %v1281 = vrot.slane %v1279, 3
      %v1283 = vadd.f32 %v1278, %v1281
      %v1284 = vmul.f32 %v1265, %v673
      %v1286 = vrot.slane %v1284, 4
      %v1288 = vadd.f32 %v1283, %v1286
      %v1289 = vmul.f32 %v1265, %v679
      %v1290 = vmul.f32 %v1266, %v679
      %v1293 = vrot.slane %v1289, 5
      %v1294 = vrot.slane %v1290, 5
      %v1295 = vsel %vm435, %v1293, %v1294
      %v1297 = vadd.f32 %v1288, %v1295
      %v1298 = vmul.f32 %v1265, %v689
      %v1299 = vmul.f32 %v1266, %v689
      %v1302 = vrot.slane %v1298, 6
      %v1303 = vrot.slane %v1299, 6
      %v1304 = vsel %vm446, %v1302, %v1303
      %v1306 = vadd.f32 %v1297, %v1304
      %s1307 = scalar_lea.vmem [#allocation2], 128
      %v1308 = vld [vmem:[%s1307] sm:$0xff]
      %v1309 = vld [vmem:[%s1307 + $0x8] sm:$0x3]
      %v1310 = vmul.f32 %v1308, %v701
      %v1311 = vadd.f32 %v1306, %v1310
      %v1312 = vmul.f32 %v1308, %v704
      %v1314 = vrot.slane %v1312, 1
      %v1316 = vadd.f32 %v1311, %v1314
      %v1317 = vmul.f32 %v1308, %v710
      %v1319 = vrot.slane %v1317, 2
      %v1321 = vadd.f32 %v1316, %v1319
      %v1322 = vmul.f32 %v1308, %v716
      %v1324 = vrot.slane %v1322, 3
      %v1326 = vadd.f32 %v1321, %v1324
      %v1327 = vmul.f32 %v1308, %v722
      %v1329 = vrot.slane %v1327, 4
      %v1331 = vadd.f32 %v1326, %v1329
      %v1332 = vmul.f32 %v1308, %v728
      %v1333 = vmul.f32 %v1309, %v728
      %v1336 = vrot.slane %v1332, 5
      %v1337 = vrot.slane %v1333, 5
      %v1338 = vsel %vm435, %v1336, %v1337
      %v1340 = vadd.f32 %v1331, %v1338
      %v1341 = vmul.f32 %v1308, %v738
      %v1342 = vmul.f32 %v1309, %v738
      %v1345 = vrot.slane %v1341, 6
      %v1346 = vrot.slane %v1342, 6
      %v1347 = vsel %vm446, %v1345, %v1346
      %v1349 = vadd.f32 %v1340, %v1347
      %v1350 = vld [vmem:[%s2] sm:$0x1]
      %v1352 = vperm.slane %v1350, 0
      %v1354 = vadd.f32 %v1349, %v1352
      %1355 = vst.msk [vmem:[#allocation3 + $0x8] sm:$0xf] %vm385, %v1354
      %v1356 = vld [vmem:[%s384] sm:$0xff]
      %v1357 = vld [vmem:[%s384 + $0x8] sm:$0x3]
      %v1358 = vmul.f32 %v1356, %v403
      %v1359 = vadd.f32 %v1358, 0.0
      %v1360 = vmul.f32 %v1356, %v406
      %v1362 = vrot.slane %v1360, 1
      %v1364 = vadd.f32 %v1359, %v1362
      %v1365 = vmul.f32 %v1356, %v412
      %v1367 = vrot.slane %v1365, 2
      %v1369 = vadd.f32 %v1364, %v1367
      %v1370 = vmul.f32 %v1356, %v418
      %v1372 = vrot.slane %v1370, 3
      %v1374 = vadd.f32 %v1369, %v1372
      %v1375 = vmul.f32 %v1356, %v424
      %v1377 = vrot.slane %v1375, 4
      %v1379 = vadd.f32 %v1374, %v1377
      %v1380 = vmul.f32 %v1356, %v430
      %v1381 = vmul.f32 %v1357, %v430
      %v1384 = vrot.slane %v1380, 5
      %v1385 = vrot.slane %v1381, 5
      %v1386 = vsel %vm435, %v1384, %v1385
      %v1388 = vadd.f32 %v1379, %v1386
      %v1389 = vmul.f32 %v1356, %v441
      %v1390 = vmul.f32 %v1357, %v441
      %v1393 = vrot.slane %v1389, 6
      %v1394 = vrot.slane %v1390, 6
      %v1395 = vsel %vm446, %v1393, %v1394
      %v1397 = vadd.f32 %v1388, %v1395
      %v1398 = vld [vmem:[%s387] sm:$0xff]
      %v1399 = vld [vmem:[%s387 + $0x8] sm:$0x3]
      %v1400 = vmul.f32 %v1398, %v455
      %v1401 = vadd.f32 %v1397, %v1400
      %v1402 = vmul.f32 %v1398, %v458
      %v1404 = vrot.slane %v1402, 1
      %v1406 = vadd.f32 %v1401, %v1404
      %v1407 = vmul.f32 %v1398, %v464
      %v1409 = vrot.slane %v1407, 2
      %v1411 = vadd.f32 %v1406, %v1409
      %v1412 = vmul.f32 %v1398, %v470
      %v1414 = vrot.slane %v1412, 3
      %v1416 = vadd.f32 %v1411, %v1414
      %v1417 = vmul.f32 %v1398, %v476
      %v1419 = vrot.slane %v1417, 4
      %v1421 = vadd.f32 %v1416, %v1419
      %v1422 = vmul.f32 %v1398, %v482
      %v1423 = vmul.f32 %v1399, %v482
      %v1426 = vrot.slane %v1422, 5
      %v1427 = vrot.slane %v1423, 5
      %v1428 = vsel %vm435, %v1426, %v1427
      %v1430 = vadd.f32 %v1421, %v1428
      %v1431 = vmul.f32 %v1398, %v492
      %v1432 = vmul.f32 %v1399, %v492
      %v1435 = vrot.slane %v1431, 6
      %v1436 = vrot.slane %v1432, 6
      %v1437 = vsel %vm446, %v1435, %v1436
      %v1439 = vadd.f32 %v1430, %v1437
      %v1440 = vld [vmem:[%s390] sm:$0xff]
      %v1441 = vld [vmem:[%s390 + $0x8] sm:$0x3]
      %v1442 = vmul.f32 %v1440, %v505
      %v1443 = vadd.f32 %v1439, %v1442
      %v1444 = vmul.f32 %v1440, %v508
      %v1446 = vrot.slane %v1444, 1
      %v1448 = vadd.f32 %v1443, %v1446
      %v1449 = vmul.f32 %v1440, %v514
      %v1451 = vrot.slane %v1449, 2
      %v1453 = vadd.f32 %v1448, %v1451
      %v1454 = vmul.f32 %v1440, %v520
      %v1456 = vrot.slane %v1454, 3
      %v1458 = vadd.f32 %v1453, %v1456
      %v1459 = vmul.f32 %v1440, %v526
      %v1461 = vrot.slane %v1459, 4
      %v1463 = vadd.f32 %v1458, %v1461
      %v1464 = vmul.f32 %v1440, %v532
      %v1465 = vmul.f32 %v1441, %v532
      %v1468 = vrot.slane %v1464, 5
      %v1469 = vrot.slane %v1465, 5
      %v1470 = vsel %vm435, %v1468, %v1469
      %v1472 = vadd.f32 %v1463, %v1470
      %v1473 = vmul.f32 %v1440, %v542
      %v1474 = vmul.f32 %v1441, %v542
      %v1477 = vrot.slane %v1473, 6
      %v1478 = vrot.slane %v1474, 6
      %v1479 = vsel %vm446, %v1477, %v1478
      %v1481 = vadd.f32 %v1472, %v1479
      %v1482 = vld [vmem:[%s392] sm:$0xff]
      %v1483 = vld [vmem:[%s392 + $0x8] sm:$0x3]
      %v1484 = vmul.f32 %v1482, %v554
      %v1485 = vadd.f32 %v1481, %v1484
      %v1486 = vmul.f32 %v1482, %v557
      %v1488 = vrot.slane %v1486, 1
      %v1490 = vadd.f32 %v1485, %v1488
      %v1491 = vmul.f32 %v1482, %v563
      %v1493 = vrot.slane %v1491, 2
      %v1495 = vadd.f32 %v1490, %v1493
      %v1496 = vmul.f32 %v1482, %v569
      %v1498 = vrot.slane %v1496, 3
      %v1500 = vadd.f32 %v1495, %v1498
      %v1501 = vmul.f32 %v1482, %v575
      %v1503 = vrot.slane %v1501, 4
      %v1505 = vadd.f32 %v1500, %v1503
      %v1506 = vmul.f32 %v1482, %v581
      %v1507 = vmul.f32 %v1483, %v581
      %v1510 = vrot.slane %v1506, 5
      %v1511 = vrot.slane %v1507, 5
      %v1512 = vsel %vm435, %v1510, %v1511
      %v1514 = vadd.f32 %v1505, %v1512
      %v1515 = vmul.f32 %v1482, %v591
      %v1516 = vmul.f32 %v1483, %v591
      %v1519 = vrot.slane %v1515, 6
      %v1520 = vrot.slane %v1516, 6
      %v1521 = vsel %vm446, %v1519, %v1520
      %v1523 = vadd.f32 %v1514, %v1521
      %v1524 = vld [vmem:[%s1006] sm:$0xff]
      %v1525 = vld [vmem:[%s1006 + $0x8] sm:$0x3]
      %v1526 = vmul.f32 %v1524, %v603
      %v1527 = vadd.f32 %v1523, %v1526
      %v1528 = vmul.f32 %v1524, %v606
      %v1530 = vrot.slane %v1528, 1
      %v1532 = vadd.f32 %v1527, %v1530
      %v1533 = vmul.f32 %v1524, %v612
      %v1535 = vrot.slane %v1533, 2
      %v1537 = vadd.f32 %v1532, %v1535
      %v1538 = vmul.f32 %v1524, %v618
      %v1540 = vrot.slane %v1538, 3
      %v1542 = vadd.f32 %v1537, %v1540
      %v1543 = vmul.f32 %v1524, %v624
      %v1545 = vrot.slane %v1543, 4
      %v1547 = vadd.f32 %v1542, %v1545
      %v1548 = vmul.f32 %v1524, %v630
      %v1549 = vmul.f32 %v1525, %v630
      %v1552 = vrot.slane %v1548, 5
      %v1553 = vrot.slane %v1549, 5
      %v1554 = vsel %vm435, %v1552, %v1553
      %v1556 = vadd.f32 %v1547, %v1554
      %v1557 = vmul.f32 %v1524, %v640
      %v1558 = vmul.f32 %v1525, %v640
      %v1561 = vrot.slane %v1557, 6
      %v1562 = vrot.slane %v1558, 6
      %v1563 = vsel %vm446, %v1561, %v1562
      %v1565 = vadd.f32 %v1556, %v1563
      %v1566 = vld [vmem:[%s1307] sm:$0xff]
      %v1567 = vld [vmem:[%s1307 + $0x8] sm:$0x3]
      %v1568 = vmul.f32 %v1566, %v652
      %v1569 = vadd.f32 %v1565, %v1568
      %v1570 = vmul.f32 %v1566, %v655
      %v1572 = vrot.slane %v1570, 1
      %v1574 = vadd.f32 %v1569, %v1572
      %v1575 = vmul.f32 %v1566, %v661
      %v1577 = vrot.slane %v1575, 2
      %v1579 = vadd.f32 %v1574, %v1577
      %v1580 = vmul.f32 %v1566, %v667
      %v1582 = vrot.slane %v1580, 3
      %v1584 = vadd.f32 %v1579, %v1582
      %v1585 = vmul.f32 %v1566, %v673
      %v1587 = vrot.slane %v1585, 4
      %v1589 = vadd.f32 %v1584, %v1587
      %v1590 = vmul.f32 %v1566, %v679
      %v1591 = vmul.f32 %v1567, %v679
      %v1594 = vrot.slane %v1590, 5
      %v1595 = vrot.slane %v1591, 5
      %v1596 = vsel %vm435, %v1594, %v1595
      %v1598 = vadd.f32 %v1589, %v1596
      %v1599 = vmul.f32 %v1566, %v689
      %v1600 = vmul.f32 %v1567, %v689
      %v1603 = vrot.slane %v1599, 6
      %v1604 = vrot.slane %v1600, 6
      %v1605 = vsel %vm446, %v1603, %v1604
      %v1607 = vadd.f32 %v1598, %v1605
      %s1608 = scalar_lea.vmem [#allocation2], 144
      %v1609 = vld [vmem:[%s1608] sm:$0xff]
      %v1610 = vld [vmem:[%s1608 + $0x8] sm:$0x3]
      %v1611 = vmul.f32 %v1609, %v701
      %v1612 = vadd.f32 %v1607, %v1611
      %v1613 = vmul.f32 %v1609, %v704
      %v1615 = vrot.slane %v1613, 1
      %v1617 = vadd.f32 %v1612, %v1615
      %v1618 = vmul.f32 %v1609, %v710
      %v1620 = vrot.slane %v1618, 2
      %v1622 = vadd.f32 %v1617, %v1620
      %v1623 = vmul.f32 %v1609, %v716
      %v1625 = vrot.slane %v1623, 3
      %v1627 = vadd.f32 %v1622, %v1625
      %v1628 = vmul.f32 %v1609, %v722
      %v1630 = vrot.slane %v1628, 4
      %v1632 = vadd.f32 %v1627, %v1630
      %v1633 = vmul.f32 %v1609, %v728
      %v1634 = vmul.f32 %v1610, %v728
      %v1637 = vrot.slane %v1633, 5
      %v1638 = vrot.slane %v1634, 5
      %v1639 = vsel %vm435, %v1637, %v1638
      %v1641 = vadd.f32 %v1632, %v1639
      %v1642 = vmul.f32 %v1609, %v738
      %v1643 = vmul.f32 %v1610, %v738
      %v1646 = vrot.slane %v1642, 6
      %v1647 = vrot.slane %v1643, 6
      %v1648 = vsel %vm446, %v1646, %v1647
      %v1650 = vadd.f32 %v1641, %v1648
      %v1651 = vld [vmem:[%s2] sm:$0x1]
      %v1653 = vperm.slane %v1651, 0
      %v1655 = vadd.f32 %v1650, %v1653
      %1656 = vst.msk [vmem:[#allocation3 + $0xc] sm:$0xf] %vm385, %v1655
      %v1657 = vld [vmem:[#allocation3] sm:$0xff]
      %v1658 = vld [vmem:[#allocation3 + $0x8] sm:$0xff]
      %v1659 = vld [vmem:[%s3] sm:$0x1]
      %v1660 = vld [vmem:[%s4] sm:$0x1]
      %v1661 = vsel %vm362, %v1657, 0.0
      %1662 = vadd.xlane.f32.xlu0 %v1661
      %v1663 = vpop.xlane.xlu0 %1662
      %v1664 = vsel %vm362, %v1658, 0.0
      %1665 = vadd.xlane.f32.xlu0 %v1664
      %v1666 = vpop.xlane.xlu0 %1665
      %v1667 = vrcp.pop 16.0
      %v1668 = vmul.f32 16.0, %v1667
      %v1669 = vsub.f32 1.0, %v1668
      %v1670 = vmul.f32 %v1667, %v1669
      %v1671 = vadd.f32 %v1667, %v1670
      %vm1672 = vweird.f32 %v1667
      %v1673 = vsel %vm1672, %v1667, %v1671
      %v1674 = vmul.f32 %v1663, %v1673
      %v1675 = vmul.f32 %v1666, %v1673
      %v1676 = vsub.f32 %v1657, %v1674
      %v1677 = vsub.f32 %v1658, %v1675
      %v1678 = vmul.f32 %v1676, %v1676
      %v1679 = vmul.f32 %v1677, %v1677
      %v1680 = vsel %vm362, %v1678, 0.0
      %1681 = vadd.xlane.f32.xlu0 %v1680
      %v1682 = vpop.xlane.xlu0 %1681
      %v1683 = vsel %vm362, %v1679, 0.0
      %1684 = vadd.xlane.f32.xlu0 %v1683
      %v1685 = vpop.xlane.xlu0 %1684
      %v1686 = vmul.f32 %v1682, %v1673
      %v1687 = vmul.f32 %v1685, %v1673
      %v1688 = vadd.f32 %v1686, 1e-06
      %v1689 = vadd.f32 %v1687, 1e-06
      %v1690 = vrsqrt.pop %v1688
      %v1691 = vmul.f32 %v1690, %v1688
      %v1692 = vmul.f32 %v1691, %v1690
      %v1693 = vmul.f32 0.5, %v1692
      %v1694 = vsub.f32 1.5, %v1693
      %v1695 = vmul.f32 %v1690, %v1694
      %vm1696 = vweird.f32 %v1688
      %vm1697 = vweird.f32 %v1690
      %vm1698 = vmor %vm1696, %vm1697
      %v1699 = vsel %vm1698, %v1690, %v1695
      %v1700 = vrsqrt.pop %v1689
      %v1701 = vmul.f32 %v1700, %v1689
      %v1702 = vmul.f32 %v1701, %v1700
      %v1703 = vmul.f32 0.5, %v1702
      %v1704 = vsub.f32 1.5, %v1703
      %v1705 = vmul.f32 %v1700, %v1704
      %vm1706 = vweird.f32 %v1689
      %vm1707 = vweird.f32 %v1700
      %vm1708 = vmor %vm1706, %vm1707
      %v1709 = vsel %vm1708, %v1700, %v1705
      %v1710 = vmul.f32 %v1676, %v1699
      %v1711 = vmul.f32 %v1677, %v1709
      %v1713 = vperm.slane %v1659, 0
      %v1715 = vmul.f32 %v1710, %v1713
      %v1716 = vmul.f32 %v1711, %v1713
      %v1718 = vperm.slane %v1660, 0
      %v1720 = vadd.f32 %v1715, %v1718
      %v1721 = vadd.f32 %v1716, %v1718
      %v1722 = vld [vmem:[%s5] sm:$0xff]
      %v1723 = vld [vmem:[%s5 + $0x8] sm:$0xff]
      %v1724 = vld [vmem:[%s6] sm:$0x1]
      %v1726 = vperm.slane %v1724, 0
      %v1729 = vsel %vm362, %v1720, 0
      %v1732 = vsel %vm362, %v1721, 0
      %1734 = vmatpush.msra.mxu0 0.0
      %1735 = vmatpush.msra.mxu0 0.0
      %1736 = vmatpush.msra.mxu0 0.0
      %1737 = vmatpush.msra.mxu0 0.0
      %1738 = vmatpush.msra.mxu0 0.0
      %1739 = vmatpush.msra.mxu0 0.0
      %1740 = vmatpush.msra.mxu0 0.0
      %1741 = vmatpush.msra.mxu0 0.0
      %1742 = vmatpush.msra.mxu0 0.0
      %1743 = vmatpush.msra.mxu0 0.0
      %1744 = vmatpush.msra.mxu0 0.0
      %1745 = vmatpush.msra.mxu0 0.0
      %1746 = vmatpush.msra.mxu0 0.0
      %1747 = vmatpush.msra.mxu0 0.0
      %1748 = vmatpush.msra.mxu0 %v1723
      %1749 = vmatpush.msra.mxu0 %v1722
      %1750 = vmatmul.f32.gmra.mxu0 %v1729
      %v1751 = vpop.f32.mrf.mxu0
      %v1752 = vadd.f32 %v1726, %v1751
      %1753 = vmatmul.f32.gmra.mxu0 %v1732
      %v1754 = vpop.f32.mrf.mxu0
      %v1755 = vadd.f32 %v1726, %v1754
      %1756 = vdwg.mxu0
      %v1757 = vmul.f32 %v1752, 0.5
      %v1758 = vmul.f32 %v1755, 0.5
      %v1759 = vmul.f32 %v1752, 0.70710677
      %v1760 = vmul.f32 %v1755, 0.70710677
      %v1761 = vand.u32 2147483647, %v1759
      %v1762 = vand.u32 2147483647, %v1760
      %v1763 = vmul.f32 %v1761, 0.3275911
      %v1764 = vmul.f32 %v1762, 0.3275911
      %v1765 = vadd.f32 %v1763, 1.0
      %v1766 = vadd.f32 %v1764, 1.0
      %v1767 = vrcp.pop %v1765
      %v1768 = vmul.f32 %v1765, %v1767
      %v1769 = vsub.f32 1.0, %v1768
      %v1770 = vmul.f32 %v1767, %v1769
      %v1771 = vadd.f32 %v1767, %v1770
      %vm1772 = vweird.f32 %v1765
      %vm1773 = vweird.f32 %v1767
      %vm1774 = vmor %vm1772, %vm1773
      %v1775 = vsel %vm1774, %v1767, %v1771
      %v1776 = vand.u32 2147483647, %v1765
      %vm1777 = vcmp.eq.f32.partialorder %v1776, 8.507059e+37
      %v1778 = vand.u32 %v1765, 2147483648
      %v1779 = vor.u32 1.1754944e-38, %v1778
      %v1780 = vsel %vm1777, %v1779, %v1775
      %v1781 = vmul.f32 1.0, %v1780
      %v1782 = vrcp.pop %v1766
      %v1783 = vmul.f32 %v1766, %v1782
      %v1784 = vsub.f32 1.0, %v1783
      %v1785 = vmul.f32 %v1782, %v1784
      %v1786 = vadd.f32 %v1782, %v1785
      %vm1787 = vweird.f32 %v1766
      %vm1788 = vweird.f32 %v1782
      %vm1789 = vmor %vm1787, %vm1788
      %v1790 = vsel %vm1789, %v1782, %v1786
      %v1791 = vand.u32 2147483647, %v1766
      %vm1792 = vcmp.eq.f32.partialorder %v1791, 8.507059e+37
      %v1793 = vand.u32 %v1766, 2147483648
      %v1794 = vor.u32 1.1754944e-38, %v1793
      %v1795 = vsel %vm1792, %v1794, %v1790
      %v1796 = vmul.f32 1.0, %v1795
      %v1797 = vmul.f32 %v1781, 1.0614054
      %v1798 = vmul.f32 %v1796, 1.0614054
      %v1799 = vadd.f32 %v1797, -1.4531521
      %v1800 = vadd.f32 %v1798, -1.4531521
      %v1801 = vmul.f32 %v1781, %v1799
      %v1802 = vmul.f32 %v1796, %v1800
      %v1803 = vadd.f32 %v1801, 1.4214138
      %v1804 = vadd.f32 %v1802, 1.4214138
      %v1805 = vmul.f32 %v1781, %v1803
      %v1806 = vmul.f32 %v1796, %v1804
      %v1807 = vadd.f32 %v1805, -0.28449672
      %v1808 = vadd.f32 %v1806, -0.28449672
      %v1809 = vmul.f32 %v1781, %v1807
      %v1810 = vmul.f32 %v1796, %v1808
      %v1811 = vadd.f32 %v1809, 0.2548296
      %v1812 = vadd.f32 %v1810, 0.2548296
      %v1813 = vmul.f32 %v1781, %v1811
      %v1814 = vmul.f32 %v1796, %v1812
      %v1815 = vsub.f32 0.0, %v1761
      %v1816 = vsub.f32 0.0, %v1762
      %v1817 = vmul.f32 %v1815, %v1761
      %v1818 = vmul.f32 %v1816, %v1762
      %v1819 = vmul.f32 %v1817, 1.442695
      %v1820 = vpow.pop %v1819
      %v1821 = vmul.f32 %v1818, 1.442695
      %v1822 = vpow.pop %v1821
      %v1823 = vmul.f32 %v1813, %v1820
      %v1824 = vmul.f32 %v1814, %v1822
      %v1825 = vsub.f32 1.0, %v1823
      %v1826 = vsub.f32 1.0, %v1824
      %vm1827 = vcmp.lt.f32.partialorder %v1759, 0.0
      %vm1828 = vcmp.lt.f32.partialorder %v1760, 0.0
      %v1829 = vsub.f32 0.0, %v1825
      %v1830 = vsub.f32 0.0, %v1826
      %v1831 = vsel %vm1827, %v1829, %v1825
      %v1832 = vsel %vm1828, %v1830, %v1826
      %v1833 = vadd.f32 %v1831, 1.0
      %v1834 = vadd.f32 %v1832, 1.0
      %v1835 = vmul.f32 %v1757, %v1833
      %v1836 = vmul.f32 %v1758, %v1834
      %v1837 = vld [vmem:[%s7] sm:$0xff]
      %v1838 = vld [vmem:[%s7 + $0x8] sm:$0xff]
      %v1839 = vld [vmem:[%s7 + $0x10] sm:$0xff]
      %v1840 = vld [vmem:[%s7 + $0x18] sm:$0xff]
      %v1841 = vld [vmem:[%s7 + $0x20] sm:$0xff]
      %v1842 = vld [vmem:[%s7 + $0x28] sm:$0xff]
      %v1843 = vld [vmem:[%s7 + $0x30] sm:$0xff]
      %v1844 = vld [vmem:[%s7 + $0x38] sm:$0xff]
      %v1845 = vld [vmem:[%s8] sm:$0x1]
      %v1847 = vperm.slane %v1845, 0
      %vm1849 = vcmask 523264
      %v1851 = vsel %vm1849, %v1835, 0
      %v1854 = vsel %vm1849, %v1836, 0
      %1856 = vmatpush.msra.mxu0 0.0
      %1857 = vmatpush.msra.mxu0 0.0
      %1858 = vmatpush.msra.mxu0 0.0
      %1859 = vmatpush.msra.mxu0 0.0
      %1860 = vmatpush.msra.mxu0 0.0
      %1861 = vmatpush.msra.mxu0 0.0
      %1862 = vmatpush.msra.mxu0 0.0
      %1863 = vmatpush.msra.mxu0 0.0
      %1864 = vmatpush.msra.mxu0 %v1844
      %1865 = vmatpush.msra.mxu0 %v1843
      %1866 = vmatpush.msra.mxu0 %v1842
      %1867 = vmatpush.msra.mxu0 %v1841
      %1868 = vmatpush.msra.mxu0 %v1840
      %1869 = vmatpush.msra.mxu0 %v1839
      %1870 = vmatpush.msra.mxu0 %v1838
      %1871 = vmatpush.msra.mxu0 %v1837
      %1872 = vmatmul.f32.gmra.mxu0 %v1851
      %v1873 = vpop.f32.mrf.mxu0
      %v1874 = vadd.f32 %v1847, %v1873
      %1875 = vmatmul.f32.gmra.mxu0 %v1854
      %v1876 = vpop.f32.mrf.mxu0
      %v1877 = vadd.f32 %v1847, %v1876
      %1878 = vdwg.mxu0
      %v1879 = vld [vmem:[%s9] sm:$0x1]
      %v1881 = vperm.slane %v1879, 0
      %v1883 = vmul.f32 %v1874, %v1881
      %v1884 = vmul.f32 %v1877, %v1881
      %v1885 = vadd.f32 %v360, %v1883
      %v1886 = vadd.f32 %v361, %v1884
      %1887 = vst.msk [vmem:[%s359] sm:$0xff] %vm362, %v1885
      %1888 = vst.msk [vmem:[%s359 + $0x8] sm:$0xff] %vm362, %v1886
      %p1889 = scmp.lt.s32.totalorder %s21, 1
      %s1890 = scalar_select %p1889, %s21, 1
      %s1891 = smul.addr %s1890, 2
      %s1892 = smul.addr %s1891, 8
      %s1893 = scalar_lea.vmem %s10, %s1892
      // Predicated region
      $region61: #{_lambda_.6} parent=59 // pred_check
        %p1894 = pneg %p254
      $region62: #{_lambda_.6} parent=59 // pred_check_branch
        %1896 = sbr.rel (%p1894) target = $region64
      $region63: #{_lambda_.6} parent=59 // pred_region
        _
      $region64: #{_lambda_.6} parent=59 // pred_fallthru
        _
    $region60: #{_lambda_.6} parent=5 // pred_fallthru
      _
    %p1897 = scmp.le.s32.totalorder 2, %s16
    // Predicated region
    $region65: #{_lambda_.6} parent=5 // pred_check
      %p1898 = pneg %p1897
    $region66: #{_lambda_.6} parent=5 // pred_check_branch
      %1900 = sbr.rel (%p1898) target = $region68
    $region67: #{_lambda_.6} parent=5 // pred_region
      %s1901 = ssub.s32 %s16, 2
      // Predicated region
      $region69: #{_lambda_.6} parent=67 // pred_check
        %p1902 = pneg %p260
      $region70: #{_lambda_.6} parent=67 // pred_check_branch
        %1904 = sbr.rel (%p1902) target = $region72
      $region71: #{_lambda_.6} parent=67 // pred_region
        %p1905 = scmp.lt.s32.totalorder %s22, 1
        %s1906 = scalar_select %p1905, %s22, 1
        %s1907 = smul.addr %s1906, 2
        %s1908 = smul.addr %s1907, 8
        %s1909 = scalar_lea.vmem %s10, %s1908
      $region72: #{_lambda_.6} parent=67 // pred_fallthru
        _
    $region68: #{_lambda_.6} parent=5 // pred_fallthru
      _
  $region6: #{_lambda_.6} parent=0 // loop_footer
    %s20 = sadd.s32 1, %s16
  $region7: #{_lambda_.6} parent=0 // loop_footer_branch
    %15 = sbr.rel target = $region3
  $region8: #{_lambda_.6} parent=0 // loop_exit
    _

</llo_original>
